<compile_context>
chip_gen: v7x
topology: tpu7x:2x2x1
jax: 0.10.0
libtpu: 0.0.40
codegen_flags: <defaults>
</compile_context>

<pallas_src>
import functools

import jax
import jax.numpy as jnp
from jax import lax
from jax.experimental import pallas as pl
from jax.experimental.pallas import tpu as pltpu

_BF16 = jnp.bfloat16


# ------------------------------------------------------------------
# Helpers
# ------------------------------------------------------------------

def _pick_row_tile(rows, target=512):
    """Largest row tile <= target that divides `rows` and is a multiple of 8,
    else the full extent (full-extent blocks always satisfy the (8,128) rule)."""
    if rows <= target:
        return rows
    for t in range(target, 7, -8):
        if rows % t == 0:
            return t
    return rows


def _ln_math(x, g, b, eps):
    mean = jnp.mean(x, axis=-1, keepdims=True)
    var = jnp.mean((x - mean) ** 2, axis=-1, keepdims=True)
    return (x - mean) * lax.rsqrt(var + eps) * g + b


# ------------------------------------------------------------------
# Fused MultiheadAttention kernel (per-batch grid step)
# ------------------------------------------------------------------

def _mha_kernel(*refs, nheads, need_weights):
    (q_ref, k_ref, v_ref, wq_ref, wk_ref, wv_ref, wo_ref,
     bq_ref, bk_ref, bv_ref, bo_ref) = refs[:11]
    o_ref = refs[11]
    p_ref = refs[12] if need_weights else None

    Sq = q_ref.shape[1]
    Sk = k_ref.shape[1]
    D = q_ref.shape[2]
    Dh = D // nheads
    scale = 1.0 / float(Dh) ** 0.5

    q = q_ref[0].astype(_BF16)
    k = k_ref[0].astype(_BF16)
    v = v_ref[0].astype(_BF16)

    # Full-width (lane-dense, N=D) QKV projections; f32 accumulate, f32 bias.
    qp = jnp.dot(q, wq_ref[...].astype(_BF16),
                 preferred_element_type=jnp.float32) + bq_ref[...]
    kp = jnp.dot(k, wk_ref[...].astype(_BF16),
                 preferred_element_type=jnp.float32) + bk_ref[...]
    vp = jnp.dot(v, wv_ref[...].astype(_BF16),
                 preferred_element_type=jnp.float32) + bv_ref[...]

    acc = jnp.zeros((Sq, D), jnp.float32)
    if need_weights:
        attn_acc = jnp.zeros((Sq, Sk), jnp.float32)

    for h in range(nheads):
        sl = slice(h * Dh, (h + 1) * Dh)
        qh = (qp[:, sl] * scale).astype(_BF16)   # fold 1/sqrt(Dh) into q
        kh = kp[:, sl].astype(_BF16)
        vh = vp[:, sl].astype(_BF16)

        # q @ k^T via contracting-last-dims dot_general (no materialized k.T).
        s = lax.dot_general(qh, kh, (((1,), (1,)), ((), ())),
                            preferred_element_type=jnp.float32)
        m = jnp.max(s, axis=-1, keepdims=True)
        e = jnp.exp(s - m)
        pn = e * pl.reciprocal(jnp.sum(e, axis=-1, keepdims=True), approx=True)

        oh = jnp.dot(pn.astype(_BF16), vh, preferred_element_type=jnp.float32)
        # Output projection accumulated per head: concat(o_h) @ Wo == sum_h o_h @ Wo[h]
        acc = acc + jnp.dot(oh.astype(_BF16), wo_ref[h].astype(_BF16),
                            preferred_element_type=jnp.float32)
        if need_weights:
            attn_acc = attn_acc + pn

    o_ref[0] = (acc + bo_ref[...]).astype(o_ref.dtype)
    if need_weights:
        p_ref[0] = (attn_acc * (1.0 / nheads)).astype(p_ref.dtype)


def pallas_mha(query, key, value, p, nheads, need_weights=False):
    """torch.nn.MultiheadAttention (batch_first, dropout=0) fused in one kernel.
    `query` may have batch 1 (broadcast across the grid via its BlockSpec)."""
    Bq, Sq, D = query.shape
    B, Sk, _ = key.shape
    Dh = D // nheads
    wo_h = p['wo'].reshape(nheads, Dh, D)

    q_map = (lambda b: (0, 0, 0)) if Bq == 1 else (lambda b: (b, 0, 0))
    bc2 = lambda b: (0, 0)
    bc3 = lambda b: (0, 0, 0)

    in_specs = [
        pl.BlockSpec((1, Sq, D), q_map),
        pl.BlockSpec((1, Sk, D), lambda b: (b, 0, 0)),
        pl.BlockSpec((1, Sk, D), lambda b: (b, 0, 0)),
        pl.BlockSpec((D, D), bc2),
        pl.BlockSpec((D, D), bc2),
        pl.BlockSpec((D, D), bc2),
        pl.BlockSpec((nheads, Dh, D), bc3),
        pl.BlockSpec((1, D), bc2),
        pl.BlockSpec((1, D), bc2),
        pl.BlockSpec((1, D), bc2),
        pl.BlockSpec((1, D), bc2),
    ]
    out_specs = [pl.BlockSpec((1, Sq, D), lambda b: (b, 0, 0))]
    out_shape = [jax.ShapeDtypeStruct((B, Sq, D), jnp.float32)]
    if need_weights:
        out_specs.append(pl.BlockSpec((1, Sq, Sk), lambda b: (b, 0, 0)))
        out_shape.append(jax.ShapeDtypeStruct((B, Sq, Sk), jnp.float32))

    res = pl.pallas_call(
        functools.partial(_mha_kernel, nheads=nheads, need_weights=need_weights),
        grid=(B,),
        in_specs=in_specs,
        out_specs=out_specs,
        out_shape=out_shape,
        compiler_params=pltpu.CompilerParams(dimension_semantics=("parallel",)),
    )(query, key, value, p['wq'], p['wk'], p['wv'], wo_h,
      p['bq'].reshape(1, D), p['bk'].reshape(1, D),
      p['bv'].reshape(1, D), p['bo'].reshape(1, D))
    if need_weights:
        return res[0], res[1]
    return res[0], None


# ------------------------------------------------------------------
# LayerNorm kernels (with optional fused residual add)
# ------------------------------------------------------------------

def _ln_kernel(x_ref, g_ref, b_ref, o_ref, *, eps):
    x = x_ref[...].astype(jnp.float32)
    o_ref[...] = _ln_math(x, g_ref[...], b_ref[...], eps).astype(o_ref.dtype)


def _add_ln_kernel(x_ref, y_ref, g_ref, b_ref, o_ref, *, eps):
    x = x_ref[...].astype(jnp.float32) + y_ref[...].astype(jnp.float32)
    o_ref[...] = _ln_math(x, g_ref[...], b_ref[...], eps).astype(o_ref.dtype)


def _layernorm_call(arrs, gamma, beta, kernel, eps):
    shp = arrs[0].shape
    D = shp[-1]
    flats = [a.reshape(-1, D) for a in arrs]
    rows = flats[0].shape[0]
    tm = _pick_row_tile(rows)
    row_spec = pl.BlockSpec((tm, D), lambda i: (i, 0))
    par_spec = pl.BlockSpec((1, D), lambda i: (0, 0))
    out = pl.pallas_call(
        functools.partial(kernel, eps=eps),
        grid=(rows // tm,),
        in_specs=[row_spec] * len(flats) + [par_spec, par_spec],
        out_specs=row_spec,
        out_shape=jax.ShapeDtypeStruct((rows, D), jnp.float32),
        compiler_params=pltpu.CompilerParams(dimension_semantics=("parallel",)),
    )(*flats, gamma.reshape(1, D), beta.reshape(1, D))
    return out.reshape(shp)


def pallas_layernorm(x, gamma, beta, eps=1e-5):
    return _layernorm_call([x], gamma, beta, _ln_kernel, eps)


def pallas_add_layernorm(x, y, gamma, beta, eps=1e-5):
    return _layernorm_call([x, y], gamma, beta, _add_ln_kernel, eps)


# ------------------------------------------------------------------
# Fused feed-forward (linear -> relu -> linear)
# ------------------------------------------------------------------

def _ffn_kernel(x_ref, w1_ref, b1_ref, w2_ref, b2_ref, o_ref):
    x = x_ref[...].astype(_BF16)
    h = jnp.dot(x, w1_ref[...].astype(_BF16),
                preferred_element_type=jnp.float32) + b1_ref[...]
    h = jnp.maximum(h, 0.0)
    y = jnp.dot(h.astype(_BF16), w2_ref[...].astype(_BF16),
                preferred_element_type=jnp.float32) + b2_ref[...]
    o_ref[...] = y.astype(o_ref.dtype)


def pallas_ffn(x, w1, b1, w2, b2):
    shp = x.shape
    D = shp[-1]
    F = w1.shape[1]
    x2 = x.reshape(-1, D)
    rows = x2.shape[0]
    tm = _pick_row_tile(rows)
    out = pl.pallas_call(
        _ffn_kernel,
        grid=(rows // tm,),
        in_specs=[
            pl.BlockSpec((tm, D), lambda i: (i, 0)),
            pl.BlockSpec((D, F), lambda i: (0, 0)),
            pl.BlockSpec((1, F), lambda i: (0, 0)),
            pl.BlockSpec((F, D), lambda i: (0, 0)),
            pl.BlockSpec((1, D), lambda i: (0, 0)),
        ],
        out_specs=pl.BlockSpec((tm, D), lambda i: (i, 0)),
        out_shape=jax.ShapeDtypeStruct((rows, D), jnp.float32),
        compiler_params=pltpu.CompilerParams(dimension_semantics=("parallel",)),
    )(x2, w1, b1.reshape(1, F), w2, b2.reshape(1, D))
    return out.reshape(shp)


# ------------------------------------------------------------------
# 3x3 conv (im2col matmul) fused with input LayerNorm
# ------------------------------------------------------------------

def _conv_ln_kernel(p_ref, w_ref, b_ref, g_ref, bb_ref, o_ref, *, eps):
    pch = p_ref[...].astype(_BF16)
    y = jnp.dot(pch, w_ref[...].astype(_BF16),
                preferred_element_type=jnp.float32) + b_ref[...]
    o_ref[...] = _ln_math(y, g_ref[...], bb_ref[...], eps).astype(o_ref.dtype)


def pallas_conv3x3_ln(x_nhwc, w, b, gamma, beta, eps=1e-5):
    """Conv2d(k=3, stride=1, pad=1) + flatten(2).permute + LayerNorm, fused.
    im2col patches are built with cheap XLA slicing; one K=9*Cin matmul runs
    in the kernel (instead of 9 K=Cin matmuls with 16x-padded lane tiles)."""
    B, H, W, Cin = x_nhwc.shape
    Cout = w.shape[-1]
    xp = jnp.pad(x_nhwc, ((0, 0), (1, 1), (1, 1), (0, 0)))
    cols = [xp[:, ky:ky + H, kx:kx + W, :] for ky in range(3) for kx in range(3)]
    patches = jnp.concatenate(cols, axis=-1).reshape(B * H * W, 9 * Cin)
    w9 = w.reshape(9 * Cin, Cout)

    rows = B * H * W
    tm = _pick_row_tile(rows)
    out = pl.pallas_call(
        functools.partial(_conv_ln_kernel, eps=eps),
        grid=(rows // tm,),
        in_specs=[
            pl.BlockSpec((tm, 9 * Cin), lambda i: (i, 0)),
            pl.BlockSpec((9 * Cin, Cout), lambda i: (0, 0)),
            pl.BlockSpec((1, Cout), lambda i: (0, 0)),
            pl.BlockSpec((1, Cout), lambda i: (0, 0)),
            pl.BlockSpec((1, Cout), lambda i: (0, 0)),
        ],
        out_specs=pl.BlockSpec((tm, Cout), lambda i: (i, 0)),
        out_shape=jax.ShapeDtypeStruct((rows, Cout), jnp.float32),
        compiler_params=pltpu.CompilerParams(dimension_semantics=("parallel",)),
    )(patches, w9, b.reshape(1, Cout), gamma.reshape(1, Cout), beta.reshape(1, Cout))
    return out.reshape(B, H * W, Cout)


# ------------------------------------------------------------------
# Final fc (over the query axis) + flatten + L2-normalize, fused per batch
# ------------------------------------------------------------------

def _fc_l2norm_kernel(x_ref, w_ref, b_ref, o_ref, *, eps):
    x = x_ref[0].astype(jnp.float32)                       # (D, LQ)
    y = jnp.dot(x, w_ref[...], preferred_element_type=jnp.float32) + b_ref[...]
    ss = jnp.sum(jnp.sum(y * y, axis=-1, keepdims=True), axis=0, keepdims=True)
    nrm = jnp.maximum(jnp.sqrt(ss), eps)                   # F.normalize eps
    o_ref[0] = (y / nrm).astype(o_ref.dtype)


def pallas_fc_l2norm(out_bsd, fc_w, fc_b, eps=1e-12):
    # PyTorch: fc(out.permute(0,2,1)).flatten(1) then F.normalize(dim=-1).
    B, LQ, D = out_bsd.shape
    R = fc_w.shape[1]
    x = jnp.transpose(out_bsd, (0, 2, 1))                  # tiny layout glue
    y = pl.pallas_call(
        functools.partial(_fc_l2norm_kernel, eps=eps),
        grid=(B,),
        in_specs=[
            pl.BlockSpec((1, D, LQ), lambda b: (b, 0, 0)),
            pl.BlockSpec((LQ, R), lambda b: (0, 0)),
            pl.BlockSpec((1, R), lambda b: (0, 0)),
        ],
        out_specs=pl.BlockSpec((1, D, R), lambda b: (b, 0, 0)),
        out_shape=jax.ShapeDtypeStruct((B, D, R), jnp.float32),
        compiler_params=pltpu.CompilerParams(dimension_semantics=("parallel",)),
    )(x, fc_w, fc_b.reshape(1, R))
    return y.reshape(B, D * R)                             # matches flatten(1) order


# ------------------------------------------------------------------
# Model forward (glue in plain JAX, compute in the fused kernels above)
# ------------------------------------------------------------------

def encoder_layer(x, p, nheads):
    """torch.nn.TransformerEncoderLayer defaults: post-LN, relu, dropout=0."""
    sa, _ = pallas_mha(x, x, x, p['self_attn'], nheads, need_weights=False)
    x = pallas_add_layernorm(x, sa, p['norm1_g'], p['norm1_b'])
    h = pallas_ffn(x, p['lin1_w'], p['lin1_b'], p['lin2_w'], p['lin2_b'])
    x = pallas_add_layernorm(x, h, p['norm2_g'], p['norm2_b'])
    return x


def boq_block(x, p, nheads):
    x = encoder_layer(x, p['encoder'], nheads)
    # Learned queries are batch-independent through self-attn + LN (dropout=0),
    # so compute once at batch 1 and broadcast via the cross-attn BlockSpec.
    q = p['queries']                                                     # (1,Q,D)
    sa, _ = pallas_mha(q, q, q, p['self_attn'], nheads, need_weights=False)
    q = pallas_add_layernorm(q, sa, p['norm_q_g'], p['norm_q_b'])        # (1,Q,D)
    out, attn = pallas_mha(q, x, x, p['cross_attn'], nheads, need_weights=True)
    out = pallas_layernorm(out, p['norm_out_g'], p['norm_out_b'])
    return x, out, attn


def boq_forward(params, x_nchw, *, nheads):
    # NCHW (PyTorch) -> NHWC for the conv stage
    x = jnp.transpose(x_nchw, (0, 2, 3, 1))
    x = pallas_conv3x3_ln(x, params['conv_w'], params['conv_b'],
                          params['norm_in_g'], params['norm_in_b'])      # (B,HW,D)

    outs, attns = [], []
    for bp in params['boqs']:
        x, out, attn = boq_block(x, bp, nheads)
        outs.append(out)
        attns.append(attn)

    out = jnp.concatenate(outs, axis=1)                                  # (B,L*Q,D)
    y = pallas_fc_l2norm(out, params['fc_w'], params['fc_b'])
    return y, attns


# ------------------------------------------------------------------
# Deterministic parameter init (synthetic; shapes match the module)
# ------------------------------------------------------------------

def _w(key, fan_in, fan_out, scale=0.02):
    return jax.random.normal(key, (fan_in, fan_out), jnp.float32) * scale


def init_mha_params(key, D):
    ks = jax.random.split(key, 4)
    z = jnp.zeros((D,), jnp.float32)
    return dict(wq=_w(ks[0], D, D), bq=z, wk=_w(ks[1], D, D), bk=z,
                wv=_w(ks[2], D, D), bv=z, wo=_w(ks[3], D, D), bo=z)


def init_encoder_params(key, D):
    k1, k2, k3 = jax.random.split(key, 3)
    return dict(
        self_attn=init_mha_params(k1, D),
        lin1_w=_w(k2, D, 4 * D), lin1_b=jnp.zeros((4 * D,), jnp.float32),
        lin2_w=_w(k3, 4 * D, D), lin2_b=jnp.zeros((D,), jnp.float32),
        norm1_g=jnp.ones((D,), jnp.float32), norm1_b=jnp.zeros((D,), jnp.float32),
        norm2_g=jnp.ones((D,), jnp.float32), norm2_b=jnp.zeros((D,), jnp.float32),
    )


def init_block_params(key, D, num_queries):
    k1, k2, k3, k4 = jax.random.split(key, 4)
    return dict(
        encoder=init_encoder_params(k1, D),
        queries=jax.random.normal(k2, (1, num_queries, D), jnp.float32),
        self_attn=init_mha_params(k3, D),
        norm_q_g=jnp.ones((D,), jnp.float32), norm_q_b=jnp.zeros((D,), jnp.float32),
        cross_attn=init_mha_params(k4, D),
        norm_out_g=jnp.ones((D,), jnp.float32), norm_out_b=jnp.zeros((D,), jnp.float32),
    )


def init_boq_params(key, in_ch, proj, num_queries, num_layers, row_dim):
    k1, k2, k3 = jax.random.split(key, 3)
    layer_keys = jax.random.split(k3, num_layers)
    return dict(
        conv_w=jax.random.normal(k1, (3, 3, in_ch, proj), jnp.float32) * 0.05,
        conv_b=jnp.zeros((proj,), jnp.float32),
        norm_in_g=jnp.ones((proj,), jnp.float32),
        norm_in_b=jnp.zeros((proj,), jnp.float32),
        boqs=[init_block_params(layer_keys[i], proj, num_queries)
              for i in range(num_layers)],
        fc_w=_w(k2, num_layers * num_queries, row_dim),
        fc_b=jnp.zeros((row_dim,), jnp.float32),
    )


# ------------------------------------------------------------------

if __name__ == "__main__":
    # small shapes consistent with the module: nheads = proj_channels // 64
    B = 2
    IN_CH = 8
    H = W = 8            # sequence length = H*W = 64
    PROJ = 128           # d_model
    NUM_QUERIES = 8
    NUM_LAYERS = 2
    ROW_DIM = 8
    NHEADS = PROJ // 64  # = 2, head_dim = 64

    key = jax.random.PRNGKey(0)
    kx, kp = jax.random.split(key)
    x = jax.random.normal(kx, (B, IN_CH, H, W), jnp.float32)  # NCHW like PyTorch
    params = init_boq_params(kp, IN_CH, PROJ, NUM_QUERIES, NUM_LAYERS, ROW_DIM)

    fwd = jax.jit(functools.partial(boq_forward, nheads=NHEADS))
    out, attns = fwd(params, x)
    out = jax.block_until_ready(out)
    attns = [jax.block_until_ready(a) for a in attns]

    assert out.shape == (B, PROJ * ROW_DIM)
    assert all(a.shape == (B, NUM_QUERIES, H * W) for a in attns)
    print("KERNEL_OK")
</pallas_src>

<mosaic_0001>
module attributes {stable_mosaic.version = 11 : i64} {
  func.func @_conv_ln_kernel(%arg0: i32, %arg1: memref<128x72xf32, #tpu.memory_space<vmem>>, %arg2: memref<72x128xf32, #tpu.memory_space<vmem>>, %arg3: memref<1x128xf32, #tpu.memory_space<vmem>>, %arg4: memref<1x128xf32, #tpu.memory_space<vmem>>, %arg5: memref<1x128xf32, #tpu.memory_space<vmem>>, %arg6: memref<128x128xf32, #tpu.memory_space<vmem>>) attributes {dimension_semantics = [#tpu.dimension_semantics<parallel>], iteration_bounds = array<i64: 1>, scalar_prefetch = 0 : i64, scratch_operands = 0 : i64, tpu.core_type = #tpu.core_type<tc>, window_params = [{transform_indices = @transform_0, window_bounds = array<i64: 128, 72>}, {pipeline_mode = #tpu.pipeline_mode<synchronous>, transform_indices = @transform_1, window_bounds = array<i64: 72, 128>}, {pipeline_mode = #tpu.pipeline_mode<synchronous>, transform_indices = @transform_2, window_bounds = array<i64: 1, 128>}, {pipeline_mode = #tpu.pipeline_mode<synchronous>, transform_indices = @transform_3, window_bounds = array<i64: 1, 128>}, {pipeline_mode = #tpu.pipeline_mode<synchronous>, transform_indices = @transform_4, window_bounds = array<i64: 1, 128>}, {transform_indices = @transform_5, window_bounds = array<i64: 128, 128>}]} {
    %c0 = arith.constant 0 : index
    %c0_0 = arith.constant 0 : index
    %0 = vector.load %arg1[%c0, %c0_0] : memref<128x72xf32, #tpu.memory_space<vmem>>, vector<128x72xf32>
    %1 = arith.truncf %0 : vector<128x72xf32> to vector<128x72xbf16>
    %c0_1 = arith.constant 0 : index
    %c0_2 = arith.constant 0 : index
    %2 = vector.load %arg2[%c0_1, %c0_2] : memref<72x128xf32, #tpu.memory_space<vmem>>, vector<72x128xf32>
    %3 = arith.truncf %2 : vector<72x128xf32> to vector<72x128xbf16>
    %cst = arith.constant dense<0.000000e+00> : vector<128x128xf32>
    %4 = tpu.matmul %1, %3, %cst {dimension_numbers = #tpu.dot_dimension_numbers<[1], [0], [0], [1], [0, 0, 1, 1], [], []>} : vector<128x72xbf16>, vector<72x128xbf16>, vector<128x128xf32> -> vector<128x128xf32>
    %c0_3 = arith.constant 0 : index
    %c0_4 = arith.constant 0 : index
    %5 = vector.load %arg3[%c0_3, %c0_4] : memref<1x128xf32, #tpu.memory_space<vmem>>, vector<1x128xf32>
    %6 = vector.broadcast %5 : vector<1x128xf32> to vector<128x128xf32>
    %7 = arith.addf %4, %6 : vector<128x128xf32>
    %c0_5 = arith.constant 0 : index
    %c0_6 = arith.constant 0 : index
    %8 = vector.load %arg4[%c0_5, %c0_6] : memref<1x128xf32, #tpu.memory_space<vmem>>, vector<1x128xf32>
    %c0_7 = arith.constant 0 : index
    %c0_8 = arith.constant 0 : index
    %9 = vector.load %arg5[%c0_7, %c0_8] : memref<1x128xf32, #tpu.memory_space<vmem>>, vector<1x128xf32>
    %cst_9 = arith.constant dense<0.000000e+00> : vector<128xf32>
    %10 = vector.multi_reduction <add>, %7, %cst_9 [1] : vector<128x128xf32> to vector<128xf32>
    %11 = vector.shape_cast %10 : vector<128xf32> to vector<128x1xf32>
    %cst_10 = arith.constant 1.280000e+02 : f32
    %12 = vector.broadcast %cst_10 : f32 to vector<128x1xf32>
    %13 = arith.divf %11, %12 : vector<128x1xf32>
    %14 = vector.broadcast %13 : vector<128x1xf32> to vector<128x128xf32>
    %15 = arith.subf %7, %14 : vector<128x128xf32>
    %16 = arith.mulf %15, %15 : vector<128x128xf32>
    %cst_11 = arith.constant dense<0.000000e+00> : vector<128xf32>
    %17 = vector.multi_reduction <add>, %16, %cst_11 [1] : vector<128x128xf32> to vector<128xf32>
    %18 = vector.shape_cast %17 : vector<128xf32> to vector<128x1xf32>
    %cst_12 = arith.constant 1.280000e+02 : f32
    %19 = vector.broadcast %cst_12 : f32 to vector<128x1xf32>
    %20 = arith.divf %18, %19 : vector<128x1xf32>
    %21 = vector.broadcast %13 : vector<128x1xf32> to vector<128x128xf32>
    %22 = arith.subf %7, %21 : vector<128x128xf32>
    %cst_13 = arith.constant 9.99999974E-6 : f32
    %23 = vector.broadcast %cst_13 : f32 to vector<128x1xf32>
    %24 = arith.addf %20, %23 : vector<128x1xf32>
    %25 = math.rsqrt %24 : vector<128x1xf32>
    %26 = vector.broadcast %25 : vector<128x1xf32> to vector<128x128xf32>
    %27 = arith.mulf %22, %26 : vector<128x128xf32>
    %28 = vector.broadcast %8 : vector<1x128xf32> to vector<128x128xf32>
    %29 = arith.mulf %27, %28 : vector<128x128xf32>
    %30 = vector.broadcast %9 : vector<1x128xf32> to vector<128x128xf32>
    %31 = arith.addf %29, %30 : vector<128x128xf32>
    %c0_14 = arith.constant 0 : index
    %c0_15 = arith.constant 0 : index
    %32 = vector.load %arg6[%c0_14, %c0_15] : memref<128x128xf32, #tpu.memory_space<vmem>>, vector<128x128xf32>
    tpu.vector_store %arg6[%c0_14, %c0_15], %31 {strides = array<i32>} : memref<128x128xf32, #tpu.memory_space<vmem>>, vector<128x128xf32>,
    return
  }
  func.func @transform_0(%arg0: i32) -> (i32, i32) {
    %c0_i32 = arith.constant 0 : i32
    %c0_i32_0 = arith.constant 0 : i32
    return %arg0, %c0_i32 : i32, i32
  }
  func.func @transform_1(%arg0: i32) -> (i32, i32) {
    %c0_i32 = arith.constant 0 : i32
    %c0_i32_0 = arith.constant 0 : i32
    %c0_i32_1 = arith.constant 0 : i32
    return %c0_i32, %c0_i32_0 : i32, i32
  }
  func.func @transform_2(%arg0: i32) -> (i32, i32) {
    %c0_i32 = arith.constant 0 : i32
    %c0_i32_0 = arith.constant 0 : i32
    %c0_i32_1 = arith.constant 0 : i32
    return %c0_i32, %c0_i32_0 : i32, i32
  }
  func.func @transform_3(%arg0: i32) -> (i32, i32) {
    %c0_i32 = arith.constant 0 : i32
    %c0_i32_0 = arith.constant 0 : i32
    %c0_i32_1 = arith.constant 0 : i32
    return %c0_i32, %c0_i32_0 : i32, i32
  }
  func.func @transform_4(%arg0: i32) -> (i32, i32) {
    %c0_i32 = arith.constant 0 : i32
    %c0_i32_0 = arith.constant 0 : i32
    %c0_i32_1 = arith.constant 0 : i32
    return %c0_i32, %c0_i32_0 : i32, i32
  }
  func.func @transform_5(%arg0: i32) -> (i32, i32) {
    %c0_i32 = arith.constant 0 : i32
    %c0_i32_0 = arith.constant 0 : i32
    return %arg0, %c0_i32 : i32, i32
  }
}

module attributes {stable_mosaic.version = 11 : i64} {
  func.func @_add_ln_kernel(%arg0: i32, %arg1: memref<128x128xf32, #tpu.memory_space<vmem>>, %arg2: memref<128x128xf32, #tpu.memory_space<vmem>>, %arg3: memref<1x128xf32, #tpu.memory_space<vmem>>, %arg4: memref<1x128xf32, #tpu.memory_space<vmem>>, %arg5: memref<128x128xf32, #tpu.memory_space<vmem>>) attributes {dimension_semantics = [#tpu.dimension_semantics<parallel>], iteration_bounds = array<i64: 1>, scalar_prefetch = 0 : i64, scratch_operands = 0 : i64, tpu.core_type = #tpu.core_type<tc>, window_params = [{transform_indices = @transform_0, window_bounds = array<i64: 128, 128>}, {transform_indices = @transform_1, window_bounds = array<i64: 128, 128>}, {pipeline_mode = #tpu.pipeline_mode<synchronous>, transform_indices = @transform_2, window_bounds = array<i64: 1, 128>}, {pipeline_mode = #tpu.pipeline_mode<synchronous>, transform_indices = @transform_3, window_bounds = array<i64: 1, 128>}, {transform_indices = @transform_4, window_bounds = array<i64: 128, 128>}]} {
    %c0 = arith.constant 0 : index
    %c0_0 = arith.constant 0 : index
    %0 = vector.load %arg1[%c0, %c0_0] : memref<128x128xf32, #tpu.memory_space<vmem>>, vector<128x128xf32>
    %c0_1 = arith.constant 0 : index
    %c0_2 = arith.constant 0 : index
    %1 = vector.load %arg2[%c0_1, %c0_2] : memref<128x128xf32, #tpu.memory_space<vmem>>, vector<128x128xf32>
    %2 = arith.addf %0, %1 : vector<128x128xf32>
    %c0_3 = arith.constant 0 : index
    %c0_4 = arith.constant 0 : index
    %3 = vector.load %arg3[%c0_3, %c0_4] : memref<1x128xf32, #tpu.memory_space<vmem>>, vector<1x128xf32>
    %c0_5 = arith.constant 0 : index
    %c0_6 = arith.constant 0 : index
    %4 = vector.load %arg4[%c0_5, %c0_6] : memref<1x128xf32, #tpu.memory_space<vmem>>, vector<1x128xf32>
    %cst = arith.constant dense<0.000000e+00> : vector<128xf32>
    %5 = vector.multi_reduction <add>, %2, %cst [1] : vector<128x128xf32> to vector<128xf32>
    %6 = vector.shape_cast %5 : vector<128xf32> to vector<128x1xf32>
    %cst_7 = arith.constant 1.280000e+02 : f32
    %7 = vector.broadcast %cst_7 : f32 to vector<128x1xf32>
    %8 = arith.divf %6, %7 : vector<128x1xf32>
    %9 = vector.broadcast %8 : vector<128x1xf32> to vector<128x128xf32>
    %10 = arith.subf %2, %9 : vector<128x128xf32>
    %11 = arith.mulf %10, %10 : vector<128x128xf32>
    %cst_8 = arith.constant dense<0.000000e+00> : vector<128xf32>
    %12 = vector.multi_reduction <add>, %11, %cst_8 [1] : vector<128x128xf32> to vector<128xf32>
    %13 = vector.shape_cast %12 : vector<128xf32> to vector<128x1xf32>
    %cst_9 = arith.constant 1.280000e+02 : f32
    %14 = vector.broadcast %cst_9 : f32 to vector<128x1xf32>
    %15 = arith.divf %13, %14 : vector<128x1xf32>
    %16 = vector.broadcast %8 : vector<128x1xf32> to vector<128x128xf32>
    %17 = arith.subf %2, %16 : vector<128x128xf32>
    %cst_10 = arith.constant 9.99999974E-6 : f32
    %18 = vector.broadcast %cst_10 : f32 to vector<128x1xf32>
    %19 = arith.addf %15, %18 : vector<128x1xf32>
    %20 = math.rsqrt %19 : vector<128x1xf32>
    %21 = vector.broadcast %20 : vector<128x1xf32> to vector<128x128xf32>
    %22 = arith.mulf %17, %21 : vector<128x128xf32>
    %23 = vector.broadcast %3 : vector<1x128xf32> to vector<128x128xf32>
    %24 = arith.mulf %22, %23 : vector<128x128xf32>
    %25 = vector.broadcast %4 : vector<1x128xf32> to vector<128x128xf32>
    %26 = arith.addf %24, %25 : vector<128x128xf32>
    %c0_11 = arith.constant 0 : index
    %c0_12 = arith.constant 0 : index
    %27 = vector.load %arg5[%c0_11, %c0_12] : memref<128x128xf32, #tpu.memory_space<vmem>>, vector<128x128xf32>
    tpu.vector_store %arg5[%c0_11, %c0_12], %26 {strides = array<i32>} : memref<128x128xf32, #tpu.memory_space<vmem>>, vector<128x128xf32>,
    return
  }
  func.func @transform_0(%arg0: i32) -> (i32, i32) {
    %c0_i32 = arith.constant 0 : i32
    %c0_i32_0 = arith.constant 0 : i32
    return %arg0, %c0_i32 : i32, i32
  }
  func.func @transform_1(%arg0: i32) -> (i32, i32) {
    %c0_i32 = arith.constant 0 : i32
    %c0_i32_0 = arith.constant 0 : i32
    return %arg0, %c0_i32 : i32, i32
  }
  func.func @transform_2(%arg0: i32) -> (i32, i32) {
    %c0_i32 = arith.constant 0 : i32
    %c0_i32_0 = arith.constant 0 : i32
    %c0_i32_1 = arith.constant 0 : i32
    return %c0_i32, %c0_i32_0 : i32, i32
  }
  func.func @transform_3(%arg0: i32) -> (i32, i32) {
    %c0_i32 = arith.constant 0 : i32
    %c0_i32_0 = arith.constant 0 : i32
    %c0_i32_1 = arith.constant 0 : i32
    return %c0_i32, %c0_i32_0 : i32, i32
  }
  func.func @transform_4(%arg0: i32) -> (i32, i32) {
    %c0_i32 = arith.constant 0 : i32
    %c0_i32_0 = arith.constant 0 : i32
    return %arg0, %c0_i32 : i32, i32
  }
}

module attributes {stable_mosaic.version = 11 : i64} {
  func.func @_mha_kernel(%arg0: i32, %arg1: memref<1x64x128xf32, #tpu.memory_space<vmem>>, %arg2: memref<1x64x128xf32, #tpu.memory_space<vmem>>, %arg3: memref<1x64x128xf32, #tpu.memory_space<vmem>>, %arg4: memref<128x128xf32, #tpu.memory_space<vmem>>, %arg5: memref<128x128xf32, #tpu.memory_space<vmem>>, %arg6: memref<128x128xf32, #tpu.memory_space<vmem>>, %arg7: memref<2x64x128xf32, #tpu.memory_space<vmem>>, %arg8: memref<1x128xf32, #tpu.memory_space<vmem>>, %arg9: memref<1x128xf32, #tpu.memory_space<vmem>>, %arg10: memref<1x128xf32, #tpu.memory_space<vmem>>, %arg11: memref<1x128xf32, #tpu.memory_space<vmem>>, %arg12: memref<1x64x128xf32, #tpu.memory_space<vmem>>) attributes {dimension_semantics = [#tpu.dimension_semantics<parallel>], iteration_bounds = array<i64: 2>, scalar_prefetch = 0 : i64, scratch_operands = 0 : i64, tpu.core_type = #tpu.core_type<tc>, window_params = [{transform_indices = @transform_0, window_bounds = array<i64: 1, 64, 128>}, {transform_indices = @transform_1, window_bounds = array<i64: 1, 64, 128>}, {transform_indices = @transform_2, window_bounds = array<i64: 1, 64, 128>}, {pipeline_mode = #tpu.pipeline_mode<synchronous>, transform_indices = @transform_3, window_bounds = array<i64: 128, 128>}, {pipeline_mode = #tpu.pipeline_mode<synchronous>, transform_indices = @transform_4, window_bounds = array<i64: 128, 128>}, {pipeline_mode = #tpu.pipeline_mode<synchronous>, transform_indices = @transform_5, window_bounds = array<i64: 128, 128>}, {pipeline_mode = #tpu.pipeline_mode<synchronous>, transform_indices = @transform_6, window_bounds = array<i64: 2, 64, 128>}, {pipeline_mode = #tpu.pipeline_mode<synchronous>, transform_indices = @transform_7, window_bounds = array<i64: 1, 128>}, {pipeline_mode = #tpu.pipeline_mode<synchronous>, transform_indices = @transform_8, window_bounds = array<i64: 1, 128>}, {pipeline_mode = #tpu.pipeline_mode<synchronous>, transform_indices = @transform_9, window_bounds = array<i64: 1, 128>}, {pipeline_mode = #tpu.pipeline_mode<synchronous>, transform_indices = @transform_10, window_bounds = array<i64: 1, 128>}, {transform_indices = @transform_11, window_bounds = array<i64: 1, 64, 128>}]} {
    %c0 = arith.constant 0 : index
    %c0_0 = arith.constant 0 : index
    %c0_1 = arith.constant 0 : index
    %0 = vector.load %arg1[%c0, %c0_0, %c0_1] : memref<1x64x128xf32, #tpu.memory_space<vmem>>, vector<1x64x128xf32>
    %1 = vector.shape_cast %0 : vector<1x64x128xf32> to vector<64x128xf32>
    %2 = arith.truncf %1 : vector<64x128xf32> to vector<64x128xbf16>
    %c0_2 = arith.constant 0 : index
    %c0_3 = arith.constant 0 : index
    %c0_4 = arith.constant 0 : index
    %3 = vector.load %arg2[%c0_2, %c0_3, %c0_4] : memref<1x64x128xf32, #tpu.memory_space<vmem>>, vector<1x64x128xf32>
    %4 = vector.shape_cast %3 : vector<1x64x128xf32> to vector<64x128xf32>
    %5 = arith.truncf %4 : vector<64x128xf32> to vector<64x128xbf16>
    %c0_5 = arith.constant 0 : index
    %c0_6 = arith.constant 0 : index
    %c0_7 = arith.constant 0 : index
    %6 = vector.load %arg3[%c0_5, %c0_6, %c0_7] : memref<1x64x128xf32, #tpu.memory_space<vmem>>, vector<1x64x128xf32>
    %7 = vector.shape_cast %6 : vector<1x64x128xf32> to vector<64x128xf32>
    %8 = arith.truncf %7 : vector<64x128xf32> to vector<64x128xbf16>
    %c0_8 = arith.constant 0 : index
    %c0_9 = arith.constant 0 : index
    %9 = vector.load %arg4[%c0_8, %c0_9] : memref<128x128xf32, #tpu.memory_space<vmem>>, vector<128x128xf32>
    %10 = arith.truncf %9 : vector<128x128xf32> to vector<128x128xbf16>
    %cst = arith.constant dense<0.000000e+00> : vector<64x128xf32>
    %11 = tpu.matmul %2, %10, %cst {dimension_numbers = #tpu.dot_dimension_numbers<[1], [0], [0], [1], [0, 0, 1, 1], [], []>} : vector<64x128xbf16>, vector<128x128xbf16>, vector<64x128xf32> -> vector<64x128xf32>
    %c0_10 = arith.constant 0 : index
    %c0_11 = arith.constant 0 : index
    %12 = vector.load %arg8[%c0_10, %c0_11] : memref<1x128xf32, #tpu.memory_space<vmem>>, vector<1x128xf32>
    %13 = vector.broadcast %12 : vector<1x128xf32> to vector<64x128xf32>
    %14 = arith.addf %11, %13 : vector<64x128xf32>
    %c0_12 = arith.constant 0 : index
    %c0_13 = arith.constant 0 : index
    %15 = vector.load %arg5[%c0_12, %c0_13] : memref<128x128xf32, #tpu.memory_space<vmem>>, vector<128x128xf32>
    %16 = arith.truncf %15 : vector<128x128xf32> to vector<128x128xbf16>
    %cst_14 = arith.constant dense<0.000000e+00> : vector<64x128xf32>
    %17 = tpu.matmul %5, %16, %cst_14 {dimension_numbers = #tpu.dot_dimension_numbers<[1], [0], [0], [1], [0, 0, 1, 1], [], []>} : vector<64x128xbf16>, vector<128x128xbf16>, vector<64x128xf32> -> vector<64x128xf32>
    %c0_15 = arith.constant 0 : index
    %c0_16 = arith.constant 0 : index
    %18 = vector.load %arg9[%c0_15, %c0_16] : memref<1x128xf32, #tpu.memory_space<vmem>>, vector<1x128xf32>
    %19 = vector.broadcast %18 : vector<1x128xf32> to vector<64x128xf32>
    %20 = arith.addf %17, %19 : vector<64x128xf32>
    %c0_17 = arith.constant 0 : index
    %c0_18 = arith.constant 0 : index
    %21 = vector.load %arg6[%c0_17, %c0_18] : memref<128x128xf32, #tpu.memory_space<vmem>>, vector<128x128xf32>
    %22 = arith.truncf %21 : vector<128x128xf32> to vector<128x128xbf16>
    %cst_19 = arith.constant dense<0.000000e+00> : vector<64x128xf32>
    %23 = tpu.matmul %8, %22, %cst_19 {dimension_numbers = #tpu.dot_dimension_numbers<[1], [0], [0], [1], [0, 0, 1, 1], [], []>} : vector<64x128xbf16>, vector<128x128xbf16>, vector<64x128xf32> -> vector<64x128xf32>
    %c0_20 = arith.constant 0 : index
    %c0_21 = arith.constant 0 : index
    %24 = vector.load %arg10[%c0_20, %c0_21] : memref<1x128xf32, #tpu.memory_space<vmem>>, vector<1x128xf32>
    %25 = vector.broadcast %24 : vector<1x128xf32> to vector<64x128xf32>
    %26 = arith.addf %23, %25 : vector<64x128xf32>
    %cst_22 = arith.constant 0.000000e+00 : f32
    %27 = vector.broadcast %cst_22 : f32 to vector<64x128xf32>
    %28 = vector.extract_strided_slice %14 {offsets = [0, 0], sizes = [64, 64], strides = [1, 1]} : vector<64x128xf32> to vector<64x64xf32>
    %cst_23 = arith.constant 1.250000e-01 : f32
    %29 = vector.broadcast %cst_23 : f32 to vector<64x64xf32>
    %30 = arith.mulf %28, %29 : vector<64x64xf32>
    %31 = arith.truncf %30 : vector<64x64xf32> to vector<64x64xbf16>
    %32 = vector.extract_strided_slice %20 {offsets = [0, 0], sizes = [64, 64], strides = [1, 1]} : vector<64x128xf32> to vector<64x64xf32>
    %33 = arith.truncf %32 : vector<64x64xf32> to vector<64x64xbf16>
    %34 = vector.extract_strided_slice %26 {offsets = [0, 0], sizes = [64, 64], strides = [1, 1]} : vector<64x128xf32> to vector<64x64xf32>
    %35 = arith.truncf %34 : vector<64x64xf32> to vector<64x64xbf16>
    %cst_24 = arith.constant dense<0.000000e+00> : vector<64x64xf32>
    %36 = tpu.matmul %31, %33, %cst_24 {dimension_numbers = #tpu.dot_dimension_numbers<[1], [1], [0], [0], [0, 0, 1, 0], [], []>} : vector<64x64xbf16>, vector<64x64xbf16>, vector<64x64xf32> -> vector<64x64xf32>
    %cst_25 = arith.constant dense<0xFF800000> : vector<64xf32>
    %37 = vector.multi_reduction <maximumf>, %36, %cst_25 [1] : vector<64x64xf32> to vector<64xf32>
    %38 = vector.shape_cast %37 : vector<64xf32> to vector<64x1xf32>
    %39 = vector.broadcast %38 : vector<64x1xf32> to vector<64x64xf32>
    %40 = arith.subf %36, %39 : vector<64x64xf32>
    %41 = math.exp %40 : vector<64x64xf32>
    %cst_26 = arith.constant dense<0.000000e+00> : vector<64xf32>
    %42 = vector.multi_reduction <add>, %41, %cst_26 [1] : vector<64x64xf32> to vector<64xf32>
    %43 = vector.shape_cast %42 : vector<64xf32> to vector<64x1xf32>
    %44 = tpu.reciprocal %43 {approx = true} : vector<64x1xf32> -> vector<64x1xf32>
    %45 = vector.broadcast %44 : vector<64x1xf32> to vector<64x64xf32>
    %46 = arith.mulf %41, %45 : vector<64x64xf32>
    %47 = arith.truncf %46 : vector<64x64xf32> to vector<64x64xbf16>
    %cst_27 = arith.constant dense<0.000000e+00> : vector<64x64xf32>
    %48 = tpu.matmul %47, %35, %cst_27 {dimension_numbers = #tpu.dot_dimension_numbers<[1], [0], [0], [1], [0, 0, 1, 1], [], []>} : vector<64x64xbf16>, vector<64x64xbf16>, vector<64x64xf32> -> vector<64x64xf32>
    %49 = arith.truncf %48 : vector<64x64xf32> to vector<64x64xbf16>
    %c0_28 = arith.constant 0 : index
    %c0_29 = arith.constant 0 : index
    %c0_30 = arith.constant 0 : index
    %50 = vector.load %arg7[%c0_28, %c0_29, %c0_30] : memref<2x64x128xf32, #tpu.memory_space<vmem>>, vector<1x64x128xf32>
    %51 = vector.shape_cast %50 : vector<1x64x128xf32> to vector<64x128xf32>
    %52 = arith.truncf %51 : vector<64x128xf32> to vector<64x128xbf16>
    %cst_31 = arith.constant dense<0.000000e+00> : vector<64x128xf32>
    %53 = tpu.matmul %49, %52, %cst_31 {dimension_numbers = #tpu.dot_dimension_numbers<[1], [0], [0], [1], [0, 0, 1, 1], [], []>} : vector<64x64xbf16>, vector<64x128xbf16>, vector<64x128xf32> -> vector<64x128xf32>
    %54 = arith.addf %27, %53 : vector<64x128xf32>
    %55 = vector.extract_strided_slice %14 {offsets = [0, 64], sizes = [64, 64], strides = [1, 1]} : vector<64x128xf32> to vector<64x64xf32>
    %cst_32 = arith.constant 1.250000e-01 : f32
    %56 = vector.broadcast %cst_32 : f32 to vector<64x64xf32>
    %57 = arith.mulf %55, %56 : vector<64x64xf32>
    %58 = arith.truncf %57 : vector<64x64xf32> to vector<64x64xbf16>
    %59 = vector.extract_strided_slice %20 {offsets = [0, 64], sizes = [64, 64], strides = [1, 1]} : vector<64x128xf32> to vector<64x64xf32>
    %60 = arith.truncf %59 : vector<64x64xf32> to vector<64x64xbf16>
    %61 = vector.extract_strided_slice %26 {offsets = [0, 64], sizes = [64, 64], strides = [1, 1]} : vector<64x128xf32> to vector<64x64xf32>
    %62 = arith.truncf %61 : vector<64x64xf32> to vector<64x64xbf16>
    %cst_33 = arith.constant dense<0.000000e+00> : vector<64x64xf32>
    %63 = tpu.matmul %58, %60, %cst_33 {dimension_numbers = #tpu.dot_dimension_numbers<[1], [1], [0], [0], [0, 0, 1, 0], [], []>} : vector<64x64xbf16>, vector<64x64xbf16>, vector<64x64xf32> -> vector<64x64xf32>
    %cst_34 = arith.constant dense<0xFF800000> : vector<64xf32>
    %64 = vector.multi_reduction <maximumf>, %63, %cst_34 [1] : vector<64x64xf32> to vector<64xf32>
    %65 = vector.shape_cast %64 : vector<64xf32> to vector<64x1xf32>
    %66 = vector.broadcast %65 : vector<64x1xf32> to vector<64x64xf32>
    %67 = arith.subf %63, %66 : vector<64x64xf32>
    %68 = math.exp %67 : vector<64x64xf32>
    %cst_35 = arith.constant dense<0.000000e+00> : vector<64xf32>
    %69 = vector.multi_reduction <add>, %68, %cst_35 [1] : vector<64x64xf32> to vector<64xf32>
    %70 = vector.shape_cast %69 : vector<64xf32> to vector<64x1xf32>
    %71 = tpu.reciprocal %70 {approx = true} : vector<64x1xf32> -> vector<64x1xf32>
    %72 = vector.broadcast %71 : vector<64x1xf32> to vector<64x64xf32>
    %73 = arith.mulf %68, %72 : vector<64x64xf32>
    %74 = arith.truncf %73 : vector<64x64xf32> to vector<64x64xbf16>
    %cst_36 = arith.constant dense<0.000000e+00> : vector<64x64xf32>
    %75 = tpu.matmul %74, %62, %cst_36 {dimension_numbers = #tpu.dot_dimension_numbers<[1], [0], [0], [1], [0, 0, 1, 1], [], []>} : vector<64x64xbf16>, vector<64x64xbf16>, vector<64x64xf32> -> vector<64x64xf32>
    %76 = arith.truncf %75 : vector<64x64xf32> to vector<64x64xbf16>
    %c1 = arith.constant 1 : index
    %c0_37 = arith.constant 0 : index
    %c0_38 = arith.constant 0 : index
    %77 = vector.load %arg7[%c1, %c0_37, %c0_38] : memref<2x64x128xf32, #tpu.memory_space<vmem>>, vector<1x64x128xf32>
    %78 = vector.shape_cast %77 : vector<1x64x128xf32> to vector<64x128xf32>
    %79 = arith.truncf %78 : vector<64x128xf32> to vector<64x128xbf16>
    %cst_39 = arith.constant dense<0.000000e+00> : vector<64x128xf32>
    %80 = tpu.matmul %76, %79, %cst_39 {dimension_numbers = #tpu.dot_dimension_numbers<[1], [0], [0], [1], [0, 0, 1, 1], [], []>} : vector<64x64xbf16>, vector<64x128xbf16>, vector<64x128xf32> -> vector<64x128xf32>
    %81 = arith.addf %54, %80 : vector<64x128xf32>
    %c0_40 = arith.constant 0 : index
    %c0_41 = arith.constant 0 : index
    %82 = vector.load %arg11[%c0_40, %c0_41] : memref<1x128xf32, #tpu.memory_space<vmem>>, vector<1x128xf32>
    %83 = vector.broadcast %82 : vector<1x128xf32> to vector<64x128xf32>
    %84 = arith.addf %81, %83 : vector<64x128xf32>
    %c0_42 = arith.constant 0 : index
    %c0_43 = arith.constant 0 : index
    %c0_44 = arith.constant 0 : index
    %85 = vector.load %arg12[%c0_42, %c0_43, %c0_44] : memref<1x64x128xf32, #tpu.memory_space<vmem>>, vector<1x64x128xf32>
    %86 = vector.shape_cast %85 : vector<1x64x128xf32> to vector<64x128xf32>
    %87 = vector.shape_cast %84 : vector<64x128xf32> to vector<1x64x128xf32>
    tpu.vector_store %arg12[%c0_42, %c0_43, %c0_44], %87 {strides = array<i32>} : memref<1x64x128xf32, #tpu.memory_space<vmem>>, vector<1x64x128xf32>,
    return
  }
  func.func @transform_0(%arg0: i32) -> (i32, i32, i32) {
    %c0_i32 = arith.constant 0 : i32
    %c0_i32_0 = arith.constant 0 : i32
    %c0_i32_1 = arith.constant 0 : i32
    return %arg0, %c0_i32, %c0_i32_0 : i32, i32, i32
  }
  func.func @transform_1(%arg0: i32) -> (i32, i32, i32) {
    %c0_i32 = arith.constant 0 : i32
    %c0_i32_0 = arith.constant 0 : i32
    %c0_i32_1 = arith.constant 0 : i32
    return %arg0, %c0_i32, %c0_i32_0 : i32, i32, i32
  }
  func.func @transform_2(%arg0: i32) -> (i32, i32, i32) {
    %c0_i32 = arith.constant 0 : i32
    %c0_i32_0 = arith.constant 0 : i32
    %c0_i32_1 = arith.constant 0 : i32
    return %arg0, %c0_i32, %c0_i32_0 : i32, i32, i32
  }
  func.func @transform_3(%arg0: i32) -> (i32, i32) {
    %c0_i32 = arith.constant 0 : i32
    %c0_i32_0 = arith.constant 0 : i32
    %c0_i32_1 = arith.constant 0 : i32
    return %c0_i32, %c0_i32_0 : i32, i32
  }
  func.func @transform_4(%arg0: i32) -> (i32, i32) {
    %c0_i32 = arith.constant 0 : i32
    %c0_i32_0 = arith.constant 0 : i32
    %c0_i32_1 = arith.constant 0 : i32
    return %c0_i32, %c0_i32_0 : i32, i32
  }
  func.func @transform_5(%arg0: i32) -> (i32, i32) {
    %c0_i32 = arith.constant 0 : i32
    %c0_i32_0 = arith.constant 0 : i32
    %c0_i32_1 = arith.constant 0 : i32
    return %c0_i32, %c0_i32_0 : i32, i32
  }
  func.func @transform_6(%arg0: i32) -> (i32, i32, i32) {
    %c0_i32 = arith.constant 0 : i32
    %c0_i32_0 = arith.constant 0 : i32
    %c0_i32_1 = arith.constant 0 : i32
    %c0_i32_2 = arith.constant 0 : i32
    return %c0_i32, %c0_i32_0, %c0_i32_1 : i32, i32, i32
  }
  func.func @transform_7(%arg0: i32) -> (i32, i32) {
    %c0_i32 = arith.constant 0 : i32
    %c0_i32_0 = arith.constant 0 : i32
    %c0_i32_1 = arith.constant 0 : i32
    return %c0_i32, %c0_i32_0 : i32, i32
  }
  func.func @transform_8(%arg0: i32) -> (i32, i32) {
    %c0_i32 = arith.constant 0 : i32
    %c0_i32_0 = arith.constant 0 : i32
    %c0_i32_1 = arith.constant 0 : i32
    return %c0_i32, %c0_i32_0 : i32, i32
  }
  func.func @transform_9(%arg0: i32) -> (i32, i32) {
    %c0_i32 = arith.constant 0 : i32
    %c0_i32_0 = arith.constant 0 : i32
    %c0_i32_1 = arith.constant 0 : i32
    return %c0_i32, %c0_i32_0 : i32, i32
  }
  func.func @transform_10(%arg0: i32) -> (i32, i32) {
    %c0_i32 = arith.constant 0 : i32
    %c0_i32_0 = arith.constant 0 : i32
    %c0_i32_1 = arith.constant 0 : i32
    return %c0_i32, %c0_i32_0 : i32, i32
  }
  func.func @transform_11(%arg0: i32) -> (i32, i32, i32) {
    %c0_i32 = arith.constant 0 : i32
    %c0_i32_0 = arith.constant 0 : i32
    %c0_i32_1 = arith.constant 0 : i32
    return %arg0, %c0_i32, %c0_i32_0 : i32, i32, i32
  }
}

module attributes {stable_mosaic.version = 11 : i64} {
  func.func @_ffn_kernel(%arg0: i32, %arg1: memref<128x128xf32, #tpu.memory_space<vmem>>, %arg2: memref<128x512xf32, #tpu.memory_space<vmem>>, %arg3: memref<1x512xf32, #tpu.memory_space<vmem>>, %arg4: memref<512x128xf32, #tpu.memory_space<vmem>>, %arg5: memref<1x128xf32, #tpu.memory_space<vmem>>, %arg6: memref<128x128xf32, #tpu.memory_space<vmem>>) attributes {dimension_semantics = [#tpu.dimension_semantics<parallel>], iteration_bounds = array<i64: 1>, scalar_prefetch = 0 : i64, scratch_operands = 0 : i64, tpu.core_type = #tpu.core_type<tc>, window_params = [{transform_indices = @transform_0, window_bounds = array<i64: 128, 128>}, {pipeline_mode = #tpu.pipeline_mode<synchronous>, transform_indices = @transform_1, window_bounds = array<i64: 128, 512>}, {pipeline_mode = #tpu.pipeline_mode<synchronous>, transform_indices = @transform_2, window_bounds = array<i64: 1, 512>}, {pipeline_mode = #tpu.pipeline_mode<synchronous>, transform_indices = @transform_3, window_bounds = array<i64: 512, 128>}, {pipeline_mode = #tpu.pipeline_mode<synchronous>, transform_indices = @transform_4, window_bounds = array<i64: 1, 128>}, {transform_indices = @transform_5, window_bounds = array<i64: 128, 128>}]} {
    %c0 = arith.constant 0 : index
    %c0_0 = arith.constant 0 : index
    %0 = vector.load %arg1[%c0, %c0_0] : memref<128x128xf32, #tpu.memory_space<vmem>>, vector<128x128xf32>
    %1 = arith.truncf %0 : vector<128x128xf32> to vector<128x128xbf16>
    %c0_1 = arith.constant 0 : index
    %c0_2 = arith.constant 0 : index
    %2 = vector.load %arg2[%c0_1, %c0_2] : memref<128x512xf32, #tpu.memory_space<vmem>>, vector<128x512xf32>
    %3 = arith.truncf %2 : vector<128x512xf32> to vector<128x512xbf16>
    %cst = arith.constant dense<0.000000e+00> : vector<128x512xf32>
    %4 = tpu.matmul %1, %3, %cst {dimension_numbers = #tpu.dot_dimension_numbers<[1], [0], [0], [1], [0, 0, 1, 1], [], []>} : vector<128x128xbf16>, vector<128x512xbf16>, vector<128x512xf32> -> vector<128x512xf32>
    %c0_3 = arith.constant 0 : index
    %c0_4 = arith.constant 0 : index
    %5 = vector.load %arg3[%c0_3, %c0_4] : memref<1x512xf32, #tpu.memory_space<vmem>>, vector<1x512xf32>
    %6 = vector.broadcast %5 : vector<1x512xf32> to vector<128x512xf32>
    %7 = arith.addf %4, %6 : vector<128x512xf32>
    %cst_5 = arith.constant 0.000000e+00 : f32
    %8 = vector.broadcast %cst_5 : f32 to vector<128x512xf32>
    %9 = arith.maximumf %7, %8 : vector<128x512xf32>
    %10 = arith.truncf %9 : vector<128x512xf32> to vector<128x512xbf16>
    %c0_6 = arith.constant 0 : index
    %c0_7 = arith.constant 0 : index
    %11 = vector.load %arg4[%c0_6, %c0_7] : memref<512x128xf32, #tpu.memory_space<vmem>>, vector<512x128xf32>
    %12 = arith.truncf %11 : vector<512x128xf32> to vector<512x128xbf16>
    %cst_8 = arith.constant dense<0.000000e+00> : vector<128x128xf32>
    %13 = tpu.matmul %10, %12, %cst_8 {dimension_numbers = #tpu.dot_dimension_numbers<[1], [0], [0], [1], [0, 0, 1, 1], [], []>} : vector<128x512xbf16>, vector<512x128xbf16>, vector<128x128xf32> -> vector<128x128xf32>
    %c0_9 = arith.constant 0 : index
    %c0_10 = arith.constant 0 : index
    %14 = vector.load %arg5[%c0_9, %c0_10] : memref<1x128xf32, #tpu.memory_space<vmem>>, vector<1x128xf32>
    %15 = vector.broadcast %14 : vector<1x128xf32> to vector<128x128xf32>
    %16 = arith.addf %13, %15 : vector<128x128xf32>
    %c0_11 = arith.constant 0 : index
    %c0_12 = arith.constant 0 : index
    %17 = vector.load %arg6[%c0_11, %c0_12] : memref<128x128xf32, #tpu.memory_space<vmem>>, vector<128x128xf32>
    tpu.vector_store %arg6[%c0_11, %c0_12], %16 {strides = array<i32>} : memref<128x128xf32, #tpu.memory_space<vmem>>, vector<128x128xf32>,
    return
  }
  func.func @transform_0(%arg0: i32) -> (i32, i32) {
    %c0_i32 = arith.constant 0 : i32
    %c0_i32_0 = arith.constant 0 : i32
    return %arg0, %c0_i32 : i32, i32
  }
  func.func @transform_1(%arg0: i32) -> (i32, i32) {
    %c0_i32 = arith.constant 0 : i32
    %c0_i32_0 = arith.constant 0 : i32
    %c0_i32_1 = arith.constant 0 : i32
    return %c0_i32, %c0_i32_0 : i32, i32
  }
  func.func @transform_2(%arg0: i32) -> (i32, i32) {
    %c0_i32 = arith.constant 0 : i32
    %c0_i32_0 = arith.constant 0 : i32
    %c0_i32_1 = arith.constant 0 : i32
    return %c0_i32, %c0_i32_0 : i32, i32
  }
  func.func @transform_3(%arg0: i32) -> (i32, i32) {
    %c0_i32 = arith.constant 0 : i32
    %c0_i32_0 = arith.constant 0 : i32
    %c0_i32_1 = arith.constant 0 : i32
    return %c0_i32, %c0_i32_0 : i32, i32
  }
  func.func @transform_4(%arg0: i32) -> (i32, i32) {
    %c0_i32 = arith.constant 0 : i32
    %c0_i32_0 = arith.constant 0 : i32
    %c0_i32_1 = arith.constant 0 : i32
    return %c0_i32, %c0_i32_0 : i32, i32
  }
  func.func @transform_5(%arg0: i32) -> (i32, i32) {
    %c0_i32 = arith.constant 0 : i32
    %c0_i32_0 = arith.constant 0 : i32
    return %arg0, %c0_i32 : i32, i32
  }
}

module attributes {stable_mosaic.version = 11 : i64} {
  func.func @_mha_kernel(%arg0: i32, %arg1: memref<1x8x128xf32, #tpu.memory_space<vmem>>, %arg2: memref<1x8x128xf32, #tpu.memory_space<vmem>>, %arg3: memref<1x8x128xf32, #tpu.memory_space<vmem>>, %arg4: memref<128x128xf32, #tpu.memory_space<vmem>>, %arg5: memref<128x128xf32, #tpu.memory_space<vmem>>, %arg6: memref<128x128xf32, #tpu.memory_space<vmem>>, %arg7: memref<2x64x128xf32, #tpu.memory_space<vmem>>, %arg8: memref<1x128xf32, #tpu.memory_space<vmem>>, %arg9: memref<1x128xf32, #tpu.memory_space<vmem>>, %arg10: memref<1x128xf32, #tpu.memory_space<vmem>>, %arg11: memref<1x128xf32, #tpu.memory_space<vmem>>, %arg12: memref<1x8x128xf32, #tpu.memory_space<vmem>>) attributes {dimension_semantics = [#tpu.dimension_semantics<parallel>], iteration_bounds = array<i64: 1>, scalar_prefetch = 0 : i64, scratch_operands = 0 : i64, tpu.core_type = #tpu.core_type<tc>, window_params = [{pipeline_mode = #tpu.pipeline_mode<synchronous>, transform_indices = @transform_0, window_bounds = array<i64: 1, 8, 128>}, {transform_indices = @transform_1, window_bounds = array<i64: 1, 8, 128>}, {transform_indices = @transform_2, window_bounds = array<i64: 1, 8, 128>}, {pipeline_mode = #tpu.pipeline_mode<synchronous>, transform_indices = @transform_3, window_bounds = array<i64: 128, 128>}, {pipeline_mode = #tpu.pipeline_mode<synchronous>, transform_indices = @transform_4, window_bounds = array<i64: 128, 128>}, {pipeline_mode = #tpu.pipeline_mode<synchronous>, transform_indices = @transform_5, window_bounds = array<i64: 128, 128>}, {pipeline_mode = #tpu.pipeline_mode<synchronous>, transform_indices = @transform_6, window_bounds = array<i64: 2, 64, 128>}, {pipeline_mode = #tpu.pipeline_mode<synchronous>, transform_indices = @transform_7, window_bounds = array<i64: 1, 128>}, {pipeline_mode = #tpu.pipeline_mode<synchronous>, transform_indices = @transform_8, window_bounds = array<i64: 1, 128>}, {pipeline_mode = #tpu.pipeline_mode<synchronous>, transform_indices = @transform_9, window_bounds = array<i64: 1, 128>}, {pipeline_mode = #tpu.pipeline_mode<synchronous>, transform_indices = @transform_10, window_bounds = array<i64: 1, 128>}, {transform_indices = @transform_11, window_bounds = array<i64: 1, 8, 128>}]} {
    %c0 = arith.constant 0 : index
    %c0_0 = arith.constant 0 : index
    %c0_1 = arith.constant 0 : index
    %0 = vector.load %arg1[%c0, %c0_0, %c0_1] : memref<1x8x128xf32, #tpu.memory_space<vmem>>, vector<1x8x128xf32>
    %1 = vector.shape_cast %0 : vector<1x8x128xf32> to vector<8x128xf32>
    %2 = arith.truncf %1 : vector<8x128xf32> to vector<8x128xbf16>
    %c0_2 = arith.constant 0 : index
    %c0_3 = arith.constant 0 : index
    %c0_4 = arith.constant 0 : index
    %3 = vector.load %arg2[%c0_2, %c0_3, %c0_4] : memref<1x8x128xf32, #tpu.memory_space<vmem>>, vector<1x8x128xf32>
    %4 = vector.shape_cast %3 : vector<1x8x128xf32> to vector<8x128xf32>
    %5 = arith.truncf %4 : vector<8x128xf32> to vector<8x128xbf16>
    %c0_5 = arith.constant 0 : index
    %c0_6 = arith.constant 0 : index
    %c0_7 = arith.constant 0 : index
    %6 = vector.load %arg3[%c0_5, %c0_6, %c0_7] : memref<1x8x128xf32, #tpu.memory_space<vmem>>, vector<1x8x128xf32>
    %7 = vector.shape_cast %6 : vector<1x8x128xf32> to vector<8x128xf32>
    %8 = arith.truncf %7 : vector<8x128xf32> to vector<8x128xbf16>
    %c0_8 = arith.constant 0 : index
    %c0_9 = arith.constant 0 : index
    %9 = vector.load %arg4[%c0_8, %c0_9] : memref<128x128xf32, #tpu.memory_space<vmem>>, vector<128x128xf32>
    %10 = arith.truncf %9 : vector<128x128xf32> to vector<128x128xbf16>
    %cst = arith.constant dense<0.000000e+00> : vector<8x128xf32>
    %11 = tpu.matmul %2, %10, %cst {dimension_numbers = #tpu.dot_dimension_numbers<[1], [0], [0], [1], [0, 0, 1, 1], [], []>} : vector<8x128xbf16>, vector<128x128xbf16>, vector<8x128xf32> -> vector<8x128xf32>
    %c0_10 = arith.constant 0 : index
    %c0_11 = arith.constant 0 : index
    %12 = vector.load %arg8[%c0_10, %c0_11] : memref<1x128xf32, #tpu.memory_space<vmem>>, vector<1x128xf32>
    %13 = vector.broadcast %12 : vector<1x128xf32> to vector<8x128xf32>
    %14 = arith.addf %11, %13 : vector<8x128xf32>
    %c0_12 = arith.constant 0 : index
    %c0_13 = arith.constant 0 : index
    %15 = vector.load %arg5[%c0_12, %c0_13] : memref<128x128xf32, #tpu.memory_space<vmem>>, vector<128x128xf32>
    %16 = arith.truncf %15 : vector<128x128xf32> to vector<128x128xbf16>
    %cst_14 = arith.constant dense<0.000000e+00> : vector<8x128xf32>
    %17 = tpu.matmul %5, %16, %cst_14 {dimension_numbers = #tpu.dot_dimension_numbers<[1], [0], [0], [1], [0, 0, 1, 1], [], []>} : vector<8x128xbf16>, vector<128x128xbf16>, vector<8x128xf32> -> vector<8x128xf32>
    %c0_15 = arith.constant 0 : index
    %c0_16 = arith.constant 0 : index
    %18 = vector.load %arg9[%c0_15, %c0_16] : memref<1x128xf32, #tpu.memory_space<vmem>>, vector<1x128xf32>
    %19 = vector.broadcast %18 : vector<1x128xf32> to vector<8x128xf32>
    %20 = arith.addf %17, %19 : vector<8x128xf32>
    %c0_17 = arith.constant 0 : index
    %c0_18 = arith.constant 0 : index
    %21 = vector.load %arg6[%c0_17, %c0_18] : memref<128x128xf32, #tpu.memory_space<vmem>>, vector<128x128xf32>
    %22 = arith.truncf %21 : vector<128x128xf32> to vector<128x128xbf16>
    %cst_19 = arith.constant dense<0.000000e+00> : vector<8x128xf32>
    %23 = tpu.matmul %8, %22, %cst_19 {dimension_numbers = #tpu.dot_dimension_numbers<[1], [0], [0], [1], [0, 0, 1, 1], [], []>} : vector<8x128xbf16>, vector<128x128xbf16>, vector<8x128xf32> -> vector<8x128xf32>
    %c0_20 = arith.constant 0 : index
    %c0_21 = arith.constant 0 : index
    %24 = vector.load %arg10[%c0_20, %c0_21] : memref<1x128xf32, #tpu.memory_space<vmem>>, vector<1x128xf32>
    %25 = vector.broadcast %24 : vector<1x128xf32> to vector<8x128xf32>
    %26 = arith.addf %23, %25 : vector<8x128xf32>
    %cst_22 = arith.constant 0.000000e+00 : f32
    %27 = vector.broadcast %cst_22 : f32 to vector<8x128xf32>
    %28 = vector.extract_strided_slice %14 {offsets = [0, 0], sizes = [8, 64], strides = [1, 1]} : vector<8x128xf32> to vector<8x64xf32>
    %cst_23 = arith.constant 1.250000e-01 : f32
    %29 = vector.broadcast %cst_23 : f32 to vector<8x64xf32>
    %30 = arith.mulf %28, %29 : vector<8x64xf32>
    %31 = arith.truncf %30 : vector<8x64xf32> to vector<8x64xbf16>
    %32 = vector.extract_strided_slice %20 {offsets = [0, 0], sizes = [8, 64], strides = [1, 1]} : vector<8x128xf32> to vector<8x64xf32>
    %33 = arith.truncf %32 : vector<8x64xf32> to vector<8x64xbf16>
    %34 = vector.extract_strided_slice %26 {offsets = [0, 0], sizes = [8, 64], strides = [1, 1]} : vector<8x128xf32> to vector<8x64xf32>
    %35 = arith.truncf %34 : vector<8x64xf32> to vector<8x64xbf16>
    %cst_24 = arith.constant dense<0.000000e+00> : vector<8x8xf32>
    %36 = tpu.matmul %31, %33, %cst_24 {dimension_numbers = #tpu.dot_dimension_numbers<[1], [1], [0], [0], [0, 0, 1, 0], [], []>} : vector<8x64xbf16>, vector<8x64xbf16>, vector<8x8xf32> -> vector<8x8xf32>
    %cst_25 = arith.constant dense<0xFF800000> : vector<8xf32>
    %37 = vector.multi_reduction <maximumf>, %36, %cst_25 [1] : vector<8x8xf32> to vector<8xf32>
    %38 = vector.shape_cast %37 : vector<8xf32> to vector<8x1xf32>
    %39 = vector.broadcast %38 : vector<8x1xf32> to vector<8x8xf32>
    %40 = arith.subf %36, %39 : vector<8x8xf32>
    %41 = math.exp %40 : vector<8x8xf32>
    %cst_26 = arith.constant dense<0.000000e+00> : vector<8xf32>
    %42 = vector.multi_reduction <add>, %41, %cst_26 [1] : vector<8x8xf32> to vector<8xf32>
    %43 = vector.shape_cast %42 : vector<8xf32> to vector<8x1xf32>
    %44 = tpu.reciprocal %43 {approx = true} : vector<8x1xf32> -> vector<8x1xf32>
    %45 = vector.broadcast %44 : vector<8x1xf32> to vector<8x8xf32>
    %46 = arith.mulf %41, %45 : vector<8x8xf32>
    %47 = arith.truncf %46 : vector<8x8xf32> to vector<8x8xbf16>
    %cst_27 = arith.constant dense<0.000000e+00> : vector<8x64xf32>
    %48 = tpu.matmul %47, %35, %cst_27 {dimension_numbers = #tpu.dot_dimension_numbers<[1], [0], [0], [1], [0, 0, 1, 1], [], []>} : vector<8x8xbf16>, vector<8x64xbf16>, vector<8x64xf32> -> vector<8x64xf32>
    %49 = arith.truncf %48 : vector<8x64xf32> to vector<8x64xbf16>
    %c0_28 = arith.constant 0 : index
    %c0_29 = arith.constant 0 : index
    %c0_30 = arith.constant 0 : index
    %50 = vector.load %arg7[%c0_28, %c0_29, %c0_30] : memref<2x64x128xf32, #tpu.memory_space<vmem>>, vector<1x64x128xf32>
    %51 = vector.shape_cast %50 : vector<1x64x128xf32> to vector<64x128xf32>
    %52 = arith.truncf %51 : vector<64x128xf32> to vector<64x128xbf16>
    %cst_31 = arith.constant dense<0.000000e+00> : vector<8x128xf32>
    %53 = tpu.matmul %49, %52, %cst_31 {dimension_numbers = #tpu.dot_dimension_numbers<[1], [0], [0], [1], [0, 0, 1, 1], [], []>} : vector<8x64xbf16>, vector<64x128xbf16>, vector<8x128xf32> -> vector<8x128xf32>
    %54 = arith.addf %27, %53 : vector<8x128xf32>
    %55 = vector.extract_strided_slice %14 {offsets = [0, 64], sizes = [8, 64], strides = [1, 1]} : vector<8x128xf32> to vector<8x64xf32>
    %cst_32 = arith.constant 1.250000e-01 : f32
    %56 = vector.broadcast %cst_32 : f32 to vector<8x64xf32>
    %57 = arith.mulf %55, %56 : vector<8x64xf32>
    %58 = arith.truncf %57 : vector<8x64xf32> to vector<8x64xbf16>
    %59 = vector.extract_strided_slice %20 {offsets = [0, 64], sizes = [8, 64], strides = [1, 1]} : vector<8x128xf32> to vector<8x64xf32>
    %60 = arith.truncf %59 : vector<8x64xf32> to vector<8x64xbf16>
    %61 = vector.extract_strided_slice %26 {offsets = [0, 64], sizes = [8, 64], strides = [1, 1]} : vector<8x128xf32> to vector<8x64xf32>
    %62 = arith.truncf %61 : vector<8x64xf32> to vector<8x64xbf16>
    %cst_33 = arith.constant dense<0.000000e+00> : vector<8x8xf32>
    %63 = tpu.matmul %58, %60, %cst_33 {dimension_numbers = #tpu.dot_dimension_numbers<[1], [1], [0], [0], [0, 0, 1, 0], [], []>} : vector<8x64xbf16>, vector<8x64xbf16>, vector<8x8xf32> -> vector<8x8xf32>
    %cst_34 = arith.constant dense<0xFF800000> : vector<8xf32>
    %64 = vector.multi_reduction <maximumf>, %63, %cst_34 [1] : vector<8x8xf32> to vector<8xf32>
    %65 = vector.shape_cast %64 : vector<8xf32> to vector<8x1xf32>
    %66 = vector.broadcast %65 : vector<8x1xf32> to vector<8x8xf32>
    %67 = arith.subf %63, %66 : vector<8x8xf32>
    %68 = math.exp %67 : vector<8x8xf32>
    %cst_35 = arith.constant dense<0.000000e+00> : vector<8xf32>
    %69 = vector.multi_reduction <add>, %68, %cst_35 [1] : vector<8x8xf32> to vector<8xf32>
    %70 = vector.shape_cast %69 : vector<8xf32> to vector<8x1xf32>
    %71 = tpu.reciprocal %70 {approx = true} : vector<8x1xf32> -> vector<8x1xf32>
    %72 = vector.broadcast %71 : vector<8x1xf32> to vector<8x8xf32>
    %73 = arith.mulf %68, %72 : vector<8x8xf32>
    %74 = arith.truncf %73 : vector<8x8xf32> to vector<8x8xbf16>
    %cst_36 = arith.constant dense<0.000000e+00> : vector<8x64xf32>
    %75 = tpu.matmul %74, %62, %cst_36 {dimension_numbers = #tpu.dot_dimension_numbers<[1], [0], [0], [1], [0, 0, 1, 1], [], []>} : vector<8x8xbf16>, vector<8x64xbf16>, vector<8x64xf32> -> vector<8x64xf32>
    %76 = arith.truncf %75 : vector<8x64xf32> to vector<8x64xbf16>
    %c1 = arith.constant 1 : index
    %c0_37 = arith.constant 0 : index
    %c0_38 = arith.constant 0 : index
    %77 = vector.load %arg7[%c1, %c0_37, %c0_38] : memref<2x64x128xf32, #tpu.memory_space<vmem>>, vector<1x64x128xf32>
    %78 = vector.shape_cast %77 : vector<1x64x128xf32> to vector<64x128xf32>
    %79 = arith.truncf %78 : vector<64x128xf32> to vector<64x128xbf16>
    %cst_39 = arith.constant dense<0.000000e+00> : vector<8x128xf32>
    %80 = tpu.matmul %76, %79, %cst_39 {dimension_numbers = #tpu.dot_dimension_numbers<[1], [0], [0], [1], [0, 0, 1, 1], [], []>} : vector<8x64xbf16>, vector<64x128xbf16>, vector<8x128xf32> -> vector<8x128xf32>
    %81 = arith.addf %54, %80 : vector<8x128xf32>
    %c0_40 = arith.constant 0 : index
    %c0_41 = arith.constant 0 : index
    %82 = vector.load %arg11[%c0_40, %c0_41] : memref<1x128xf32, #tpu.memory_space<vmem>>, vector<1x128xf32>
    %83 = vector.broadcast %82 : vector<1x128xf32> to vector<8x128xf32>
    %84 = arith.addf %81, %83 : vector<8x128xf32>
    %c0_42 = arith.constant 0 : index
    %c0_43 = arith.constant 0 : index
    %c0_44 = arith.constant 0 : index
    %85 = vector.load %arg12[%c0_42, %c0_43, %c0_44] : memref<1x8x128xf32, #tpu.memory_space<vmem>>, vector<1x8x128xf32>
    %86 = vector.shape_cast %85 : vector<1x8x128xf32> to vector<8x128xf32>
    %87 = vector.shape_cast %84 : vector<8x128xf32> to vector<1x8x128xf32>
    tpu.vector_store %arg12[%c0_42, %c0_43, %c0_44], %87 {strides = array<i32>} : memref<1x8x128xf32, #tpu.memory_space<vmem>>, vector<1x8x128xf32>,
    return
  }
  func.func @transform_0(%arg0: i32) -> (i32, i32, i32) {
    %c0_i32 = arith.constant 0 : i32
    %c0_i32_0 = arith.constant 0 : i32
    %c0_i32_1 = arith.constant 0 : i32
    %c0_i32_2 = arith.constant 0 : i32
    return %c0_i32, %c0_i32_0, %c0_i32_1 : i32, i32, i32
  }
  func.func @transform_1(%arg0: i32) -> (i32, i32, i32) {
    %c0_i32 = arith.constant 0 : i32
    %c0_i32_0 = arith.constant 0 : i32
    %c0_i32_1 = arith.constant 0 : i32
    return %arg0, %c0_i32, %c0_i32_0 : i32, i32, i32
  }
  func.func @transform_2(%arg0: i32) -> (i32, i32, i32) {
    %c0_i32 = arith.constant 0 : i32
    %c0_i32_0 = arith.constant 0 : i32
    %c0_i32_1 = arith.constant 0 : i32
    return %arg0, %c0_i32, %c0_i32_0 : i32, i32, i32
  }
  func.func @transform_3(%arg0: i32) -> (i32, i32) {
    %c0_i32 = arith.constant 0 : i32
    %c0_i32_0 = arith.constant 0 : i32
    %c0_i32_1 = arith.constant 0 : i32
    return %c0_i32, %c0_i32_0 : i32, i32
  }
  func.func @transform_4(%arg0: i32) -> (i32, i32) {
    %c0_i32 = arith.constant 0 : i32
    %c0_i32_0 = arith.constant 0 : i32
    %c0_i32_1 = arith.constant 0 : i32
    return %c0_i32, %c0_i32_0 : i32, i32
  }
  func.func @transform_5(%arg0: i32) -> (i32, i32) {
    %c0_i32 = arith.constant 0 : i32
    %c0_i32_0 = arith.constant 0 : i32
    %c0_i32_1 = arith.constant 0 : i32
    return %c0_i32, %c0_i32_0 : i32, i32
  }
  func.func @transform_6(%arg0: i32) -> (i32, i32, i32) {
    %c0_i32 = arith.constant 0 : i32
    %c0_i32_0 = arith.constant 0 : i32
    %c0_i32_1 = arith.constant 0 : i32
    %c0_i32_2 = arith.constant 0 : i32
    return %c0_i32, %c0_i32_0, %c0_i32_1 : i32, i32, i32
  }
  func.func @transform_7(%arg0: i32) -> (i32, i32) {
    %c0_i32 = arith.constant 0 : i32
    %c0_i32_0 = arith.constant 0 : i32
    %c0_i32_1 = arith.constant 0 : i32
    return %c0_i32, %c0_i32_0 : i32, i32
  }
  func.func @transform_8(%arg0: i32) -> (i32, i32) {
    %c0_i32 = arith.constant 0 : i32
    %c0_i32_0 = arith.constant 0 : i32
    %c0_i32_1 = arith.constant 0 : i32
    return %c0_i32, %c0_i32_0 : i32, i32
  }
  func.func @transform_9(%arg0: i32) -> (i32, i32) {
    %c0_i32 = arith.constant 0 : i32
    %c0_i32_0 = arith.constant 0 : i32
    %c0_i32_1 = arith.constant 0 : i32
    return %c0_i32, %c0_i32_0 : i32, i32
  }
  func.func @transform_10(%arg0: i32) -> (i32, i32) {
    %c0_i32 = arith.constant 0 : i32
    %c0_i32_0 = arith.constant 0 : i32
    %c0_i32_1 = arith.constant 0 : i32
    return %c0_i32, %c0_i32_0 : i32, i32
  }
  func.func @transform_11(%arg0: i32) -> (i32, i32, i32) {
    %c0_i32 = arith.constant 0 : i32
    %c0_i32_0 = arith.constant 0 : i32
    %c0_i32_1 = arith.constant 0 : i32
    return %arg0, %c0_i32, %c0_i32_0 : i32, i32, i32
  }
}

module attributes {stable_mosaic.version = 11 : i64} {
  func.func @_add_ln_kernel(%arg0: i32, %arg1: memref<8x128xf32, #tpu.memory_space<vmem>>, %arg2: memref<8x128xf32, #tpu.memory_space<vmem>>, %arg3: memref<1x128xf32, #tpu.memory_space<vmem>>, %arg4: memref<1x128xf32, #tpu.memory_space<vmem>>, %arg5: memref<8x128xf32, #tpu.memory_space<vmem>>) attributes {dimension_semantics = [#tpu.dimension_semantics<parallel>], iteration_bounds = array<i64: 1>, scalar_prefetch = 0 : i64, scratch_operands = 0 : i64, tpu.core_type = #tpu.core_type<tc>, window_params = [{transform_indices = @transform_0, window_bounds = array<i64: 8, 128>}, {transform_indices = @transform_1, window_bounds = array<i64: 8, 128>}, {pipeline_mode = #tpu.pipeline_mode<synchronous>, transform_indices = @transform_2, window_bounds = array<i64: 1, 128>}, {pipeline_mode = #tpu.pipeline_mode<synchronous>, transform_indices = @transform_3, window_bounds = array<i64: 1, 128>}, {transform_indices = @transform_4, window_bounds = array<i64: 8, 128>}]} {
    %c0 = arith.constant 0 : index
    %c0_0 = arith.constant 0 : index
    %0 = vector.load %arg1[%c0, %c0_0] : memref<8x128xf32, #tpu.memory_space<vmem>>, vector<8x128xf32>
    %c0_1 = arith.constant 0 : index
    %c0_2 = arith.constant 0 : index
    %1 = vector.load %arg2[%c0_1, %c0_2] : memref<8x128xf32, #tpu.memory_space<vmem>>, vector<8x128xf32>
    %2 = arith.addf %0, %1 : vector<8x128xf32>
    %c0_3 = arith.constant 0 : index
    %c0_4 = arith.constant 0 : index
    %3 = vector.load %arg3[%c0_3, %c0_4] : memref<1x128xf32, #tpu.memory_space<vmem>>, vector<1x128xf32>
    %c0_5 = arith.constant 0 : index
    %c0_6 = arith.constant 0 : index
    %4 = vector.load %arg4[%c0_5, %c0_6] : memref<1x128xf32, #tpu.memory_space<vmem>>, vector<1x128xf32>
    %cst = arith.constant dense<0.000000e+00> : vector<8xf32>
    %5 = vector.multi_reduction <add>, %2, %cst [1] : vector<8x128xf32> to vector<8xf32>
    %6 = vector.shape_cast %5 : vector<8xf32> to vector<8x1xf32>
    %cst_7 = arith.constant 1.280000e+02 : f32
    %7 = vector.broadcast %cst_7 : f32 to vector<8x1xf32>
    %8 = arith.divf %6, %7 : vector<8x1xf32>
    %9 = vector.broadcast %8 : vector<8x1xf32> to vector<8x128xf32>
    %10 = arith.subf %2, %9 : vector<8x128xf32>
    %11 = arith.mulf %10, %10 : vector<8x128xf32>
    %cst_8 = arith.constant dense<0.000000e+00> : vector<8xf32>
    %12 = vector.multi_reduction <add>, %11, %cst_8 [1] : vector<8x128xf32> to vector<8xf32>
    %13 = vector.shape_cast %12 : vector<8xf32> to vector<8x1xf32>
    %cst_9 = arith.constant 1.280000e+02 : f32
    %14 = vector.broadcast %cst_9 : f32 to vector<8x1xf32>
    %15 = arith.divf %13, %14 : vector<8x1xf32>
    %16 = vector.broadcast %8 : vector<8x1xf32> to vector<8x128xf32>
    %17 = arith.subf %2, %16 : vector<8x128xf32>
    %cst_10 = arith.constant 9.99999974E-6 : f32
    %18 = vector.broadcast %cst_10 : f32 to vector<8x1xf32>
    %19 = arith.addf %15, %18 : vector<8x1xf32>
    %20 = math.rsqrt %19 : vector<8x1xf32>
    %21 = vector.broadcast %20 : vector<8x1xf32> to vector<8x128xf32>
    %22 = arith.mulf %17, %21 : vector<8x128xf32>
    %23 = vector.broadcast %3 : vector<1x128xf32> to vector<8x128xf32>
    %24 = arith.mulf %22, %23 : vector<8x128xf32>
    %25 = vector.broadcast %4 : vector<1x128xf32> to vector<8x128xf32>
    %26 = arith.addf %24, %25 : vector<8x128xf32>
    %c0_11 = arith.constant 0 : index
    %c0_12 = arith.constant 0 : index
    %27 = vector.load %arg5[%c0_11, %c0_12] : memref<8x128xf32, #tpu.memory_space<vmem>>, vector<8x128xf32>
    tpu.vector_store %arg5[%c0_11, %c0_12], %26 {strides = array<i32>} : memref<8x128xf32, #tpu.memory_space<vmem>>, vector<8x128xf32>,
    return
  }
  func.func @transform_0(%arg0: i32) -> (i32, i32) {
    %c0_i32 = arith.constant 0 : i32
    %c0_i32_0 = arith.constant 0 : i32
    return %arg0, %c0_i32 : i32, i32
  }
  func.func @transform_1(%arg0: i32) -> (i32, i32) {
    %c0_i32 = arith.constant 0 : i32
    %c0_i32_0 = arith.constant 0 : i32
    return %arg0, %c0_i32 : i32, i32
  }
  func.func @transform_2(%arg0: i32) -> (i32, i32) {
    %c0_i32 = arith.constant 0 : i32
    %c0_i32_0 = arith.constant 0 : i32
    %c0_i32_1 = arith.constant 0 : i32
    return %c0_i32, %c0_i32_0 : i32, i32
  }
  func.func @transform_3(%arg0: i32) -> (i32, i32) {
    %c0_i32 = arith.constant 0 : i32
    %c0_i32_0 = arith.constant 0 : i32
    %c0_i32_1 = arith.constant 0 : i32
    return %c0_i32, %c0_i32_0 : i32, i32
  }
  func.func @transform_4(%arg0: i32) -> (i32, i32) {
    %c0_i32 = arith.constant 0 : i32
    %c0_i32_0 = arith.constant 0 : i32
    return %arg0, %c0_i32 : i32, i32
  }
}

module attributes {stable_mosaic.version = 11 : i64} {
  func.func @_mha_kernel(%arg0: i32, %arg1: memref<1x8x128xf32, #tpu.memory_space<vmem>>, %arg2: memref<1x64x128xf32, #tpu.memory_space<vmem>>, %arg3: memref<1x64x128xf32, #tpu.memory_space<vmem>>, %arg4: memref<128x128xf32, #tpu.memory_space<vmem>>, %arg5: memref<128x128xf32, #tpu.memory_space<vmem>>, %arg6: memref<128x128xf32, #tpu.memory_space<vmem>>, %arg7: memref<2x64x128xf32, #tpu.memory_space<vmem>>, %arg8: memref<1x128xf32, #tpu.memory_space<vmem>>, %arg9: memref<1x128xf32, #tpu.memory_space<vmem>>, %arg10: memref<1x128xf32, #tpu.memory_space<vmem>>, %arg11: memref<1x128xf32, #tpu.memory_space<vmem>>, %arg12: memref<1x8x128xf32, #tpu.memory_space<vmem>>, %arg13: memref<1x8x64xf32, #tpu.memory_space<vmem>>) attributes {dimension_semantics = [#tpu.dimension_semantics<parallel>], iteration_bounds = array<i64: 2>, scalar_prefetch = 0 : i64, scratch_operands = 0 : i64, tpu.core_type = #tpu.core_type<tc>, window_params = [{pipeline_mode = #tpu.pipeline_mode<synchronous>, transform_indices = @transform_0, window_bounds = array<i64: 1, 8, 128>}, {transform_indices = @transform_1, window_bounds = array<i64: 1, 64, 128>}, {transform_indices = @transform_2, window_bounds = array<i64: 1, 64, 128>}, {pipeline_mode = #tpu.pipeline_mode<synchronous>, transform_indices = @transform_3, window_bounds = array<i64: 128, 128>}, {pipeline_mode = #tpu.pipeline_mode<synchronous>, transform_indices = @transform_4, window_bounds = array<i64: 128, 128>}, {pipeline_mode = #tpu.pipeline_mode<synchronous>, transform_indices = @transform_5, window_bounds = array<i64: 128, 128>}, {pipeline_mode = #tpu.pipeline_mode<synchronous>, transform_indices = @transform_6, window_bounds = array<i64: 2, 64, 128>}, {pipeline_mode = #tpu.pipeline_mode<synchronous>, transform_indices = @transform_7, window_bounds = array<i64: 1, 128>}, {pipeline_mode = #tpu.pipeline_mode<synchronous>, transform_indices = @transform_8, window_bounds = array<i64: 1, 128>}, {pipeline_mode = #tpu.pipeline_mode<synchronous>, transform_indices = @transform_9, window_bounds = array<i64: 1, 128>}, {pipeline_mode = #tpu.pipeline_mode<synchronous>, transform_indices = @transform_10, window_bounds = array<i64: 1, 128>}, {transform_indices = @transform_11, window_bounds = array<i64: 1, 8, 128>}, {transform_indices = @transform_12, window_bounds = array<i64: 1, 8, 64>}]} {
    %c0 = arith.constant 0 : index
    %c0_0 = arith.constant 0 : index
    %c0_1 = arith.constant 0 : index
    %0 = vector.load %arg1[%c0, %c0_0, %c0_1] : memref<1x8x128xf32, #tpu.memory_space<vmem>>, vector<1x8x128xf32>
    %1 = vector.shape_cast %0 : vector<1x8x128xf32> to vector<8x128xf32>
    %2 = arith.truncf %1 : vector<8x128xf32> to vector<8x128xbf16>
    %c0_2 = arith.constant 0 : index
    %c0_3 = arith.constant 0 : index
    %c0_4 = arith.constant 0 : index
    %3 = vector.load %arg2[%c0_2, %c0_3, %c0_4] : memref<1x64x128xf32, #tpu.memory_space<vmem>>, vector<1x64x128xf32>
    %4 = vector.shape_cast %3 : vector<1x64x128xf32> to vector<64x128xf32>
    %5 = arith.truncf %4 : vector<64x128xf32> to vector<64x128xbf16>
    %c0_5 = arith.constant 0 : index
    %c0_6 = arith.constant 0 : index
    %c0_7 = arith.constant 0 : index
    %6 = vector.load %arg3[%c0_5, %c0_6, %c0_7] : memref<1x64x128xf32, #tpu.memory_space<vmem>>, vector<1x64x128xf32>
    %7 = vector.shape_cast %6 : vector<1x64x128xf32> to vector<64x128xf32>
    %8 = arith.truncf %7 : vector<64x128xf32> to vector<64x128xbf16>
    %c0_8 = arith.constant 0 : index
    %c0_9 = arith.constant 0 : index
    %9 = vector.load %arg4[%c0_8, %c0_9] : memref<128x128xf32, #tpu.memory_space<vmem>>, vector<128x128xf32>
    %10 = arith.truncf %9 : vector<128x128xf32> to vector<128x128xbf16>
    %cst = arith.constant dense<0.000000e+00> : vector<8x128xf32>
    %11 = tpu.matmul %2, %10, %cst {dimension_numbers = #tpu.dot_dimension_numbers<[1], [0], [0], [1], [0, 0, 1, 1], [], []>} : vector<8x128xbf16>, vector<128x128xbf16>, vector<8x128xf32> -> vector<8x128xf32>
    %c0_10 = arith.constant 0 : index
    %c0_11 = arith.constant 0 : index
    %12 = vector.load %arg8[%c0_10, %c0_11] : memref<1x128xf32, #tpu.memory_space<vmem>>, vector<1x128xf32>
    %13 = vector.broadcast %12 : vector<1x128xf32> to vector<8x128xf32>
    %14 = arith.addf %11, %13 : vector<8x128xf32>
    %c0_12 = arith.constant 0 : index
    %c0_13 = arith.constant 0 : index
    %15 = vector.load %arg5[%c0_12, %c0_13] : memref<128x128xf32, #tpu.memory_space<vmem>>, vector<128x128xf32>
    %16 = arith.truncf %15 : vector<128x128xf32> to vector<128x128xbf16>
    %cst_14 = arith.constant dense<0.000000e+00> : vector<64x128xf32>
    %17 = tpu.matmul %5, %16, %cst_14 {dimension_numbers = #tpu.dot_dimension_numbers<[1], [0], [0], [1], [0, 0, 1, 1], [], []>} : vector<64x128xbf16>, vector<128x128xbf16>, vector<64x128xf32> -> vector<64x128xf32>
    %c0_15 = arith.constant 0 : index
    %c0_16 = arith.constant 0 : index
    %18 = vector.load %arg9[%c0_15, %c0_16] : memref<1x128xf32, #tpu.memory_space<vmem>>, vector<1x128xf32>
    %19 = vector.broadcast %18 : vector<1x128xf32> to vector<64x128xf32>
    %20 = arith.addf %17, %19 : vector<64x128xf32>
    %c0_17 = arith.constant 0 : index
    %c0_18 = arith.constant 0 : index
    %21 = vector.load %arg6[%c0_17, %c0_18] : memref<128x128xf32, #tpu.memory_space<vmem>>, vector<128x128xf32>
    %22 = arith.truncf %21 : vector<128x128xf32> to vector<128x128xbf16>
    %cst_19 = arith.constant dense<0.000000e+00> : vector<64x128xf32>
    %23 = tpu.matmul %8, %22, %cst_19 {dimension_numbers = #tpu.dot_dimension_numbers<[1], [0], [0], [1], [0, 0, 1, 1], [], []>} : vector<64x128xbf16>, vector<128x128xbf16>, vector<64x128xf32> -> vector<64x128xf32>
    %c0_20 = arith.constant 0 : index
    %c0_21 = arith.constant 0 : index
    %24 = vector.load %arg10[%c0_20, %c0_21] : memref<1x128xf32, #tpu.memory_space<vmem>>, vector<1x128xf32>
    %25 = vector.broadcast %24 : vector<1x128xf32> to vector<64x128xf32>
    %26 = arith.addf %23, %25 : vector<64x128xf32>
    %cst_22 = arith.constant 0.000000e+00 : f32
    %27 = vector.broadcast %cst_22 : f32 to vector<8x128xf32>
    %cst_23 = arith.constant 0.000000e+00 : f32
    %28 = vector.broadcast %cst_23 : f32 to vector<8x64xf32>
    %29 = vector.extract_strided_slice %14 {offsets = [0, 0], sizes = [8, 64], strides = [1, 1]} : vector<8x128xf32> to vector<8x64xf32>
    %cst_24 = arith.constant 1.250000e-01 : f32
    %30 = vector.broadcast %cst_24 : f32 to vector<8x64xf32>
    %31 = arith.mulf %29, %30 : vector<8x64xf32>
    %32 = arith.truncf %31 : vector<8x64xf32> to vector<8x64xbf16>
    %33 = vector.extract_strided_slice %20 {offsets = [0, 0], sizes = [64, 64], strides = [1, 1]} : vector<64x128xf32> to vector<64x64xf32>
    %34 = arith.truncf %33 : vector<64x64xf32> to vector<64x64xbf16>
    %35 = vector.extract_strided_slice %26 {offsets = [0, 0], sizes = [64, 64], strides = [1, 1]} : vector<64x128xf32> to vector<64x64xf32>
    %36 = arith.truncf %35 : vector<64x64xf32> to vector<64x64xbf16>
    %cst_25 = arith.constant dense<0.000000e+00> : vector<8x64xf32>
    %37 = tpu.matmul %32, %34, %cst_25 {dimension_numbers = #tpu.dot_dimension_numbers<[1], [1], [0], [0], [0, 0, 1, 0], [], []>} : vector<8x64xbf16>, vector<64x64xbf16>, vector<8x64xf32> -> vector<8x64xf32>
    %cst_26 = arith.constant dense<0xFF800000> : vector<8xf32>
    %38 = vector.multi_reduction <maximumf>, %37, %cst_26 [1] : vector<8x64xf32> to vector<8xf32>
    %39 = vector.shape_cast %38 : vector<8xf32> to vector<8x1xf32>
    %40 = vector.broadcast %39 : vector<8x1xf32> to vector<8x64xf32>
    %41 = arith.subf %37, %40 : vector<8x64xf32>
    %42 = math.exp %41 : vector<8x64xf32>
    %cst_27 = arith.constant dense<0.000000e+00> : vector<8xf32>
    %43 = vector.multi_reduction <add>, %42, %cst_27 [1] : vector<8x64xf32> to vector<8xf32>
    %44 = vector.shape_cast %43 : vector<8xf32> to vector<8x1xf32>
    %45 = tpu.reciprocal %44 {approx = true} : vector<8x1xf32> -> vector<8x1xf32>
    %46 = vector.broadcast %45 : vector<8x1xf32> to vector<8x64xf32>
    %47 = arith.mulf %42, %46 : vector<8x64xf32>
    %48 = arith.truncf %47 : vector<8x64xf32> to vector<8x64xbf16>
    %cst_28 = arith.constant dense<0.000000e+00> : vector<8x64xf32>
    %49 = tpu.matmul %48, %36, %cst_28 {dimension_numbers = #tpu.dot_dimension_numbers<[1], [0], [0], [1], [0, 0, 1, 1], [], []>} : vector<8x64xbf16>, vector<64x64xbf16>, vector<8x64xf32> -> vector<8x64xf32>
    %50 = arith.truncf %49 : vector<8x64xf32> to vector<8x64xbf16>
    %c0_29 = arith.constant 0 : index
    %c0_30 = arith.constant 0 : index
    %c0_31 = arith.constant 0 : index
    %51 = vector.load %arg7[%c0_29, %c0_30, %c0_31] : memref<2x64x128xf32, #tpu.memory_space<vmem>>, vector<1x64x128xf32>
    %52 = vector.shape_cast %51 : vector<1x64x128xf32> to vector<64x128xf32>
    %53 = arith.truncf %52 : vector<64x128xf32> to vector<64x128xbf16>
    %cst_32 = arith.constant dense<0.000000e+00> : vector<8x128xf32>
    %54 = tpu.matmul %50, %53, %cst_32 {dimension_numbers = #tpu.dot_dimension_numbers<[1], [0], [0], [1], [0, 0, 1, 1], [], []>} : vector<8x64xbf16>, vector<64x128xbf16>, vector<8x128xf32> -> vector<8x128xf32>
    %55 = arith.addf %27, %54 : vector<8x128xf32>
    %56 = arith.addf %28, %47 : vector<8x64xf32>
    %57 = vector.extract_strided_slice %14 {offsets = [0, 64], sizes = [8, 64], strides = [1, 1]} : vector<8x128xf32> to vector<8x64xf32>
    %cst_33 = arith.constant 1.250000e-01 : f32
    %58 = vector.broadcast %cst_33 : f32 to vector<8x64xf32>
    %59 = arith.mulf %57, %58 : vector<8x64xf32>
    %60 = arith.truncf %59 : vector<8x64xf32> to vector<8x64xbf16>
    %61 = vector.extract_strided_slice %20 {offsets = [0, 64], sizes = [64, 64], strides = [1, 1]} : vector<64x128xf32> to vector<64x64xf32>
    %62 = arith.truncf %61 : vector<64x64xf32> to vector<64x64xbf16>
    %63 = vector.extract_strided_slice %26 {offsets = [0, 64], sizes = [64, 64], strides = [1, 1]} : vector<64x128xf32> to vector<64x64xf32>
    %64 = arith.truncf %63 : vector<64x64xf32> to vector<64x64xbf16>
    %cst_34 = arith.constant dense<0.000000e+00> : vector<8x64xf32>
    %65 = tpu.matmul %60, %62, %cst_34 {dimension_numbers = #tpu.dot_dimension_numbers<[1], [1], [0], [0], [0, 0, 1, 0], [], []>} : vector<8x64xbf16>, vector<64x64xbf16>, vector<8x64xf32> -> vector<8x64xf32>
    %cst_35 = arith.constant dense<0xFF800000> : vector<8xf32>
    %66 = vector.multi_reduction <maximumf>, %65, %cst_35 [1] : vector<8x64xf32> to vector<8xf32>
    %67 = vector.shape_cast %66 : vector<8xf32> to vector<8x1xf32>
    %68 = vector.broadcast %67 : vector<8x1xf32> to vector<8x64xf32>
    %69 = arith.subf %65, %68 : vector<8x64xf32>
    %70 = math.exp %69 : vector<8x64xf32>
    %cst_36 = arith.constant dense<0.000000e+00> : vector<8xf32>
    %71 = vector.multi_reduction <add>, %70, %cst_36 [1] : vector<8x64xf32> to vector<8xf32>
    %72 = vector.shape_cast %71 : vector<8xf32> to vector<8x1xf32>
    %73 = tpu.reciprocal %72 {approx = true} : vector<8x1xf32> -> vector<8x1xf32>
    %74 = vector.broadcast %73 : vector<8x1xf32> to vector<8x64xf32>
    %75 = arith.mulf %70, %74 : vector<8x64xf32>
    %76 = arith.truncf %75 : vector<8x64xf32> to vector<8x64xbf16>
    %cst_37 = arith.constant dense<0.000000e+00> : vector<8x64xf32>
    %77 = tpu.matmul %76, %64, %cst_37 {dimension_numbers = #tpu.dot_dimension_numbers<[1], [0], [0], [1], [0, 0, 1, 1], [], []>} : vector<8x64xbf16>, vector<64x64xbf16>, vector<8x64xf32> -> vector<8x64xf32>
    %78 = arith.truncf %77 : vector<8x64xf32> to vector<8x64xbf16>
    %c1 = arith.constant 1 : index
    %c0_38 = arith.constant 0 : index
    %c0_39 = arith.constant 0 : index
    %79 = vector.load %arg7[%c1, %c0_38, %c0_39] : memref<2x64x128xf32, #tpu.memory_space<vmem>>, vector<1x64x128xf32>
    %80 = vector.shape_cast %79 : vector<1x64x128xf32> to vector<64x128xf32>
    %81 = arith.truncf %80 : vector<64x128xf32> to vector<64x128xbf16>
    %cst_40 = arith.constant dense<0.000000e+00> : vector<8x128xf32>
    %82 = tpu.matmul %78, %81, %cst_40 {dimension_numbers = #tpu.dot_dimension_numbers<[1], [0], [0], [1], [0, 0, 1, 1], [], []>} : vector<8x64xbf16>, vector<64x128xbf16>, vector<8x128xf32> -> vector<8x128xf32>
    %83 = arith.addf %55, %82 : vector<8x128xf32>
    %84 = arith.addf %56, %75 : vector<8x64xf32>
    %c0_41 = arith.constant 0 : index
    %c0_42 = arith.constant 0 : index
    %85 = vector.load %arg11[%c0_41, %c0_42] : memref<1x128xf32, #tpu.memory_space<vmem>>, vector<1x128xf32>
    %86 = vector.broadcast %85 : vector<1x128xf32> to vector<8x128xf32>
    %87 = arith.addf %83, %86 : vector<8x128xf32>
    %c0_43 = arith.constant 0 : index
    %c0_44 = arith.constant 0 : index
    %c0_45 = arith.constant 0 : index
    %88 = vector.load %arg12[%c0_43, %c0_44, %c0_45] : memref<1x8x128xf32, #tpu.memory_space<vmem>>, vector<1x8x128xf32>
    %89 = vector.shape_cast %88 : vector<1x8x128xf32> to vector<8x128xf32>
    %90 = vector.shape_cast %87 : vector<8x128xf32> to vector<1x8x128xf32>
    tpu.vector_store %arg12[%c0_43, %c0_44, %c0_45], %90 {strides = array<i32>} : memref<1x8x128xf32, #tpu.memory_space<vmem>>, vector<1x8x128xf32>,
    %cst_46 = arith.constant 5.000000e-01 : f32
    %91 = vector.broadcast %cst_46 : f32 to vector<8x64xf32>
    %92 = arith.mulf %84, %91 : vector<8x64xf32>
    %c0_47 = arith.constant 0 : index
    %c0_48 = arith.constant 0 : index
    %c0_49 = arith.constant 0 : index
    %93 = vector.load %arg13[%c0_47, %c0_48, %c0_49] : memref<1x8x64xf32, #tpu.memory_space<vmem>>, vector<1x8x64xf32>
    %94 = vector.shape_cast %93 : vector<1x8x64xf32> to vector<8x64xf32>
    %95 = vector.shape_cast %92 : vector<8x64xf32> to vector<1x8x64xf32>
    tpu.vector_store %arg13[%c0_47, %c0_48, %c0_49], %95 {strides = array<i32>} : memref<1x8x64xf32, #tpu.memory_space<vmem>>, vector<1x8x64xf32>,
    return
  }
  func.func @transform_0(%arg0: i32) -> (i32, i32, i32) {
    %c0_i32 = arith.constant 0 : i32
    %c0_i32_0 = arith.constant 0 : i32
    %c0_i32_1 = arith.constant 0 : i32
    %c0_i32_2 = arith.constant 0 : i32
    return %c0_i32, %c0_i32_0, %c0_i32_1 : i32, i32, i32
  }
  func.func @transform_1(%arg0: i32) -> (i32, i32, i32) {
    %c0_i32 = arith.constant 0 : i32
    %c0_i32_0 = arith.constant 0 : i32
    %c0_i32_1 = arith.constant 0 : i32
    return %arg0, %c0_i32, %c0_i32_0 : i32, i32, i32
  }
  func.func @transform_2(%arg0: i32) -> (i32, i32, i32) {
    %c0_i32 = arith.constant 0 : i32
    %c0_i32_0 = arith.constant 0 : i32
    %c0_i32_1 = arith.constant 0 : i32
    return %arg0, %c0_i32, %c0_i32_0 : i32, i32, i32
  }
  func.func @transform_3(%arg0: i32) -> (i32, i32) {
    %c0_i32 = arith.constant 0 : i32
    %c0_i32_0 = arith.constant 0 : i32
    %c0_i32_1 = arith.constant 0 : i32
    return %c0_i32, %c0_i32_0 : i32, i32
  }
  func.func @transform_4(%arg0: i32) -> (i32, i32) {
    %c0_i32 = arith.constant 0 : i32
    %c0_i32_0 = arith.constant 0 : i32
    %c0_i32_1 = arith.constant 0 : i32
    return %c0_i32, %c0_i32_0 : i32, i32
  }
  func.func @transform_5(%arg0: i32) -> (i32, i32) {
    %c0_i32 = arith.constant 0 : i32
    %c0_i32_0 = arith.constant 0 : i32
    %c0_i32_1 = arith.constant 0 : i32
    return %c0_i32, %c0_i32_0 : i32, i32
  }
  func.func @transform_6(%arg0: i32) -> (i32, i32, i32) {
    %c0_i32 = arith.constant 0 : i32
    %c0_i32_0 = arith.constant 0 : i32
    %c0_i32_1 = arith.constant 0 : i32
    %c0_i32_2 = arith.constant 0 : i32
    return %c0_i32, %c0_i32_0, %c0_i32_1 : i32, i32, i32
  }
  func.func @transform_7(%arg0: i32) -> (i32, i32) {
    %c0_i32 = arith.constant 0 : i32
    %c0_i32_0 = arith.constant 0 : i32
    %c0_i32_1 = arith.constant 0 : i32
    return %c0_i32, %c0_i32_0 : i32, i32
  }
  func.func @transform_8(%arg0: i32) -> (i32, i32) {
    %c0_i32 = arith.constant 0 : i32
    %c0_i32_0 = arith.constant 0 : i32
    %c0_i32_1 = arith.constant 0 : i32
    return %c0_i32, %c0_i32_0 : i32, i32
  }
  func.func @transform_9(%arg0: i32) -> (i32, i32) {
    %c0_i32 = arith.constant 0 : i32
    %c0_i32_0 = arith.constant 0 : i32
    %c0_i32_1 = arith.constant 0 : i32
    return %c0_i32, %c0_i32_0 : i32, i32
  }
  func.func @transform_10(%arg0: i32) -> (i32, i32) {
    %c0_i32 = arith.constant 0 : i32
    %c0_i32_0 = arith.constant 0 : i32
    %c0_i32_1 = arith.constant 0 : i32
    return %c0_i32, %c0_i32_0 : i32, i32
  }
  func.func @transform_11(%arg0: i32) -> (i32, i32, i32) {
    %c0_i32 = arith.constant 0 : i32
    %c0_i32_0 = arith.constant 0 : i32
    %c0_i32_1 = arith.constant 0 : i32
    return %arg0, %c0_i32, %c0_i32_0 : i32, i32, i32
  }
  func.func @transform_12(%arg0: i32) -> (i32, i32, i32) {
    %c0_i32 = arith.constant 0 : i32
    %c0_i32_0 = arith.constant 0 : i32
    %c0_i32_1 = arith.constant 0 : i32
    return %arg0, %c0_i32, %c0_i32_0 : i32, i32, i32
  }
}

module attributes {stable_mosaic.version = 11 : i64} {
  func.func @_ln_kernel(%arg0: i32, %arg1: memref<16x128xf32, #tpu.memory_space<vmem>>, %arg2: memref<1x128xf32, #tpu.memory_space<vmem>>, %arg3: memref<1x128xf32, #tpu.memory_space<vmem>>, %arg4: memref<16x128xf32, #tpu.memory_space<vmem>>) attributes {dimension_semantics = [#tpu.dimension_semantics<parallel>], iteration_bounds = array<i64: 1>, scalar_prefetch = 0 : i64, scratch_operands = 0 : i64, tpu.core_type = #tpu.core_type<tc>, window_params = [{transform_indices = @transform_0, window_bounds = array<i64: 16, 128>}, {pipeline_mode = #tpu.pipeline_mode<synchronous>, transform_indices = @transform_1, window_bounds = array<i64: 1, 128>}, {pipeline_mode = #tpu.pipeline_mode<synchronous>, transform_indices = @transform_2, window_bounds = array<i64: 1, 128>}, {transform_indices = @transform_3, window_bounds = array<i64: 16, 128>}]} {
    %c0 = arith.constant 0 : index
    %c0_0 = arith.constant 0 : index
    %0 = vector.load %arg1[%c0, %c0_0] : memref<16x128xf32, #tpu.memory_space<vmem>>, vector<16x128xf32>
    %c0_1 = arith.constant 0 : index
    %c0_2 = arith.constant 0 : index
    %1 = vector.load %arg2[%c0_1, %c0_2] : memref<1x128xf32, #tpu.memory_space<vmem>>, vector<1x128xf32>
    %c0_3 = arith.constant 0 : index
    %c0_4 = arith.constant 0 : index
    %2 = vector.load %arg3[%c0_3, %c0_4] : memref<1x128xf32, #tpu.memory_space<vmem>>, vector<1x128xf32>
    %cst = arith.constant dense<0.000000e+00> : vector<16xf32>
    %3 = vector.multi_reduction <add>, %0, %cst [1] : vector<16x128xf32> to vector<16xf32>
    %4 = vector.shape_cast %3 : vector<16xf32> to vector<16x1xf32>
    %cst_5 = arith.constant 1.280000e+02 : f32
    %5 = vector.broadcast %cst_5 : f32 to vector<16x1xf32>
    %6 = arith.divf %4, %5 : vector<16x1xf32>
    %7 = vector.broadcast %6 : vector<16x1xf32> to vector<16x128xf32>
    %8 = arith.subf %0, %7 : vector<16x128xf32>
    %9 = arith.mulf %8, %8 : vector<16x128xf32>
    %cst_6 = arith.constant dense<0.000000e+00> : vector<16xf32>
    %10 = vector.multi_reduction <add>, %9, %cst_6 [1] : vector<16x128xf32> to vector<16xf32>
    %11 = vector.shape_cast %10 : vector<16xf32> to vector<16x1xf32>
    %cst_7 = arith.constant 1.280000e+02 : f32
    %12 = vector.broadcast %cst_7 : f32 to vector<16x1xf32>
    %13 = arith.divf %11, %12 : vector<16x1xf32>
    %14 = vector.broadcast %6 : vector<16x1xf32> to vector<16x128xf32>
    %15 = arith.subf %0, %14 : vector<16x128xf32>
    %cst_8 = arith.constant 9.99999974E-6 : f32
    %16 = vector.broadcast %cst_8 : f32 to vector<16x1xf32>
    %17 = arith.addf %13, %16 : vector<16x1xf32>
    %18 = math.rsqrt %17 : vector<16x1xf32>
    %19 = vector.broadcast %18 : vector<16x1xf32> to vector<16x128xf32>
    %20 = arith.mulf %15, %19 : vector<16x128xf32>
    %21 = vector.broadcast %1 : vector<1x128xf32> to vector<16x128xf32>
    %22 = arith.mulf %20, %21 : vector<16x128xf32>
    %23 = vector.broadcast %2 : vector<1x128xf32> to vector<16x128xf32>
    %24 = arith.addf %22, %23 : vector<16x128xf32>
    %c0_9 = arith.constant 0 : index
    %c0_10 = arith.constant 0 : index
    %25 = vector.load %arg4[%c0_9, %c0_10] : memref<16x128xf32, #tpu.memory_space<vmem>>, vector<16x128xf32>
    tpu.vector_store %arg4[%c0_9, %c0_10], %24 {strides = array<i32>} : memref<16x128xf32, #tpu.memory_space<vmem>>, vector<16x128xf32>,
    return
  }
  func.func @transform_0(%arg0: i32) -> (i32, i32) {
    %c0_i32 = arith.constant 0 : i32
    %c0_i32_0 = arith.constant 0 : i32
    return %arg0, %c0_i32 : i32, i32
  }
  func.func @transform_1(%arg0: i32) -> (i32, i32) {
    %c0_i32 = arith.constant 0 : i32
    %c0_i32_0 = arith.constant 0 : i32
    %c0_i32_1 = arith.constant 0 : i32
    return %c0_i32, %c0_i32_0 : i32, i32
  }
  func.func @transform_2(%arg0: i32) -> (i32, i32) {
    %c0_i32 = arith.constant 0 : i32
    %c0_i32_0 = arith.constant 0 : i32
    %c0_i32_1 = arith.constant 0 : i32
    return %c0_i32, %c0_i32_0 : i32, i32
  }
  func.func @transform_3(%arg0: i32) -> (i32, i32) {
    %c0_i32 = arith.constant 0 : i32
    %c0_i32_0 = arith.constant 0 : i32
    return %arg0, %c0_i32 : i32, i32
  }
}

module attributes {stable_mosaic.version = 11 : i64} {
  func.func @_fc_l2norm_kernel(%arg0: i32, %arg1: memref<1x128x16xf32, #tpu.memory_space<vmem>>, %arg2: memref<16x8xf32, #tpu.memory_space<vmem>>, %arg3: memref<1x8xf32, #tpu.memory_space<vmem>>, %arg4: memref<1x128x8xf32, #tpu.memory_space<vmem>>) attributes {dimension_semantics = [#tpu.dimension_semantics<parallel>], iteration_bounds = array<i64: 2>, scalar_prefetch = 0 : i64, scratch_operands = 0 : i64, tpu.core_type = #tpu.core_type<tc>, window_params = [{transform_indices = @transform_0, window_bounds = array<i64: 1, 128, 16>}, {pipeline_mode = #tpu.pipeline_mode<synchronous>, transform_indices = @transform_1, window_bounds = array<i64: 16, 8>}, {pipeline_mode = #tpu.pipeline_mode<synchronous>, transform_indices = @transform_2, window_bounds = array<i64: 1, 8>}, {transform_indices = @transform_3, window_bounds = array<i64: 1, 128, 8>}]} {
    %c0 = arith.constant 0 : index
    %c0_0 = arith.constant 0 : index
    %c0_1 = arith.constant 0 : index
    %0 = vector.load %arg1[%c0, %c0_0, %c0_1] : memref<1x128x16xf32, #tpu.memory_space<vmem>>, vector<1x128x16xf32>
    %1 = vector.shape_cast %0 : vector<1x128x16xf32> to vector<128x16xf32>
    %c0_2 = arith.constant 0 : index
    %c0_3 = arith.constant 0 : index
    %2 = vector.load %arg2[%c0_2, %c0_3] : memref<16x8xf32, #tpu.memory_space<vmem>>, vector<16x8xf32>
    %cst = arith.constant dense<0.000000e+00> : vector<128x8xf32>
    %3 = tpu.matmul %1, %2, %cst {dimension_numbers = #tpu.dot_dimension_numbers<[1], [0], [0], [1], [0, 0, 1, 1], [], []>} : vector<128x16xf32>, vector<16x8xf32>, vector<128x8xf32> -> vector<128x8xf32>
    %c0_4 = arith.constant 0 : index
    %c0_5 = arith.constant 0 : index
    %4 = vector.load %arg3[%c0_4, %c0_5] : memref<1x8xf32, #tpu.memory_space<vmem>>, vector<1x8xf32>
    %5 = vector.broadcast %4 : vector<1x8xf32> to vector<128x8xf32>
    %6 = arith.addf %3, %5 : vector<128x8xf32>
    %7 = arith.mulf %6, %6 : vector<128x8xf32>
    %cst_6 = arith.constant dense<0.000000e+00> : vector<128xf32>
    %8 = vector.multi_reduction <add>, %7, %cst_6 [1] : vector<128x8xf32> to vector<128xf32>
    %9 = vector.shape_cast %8 : vector<128xf32> to vector<128x1xf32>
    %cst_7 = arith.constant dense<0.000000e+00> : vector<1xf32>
    %10 = vector.multi_reduction <add>, %9, %cst_7 [0] : vector<128x1xf32> to vector<1xf32>
    %11 = vector.shape_cast %10 : vector<1xf32> to vector<1x1xf32>
    %12 = math.sqrt %11 : vector<1x1xf32>
    %cst_8 = arith.constant 9.99999996E-13 : f32
    %13 = vector.broadcast %cst_8 : f32 to vector<1x1xf32>
    %14 = arith.maximumf %12, %13 : vector<1x1xf32>
    %15 = vector.broadcast %14 : vector<1x1xf32> to vector<128x8xf32>
    %16 = arith.divf %6, %15 : vector<128x8xf32>
    %c0_9 = arith.constant 0 : index
    %c0_10 = arith.constant 0 : index
    %c0_11 = arith.constant 0 : index
    %17 = vector.load %arg4[%c0_9, %c0_10, %c0_11] : memref<1x128x8xf32, #tpu.memory_space<vmem>>, vector<1x128x8xf32>
    %18 = vector.shape_cast %17 : vector<1x128x8xf32> to vector<128x8xf32>
    %19 = vector.shape_cast %16 : vector<128x8xf32> to vector<1x128x8xf32>
    tpu.vector_store %arg4[%c0_9, %c0_10, %c0_11], %19 {strides = array<i32>} : memref<1x128x8xf32, #tpu.memory_space<vmem>>, vector<1x128x8xf32>,
    return
  }
  func.func @transform_0(%arg0: i32) -> (i32, i32, i32) {
    %c0_i32 = arith.constant 0 : i32
    %c0_i32_0 = arith.constant 0 : i32
    %c0_i32_1 = arith.constant 0 : i32
    return %arg0, %c0_i32, %c0_i32_0 : i32, i32, i32
  }
  func.func @transform_1(%arg0: i32) -> (i32, i32) {
    %c0_i32 = arith.constant 0 : i32
    %c0_i32_0 = arith.constant 0 : i32
    %c0_i32_1 = arith.constant 0 : i32
    return %c0_i32, %c0_i32_0 : i32, i32
  }
  func.func @transform_2(%arg0: i32) -> (i32, i32) {
    %c0_i32 = arith.constant 0 : i32
    %c0_i32_0 = arith.constant 0 : i32
    %c0_i32_1 = arith.constant 0 : i32
    return %c0_i32, %c0_i32_0 : i32, i32
  }
  func.func @transform_3(%arg0: i32) -> (i32, i32, i32) {
    %c0_i32 = arith.constant 0 : i32
    %c0_i32_0 = arith.constant 0 : i32
    %c0_i32_1 = arith.constant 0 : i32
    return %arg0, %c0_i32, %c0_i32_0 : i32, i32, i32
  }
}

</mosaic_0001>

<llo_original>
// kernel: boq_forward.18
$region0: #{boq_forward.18}
  #allocation0 [shape = 'u32[]', space=smem, size = 0x4, offset = 0x4, fixed_abs, tag = 'smem constant byte address 0x4 - core index']
  #allocation1 [shape = 'u32[144,128]{1,0:T(1,128)}', space=vmem, size = 0x12000, scoped, tag = 'internal scratch']
  %s0 = inlined_call_operand.vmem [shape: f32[128,72], index: 0, kind: input, shape index: {}]
  %s1 = inlined_call_operand.vmem [shape: f32[72,128], index: 1, kind: input, shape index: {}]
  %s2 = inlined_call_operand.vmem [shape: f32[1,128], index: 2, kind: input, shape index: {}]
  %s3 = inlined_call_operand.vmem [shape: f32[1,128], index: 3, kind: input, shape index: {}]
  %s4 = inlined_call_operand.vmem [shape: f32[1,128], index: 4, kind: input, shape index: {}]
  %s5 = inlined_call_operand.vmem [shape: f32[128,128], index: 5, kind: output, shape index: {}]
  %s6 = sld [smem:[#allocation0]]
  $region30: #{boq_forward.18} parent=0
    _
  %s8 = ssub.s32 1, %s6
  %s9 = scalar_select 0, %s8, %s6
  // Predicated region
  $region2: #{boq_forward.18} parent=0 // pred_check
    _
  $region3: #{boq_forward.18} parent=0 // pred_check_branch
    %11 = sbr.rel (0) target = $region5
  $region4: #{boq_forward.18} parent=0 // pred_region
    _
  $region5: #{boq_forward.18} parent=0 // pred_fallthru
    _
  // Predicated region
  $region6: #{boq_forward.18} parent=0 // pred_check
    _
  $region7: #{boq_forward.18} parent=0 // pred_check_branch
    %13 = sbr.rel (0) target = $region9
  $region8: #{boq_forward.18} parent=0 // pred_region
    _
  $region9: #{boq_forward.18} parent=0 // pred_fallthru
    _
  // Predicated region
  $region10: #{boq_forward.18} parent=0 // pred_check
    _
  $region11: #{boq_forward.18} parent=0 // pred_check_branch
    %15 = sbr.rel (0) target = $region13
  $region12: #{boq_forward.18} parent=0 // pred_region
    _
  $region13: #{boq_forward.18} parent=0 // pred_fallthru
    _
  // Predicated region
  $region14: #{boq_forward.18} parent=0 // pred_check
    _
  $region15: #{boq_forward.18} parent=0 // pred_check_branch
    %17 = sbr.rel (0) target = $region17
  $region16: #{boq_forward.18} parent=0 // pred_region
    _
  $region17: #{boq_forward.18} parent=0 // pred_fallthru
    _
  // Predicated region
  $region18: #{boq_forward.18} parent=0 // pred_check
    _
  $region19: #{boq_forward.18} parent=0 // pred_check_branch
    %19 = sbr.rel (0) target = $region21
  $region20: #{boq_forward.18} parent=0 // pred_region
    _
  $region21: #{boq_forward.18} parent=0 // pred_fallthru
    _
  %v21 = vld [vmem:[%s0] sm:$0xff]
  %v22 = vld [vmem:[%s0 + $0x8] sm:$0xff]
  %v23 = vld [vmem:[%s0 + $0x10] sm:$0xff]
  %v24 = vld [vmem:[%s0 + $0x18] sm:$0xff]
  %v25 = vld [vmem:[%s0 + $0x20] sm:$0xff]
  %v26 = vld [vmem:[%s0 + $0x28] sm:$0xff]
  %v27 = vld [vmem:[%s0 + $0x30] sm:$0xff]
  %v28 = vld [vmem:[%s0 + $0x38] sm:$0xff]
  %v29 = vld [vmem:[%s0 + $0x40] sm:$0xff]
  %v30 = vld [vmem:[%s0 + $0x48] sm:$0xff]
  %v31 = vld [vmem:[%s0 + $0x50] sm:$0xff]
  %v32 = vld [vmem:[%s0 + $0x58] sm:$0xff]
  %v33 = vld [vmem:[%s0 + $0x60] sm:$0xff]
  %v34 = vld [vmem:[%s0 + $0x68] sm:$0xff]
  %v35 = vld [vmem:[%s0 + $0x70] sm:$0xff]
  %v36 = vld [vmem:[%s0 + $0x78] sm:$0xff]
  %v37 = vpack.c.bf16 %v22, %v21
  %v38 = vpack.c.bf16 %v24, %v23
  %v39 = vpack.c.bf16 %v26, %v25
  %v40 = vpack.c.bf16 %v28, %v27
  %v41 = vpack.c.bf16 %v30, %v29
  %v42 = vpack.c.bf16 %v32, %v31
  %v43 = vpack.c.bf16 %v34, %v33
  %v44 = vpack.c.bf16 %v36, %v35
  %v45 = vld [vmem:[%s1] sm:$0xff]
  %v46 = vld [vmem:[%s1 + $0x8] sm:$0xff]
  %v47 = vld [vmem:[%s1 + $0x10] sm:$0xff]
  %v48 = vld [vmem:[%s1 + $0x18] sm:$0xff]
  %v49 = vld [vmem:[%s1 + $0x20] sm:$0xff]
  %v50 = vld [vmem:[%s1 + $0x28] sm:$0xff]
  %v51 = vld [vmem:[%s1 + $0x30] sm:$0xff]
  %v52 = vld [vmem:[%s1 + $0x38] sm:$0xff]
  %v53 = vld [vmem:[%s1 + $0x40] sm:$0xff]
  %v54 = vpack.c.bf16 %v46, %v45
  %v55 = vpack.c.bf16 %v48, %v47
  %v56 = vpack.c.bf16 %v50, %v49
  %v57 = vpack.c.bf16 %v52, %v51
  %v58 = vpack.c.bf16 %v53, %v53
  %v59 = vld [vmem:[%s2] sm:$0x1]
  %v61 = vlaneseq
  %v62 = vshrl.u32 %v61, 7
  %v63 = vsub.s32 0, %v62
  %v64 = vrot.slane %v59, %v63
  %vm66 = vcmask 588800
  %v68 = vsel %vm66, %v37, 0
  %v71 = vsel %vm66, %v38, 0
  %v74 = vsel %vm66, %v39, 0
  %v77 = vsel %vm66, %v40, 0
  %v80 = vsel %vm66, %v41, 0
  %v83 = vsel %vm66, %v42, 0
  %v86 = vsel %vm66, %v43, 0
  %v89 = vsel %vm66, %v44, 0
  %vm91 = vcmask 1043456
  %v93 = vsel %vm91, %v58, 0
  %95 = vmatprep.subr.bf16.mxu0 0
  %96 = vmatpush1.bf16.msra.mxu0 %v54
  %97 = vmatprep.subr.bf16.mxu0 0
  %98 = vmatpush1.bf16.msra.mxu0 %v55
  %99 = vmatprep.subr.bf16.mxu0 0
  %100 = vmatpush1.bf16.msra.mxu0 %v56
  %101 = vmatprep.subr.bf16.mxu0 0
  %102 = vmatpush1.bf16.msra.mxu0 %v57
  %103 = vmatprep.subr.bf16.mxu0 0
  %104 = vmatpush1.bf16.msra.mxu0 %v93
  %105 = vmatprep.subr.bf16.mxu0 0
  %106 = vmatpush1.bf16.msra.mxu0 0
  %107 = vmatprep.subr.bf16.mxu0 0
  %108 = vmatpush1.bf16.msra.mxu0 0
  %109 = vmatprep.subr.bf16.mxu0 0
  %110 = vmatpush1.bf16.msra.mxu0 0
  %111 = vmatprep.subr.bf16.mxu0 0
  %112 = vmatpush1.bf16.msra.mxu0 0
  %113 = vmatprep.subr.bf16.mxu0 0
  %114 = vmatpush1.bf16.msra.mxu0 0
  %115 = vmatprep.subr.bf16.mxu0 0
  %116 = vmatpush1.bf16.msra.mxu0 0
  %117 = vmatprep.subr.bf16.mxu0 0
  %118 = vmatpush1.bf16.msra.mxu0 0
  %119 = vmatprep.subr.bf16.mxu0 0
  %120 = vmatpush1.bf16.msra.mxu0 0
  %121 = vmatprep.subr.bf16.mxu0 0
  %122 = vmatpush1.bf16.msra.mxu0 0
  %123 = vmatprep.subr.bf16.mxu0 0
  %124 = vmatpush1.bf16.msra.mxu0 0
  %125 = vmatprep.subr.bf16.mxu0 0
  %126 = vmatpush1.bf16.msra.mxu0 0
  %127 = vmatprep.mubr.bf16.mxu0 0
  %128 = vmatmul.mubr.bf16.gmra.mrb[0].mxu0 %v68
  %v129 = vpop.f32.mrb[0].mxu0
  %v130 = vadd.f32 %v64, %v129
  %v131 = vpop.f32.mrb[0].mxu0
  %v132 = vpop.f32.mrb[0].mxu0
  %v133 = vadd.f32 %v64, %v132
  %v134 = vpop.f32.mrb[0].mxu0
  %135 = vmatprep.mubr.bf16.mxu0 0
  %136 = vmatmul.mubr.bf16.gmra.mrb[0].mxu0 %v71
  %v137 = vpop.f32.mrb[0].mxu0
  %v138 = vadd.f32 %v64, %v137
  %v139 = vpop.f32.mrb[0].mxu0
  %v140 = vpop.f32.mrb[0].mxu0
  %v141 = vadd.f32 %v64, %v140
  %v142 = vpop.f32.mrb[0].mxu0
  %143 = vmatprep.mubr.bf16.mxu0 0
  %144 = vmatmul.mubr.bf16.gmra.mrb[0].mxu0 %v74
  %v145 = vpop.f32.mrb[0].mxu0
  %v146 = vadd.f32 %v64, %v145
  %v147 = vpop.f32.mrb[0].mxu0
  %v148 = vpop.f32.mrb[0].mxu0
  %v149 = vadd.f32 %v64, %v148
  %v150 = vpop.f32.mrb[0].mxu0
  %151 = vmatprep.mubr.bf16.mxu0 0
  %152 = vmatmul.mubr.bf16.gmra.mrb[0].mxu0 %v77
  %v153 = vpop.f32.mrb[0].mxu0
  %v154 = vadd.f32 %v64, %v153
  %v155 = vpop.f32.mrb[0].mxu0
  %v156 = vpop.f32.mrb[0].mxu0
  %v157 = vadd.f32 %v64, %v156
  %v158 = vpop.f32.mrb[0].mxu0
  %159 = vmatprep.mubr.bf16.mxu0 0
  %160 = vmatmul.mubr.bf16.gmra.mrb[0].mxu0 %v80
  %v161 = vpop.f32.mrb[0].mxu0
  %v162 = vadd.f32 %v64, %v161
  %v163 = vpop.f32.mrb[0].mxu0
  %v164 = vpop.f32.mrb[0].mxu0
  %v165 = vadd.f32 %v64, %v164
  %v166 = vpop.f32.mrb[0].mxu0
  %167 = vmatprep.mubr.bf16.mxu0 0
  %168 = vmatmul.mubr.bf16.gmra.mrb[0].mxu0 %v83
  %v169 = vpop.f32.mrb[0].mxu0
  %v170 = vadd.f32 %v64, %v169
  %v171 = vpop.f32.mrb[0].mxu0
  %v172 = vpop.f32.mrb[0].mxu0
  %v173 = vadd.f32 %v64, %v172
  %v174 = vpop.f32.mrb[0].mxu0
  %175 = vmatprep.mubr.bf16.mxu0 0
  %176 = vmatmul.mubr.bf16.gmra.mrb[0].mxu0 %v86
  %v177 = vpop.f32.mrb[0].mxu0
  %v178 = vadd.f32 %v64, %v177
  %v179 = vpop.f32.mrb[0].mxu0
  %v180 = vpop.f32.mrb[0].mxu0
  %v181 = vadd.f32 %v64, %v180
  %v182 = vpop.f32.mrb[0].mxu0
  %183 = vmatprep.mubr.bf16.mxu0 0
  %184 = vmatmul.mubr.bf16.gmra.mrb[0].mxu0 %v89
  %v185 = vpop.f32.mrb[0].mxu0
  %v186 = vadd.f32 %v64, %v185
  %v187 = vpop.f32.mrb[0].mxu0
  %v188 = vpop.f32.mrb[0].mxu0
  %v189 = vadd.f32 %v64, %v188
  %v190 = vpop.f32.mrb[0].mxu0
  %191 = vdwg.mxu0
  %v192 = vld [vmem:[%s3] sm:$0x1]
  %v193 = vld [vmem:[%s4] sm:$0x1]
  %194 = vadd.xlane.f32.xlu0 %v130
  %v195 = vpop.xlane.xlu0 %194
  %196 = vadd.xlane.f32.xlu0 %v133
  %v197 = vpop.xlane.xlu0 %196
  %198 = vadd.xlane.f32.xlu0 %v138
  %v199 = vpop.xlane.xlu0 %198
  %200 = vadd.xlane.f32.xlu0 %v141
  %v201 = vpop.xlane.xlu0 %200
  %202 = vadd.xlane.f32.xlu0 %v146
  %v203 = vpop.xlane.xlu0 %202
  %204 = vadd.xlane.f32.xlu0 %v149
  %v205 = vpop.xlane.xlu0 %204
  %206 = vadd.xlane.f32.xlu0 %v154
  %v207 = vpop.xlane.xlu0 %206
  %208 = vadd.xlane.f32.xlu0 %v157
  %v209 = vpop.xlane.xlu0 %208
  %210 = vadd.xlane.f32.xlu0 %v162
  %v211 = vpop.xlane.xlu0 %210
  %212 = vadd.xlane.f32.xlu0 %v165
  %v213 = vpop.xlane.xlu0 %212
  %214 = vadd.xlane.f32.xlu0 %v170
  %v215 = vpop.xlane.xlu0 %214
  %216 = vadd.xlane.f32.xlu0 %v173
  %v217 = vpop.xlane.xlu0 %216
  %218 = vadd.xlane.f32.xlu0 %v178
  %v219 = vpop.xlane.xlu0 %218
  %220 = vadd.xlane.f32.xlu0 %v181
  %v221 = vpop.xlane.xlu0 %220
  %222 = vadd.xlane.f32.xlu0 %v186
  %v223 = vpop.xlane.xlu0 %222
  %224 = vadd.xlane.f32.xlu0 %v189
  %v225 = vpop.xlane.xlu0 %224
  %v226 = vrcp.pop 128.0
  %v227 = vmul.f32 %v195, %v226
  %v228 = vmul.f32 %v197, %v226
  %v229 = vmul.f32 %v199, %v226
  %v230 = vmul.f32 %v201, %v226
  %v231 = vmul.f32 %v203, %v226
  %v232 = vmul.f32 %v205, %v226
  %v233 = vmul.f32 %v207, %v226
  %v234 = vmul.f32 %v209, %v226
  %v235 = vmul.f32 %v211, %v226
  %v236 = vmul.f32 %v213, %v226
  %v237 = vmul.f32 %v215, %v226
  %v238 = vmul.f32 %v217, %v226
  %v239 = vmul.f32 %v219, %v226
  %v240 = vmul.f32 %v221, %v226
  %v241 = vmul.f32 %v223, %v226
  %v242 = vmul.f32 %v225, %v226
  %v243 = vsub.f32 %v130, %v227
  %v244 = vsub.f32 %v133, %v228
  %v245 = vsub.f32 %v138, %v229
  %v246 = vsub.f32 %v141, %v230
  %v247 = vsub.f32 %v146, %v231
  %v248 = vsub.f32 %v149, %v232
  %v249 = vsub.f32 %v154, %v233
  %v250 = vsub.f32 %v157, %v234
  %v251 = vsub.f32 %v162, %v235
  %v252 = vsub.f32 %v165, %v236
  %v253 = vsub.f32 %v170, %v237
  %v254 = vsub.f32 %v173, %v238
  %v255 = vsub.f32 %v178, %v239
  %v256 = vsub.f32 %v181, %v240
  %v257 = vsub.f32 %v186, %v241
  %v258 = vsub.f32 %v189, %v242
  %v259 = vmul.f32 %v243, %v243
  %v260 = vmul.f32 %v244, %v244
  %v261 = vmul.f32 %v245, %v245
  %v262 = vmul.f32 %v246, %v246
  %v263 = vmul.f32 %v247, %v247
  %v264 = vmul.f32 %v248, %v248
  %v265 = vmul.f32 %v249, %v249
  %v266 = vmul.f32 %v250, %v250
  %v267 = vmul.f32 %v251, %v251
  %v268 = vmul.f32 %v252, %v252
  %v269 = vmul.f32 %v253, %v253
  %v270 = vmul.f32 %v254, %v254
  %v271 = vmul.f32 %v255, %v255
  %v272 = vmul.f32 %v256, %v256
  %v273 = vmul.f32 %v257, %v257
  %v274 = vmul.f32 %v258, %v258
  %275 = vadd.xlane.f32.xlu0 %v259
  %v276 = vpop.xlane.xlu0 %275
  %277 = vadd.xlane.f32.xlu0 %v260
  %v278 = vpop.xlane.xlu0 %277
  %279 = vadd.xlane.f32.xlu0 %v261
  %v280 = vpop.xlane.xlu0 %279
  %281 = vadd.xlane.f32.xlu0 %v262
  %v282 = vpop.xlane.xlu0 %281
  %283 = vadd.xlane.f32.xlu0 %v263
  %v284 = vpop.xlane.xlu0 %283
  %285 = vadd.xlane.f32.xlu0 %v264
  %v286 = vpop.xlane.xlu0 %285
  %287 = vadd.xlane.f32.xlu0 %v265
  %v288 = vpop.xlane.xlu0 %287
  %289 = vadd.xlane.f32.xlu0 %v266
  %v290 = vpop.xlane.xlu0 %289
  %291 = vadd.xlane.f32.xlu0 %v267
  %v292 = vpop.xlane.xlu0 %291
  %293 = vadd.xlane.f32.xlu0 %v268
  %v294 = vpop.xlane.xlu0 %293
  %295 = vadd.xlane.f32.xlu0 %v269
  %v296 = vpop.xlane.xlu0 %295
  %297 = vadd.xlane.f32.xlu0 %v270
  %v298 = vpop.xlane.xlu0 %297
  %299 = vadd.xlane.f32.xlu0 %v271
  %v300 = vpop.xlane.xlu0 %299
  %301 = vadd.xlane.f32.xlu0 %v272
  %v302 = vpop.xlane.xlu0 %301
  %303 = vadd.xlane.f32.xlu0 %v273
  %v304 = vpop.xlane.xlu0 %303
  %305 = vadd.xlane.f32.xlu0 %v274
  %v306 = vpop.xlane.xlu0 %305
  %v307 = vmul.f32 %v276, %v226
  %v308 = vmul.f32 %v278, %v226
  %v309 = vmul.f32 %v280, %v226
  %v310 = vmul.f32 %v282, %v226
  %v311 = vmul.f32 %v284, %v226
  %v312 = vmul.f32 %v286, %v226
  %v313 = vmul.f32 %v288, %v226
  %v314 = vmul.f32 %v290, %v226
  %v315 = vmul.f32 %v292, %v226
  %v316 = vmul.f32 %v294, %v226
  %v317 = vmul.f32 %v296, %v226
  %v318 = vmul.f32 %v298, %v226
  %v319 = vmul.f32 %v300, %v226
  %v320 = vmul.f32 %v302, %v226
  %v321 = vmul.f32 %v304, %v226
  %v322 = vmul.f32 %v306, %v226
  %v323 = vadd.f32 %v307, 1e-05
  %v324 = vadd.f32 %v308, 1e-05
  %v325 = vadd.f32 %v309, 1e-05
  %v326 = vadd.f32 %v310, 1e-05
  %v327 = vadd.f32 %v311, 1e-05
  %v328 = vadd.f32 %v312, 1e-05
  %v329 = vadd.f32 %v313, 1e-05
  %v330 = vadd.f32 %v314, 1e-05
  %v331 = vadd.f32 %v315, 1e-05
  %v332 = vadd.f32 %v316, 1e-05
  %v333 = vadd.f32 %v317, 1e-05
  %v334 = vadd.f32 %v318, 1e-05
  %v335 = vadd.f32 %v319, 1e-05
  %v336 = vadd.f32 %v320, 1e-05
  %v337 = vadd.f32 %v321, 1e-05
  %v338 = vadd.f32 %v322, 1e-05
  %v339 = vrsqrt.pop %v323
  %v340 = vrsqrt.pop %v324
  %v341 = vrsqrt.pop %v325
  %v342 = vrsqrt.pop %v326
  %v343 = vrsqrt.pop %v327
  %v344 = vrsqrt.pop %v328
  %v345 = vrsqrt.pop %v329
  %v346 = vrsqrt.pop %v330
  %v347 = vrsqrt.pop %v331
  %v348 = vrsqrt.pop %v332
  %v349 = vrsqrt.pop %v333
  %v350 = vrsqrt.pop %v334
  %v351 = vrsqrt.pop %v335
  %v352 = vrsqrt.pop %v336
  %v353 = vrsqrt.pop %v337
  %v354 = vrsqrt.pop %v338
  %v355 = vmul.f32 %v243, %v339
  %v356 = vmul.f32 %v244, %v340
  %v357 = vmul.f32 %v245, %v341
  %v358 = vmul.f32 %v246, %v342
  %v359 = vmul.f32 %v247, %v343
  %v360 = vmul.f32 %v248, %v344
  %v361 = vmul.f32 %v249, %v345
  %v362 = vmul.f32 %v250, %v346
  %v363 = vmul.f32 %v251, %v347
  %v364 = vmul.f32 %v252, %v348
  %v365 = vmul.f32 %v253, %v349
  %v366 = vmul.f32 %v254, %v350
  %v367 = vmul.f32 %v255, %v351
  %v368 = vmul.f32 %v256, %v352
  %v369 = vmul.f32 %v257, %v353
  %v370 = vmul.f32 %v258, %v354
  %v372 = vlaneseq
  %v373 = vshrl.u32 %v372, 7
  %v374 = vsub.s32 0, %v373
  %v375 = vrot.slane %v192, %v374
  %v377 = vmul.f32 %v355, %v375
  %v378 = vmul.f32 %v356, %v375
  %v379 = vmul.f32 %v357, %v375
  %v380 = vmul.f32 %v358, %v375
  %v381 = vmul.f32 %v359, %v375
  %v382 = vmul.f32 %v360, %v375
  %v383 = vmul.f32 %v361, %v375
  %v384 = vmul.f32 %v362, %v375
  %v385 = vmul.f32 %v363, %v375
  %v386 = vmul.f32 %v364, %v375
  %v387 = vmul.f32 %v365, %v375
  %v388 = vmul.f32 %v366, %v375
  %v389 = vmul.f32 %v367, %v375
  %v390 = vmul.f32 %v368, %v375
  %v391 = vmul.f32 %v369, %v375
  %v392 = vmul.f32 %v370, %v375
  %v394 = vlaneseq
  %v395 = vshrl.u32 %v394, 7
  %v396 = vsub.s32 0, %v395
  %v397 = vrot.slane %v193, %v396
  %v399 = vadd.f32 %v377, %v397
  %v400 = vadd.f32 %v378, %v397
  %v401 = vadd.f32 %v379, %v397
  %v402 = vadd.f32 %v380, %v397
  %v403 = vadd.f32 %v381, %v397
  %v404 = vadd.f32 %v382, %v397
  %v405 = vadd.f32 %v383, %v397
  %v406 = vadd.f32 %v384, %v397
  %v407 = vadd.f32 %v385, %v397
  %v408 = vadd.f32 %v386, %v397
  %v409 = vadd.f32 %v387, %v397
  %v410 = vadd.f32 %v388, %v397
  %v411 = vadd.f32 %v389, %v397
  %v412 = vadd.f32 %v390, %v397
  %v413 = vadd.f32 %v391, %v397
  %v414 = vadd.f32 %v392, %v397
  %415 = vst [vmem:[%s5] sm:$0xff] %v399
  %416 = vst [vmem:[%s5 + $0x8] sm:$0xff] %v400
  %417 = vst [vmem:[%s5 + $0x10] sm:$0xff] %v401
  %418 = vst [vmem:[%s5 + $0x18] sm:$0xff] %v402
  %419 = vst [vmem:[%s5 + $0x20] sm:$0xff] %v403
  %420 = vst [vmem:[%s5 + $0x28] sm:$0xff] %v404
  %421 = vst [vmem:[%s5 + $0x30] sm:$0xff] %v405
  %422 = vst [vmem:[%s5 + $0x38] sm:$0xff] %v406
  %423 = vst [vmem:[%s5 + $0x40] sm:$0xff] %v407
  %424 = vst [vmem:[%s5 + $0x48] sm:$0xff] %v408
  %425 = vst [vmem:[%s5 + $0x50] sm:$0xff] %v409
  %426 = vst [vmem:[%s5 + $0x58] sm:$0xff] %v410
  %427 = vst [vmem:[%s5 + $0x60] sm:$0xff] %v411
  %428 = vst [vmem:[%s5 + $0x68] sm:$0xff] %v412
  %429 = vst [vmem:[%s5 + $0x70] sm:$0xff] %v413
  %430 = vst [vmem:[%s5 + $0x78] sm:$0xff] %v414
  // Predicated region
  $region22: #{boq_forward.18} parent=0 // pred_check
    _
  $region23: #{boq_forward.18} parent=0 // pred_check_branch
    %432 = sbr.rel (0) target = $region25
  $region24: #{boq_forward.18} parent=0 // pred_region
    _
  $region25: #{boq_forward.18} parent=0 // pred_fallthru
    _
  // Predicated region
  $region26: #{boq_forward.18} parent=0 // pred_check
    _
  $region27: #{boq_forward.18} parent=0 // pred_check_branch
    %434 = sbr.rel (0) target = $region29
  $region28: #{boq_forward.18} parent=0 // pred_region
    _
  $region29: #{boq_forward.18} parent=0 // pred_fallthru
    _

// kernel: boq_forward.20
$region0: #{boq_forward.20}
  #allocation0 [shape = 'u32[]', space=smem, size = 0x4, offset = 0x4, fixed_abs, tag = 'smem constant byte address 0x4 - core index']
  #allocation1 [shape = 'u32[144,128]{1,0:T(1,128)}', space=vmem, size = 0x12000, scoped, tag = 'internal scratch']
  %s0 = inlined_call_operand.vmem [shape: f32[128,128], index: 0, kind: input, shape index: {}]
  %s1 = inlined_call_operand.vmem [shape: f32[128,128], index: 1, kind: input, shape index: {}]
  %s2 = inlined_call_operand.vmem [shape: f32[1,128], index: 2, kind: input, shape index: {}]
  %s3 = inlined_call_operand.vmem [shape: f32[1,128], index: 3, kind: input, shape index: {}]
  %s4 = inlined_call_operand.vmem [shape: f32[128,128], index: 4, kind: output, shape index: {}]
  %s5 = sld [smem:[#allocation0]]
  $region26: #{boq_forward.20} parent=0
    _
  %s7 = ssub.s32 1, %s5
  %s8 = scalar_select 0, %s7, %s5
  // Predicated region
  $region2: #{boq_forward.20} parent=0 // pred_check
    _
  $region3: #{boq_forward.20} parent=0 // pred_check_branch
    %10 = sbr.rel (0) target = $region5
  $region4: #{boq_forward.20} parent=0 // pred_region
    _
  $region5: #{boq_forward.20} parent=0 // pred_fallthru
    _
  // Predicated region
  $region6: #{boq_forward.20} parent=0 // pred_check
    _
  $region7: #{boq_forward.20} parent=0 // pred_check_branch
    %12 = sbr.rel (0) target = $region9
  $region8: #{boq_forward.20} parent=0 // pred_region
    _
  $region9: #{boq_forward.20} parent=0 // pred_fallthru
    _
  // Predicated region
  $region10: #{boq_forward.20} parent=0 // pred_check
    _
  $region11: #{boq_forward.20} parent=0 // pred_check_branch
    %14 = sbr.rel (0) target = $region13
  $region12: #{boq_forward.20} parent=0 // pred_region
    _
  $region13: #{boq_forward.20} parent=0 // pred_fallthru
    _
  // Predicated region
  $region14: #{boq_forward.20} parent=0 // pred_check
    _
  $region15: #{boq_forward.20} parent=0 // pred_check_branch
    %16 = sbr.rel (0) target = $region17
  $region16: #{boq_forward.20} parent=0 // pred_region
    _
  $region17: #{boq_forward.20} parent=0 // pred_fallthru
    _
  %v17 = vld [vmem:[%s0] sm:$0xff]
  %v18 = vld [vmem:[%s0 + $0x8] sm:$0xff]
  %v19 = vld [vmem:[%s0 + $0x10] sm:$0xff]
  %v20 = vld [vmem:[%s0 + $0x18] sm:$0xff]
  %v21 = vld [vmem:[%s0 + $0x20] sm:$0xff]
  %v22 = vld [vmem:[%s0 + $0x28] sm:$0xff]
  %v23 = vld [vmem:[%s0 + $0x30] sm:$0xff]
  %v24 = vld [vmem:[%s0 + $0x38] sm:$0xff]
  %v25 = vld [vmem:[%s0 + $0x40] sm:$0xff]
  %v26 = vld [vmem:[%s0 + $0x48] sm:$0xff]
  %v27 = vld [vmem:[%s0 + $0x50] sm:$0xff]
  %v28 = vld [vmem:[%s0 + $0x58] sm:$0xff]
  %v29 = vld [vmem:[%s0 + $0x60] sm:$0xff]
  %v30 = vld [vmem:[%s0 + $0x68] sm:$0xff]
  %v31 = vld [vmem:[%s0 + $0x70] sm:$0xff]
  %v32 = vld [vmem:[%s0 + $0x78] sm:$0xff]
  %v33 = vld [vmem:[%s1] sm:$0xff]
  %v34 = vld [vmem:[%s1 + $0x8] sm:$0xff]
  %v35 = vld [vmem:[%s1 + $0x10] sm:$0xff]
  %v36 = vld [vmem:[%s1 + $0x18] sm:$0xff]
  %v37 = vld [vmem:[%s1 + $0x20] sm:$0xff]
  %v38 = vld [vmem:[%s1 + $0x28] sm:$0xff]
  %v39 = vld [vmem:[%s1 + $0x30] sm:$0xff]
  %v40 = vld [vmem:[%s1 + $0x38] sm:$0xff]
  %v41 = vld [vmem:[%s1 + $0x40] sm:$0xff]
  %v42 = vld [vmem:[%s1 + $0x48] sm:$0xff]
  %v43 = vld [vmem:[%s1 + $0x50] sm:$0xff]
  %v44 = vld [vmem:[%s1 + $0x58] sm:$0xff]
  %v45 = vld [vmem:[%s1 + $0x60] sm:$0xff]
  %v46 = vld [vmem:[%s1 + $0x68] sm:$0xff]
  %v47 = vld [vmem:[%s1 + $0x70] sm:$0xff]
  %v48 = vld [vmem:[%s1 + $0x78] sm:$0xff]
  %v49 = vadd.f32 %v17, %v33
  %v50 = vadd.f32 %v18, %v34
  %v51 = vadd.f32 %v19, %v35
  %v52 = vadd.f32 %v20, %v36
  %v53 = vadd.f32 %v21, %v37
  %v54 = vadd.f32 %v22, %v38
  %v55 = vadd.f32 %v23, %v39
  %v56 = vadd.f32 %v24, %v40
  %v57 = vadd.f32 %v25, %v41
  %v58 = vadd.f32 %v26, %v42
  %v59 = vadd.f32 %v27, %v43
  %v60 = vadd.f32 %v28, %v44
  %v61 = vadd.f32 %v29, %v45
  %v62 = vadd.f32 %v30, %v46
  %v63 = vadd.f32 %v31, %v47
  %v64 = vadd.f32 %v32, %v48
  %v65 = vld [vmem:[%s2] sm:$0x1]
  %v66 = vld [vmem:[%s3] sm:$0x1]
  %67 = vadd.xlane.f32.xlu0 %v49
  %v68 = vpop.xlane.xlu0 %67
  %69 = vadd.xlane.f32.xlu0 %v50
  %v70 = vpop.xlane.xlu0 %69
  %71 = vadd.xlane.f32.xlu0 %v51
  %v72 = vpop.xlane.xlu0 %71
  %73 = vadd.xlane.f32.xlu0 %v52
  %v74 = vpop.xlane.xlu0 %73
  %75 = vadd.xlane.f32.xlu0 %v53
  %v76 = vpop.xlane.xlu0 %75
  %77 = vadd.xlane.f32.xlu0 %v54
  %v78 = vpop.xlane.xlu0 %77
  %79 = vadd.xlane.f32.xlu0 %v55
  %v80 = vpop.xlane.xlu0 %79
  %81 = vadd.xlane.f32.xlu0 %v56
  %v82 = vpop.xlane.xlu0 %81
  %83 = vadd.xlane.f32.xlu0 %v57
  %v84 = vpop.xlane.xlu0 %83
  %85 = vadd.xlane.f32.xlu0 %v58
  %v86 = vpop.xlane.xlu0 %85
  %87 = vadd.xlane.f32.xlu0 %v59
  %v88 = vpop.xlane.xlu0 %87
  %89 = vadd.xlane.f32.xlu0 %v60
  %v90 = vpop.xlane.xlu0 %89
  %91 = vadd.xlane.f32.xlu0 %v61
  %v92 = vpop.xlane.xlu0 %91
  %93 = vadd.xlane.f32.xlu0 %v62
  %v94 = vpop.xlane.xlu0 %93
  %95 = vadd.xlane.f32.xlu0 %v63
  %v96 = vpop.xlane.xlu0 %95
  %97 = vadd.xlane.f32.xlu0 %v64
  %v98 = vpop.xlane.xlu0 %97
  %v99 = vrcp.pop 128.0
  %v100 = vmul.f32 %v68, %v99
  %v101 = vmul.f32 %v70, %v99
  %v102 = vmul.f32 %v72, %v99
  %v103 = vmul.f32 %v74, %v99
  %v104 = vmul.f32 %v76, %v99
  %v105 = vmul.f32 %v78, %v99
  %v106 = vmul.f32 %v80, %v99
  %v107 = vmul.f32 %v82, %v99
  %v108 = vmul.f32 %v84, %v99
  %v109 = vmul.f32 %v86, %v99
  %v110 = vmul.f32 %v88, %v99
  %v111 = vmul.f32 %v90, %v99
  %v112 = vmul.f32 %v92, %v99
  %v113 = vmul.f32 %v94, %v99
  %v114 = vmul.f32 %v96, %v99
  %v115 = vmul.f32 %v98, %v99
  %v116 = vsub.f32 %v49, %v100
  %v117 = vsub.f32 %v50, %v101
  %v118 = vsub.f32 %v51, %v102
  %v119 = vsub.f32 %v52, %v103
  %v120 = vsub.f32 %v53, %v104
  %v121 = vsub.f32 %v54, %v105
  %v122 = vsub.f32 %v55, %v106
  %v123 = vsub.f32 %v56, %v107
  %v124 = vsub.f32 %v57, %v108
  %v125 = vsub.f32 %v58, %v109
  %v126 = vsub.f32 %v59, %v110
  %v127 = vsub.f32 %v60, %v111
  %v128 = vsub.f32 %v61, %v112
  %v129 = vsub.f32 %v62, %v113
  %v130 = vsub.f32 %v63, %v114
  %v131 = vsub.f32 %v64, %v115
  %v132 = vmul.f32 %v116, %v116
  %v133 = vmul.f32 %v117, %v117
  %v134 = vmul.f32 %v118, %v118
  %v135 = vmul.f32 %v119, %v119
  %v136 = vmul.f32 %v120, %v120
  %v137 = vmul.f32 %v121, %v121
  %v138 = vmul.f32 %v122, %v122
  %v139 = vmul.f32 %v123, %v123
  %v140 = vmul.f32 %v124, %v124
  %v141 = vmul.f32 %v125, %v125
  %v142 = vmul.f32 %v126, %v126
  %v143 = vmul.f32 %v127, %v127
  %v144 = vmul.f32 %v128, %v128
  %v145 = vmul.f32 %v129, %v129
  %v146 = vmul.f32 %v130, %v130
  %v147 = vmul.f32 %v131, %v131
  %148 = vadd.xlane.f32.xlu0 %v132
  %v149 = vpop.xlane.xlu0 %148
  %150 = vadd.xlane.f32.xlu0 %v133
  %v151 = vpop.xlane.xlu0 %150
  %152 = vadd.xlane.f32.xlu0 %v134
  %v153 = vpop.xlane.xlu0 %152
  %154 = vadd.xlane.f32.xlu0 %v135
  %v155 = vpop.xlane.xlu0 %154
  %156 = vadd.xlane.f32.xlu0 %v136
  %v157 = vpop.xlane.xlu0 %156
  %158 = vadd.xlane.f32.xlu0 %v137
  %v159 = vpop.xlane.xlu0 %158
  %160 = vadd.xlane.f32.xlu0 %v138
  %v161 = vpop.xlane.xlu0 %160
  %162 = vadd.xlane.f32.xlu0 %v139
  %v163 = vpop.xlane.xlu0 %162
  %164 = vadd.xlane.f32.xlu0 %v140
  %v165 = vpop.xlane.xlu0 %164
  %166 = vadd.xlane.f32.xlu0 %v141
  %v167 = vpop.xlane.xlu0 %166
  %168 = vadd.xlane.f32.xlu0 %v142
  %v169 = vpop.xlane.xlu0 %168
  %170 = vadd.xlane.f32.xlu0 %v143
  %v171 = vpop.xlane.xlu0 %170
  %172 = vadd.xlane.f32.xlu0 %v144
  %v173 = vpop.xlane.xlu0 %172
  %174 = vadd.xlane.f32.xlu0 %v145
  %v175 = vpop.xlane.xlu0 %174
  %176 = vadd.xlane.f32.xlu0 %v146
  %v177 = vpop.xlane.xlu0 %176
  %178 = vadd.xlane.f32.xlu0 %v147
  %v179 = vpop.xlane.xlu0 %178
  %v180 = vmul.f32 %v149, %v99
  %v181 = vmul.f32 %v151, %v99
  %v182 = vmul.f32 %v153, %v99
  %v183 = vmul.f32 %v155, %v99
  %v184 = vmul.f32 %v157, %v99
  %v185 = vmul.f32 %v159, %v99
  %v186 = vmul.f32 %v161, %v99
  %v187 = vmul.f32 %v163, %v99
  %v188 = vmul.f32 %v165, %v99
  %v189 = vmul.f32 %v167, %v99
  %v190 = vmul.f32 %v169, %v99
  %v191 = vmul.f32 %v171, %v99
  %v192 = vmul.f32 %v173, %v99
  %v193 = vmul.f32 %v175, %v99
  %v194 = vmul.f32 %v177, %v99
  %v195 = vmul.f32 %v179, %v99
  %v196 = vadd.f32 %v180, 1e-05
  %v197 = vadd.f32 %v181, 1e-05
  %v198 = vadd.f32 %v182, 1e-05
  %v199 = vadd.f32 %v183, 1e-05
  %v200 = vadd.f32 %v184, 1e-05
  %v201 = vadd.f32 %v185, 1e-05
  %v202 = vadd.f32 %v186, 1e-05
  %v203 = vadd.f32 %v187, 1e-05
  %v204 = vadd.f32 %v188, 1e-05
  %v205 = vadd.f32 %v189, 1e-05
  %v206 = vadd.f32 %v190, 1e-05
  %v207 = vadd.f32 %v191, 1e-05
  %v208 = vadd.f32 %v192, 1e-05
  %v209 = vadd.f32 %v193, 1e-05
  %v210 = vadd.f32 %v194, 1e-05
  %v211 = vadd.f32 %v195, 1e-05
  %v212 = vrsqrt.pop %v196
  %v213 = vrsqrt.pop %v197
  %v214 = vrsqrt.pop %v198
  %v215 = vrsqrt.pop %v199
  %v216 = vrsqrt.pop %v200
  %v217 = vrsqrt.pop %v201
  %v218 = vrsqrt.pop %v202
  %v219 = vrsqrt.pop %v203
  %v220 = vrsqrt.pop %v204
  %v221 = vrsqrt.pop %v205
  %v222 = vrsqrt.pop %v206
  %v223 = vrsqrt.pop %v207
  %v224 = vrsqrt.pop %v208
  %v225 = vrsqrt.pop %v209
  %v226 = vrsqrt.pop %v210
  %v227 = vrsqrt.pop %v211
  %v228 = vmul.f32 %v116, %v212
  %v229 = vmul.f32 %v117, %v213
  %v230 = vmul.f32 %v118, %v214
  %v231 = vmul.f32 %v119, %v215
  %v232 = vmul.f32 %v120, %v216
  %v233 = vmul.f32 %v121, %v217
  %v234 = vmul.f32 %v122, %v218
  %v235 = vmul.f32 %v123, %v219
  %v236 = vmul.f32 %v124, %v220
  %v237 = vmul.f32 %v125, %v221
  %v238 = vmul.f32 %v126, %v222
  %v239 = vmul.f32 %v127, %v223
  %v240 = vmul.f32 %v128, %v224
  %v241 = vmul.f32 %v129, %v225
  %v242 = vmul.f32 %v130, %v226
  %v243 = vmul.f32 %v131, %v227
  %v245 = vlaneseq
  %v246 = vshrl.u32 %v245, 7
  %v247 = vsub.s32 0, %v246
  %v248 = vrot.slane %v65, %v247
  %v250 = vmul.f32 %v228, %v248
  %v251 = vmul.f32 %v229, %v248
  %v252 = vmul.f32 %v230, %v248
  %v253 = vmul.f32 %v231, %v248
  %v254 = vmul.f32 %v232, %v248
  %v255 = vmul.f32 %v233, %v248
  %v256 = vmul.f32 %v234, %v248
  %v257 = vmul.f32 %v235, %v248
  %v258 = vmul.f32 %v236, %v248
  %v259 = vmul.f32 %v237, %v248
  %v260 = vmul.f32 %v238, %v248
  %v261 = vmul.f32 %v239, %v248
  %v262 = vmul.f32 %v240, %v248
  %v263 = vmul.f32 %v241, %v248
  %v264 = vmul.f32 %v242, %v248
  %v265 = vmul.f32 %v243, %v248
  %v267 = vlaneseq
  %v268 = vshrl.u32 %v267, 7
  %v269 = vsub.s32 0, %v268
  %v270 = vrot.slane %v66, %v269
  %v272 = vadd.f32 %v250, %v270
  %v273 = vadd.f32 %v251, %v270
  %v274 = vadd.f32 %v252, %v270
  %v275 = vadd.f32 %v253, %v270
  %v276 = vadd.f32 %v254, %v270
  %v277 = vadd.f32 %v255, %v270
  %v278 = vadd.f32 %v256, %v270
  %v279 = vadd.f32 %v257, %v270
  %v280 = vadd.f32 %v258, %v270
  %v281 = vadd.f32 %v259, %v270
  %v282 = vadd.f32 %v260, %v270
  %v283 = vadd.f32 %v261, %v270
  %v284 = vadd.f32 %v262, %v270
  %v285 = vadd.f32 %v263, %v270
  %v286 = vadd.f32 %v264, %v270
  %v287 = vadd.f32 %v265, %v270
  %288 = vst [vmem:[%s4] sm:$0xff] %v272
  %289 = vst [vmem:[%s4 + $0x8] sm:$0xff] %v273
  %290 = vst [vmem:[%s4 + $0x10] sm:$0xff] %v274
  %291 = vst [vmem:[%s4 + $0x18] sm:$0xff] %v275
  %292 = vst [vmem:[%s4 + $0x20] sm:$0xff] %v276
  %293 = vst [vmem:[%s4 + $0x28] sm:$0xff] %v277
  %294 = vst [vmem:[%s4 + $0x30] sm:$0xff] %v278
  %295 = vst [vmem:[%s4 + $0x38] sm:$0xff] %v279
  %296 = vst [vmem:[%s4 + $0x40] sm:$0xff] %v280
  %297 = vst [vmem:[%s4 + $0x48] sm:$0xff] %v281
  %298 = vst [vmem:[%s4 + $0x50] sm:$0xff] %v282
  %299 = vst [vmem:[%s4 + $0x58] sm:$0xff] %v283
  %300 = vst [vmem:[%s4 + $0x60] sm:$0xff] %v284
  %301 = vst [vmem:[%s4 + $0x68] sm:$0xff] %v285
  %302 = vst [vmem:[%s4 + $0x70] sm:$0xff] %v286
  %303 = vst [vmem:[%s4 + $0x78] sm:$0xff] %v287
  // Predicated region
  $region18: #{boq_forward.20} parent=0 // pred_check
    _
  $region19: #{boq_forward.20} parent=0 // pred_check_branch
    %305 = sbr.rel (0) target = $region21
  $region20: #{boq_forward.20} parent=0 // pred_region
    _
  $region21: #{boq_forward.20} parent=0 // pred_fallthru
    _
  // Predicated region
  $region22: #{boq_forward.20} parent=0 // pred_check
    _
  $region23: #{boq_forward.20} parent=0 // pred_check_branch
    %307 = sbr.rel (0) target = $region25
  $region24: #{boq_forward.20} parent=0 // pred_region
    _
  $region25: #{boq_forward.20} parent=0 // pred_fallthru
    _

// kernel: boq_forward.21
$region0: #{boq_forward.21}
  #allocation0 [shape = 'u32[]', space=smem, size = 0x4, offset = 0x4, fixed_abs, tag = 'smem constant byte address 0x4 - core index']
  #allocation1 [shape = 'u32[144,128]{1,0:T(1,128)}', space=vmem, size = 0x12000, scoped, tag = 'internal scratch']
  %s0 = inlined_call_operand.vmem [shape: f32[128,128], index: 0, kind: input, shape index: {}]
  %s1 = inlined_call_operand.vmem [shape: f32[128,512], index: 1, kind: input, shape index: {}]
  %s2 = inlined_call_operand.vmem [shape: f32[1,512], index: 2, kind: input, shape index: {}]
  %s3 = inlined_call_operand.vmem [shape: f32[512,128], index: 3, kind: input, shape index: {}]
  %s4 = inlined_call_operand.vmem [shape: f32[1,128], index: 4, kind: input, shape index: {}]
  %s5 = inlined_call_operand.vmem [shape: f32[128,128], index: 5, kind: output, shape index: {}]
  %s6 = sld [smem:[#allocation0]]
  $region30: #{boq_forward.21} parent=0
    _
  %s8 = ssub.s32 1, %s6
  %s9 = scalar_select 0, %s8, %s6
  // Predicated region
  $region2: #{boq_forward.21} parent=0 // pred_check
    _
  $region3: #{boq_forward.21} parent=0 // pred_check_branch
    %11 = sbr.rel (0) target = $region5
  $region4: #{boq_forward.21} parent=0 // pred_region
    _
  $region5: #{boq_forward.21} parent=0 // pred_fallthru
    _
  // Predicated region
  $region6: #{boq_forward.21} parent=0 // pred_check
    _
  $region7: #{boq_forward.21} parent=0 // pred_check_branch
    %13 = sbr.rel (0) target = $region9
  $region8: #{boq_forward.21} parent=0 // pred_region
    _
  $region9: #{boq_forward.21} parent=0 // pred_fallthru
    _
  // Predicated region
  $region10: #{boq_forward.21} parent=0 // pred_check
    _
  $region11: #{boq_forward.21} parent=0 // pred_check_branch
    %15 = sbr.rel (0) target = $region13
  $region12: #{boq_forward.21} parent=0 // pred_region
    _
  $region13: #{boq_forward.21} parent=0 // pred_fallthru
    _
  // Predicated region
  $region14: #{boq_forward.21} parent=0 // pred_check
    _
  $region15: #{boq_forward.21} parent=0 // pred_check_branch
    %17 = sbr.rel (0) target = $region17
  $region16: #{boq_forward.21} parent=0 // pred_region
    _
  $region17: #{boq_forward.21} parent=0 // pred_fallthru
    _
  // Predicated region
  $region18: #{boq_forward.21} parent=0 // pred_check
    _
  $region19: #{boq_forward.21} parent=0 // pred_check_branch
    %19 = sbr.rel (0) target = $region21
  $region20: #{boq_forward.21} parent=0 // pred_region
    _
  $region21: #{boq_forward.21} parent=0 // pred_fallthru
    _
  %v21 = vld [vmem:[%s0] sm:$0xff]
  %v22 = vld [vmem:[%s0 + $0x8] sm:$0xff]
  %v23 = vld [vmem:[%s0 + $0x10] sm:$0xff]
  %v24 = vld [vmem:[%s0 + $0x18] sm:$0xff]
  %v25 = vld [vmem:[%s0 + $0x20] sm:$0xff]
  %v26 = vld [vmem:[%s0 + $0x28] sm:$0xff]
  %v27 = vld [vmem:[%s0 + $0x30] sm:$0xff]
  %v28 = vld [vmem:[%s0 + $0x38] sm:$0xff]
  %v29 = vld [vmem:[%s0 + $0x40] sm:$0xff]
  %v30 = vld [vmem:[%s0 + $0x48] sm:$0xff]
  %v31 = vld [vmem:[%s0 + $0x50] sm:$0xff]
  %v32 = vld [vmem:[%s0 + $0x58] sm:$0xff]
  %v33 = vld [vmem:[%s0 + $0x60] sm:$0xff]
  %v34 = vld [vmem:[%s0 + $0x68] sm:$0xff]
  %v35 = vld [vmem:[%s0 + $0x70] sm:$0xff]
  %v36 = vld [vmem:[%s0 + $0x78] sm:$0xff]
  %v37 = vpack.c.bf16 %v22, %v21
  %v38 = vpack.c.bf16 %v24, %v23
  %v39 = vpack.c.bf16 %v26, %v25
  %v40 = vpack.c.bf16 %v28, %v27
  %v41 = vpack.c.bf16 %v30, %v29
  %v42 = vpack.c.bf16 %v32, %v31
  %v43 = vpack.c.bf16 %v34, %v33
  %v44 = vpack.c.bf16 %v36, %v35
  %v45 = vld [vmem:[%s1] sm:$0xff]
  %v46 = vld [vmem:[%s1 + $0x8] sm:$0xff]
  %v47 = vld [vmem:[%s1 + $0x10] sm:$0xff]
  %v48 = vld [vmem:[%s1 + $0x18] sm:$0xff]
  %v49 = vld [vmem:[%s1 + $0x20] sm:$0xff]
  %v50 = vld [vmem:[%s1 + $0x28] sm:$0xff]
  %v51 = vld [vmem:[%s1 + $0x30] sm:$0xff]
  %v52 = vld [vmem:[%s1 + $0x38] sm:$0xff]
  %v53 = vld [vmem:[%s1 + $0x40] sm:$0xff]
  %v54 = vld [vmem:[%s1 + $0x48] sm:$0xff]
  %v55 = vld [vmem:[%s1 + $0x50] sm:$0xff]
  %v56 = vld [vmem:[%s1 + $0x58] sm:$0xff]
  %v57 = vld [vmem:[%s1 + $0x60] sm:$0xff]
  %v58 = vld [vmem:[%s1 + $0x68] sm:$0xff]
  %v59 = vld [vmem:[%s1 + $0x70] sm:$0xff]
  %v60 = vld [vmem:[%s1 + $0x78] sm:$0xff]
  %v61 = vld [vmem:[%s1 + $0x80] sm:$0xff]
  %v62 = vld [vmem:[%s1 + $0x88] sm:$0xff]
  %v63 = vld [vmem:[%s1 + $0x90] sm:$0xff]
  %v64 = vld [vmem:[%s1 + $0x98] sm:$0xff]
  %v65 = vld [vmem:[%s1 + $0xa0] sm:$0xff]
  %v66 = vld [vmem:[%s1 + $0xa8] sm:$0xff]
  %v67 = vld [vmem:[%s1 + $0xb0] sm:$0xff]
  %v68 = vld [vmem:[%s1 + $0xb8] sm:$0xff]
  %v69 = vld [vmem:[%s1 + $0xc0] sm:$0xff]
  %v70 = vld [vmem:[%s1 + $0xc8] sm:$0xff]
  %v71 = vld [vmem:[%s1 + $0xd0] sm:$0xff]
  %v72 = vld [vmem:[%s1 + $0xd8] sm:$0xff]
  %v73 = vld [vmem:[%s1 + $0xe0] sm:$0xff]
  %v74 = vld [vmem:[%s1 + $0xe8] sm:$0xff]
  %v75 = vld [vmem:[%s1 + $0xf0] sm:$0xff]
  %v76 = vld [vmem:[%s1 + $0xf8] sm:$0xff]
  %v77 = vld [vmem:[%s1 + $0x100] sm:$0xff]
  %v78 = vld [vmem:[%s1 + $0x108] sm:$0xff]
  %v79 = vld [vmem:[%s1 + $0x110] sm:$0xff]
  %v80 = vld [vmem:[%s1 + $0x118] sm:$0xff]
  %v81 = vld [vmem:[%s1 + $0x120] sm:$0xff]
  %v82 = vld [vmem:[%s1 + $0x128] sm:$0xff]
  %v83 = vld [vmem:[%s1 + $0x130] sm:$0xff]
  %v84 = vld [vmem:[%s1 + $0x138] sm:$0xff]
  %v85 = vld [vmem:[%s1 + $0x140] sm:$0xff]
  %v86 = vld [vmem:[%s1 + $0x148] sm:$0xff]
  %v87 = vld [vmem:[%s1 + $0x150] sm:$0xff]
  %v88 = vld [vmem:[%s1 + $0x158] sm:$0xff]
  %v89 = vld [vmem:[%s1 + $0x160] sm:$0xff]
  %v90 = vld [vmem:[%s1 + $0x168] sm:$0xff]
  %v91 = vld [vmem:[%s1 + $0x170] sm:$0xff]
  %v92 = vld [vmem:[%s1 + $0x178] sm:$0xff]
  %v93 = vld [vmem:[%s1 + $0x180] sm:$0xff]
  %v94 = vld [vmem:[%s1 + $0x188] sm:$0xff]
  %v95 = vld [vmem:[%s1 + $0x190] sm:$0xff]
  %v96 = vld [vmem:[%s1 + $0x198] sm:$0xff]
  %v97 = vld [vmem:[%s1 + $0x1a0] sm:$0xff]
  %v98 = vld [vmem:[%s1 + $0x1a8] sm:$0xff]
  %v99 = vld [vmem:[%s1 + $0x1b0] sm:$0xff]
  %v100 = vld [vmem:[%s1 + $0x1b8] sm:$0xff]
  %v101 = vld [vmem:[%s1 + $0x1c0] sm:$0xff]
  %v102 = vld [vmem:[%s1 + $0x1c8] sm:$0xff]
  %v103 = vld [vmem:[%s1 + $0x1d0] sm:$0xff]
  %v104 = vld [vmem:[%s1 + $0x1d8] sm:$0xff]
  %v105 = vld [vmem:[%s1 + $0x1e0] sm:$0xff]
  %v106 = vld [vmem:[%s1 + $0x1e8] sm:$0xff]
  %v107 = vld [vmem:[%s1 + $0x1f0] sm:$0xff]
  %v108 = vld [vmem:[%s1 + $0x1f8] sm:$0xff]
  %v109 = vpack.c.bf16 %v49, %v45
  %v110 = vpack.c.bf16 %v50, %v46
  %v111 = vpack.c.bf16 %v51, %v47
  %v112 = vpack.c.bf16 %v52, %v48
  %v113 = vpack.c.bf16 %v57, %v53
  %v114 = vpack.c.bf16 %v58, %v54
  %v115 = vpack.c.bf16 %v59, %v55
  %v116 = vpack.c.bf16 %v60, %v56
  %v117 = vpack.c.bf16 %v65, %v61
  %v118 = vpack.c.bf16 %v66, %v62
  %v119 = vpack.c.bf16 %v67, %v63
  %v120 = vpack.c.bf16 %v68, %v64
  %v121 = vpack.c.bf16 %v73, %v69
  %v122 = vpack.c.bf16 %v74, %v70
  %v123 = vpack.c.bf16 %v75, %v71
  %v124 = vpack.c.bf16 %v76, %v72
  %v125 = vpack.c.bf16 %v81, %v77
  %v126 = vpack.c.bf16 %v82, %v78
  %v127 = vpack.c.bf16 %v83, %v79
  %v128 = vpack.c.bf16 %v84, %v80
  %v129 = vpack.c.bf16 %v89, %v85
  %v130 = vpack.c.bf16 %v90, %v86
  %v131 = vpack.c.bf16 %v91, %v87
  %v132 = vpack.c.bf16 %v92, %v88
  %v133 = vpack.c.bf16 %v97, %v93
  %v134 = vpack.c.bf16 %v98, %v94
  %v135 = vpack.c.bf16 %v99, %v95
  %v136 = vpack.c.bf16 %v100, %v96
  %v137 = vpack.c.bf16 %v105, %v101
  %v138 = vpack.c.bf16 %v106, %v102
  %v139 = vpack.c.bf16 %v107, %v103
  %v140 = vpack.c.bf16 %v108, %v104
  %v141 = vld [vmem:[%s2] sm:$0xf]
  %v143 = vlaneseq
  %v144 = vshrl.u32 %v143, 7
  %v145 = vsub.s32 0, %v144
  %v146 = vrot.slane %v141, %v145
  %v147 = vlaneseq
  %v148 = vshrl.u32 %v147, 7
  %v149 = vsub.s32 1, %v148
  %v150 = vrot.slane %v141, %v149
  %v151 = vlaneseq
  %v152 = vshrl.u32 %v151, 7
  %v153 = vsub.s32 2, %v152
  %v154 = vrot.slane %v141, %v153
  %v155 = vlaneseq
  %v156 = vshrl.u32 %v155, 7
  %v157 = vsub.s32 3, %v156
  %v158 = vrot.slane %v141, %v157
  %163 = vmatprep.subr.bf16.mxu0 %v110
  %164 = vmatpush1.bf16.msra.mxu0 %v109
  %165 = vmatprep.subr.bf16.mxu0 %v114
  %166 = vmatpush1.bf16.msra.mxu0 %v113
  %167 = vmatprep.subr.bf16.mxu0 %v118
  %168 = vmatpush1.bf16.msra.mxu0 %v117
  %169 = vmatprep.subr.bf16.mxu0 %v122
  %170 = vmatpush1.bf16.msra.mxu0 %v121
  %171 = vmatprep.subr.bf16.mxu0 %v126
  %172 = vmatpush1.bf16.msra.mxu0 %v125
  %173 = vmatprep.subr.bf16.mxu0 %v130
  %174 = vmatpush1.bf16.msra.mxu0 %v129
  %175 = vmatprep.subr.bf16.mxu0 %v134
  %176 = vmatpush1.bf16.msra.mxu0 %v133
  %177 = vmatprep.subr.bf16.mxu0 %v138
  %178 = vmatpush1.bf16.msra.mxu0 %v137
  %179 = vmatprep.subr.bf16.mxu0 0
  %180 = vmatpush1.bf16.msra.mxu0 0
  %181 = vmatprep.subr.bf16.mxu0 0
  %182 = vmatpush1.bf16.msra.mxu0 0
  %183 = vmatprep.subr.bf16.mxu0 0
  %184 = vmatpush1.bf16.msra.mxu0 0
  %185 = vmatprep.subr.bf16.mxu0 0
  %186 = vmatpush1.bf16.msra.mxu0 0
  %187 = vmatprep.subr.bf16.mxu0 0
  %188 = vmatpush1.bf16.msra.mxu0 0
  %189 = vmatprep.subr.bf16.mxu0 0
  %190 = vmatpush1.bf16.msra.mxu0 0
  %191 = vmatprep.subr.bf16.mxu0 0
  %192 = vmatpush1.bf16.msra.mxu0 0
  %193 = vmatprep.subr.bf16.mxu0 0
  %194 = vmatpush1.bf16.msra.mxu0 0
  %195 = vmatprep.mubr.bf16.mxu0 0
  %196 = vmatmul.mubr.bf16.gmra.mrb[0].mxu0 %v37
  %v197 = vpop.f32.mrb[0].mxu0
  %v198 = vadd.f32 %v146, %v197
  %v199 = vpop.f32.mrb[0].mxu0
  %v200 = vadd.f32 %v150, %v199
  %v201 = vpop.f32.mrb[0].mxu0
  %v202 = vadd.f32 %v146, %v201
  %v203 = vpop.f32.mrb[0].mxu0
  %v204 = vadd.f32 %v150, %v203
  %205 = vmatprep.mubr.bf16.mxu0 0
  %206 = vmatmul.mubr.bf16.gmra.mrb[0].mxu0 %v38
  %v207 = vpop.f32.mrb[0].mxu0
  %v208 = vadd.f32 %v146, %v207
  %v209 = vpop.f32.mrb[0].mxu0
  %v210 = vadd.f32 %v150, %v209
  %v211 = vpop.f32.mrb[0].mxu0
  %v212 = vadd.f32 %v146, %v211
  %v213 = vpop.f32.mrb[0].mxu0
  %v214 = vadd.f32 %v150, %v213
  %215 = vmatprep.mubr.bf16.mxu0 0
  %216 = vmatmul.mubr.bf16.gmra.mrb[0].mxu0 %v39
  %v217 = vpop.f32.mrb[0].mxu0
  %v218 = vadd.f32 %v146, %v217
  %v219 = vpop.f32.mrb[0].mxu0
  %v220 = vadd.f32 %v150, %v219
  %v221 = vpop.f32.mrb[0].mxu0
  %v222 = vadd.f32 %v146, %v221
  %v223 = vpop.f32.mrb[0].mxu0
  %v224 = vadd.f32 %v150, %v223
  %225 = vmatprep.mubr.bf16.mxu0 0
  %226 = vmatmul.mubr.bf16.gmra.mrb[0].mxu0 %v40
  %v227 = vpop.f32.mrb[0].mxu0
  %v228 = vadd.f32 %v146, %v227
  %v229 = vpop.f32.mrb[0].mxu0
  %v230 = vadd.f32 %v150, %v229
  %v231 = vpop.f32.mrb[0].mxu0
  %v232 = vadd.f32 %v146, %v231
  %v233 = vpop.f32.mrb[0].mxu0
  %v234 = vadd.f32 %v150, %v233
  %235 = vmatprep.mubr.bf16.mxu0 0
  %236 = vmatmul.mubr.bf16.gmra.mrb[0].mxu0 %v41
  %v237 = vpop.f32.mrb[0].mxu0
  %v238 = vadd.f32 %v146, %v237
  %v239 = vpop.f32.mrb[0].mxu0
  %v240 = vadd.f32 %v150, %v239
  %v241 = vpop.f32.mrb[0].mxu0
  %v242 = vadd.f32 %v146, %v241
  %v243 = vpop.f32.mrb[0].mxu0
  %v244 = vadd.f32 %v150, %v243
  %245 = vmatprep.mubr.bf16.mxu0 0
  %246 = vmatmul.mubr.bf16.gmra.mrb[0].mxu0 %v42
  %v247 = vpop.f32.mrb[0].mxu0
  %v248 = vadd.f32 %v146, %v247
  %v249 = vpop.f32.mrb[0].mxu0
  %v250 = vadd.f32 %v150, %v249
  %v251 = vpop.f32.mrb[0].mxu0
  %v252 = vadd.f32 %v146, %v251
  %v253 = vpop.f32.mrb[0].mxu0
  %v254 = vadd.f32 %v150, %v253
  %255 = vmatprep.mubr.bf16.mxu0 0
  %256 = vmatmul.mubr.bf16.gmra.mrb[0].mxu0 %v43
  %v257 = vpop.f32.mrb[0].mxu0
  %v258 = vadd.f32 %v146, %v257
  %v259 = vpop.f32.mrb[0].mxu0
  %v260 = vadd.f32 %v150, %v259
  %v261 = vpop.f32.mrb[0].mxu0
  %v262 = vadd.f32 %v146, %v261
  %v263 = vpop.f32.mrb[0].mxu0
  %v264 = vadd.f32 %v150, %v263
  %265 = vmatprep.mubr.bf16.mxu0 0
  %266 = vmatmul.mubr.bf16.gmra.mrb[0].mxu0 %v44
  %v267 = vpop.f32.mrb[0].mxu0
  %v268 = vadd.f32 %v146, %v267
  %v269 = vpop.f32.mrb[0].mxu0
  %v270 = vadd.f32 %v150, %v269
  %v271 = vpop.f32.mrb[0].mxu0
  %v272 = vadd.f32 %v146, %v271
  %v273 = vpop.f32.mrb[0].mxu0
  %v274 = vadd.f32 %v150, %v273
  %275 = vdwg.mxu0
  %276 = vmatprep.subr.bf16.mxu0 %v112
  %277 = vmatpush1.bf16.msra.mxu0 %v111
  %278 = vmatprep.subr.bf16.mxu0 %v116
  %279 = vmatpush1.bf16.msra.mxu0 %v115
  %280 = vmatprep.subr.bf16.mxu0 %v120
  %281 = vmatpush1.bf16.msra.mxu0 %v119
  %282 = vmatprep.subr.bf16.mxu0 %v124
  %283 = vmatpush1.bf16.msra.mxu0 %v123
  %284 = vmatprep.subr.bf16.mxu0 %v128
  %285 = vmatpush1.bf16.msra.mxu0 %v127
  %286 = vmatprep.subr.bf16.mxu0 %v132
  %287 = vmatpush1.bf16.msra.mxu0 %v131
  %288 = vmatprep.subr.bf16.mxu0 %v136
  %289 = vmatpush1.bf16.msra.mxu0 %v135
  %290 = vmatprep.subr.bf16.mxu0 %v140
  %291 = vmatpush1.bf16.msra.mxu0 %v139
  %292 = vmatprep.subr.bf16.mxu0 0
  %293 = vmatpush1.bf16.msra.mxu0 0
  %294 = vmatprep.subr.bf16.mxu0 0
  %295 = vmatpush1.bf16.msra.mxu0 0
  %296 = vmatprep.subr.bf16.mxu0 0
  %297 = vmatpush1.bf16.msra.mxu0 0
  %298 = vmatprep.subr.bf16.mxu0 0
  %299 = vmatpush1.bf16.msra.mxu0 0
  %300 = vmatprep.subr.bf16.mxu0 0
  %301 = vmatpush1.bf16.msra.mxu0 0
  %302 = vmatprep.subr.bf16.mxu0 0
  %303 = vmatpush1.bf16.msra.mxu0 0
  %304 = vmatprep.subr.bf16.mxu0 0
  %305 = vmatpush1.bf16.msra.mxu0 0
  %306 = vmatprep.subr.bf16.mxu0 0
  %307 = vmatpush1.bf16.msra.mxu0 0
  %308 = vmatprep.mubr.bf16.mxu0 0
  %309 = vmatmul.mubr.bf16.gmra.mrb[0].mxu0 %v37
  %v310 = vpop.f32.mrb[0].mxu0
  %v311 = vadd.f32 %v154, %v310
  %v312 = vpop.f32.mrb[0].mxu0
  %v313 = vadd.f32 %v158, %v312
  %v314 = vpop.f32.mrb[0].mxu0
  %v315 = vadd.f32 %v154, %v314
  %v316 = vpop.f32.mrb[0].mxu0
  %v317 = vadd.f32 %v158, %v316
  %318 = vmatprep.mubr.bf16.mxu0 0
  %319 = vmatmul.mubr.bf16.gmra.mrb[0].mxu0 %v38
  %v320 = vpop.f32.mrb[0].mxu0
  %v321 = vadd.f32 %v154, %v320
  %v322 = vpop.f32.mrb[0].mxu0
  %v323 = vadd.f32 %v158, %v322
  %v324 = vpop.f32.mrb[0].mxu0
  %v325 = vadd.f32 %v154, %v324
  %v326 = vpop.f32.mrb[0].mxu0
  %v327 = vadd.f32 %v158, %v326
  %328 = vmatprep.mubr.bf16.mxu0 0
  %329 = vmatmul.mubr.bf16.gmra.mrb[0].mxu0 %v39
  %v330 = vpop.f32.mrb[0].mxu0
  %v331 = vadd.f32 %v154, %v330
  %v332 = vpop.f32.mrb[0].mxu0
  %v333 = vadd.f32 %v158, %v332
  %v334 = vpop.f32.mrb[0].mxu0
  %v335 = vadd.f32 %v154, %v334
  %v336 = vpop.f32.mrb[0].mxu0
  %v337 = vadd.f32 %v158, %v336
  %338 = vmatprep.mubr.bf16.mxu0 0
  %339 = vmatmul.mubr.bf16.gmra.mrb[0].mxu0 %v40
  %v340 = vpop.f32.mrb[0].mxu0
  %v341 = vadd.f32 %v154, %v340
  %v342 = vpop.f32.mrb[0].mxu0
  %v343 = vadd.f32 %v158, %v342
  %v344 = vpop.f32.mrb[0].mxu0
  %v345 = vadd.f32 %v154, %v344
  %v346 = vpop.f32.mrb[0].mxu0
  %v347 = vadd.f32 %v158, %v346
  %348 = vmatprep.mubr.bf16.mxu0 0
  %349 = vmatmul.mubr.bf16.gmra.mrb[0].mxu0 %v41
  %v350 = vpop.f32.mrb[0].mxu0
  %v351 = vadd.f32 %v154, %v350
  %v352 = vpop.f32.mrb[0].mxu0
  %v353 = vadd.f32 %v158, %v352
  %v354 = vpop.f32.mrb[0].mxu0
  %v355 = vadd.f32 %v154, %v354
  %v356 = vpop.f32.mrb[0].mxu0
  %v357 = vadd.f32 %v158, %v356
  %358 = vmatprep.mubr.bf16.mxu0 0
  %359 = vmatmul.mubr.bf16.gmra.mrb[0].mxu0 %v42
  %v360 = vpop.f32.mrb[0].mxu0
  %v361 = vadd.f32 %v154, %v360
  %v362 = vpop.f32.mrb[0].mxu0
  %v363 = vadd.f32 %v158, %v362
  %v364 = vpop.f32.mrb[0].mxu0
  %v365 = vadd.f32 %v154, %v364
  %v366 = vpop.f32.mrb[0].mxu0
  %v367 = vadd.f32 %v158, %v366
  %368 = vmatprep.mubr.bf16.mxu0 0
  %369 = vmatmul.mubr.bf16.gmra.mrb[0].mxu0 %v43
  %v370 = vpop.f32.mrb[0].mxu0
  %v371 = vadd.f32 %v154, %v370
  %v372 = vpop.f32.mrb[0].mxu0
  %v373 = vadd.f32 %v158, %v372
  %v374 = vpop.f32.mrb[0].mxu0
  %v375 = vadd.f32 %v154, %v374
  %v376 = vpop.f32.mrb[0].mxu0
  %v377 = vadd.f32 %v158, %v376
  %378 = vmatprep.mubr.bf16.mxu0 0
  %379 = vmatmul.mubr.bf16.gmra.mrb[0].mxu0 %v44
  %v380 = vpop.f32.mrb[0].mxu0
  %v381 = vadd.f32 %v154, %v380
  %v382 = vpop.f32.mrb[0].mxu0
  %v383 = vadd.f32 %v158, %v382
  %v384 = vpop.f32.mrb[0].mxu0
  %v385 = vadd.f32 %v154, %v384
  %v386 = vpop.f32.mrb[0].mxu0
  %v387 = vadd.f32 %v158, %v386
  %388 = vdwg.mxu0
  %v389 = vmax.f32 %v198, 0.0
  %v390 = vmax.f32 %v200, 0.0
  %v391 = vmax.f32 %v311, 0.0
  %v392 = vmax.f32 %v313, 0.0
  %v393 = vmax.f32 %v202, 0.0
  %v394 = vmax.f32 %v204, 0.0
  %v395 = vmax.f32 %v315, 0.0
  %v396 = vmax.f32 %v317, 0.0
  %v397 = vmax.f32 %v208, 0.0
  %v398 = vmax.f32 %v210, 0.0
  %v399 = vmax.f32 %v321, 0.0
  %v400 = vmax.f32 %v323, 0.0
  %v401 = vmax.f32 %v212, 0.0
  %v402 = vmax.f32 %v214, 0.0
  %v403 = vmax.f32 %v325, 0.0
  %v404 = vmax.f32 %v327, 0.0
  %v405 = vmax.f32 %v218, 0.0
  %v406 = vmax.f32 %v220, 0.0
  %v407 = vmax.f32 %v331, 0.0
  %v408 = vmax.f32 %v333, 0.0
  %v409 = vmax.f32 %v222, 0.0
  %v410 = vmax.f32 %v224, 0.0
  %v411 = vmax.f32 %v335, 0.0
  %v412 = vmax.f32 %v337, 0.0
  %v413 = vmax.f32 %v228, 0.0
  %v414 = vmax.f32 %v230, 0.0
  %v415 = vmax.f32 %v341, 0.0
  %v416 = vmax.f32 %v343, 0.0
  %v417 = vmax.f32 %v232, 0.0
  %v418 = vmax.f32 %v234, 0.0
  %v419 = vmax.f32 %v345, 0.0
  %v420 = vmax.f32 %v347, 0.0
  %v421 = vmax.f32 %v238, 0.0
  %v422 = vmax.f32 %v240, 0.0
  %v423 = vmax.f32 %v351, 0.0
  %v424 = vmax.f32 %v353, 0.0
  %v425 = vmax.f32 %v242, 0.0
  %v426 = vmax.f32 %v244, 0.0
  %v427 = vmax.f32 %v355, 0.0
  %v428 = vmax.f32 %v357, 0.0
  %v429 = vmax.f32 %v248, 0.0
  %v430 = vmax.f32 %v250, 0.0
  %v431 = vmax.f32 %v361, 0.0
  %v432 = vmax.f32 %v363, 0.0
  %v433 = vmax.f32 %v252, 0.0
  %v434 = vmax.f32 %v254, 0.0
  %v435 = vmax.f32 %v365, 0.0
  %v436 = vmax.f32 %v367, 0.0
  %v437 = vmax.f32 %v258, 0.0
  %v438 = vmax.f32 %v260, 0.0
  %v439 = vmax.f32 %v371, 0.0
  %v440 = vmax.f32 %v373, 0.0
  %v441 = vmax.f32 %v262, 0.0
  %v442 = vmax.f32 %v264, 0.0
  %v443 = vmax.f32 %v375, 0.0
  %v444 = vmax.f32 %v377, 0.0
  %v445 = vmax.f32 %v268, 0.0
  %v446 = vmax.f32 %v270, 0.0
  %v447 = vmax.f32 %v381, 0.0
  %v448 = vmax.f32 %v383, 0.0
  %v449 = vmax.f32 %v272, 0.0
  %v450 = vmax.f32 %v274, 0.0
  %v451 = vmax.f32 %v385, 0.0
  %v452 = vmax.f32 %v387, 0.0
  %v453 = vpack.c.bf16 %v393, %v389
  %v454 = vpack.c.bf16 %v394, %v390
  %v455 = vpack.c.bf16 %v395, %v391
  %v456 = vpack.c.bf16 %v396, %v392
  %v457 = vpack.c.bf16 %v401, %v397
  %v458 = vpack.c.bf16 %v402, %v398
  %v459 = vpack.c.bf16 %v403, %v399
  %v460 = vpack.c.bf16 %v404, %v400
  %v461 = vpack.c.bf16 %v409, %v405
  %v462 = vpack.c.bf16 %v410, %v406
  %v463 = vpack.c.bf16 %v411, %v407
  %v464 = vpack.c.bf16 %v412, %v408
  %v465 = vpack.c.bf16 %v417, %v413
  %v466 = vpack.c.bf16 %v418, %v414
  %v467 = vpack.c.bf16 %v419, %v415
  %v468 = vpack.c.bf16 %v420, %v416
  %v469 = vpack.c.bf16 %v425, %v421
  %v470 = vpack.c.bf16 %v426, %v422
  %v471 = vpack.c.bf16 %v427, %v423
  %v472 = vpack.c.bf16 %v428, %v424
  %v473 = vpack.c.bf16 %v433, %v429
  %v474 = vpack.c.bf16 %v434, %v430
  %v475 = vpack.c.bf16 %v435, %v431
  %v476 = vpack.c.bf16 %v436, %v432
  %v477 = vpack.c.bf16 %v441, %v437
  %v478 = vpack.c.bf16 %v442, %v438
  %v479 = vpack.c.bf16 %v443, %v439
  %v480 = vpack.c.bf16 %v444, %v440
  %v481 = vpack.c.bf16 %v449, %v445
  %v482 = vpack.c.bf16 %v450, %v446
  %v483 = vpack.c.bf16 %v451, %v447
  %v484 = vpack.c.bf16 %v452, %v448
  %v485 = vld [vmem:[%s3] sm:$0xff]
  %v486 = vld [vmem:[%s3 + $0x8] sm:$0xff]
  %v487 = vld [vmem:[%s3 + $0x10] sm:$0xff]
  %v488 = vld [vmem:[%s3 + $0x18] sm:$0xff]
  %v489 = vld [vmem:[%s3 + $0x20] sm:$0xff]
  %v490 = vld [vmem:[%s3 + $0x28] sm:$0xff]
  %v491 = vld [vmem:[%s3 + $0x30] sm:$0xff]
  %v492 = vld [vmem:[%s3 + $0x38] sm:$0xff]
  %v493 = vld [vmem:[%s3 + $0x40] sm:$0xff]
  %v494 = vld [vmem:[%s3 + $0x48] sm:$0xff]
  %v495 = vld [vmem:[%s3 + $0x50] sm:$0xff]
  %v496 = vld [vmem:[%s3 + $0x58] sm:$0xff]
  %v497 = vld [vmem:[%s3 + $0x60] sm:$0xff]
  %v498 = vld [vmem:[%s3 + $0x68] sm:$0xff]
  %v499 = vld [vmem:[%s3 + $0x70] sm:$0xff]
  %v500 = vld [vmem:[%s3 + $0x78] sm:$0xff]
  %v501 = vld [vmem:[%s3 + $0x80] sm:$0xff]
  %v502 = vld [vmem:[%s3 + $0x88] sm:$0xff]
  %v503 = vld [vmem:[%s3 + $0x90] sm:$0xff]
  %v504 = vld [vmem:[%s3 + $0x98] sm:$0xff]
  %v505 = vld [vmem:[%s3 + $0xa0] sm:$0xff]
  %v506 = vld [vmem:[%s3 + $0xa8] sm:$0xff]
  %v507 = vld [vmem:[%s3 + $0xb0] sm:$0xff]
  %v508 = vld [vmem:[%s3 + $0xb8] sm:$0xff]
  %v509 = vld [vmem:[%s3 + $0xc0] sm:$0xff]
  %v510 = vld [vmem:[%s3 + $0xc8] sm:$0xff]
  %v511 = vld [vmem:[%s3 + $0xd0] sm:$0xff]
  %v512 = vld [vmem:[%s3 + $0xd8] sm:$0xff]
  %v513 = vld [vmem:[%s3 + $0xe0] sm:$0xff]
  %v514 = vld [vmem:[%s3 + $0xe8] sm:$0xff]
  %v515 = vld [vmem:[%s3 + $0xf0] sm:$0xff]
  %v516 = vld [vmem:[%s3 + $0xf8] sm:$0xff]
  %v517 = vld [vmem:[%s3 + $0x100] sm:$0xff]
  %v518 = vld [vmem:[%s3 + $0x108] sm:$0xff]
  %v519 = vld [vmem:[%s3 + $0x110] sm:$0xff]
  %v520 = vld [vmem:[%s3 + $0x118] sm:$0xff]
  %v521 = vld [vmem:[%s3 + $0x120] sm:$0xff]
  %v522 = vld [vmem:[%s3 + $0x128] sm:$0xff]
  %v523 = vld [vmem:[%s3 + $0x130] sm:$0xff]
  %v524 = vld [vmem:[%s3 + $0x138] sm:$0xff]
  %v525 = vld [vmem:[%s3 + $0x140] sm:$0xff]
  %v526 = vld [vmem:[%s3 + $0x148] sm:$0xff]
  %v527 = vld [vmem:[%s3 + $0x150] sm:$0xff]
  %v528 = vld [vmem:[%s3 + $0x158] sm:$0xff]
  %v529 = vld [vmem:[%s3 + $0x160] sm:$0xff]
  %v530 = vld [vmem:[%s3 + $0x168] sm:$0xff]
  %v531 = vld [vmem:[%s3 + $0x170] sm:$0xff]
  %v532 = vld [vmem:[%s3 + $0x178] sm:$0xff]
  %v533 = vld [vmem:[%s3 + $0x180] sm:$0xff]
  %v534 = vld [vmem:[%s3 + $0x188] sm:$0xff]
  %v535 = vld [vmem:[%s3 + $0x190] sm:$0xff]
  %v536 = vld [vmem:[%s3 + $0x198] sm:$0xff]
  %v537 = vld [vmem:[%s3 + $0x1a0] sm:$0xff]
  %v538 = vld [vmem:[%s3 + $0x1a8] sm:$0xff]
  %v539 = vld [vmem:[%s3 + $0x1b0] sm:$0xff]
  %v540 = vld [vmem:[%s3 + $0x1b8] sm:$0xff]
  %v541 = vld [vmem:[%s3 + $0x1c0] sm:$0xff]
  %v542 = vld [vmem:[%s3 + $0x1c8] sm:$0xff]
  %v543 = vld [vmem:[%s3 + $0x1d0] sm:$0xff]
  %v544 = vld [vmem:[%s3 + $0x1d8] sm:$0xff]
  %v545 = vld [vmem:[%s3 + $0x1e0] sm:$0xff]
  %v546 = vld [vmem:[%s3 + $0x1e8] sm:$0xff]
  %v547 = vld [vmem:[%s3 + $0x1f0] sm:$0xff]
  %v548 = vld [vmem:[%s3 + $0x1f8] sm:$0xff]
  %v549 = vpack.c.bf16 %v486, %v485
  %v550 = vpack.c.bf16 %v488, %v487
  %v551 = vpack.c.bf16 %v490, %v489
  %v552 = vpack.c.bf16 %v492, %v491
  %v553 = vpack.c.bf16 %v494, %v493
  %v554 = vpack.c.bf16 %v496, %v495
  %v555 = vpack.c.bf16 %v498, %v497
  %v556 = vpack.c.bf16 %v500, %v499
  %v557 = vpack.c.bf16 %v502, %v501
  %v558 = vpack.c.bf16 %v504, %v503
  %v559 = vpack.c.bf16 %v506, %v505
  %v560 = vpack.c.bf16 %v508, %v507
  %v561 = vpack.c.bf16 %v510, %v509
  %v562 = vpack.c.bf16 %v512, %v511
  %v563 = vpack.c.bf16 %v514, %v513
  %v564 = vpack.c.bf16 %v516, %v515
  %v565 = vpack.c.bf16 %v518, %v517
  %v566 = vpack.c.bf16 %v520, %v519
  %v567 = vpack.c.bf16 %v522, %v521
  %v568 = vpack.c.bf16 %v524, %v523
  %v569 = vpack.c.bf16 %v526, %v525
  %v570 = vpack.c.bf16 %v528, %v527
  %v571 = vpack.c.bf16 %v530, %v529
  %v572 = vpack.c.bf16 %v532, %v531
  %v573 = vpack.c.bf16 %v534, %v533
  %v574 = vpack.c.bf16 %v536, %v535
  %v575 = vpack.c.bf16 %v538, %v537
  %v576 = vpack.c.bf16 %v540, %v539
  %v577 = vpack.c.bf16 %v542, %v541
  %v578 = vpack.c.bf16 %v544, %v543
  %v579 = vpack.c.bf16 %v546, %v545
  %v580 = vpack.c.bf16 %v548, %v547
  %v581 = vld [vmem:[%s4] sm:$0x1]
  %v583 = vlaneseq
  %v584 = vshrl.u32 %v583, 7
  %v585 = vsub.s32 0, %v584
  %v586 = vrot.slane %v581, %v585
  %588 = vmatprep.subr.bf16.mxu0 0
  %589 = vmatpush1.bf16.msra.mxu0 %v549
  %590 = vmatprep.subr.bf16.mxu0 0
  %591 = vmatpush1.bf16.msra.mxu0 %v550
  %592 = vmatprep.subr.bf16.mxu0 0
  %593 = vmatpush1.bf16.msra.mxu0 %v551
  %594 = vmatprep.subr.bf16.mxu0 0
  %595 = vmatpush1.bf16.msra.mxu0 %v552
  %596 = vmatprep.subr.bf16.mxu0 0
  %597 = vmatpush1.bf16.msra.mxu0 %v553
  %598 = vmatprep.subr.bf16.mxu0 0
  %599 = vmatpush1.bf16.msra.mxu0 %v554
  %600 = vmatprep.subr.bf16.mxu0 0
  %601 = vmatpush1.bf16.msra.mxu0 %v555
  %602 = vmatprep.subr.bf16.mxu0 0
  %603 = vmatpush1.bf16.msra.mxu0 %v556
  %604 = vmatprep.subr.bf16.mxu0 0
  %605 = vmatpush1.bf16.msra.mxu0 %v557
  %606 = vmatprep.subr.bf16.mxu0 0
  %607 = vmatpush1.bf16.msra.mxu0 %v558
  %608 = vmatprep.subr.bf16.mxu0 0
  %609 = vmatpush1.bf16.msra.mxu0 %v559
  %610 = vmatprep.subr.bf16.mxu0 0
  %611 = vmatpush1.bf16.msra.mxu0 %v560
  %612 = vmatprep.subr.bf16.mxu0 0
  %613 = vmatpush1.bf16.msra.mxu0 %v561
  %614 = vmatprep.subr.bf16.mxu0 0
  %615 = vmatpush1.bf16.msra.mxu0 %v562
  %616 = vmatprep.subr.bf16.mxu0 0
  %617 = vmatpush1.bf16.msra.mxu0 %v563
  %618 = vmatprep.subr.bf16.mxu0 0
  %619 = vmatpush1.bf16.msra.mxu0 %v564
  %620 = vmatprep.mubr.bf16.mxu0 %v454
  %621 = vmatmul.mubr.bf16.gmra.mrb[0].mxu0 %v453
  %v622 = vpop.f32.mrb[0].mxu0
  %v623 = vadd.f32 %v586, %v622
  %v624 = vpop.f32.mrb[0].mxu0
  %v625 = vpop.f32.mrb[0].mxu0
  %v626 = vadd.f32 %v586, %v625
  %v627 = vpop.f32.mrb[0].mxu0
  %628 = vmatprep.mubr.bf16.mxu0 %v458
  %629 = vmatmul.mubr.bf16.gmra.mrb[0].mxu0 %v457
  %v630 = vpop.f32.mrb[0].mxu0
  %v631 = vadd.f32 %v586, %v630
  %v632 = vpop.f32.mrb[0].mxu0
  %v633 = vpop.f32.mrb[0].mxu0
  %v634 = vadd.f32 %v586, %v633
  %v635 = vpop.f32.mrb[0].mxu0
  %636 = vmatprep.mubr.bf16.mxu0 %v462
  %637 = vmatmul.mubr.bf16.gmra.mrb[0].mxu0 %v461
  %v638 = vpop.f32.mrb[0].mxu0
  %v639 = vadd.f32 %v586, %v638
  %v640 = vpop.f32.mrb[0].mxu0
  %v641 = vpop.f32.mrb[0].mxu0
  %v642 = vadd.f32 %v586, %v641
  %v643 = vpop.f32.mrb[0].mxu0
  %644 = vmatprep.mubr.bf16.mxu0 %v466
  %645 = vmatmul.mubr.bf16.gmra.mrb[0].mxu0 %v465
  %v646 = vpop.f32.mrb[0].mxu0
  %v647 = vadd.f32 %v586, %v646
  %v648 = vpop.f32.mrb[0].mxu0
  %v649 = vpop.f32.mrb[0].mxu0
  %v650 = vadd.f32 %v586, %v649
  %v651 = vpop.f32.mrb[0].mxu0
  %652 = vmatprep.mubr.bf16.mxu0 %v470
  %653 = vmatmul.mubr.bf16.gmra.mrb[0].mxu0 %v469
  %v654 = vpop.f32.mrb[0].mxu0
  %v655 = vadd.f32 %v586, %v654
  %v656 = vpop.f32.mrb[0].mxu0
  %v657 = vpop.f32.mrb[0].mxu0
  %v658 = vadd.f32 %v586, %v657
  %v659 = vpop.f32.mrb[0].mxu0
  %660 = vmatprep.mubr.bf16.mxu0 %v474
  %661 = vmatmul.mubr.bf16.gmra.mrb[0].mxu0 %v473
  %v662 = vpop.f32.mrb[0].mxu0
  %v663 = vadd.f32 %v586, %v662
  %v664 = vpop.f32.mrb[0].mxu0
  %v665 = vpop.f32.mrb[0].mxu0
  %v666 = vadd.f32 %v586, %v665
  %v667 = vpop.f32.mrb[0].mxu0
  %668 = vmatprep.mubr.bf16.mxu0 %v478
  %669 = vmatmul.mubr.bf16.gmra.mrb[0].mxu0 %v477
  %v670 = vpop.f32.mrb[0].mxu0
  %v671 = vadd.f32 %v586, %v670
  %v672 = vpop.f32.mrb[0].mxu0
  %v673 = vpop.f32.mrb[0].mxu0
  %v674 = vadd.f32 %v586, %v673
  %v675 = vpop.f32.mrb[0].mxu0
  %676 = vmatprep.mubr.bf16.mxu0 %v482
  %677 = vmatmul.mubr.bf16.gmra.mrb[0].mxu0 %v481
  %v678 = vpop.f32.mrb[0].mxu0
  %v679 = vadd.f32 %v586, %v678
  %v680 = vpop.f32.mrb[0].mxu0
  %v681 = vpop.f32.mrb[0].mxu0
  %v682 = vadd.f32 %v586, %v681
  %v683 = vpop.f32.mrb[0].mxu0
  %684 = vdwg.mxu0
  %685 = vmatprep.subr.bf16.mxu0 0
  %686 = vmatpush1.bf16.msra.mxu0 %v565
  %687 = vmatprep.subr.bf16.mxu0 0
  %688 = vmatpush1.bf16.msra.mxu0 %v566
  %689 = vmatprep.subr.bf16.mxu0 0
  %690 = vmatpush1.bf16.msra.mxu0 %v567
  %691 = vmatprep.subr.bf16.mxu0 0
  %692 = vmatpush1.bf16.msra.mxu0 %v568
  %693 = vmatprep.subr.bf16.mxu0 0
  %694 = vmatpush1.bf16.msra.mxu0 %v569
  %695 = vmatprep.subr.bf16.mxu0 0
  %696 = vmatpush1.bf16.msra.mxu0 %v570
  %697 = vmatprep.subr.bf16.mxu0 0
  %698 = vmatpush1.bf16.msra.mxu0 %v571
  %699 = vmatprep.subr.bf16.mxu0 0
  %700 = vmatpush1.bf16.msra.mxu0 %v572
  %701 = vmatprep.subr.bf16.mxu0 0
  %702 = vmatpush1.bf16.msra.mxu0 %v573
  %703 = vmatprep.subr.bf16.mxu0 0
  %704 = vmatpush1.bf16.msra.mxu0 %v574
  %705 = vmatprep.subr.bf16.mxu0 0
  %706 = vmatpush1.bf16.msra.mxu0 %v575
  %707 = vmatprep.subr.bf16.mxu0 0
  %708 = vmatpush1.bf16.msra.mxu0 %v576
  %709 = vmatprep.subr.bf16.mxu0 0
  %710 = vmatpush1.bf16.msra.mxu0 %v577
  %711 = vmatprep.subr.bf16.mxu0 0
  %712 = vmatpush1.bf16.msra.mxu0 %v578
  %713 = vmatprep.subr.bf16.mxu0 0
  %714 = vmatpush1.bf16.msra.mxu0 %v579
  %715 = vmatprep.subr.bf16.mxu0 0
  %716 = vmatpush1.bf16.msra.mxu0 %v580
  %717 = vmatprep.mubr.bf16.mxu0 %v456
  %718 = vmatmul.mubr.bf16.gmra.mrb[0].mxu0 %v455
  %v719 = vpop.f32.mrb[0].mxu0
  %v720 = vadd.f32 %v623, %v719
  %v721 = vpop.f32.mrb[0].mxu0
  %v722 = vpop.f32.mrb[0].mxu0
  %v723 = vadd.f32 %v626, %v722
  %v724 = vpop.f32.mrb[0].mxu0
  %725 = vmatprep.mubr.bf16.mxu0 %v460
  %726 = vmatmul.mubr.bf16.gmra.mrb[0].mxu0 %v459
  %v727 = vpop.f32.mrb[0].mxu0
  %v728 = vadd.f32 %v631, %v727
  %v729 = vpop.f32.mrb[0].mxu0
  %v730 = vpop.f32.mrb[0].mxu0
  %v731 = vadd.f32 %v634, %v730
  %v732 = vpop.f32.mrb[0].mxu0
  %733 = vmatprep.mubr.bf16.mxu0 %v464
  %734 = vmatmul.mubr.bf16.gmra.mrb[0].mxu0 %v463
  %v735 = vpop.f32.mrb[0].mxu0
  %v736 = vadd.f32 %v639, %v735
  %v737 = vpop.f32.mrb[0].mxu0
  %v738 = vpop.f32.mrb[0].mxu0
  %v739 = vadd.f32 %v642, %v738
  %v740 = vpop.f32.mrb[0].mxu0
  %741 = vmatprep.mubr.bf16.mxu0 %v468
  %742 = vmatmul.mubr.bf16.gmra.mrb[0].mxu0 %v467
  %v743 = vpop.f32.mrb[0].mxu0
  %v744 = vadd.f32 %v647, %v743
  %v745 = vpop.f32.mrb[0].mxu0
  %v746 = vpop.f32.mrb[0].mxu0
  %v747 = vadd.f32 %v650, %v746
  %v748 = vpop.f32.mrb[0].mxu0
  %749 = vmatprep.mubr.bf16.mxu0 %v472
  %750 = vmatmul.mubr.bf16.gmra.mrb[0].mxu0 %v471
  %v751 = vpop.f32.mrb[0].mxu0
  %v752 = vadd.f32 %v655, %v751
  %v753 = vpop.f32.mrb[0].mxu0
  %v754 = vpop.f32.mrb[0].mxu0
  %v755 = vadd.f32 %v658, %v754
  %v756 = vpop.f32.mrb[0].mxu0
  %757 = vmatprep.mubr.bf16.mxu0 %v476
  %758 = vmatmul.mubr.bf16.gmra.mrb[0].mxu0 %v475
  %v759 = vpop.f32.mrb[0].mxu0
  %v760 = vadd.f32 %v663, %v759
  %v761 = vpop.f32.mrb[0].mxu0
  %v762 = vpop.f32.mrb[0].mxu0
  %v763 = vadd.f32 %v666, %v762
  %v764 = vpop.f32.mrb[0].mxu0
  %765 = vmatprep.mubr.bf16.mxu0 %v480
  %766 = vmatmul.mubr.bf16.gmra.mrb[0].mxu0 %v479
  %v767 = vpop.f32.mrb[0].mxu0
  %v768 = vadd.f32 %v671, %v767
  %v769 = vpop.f32.mrb[0].mxu0
  %v770 = vpop.f32.mrb[0].mxu0
  %v771 = vadd.f32 %v674, %v770
  %v772 = vpop.f32.mrb[0].mxu0
  %773 = vmatprep.mubr.bf16.mxu0 %v484
  %774 = vmatmul.mubr.bf16.gmra.mrb[0].mxu0 %v483
  %v775 = vpop.f32.mrb[0].mxu0
  %v776 = vadd.f32 %v679, %v775
  %v777 = vpop.f32.mrb[0].mxu0
  %v778 = vpop.f32.mrb[0].mxu0
  %v779 = vadd.f32 %v682, %v778
  %v780 = vpop.f32.mrb[0].mxu0
  %781 = vdwg.mxu0
  %782 = vst [vmem:[%s5] sm:$0xff] %v720
  %783 = vst [vmem:[%s5 + $0x8] sm:$0xff] %v723
  %784 = vst [vmem:[%s5 + $0x10] sm:$0xff] %v728
  %785 = vst [vmem:[%s5 + $0x18] sm:$0xff] %v731
  %786 = vst [vmem:[%s5 + $0x20] sm:$0xff] %v736
  %787 = vst [vmem:[%s5 + $0x28] sm:$0xff] %v739
  %788 = vst [vmem:[%s5 + $0x30] sm:$0xff] %v744
  %789 = vst [vmem:[%s5 + $0x38] sm:$0xff] %v747
  %790 = vst [vmem:[%s5 + $0x40] sm:$0xff] %v752
  %791 = vst [vmem:[%s5 + $0x48] sm:$0xff] %v755
  %792 = vst [vmem:[%s5 + $0x50] sm:$0xff] %v760
  %793 = vst [vmem:[%s5 + $0x58] sm:$0xff] %v763
  %794 = vst [vmem:[%s5 + $0x60] sm:$0xff] %v768
  %795 = vst [vmem:[%s5 + $0x68] sm:$0xff] %v771
  %796 = vst [vmem:[%s5 + $0x70] sm:$0xff] %v776
  %797 = vst [vmem:[%s5 + $0x78] sm:$0xff] %v779
  // Predicated region
  $region22: #{boq_forward.21} parent=0 // pred_check
    _
  $region23: #{boq_forward.21} parent=0 // pred_check_branch
    %799 = sbr.rel (0) target = $region25
  $region24: #{boq_forward.21} parent=0 // pred_region
    _
  $region25: #{boq_forward.21} parent=0 // pred_fallthru
    _
  // Predicated region
  $region26: #{boq_forward.21} parent=0 // pred_check
    _
  $region27: #{boq_forward.21} parent=0 // pred_check_branch
    %801 = sbr.rel (0) target = $region29
  $region28: #{boq_forward.21} parent=0 // pred_region
    _
  $region29: #{boq_forward.21} parent=0 // pred_fallthru
    _

// kernel: boq_forward.32
$region0: #{boq_forward.32}
  #allocation0 [shape = 'u32[]', space=smem, size = 0x4, offset = 0x4, fixed_abs, tag = 'smem constant byte address 0x4 - core index']
  #allocation1 [shape = 'u32[144,128]{1,0:T(1,128)}', space=vmem, size = 0x12000, scoped, tag = 'internal scratch']
  %s0 = inlined_call_operand.vmem [shape: f32[8,128], index: 0, kind: input, shape index: {}]
  %s1 = inlined_call_operand.vmem [shape: f32[8,128], index: 1, kind: input, shape index: {}]
  %s2 = inlined_call_operand.vmem [shape: f32[1,128], index: 2, kind: input, shape index: {}]
  %s3 = inlined_call_operand.vmem [shape: f32[1,128], index: 3, kind: input, shape index: {}]
  %s4 = inlined_call_operand.vmem [shape: f32[8,128], index: 4, kind: output, shape index: {}]
  %s5 = sld [smem:[#allocation0]]
  $region26: #{boq_forward.32} parent=0
    _
  %s7 = ssub.s32 1, %s5
  %s8 = scalar_select 0, %s7, %s5
  // Predicated region
  $region2: #{boq_forward.32} parent=0 // pred_check
    _
  $region3: #{boq_forward.32} parent=0 // pred_check_branch
    %10 = sbr.rel (0) target = $region5
  $region4: #{boq_forward.32} parent=0 // pred_region
    _
  $region5: #{boq_forward.32} parent=0 // pred_fallthru
    _
  // Predicated region
  $region6: #{boq_forward.32} parent=0 // pred_check
    _
  $region7: #{boq_forward.32} parent=0 // pred_check_branch
    %12 = sbr.rel (0) target = $region9
  $region8: #{boq_forward.32} parent=0 // pred_region
    _
  $region9: #{boq_forward.32} parent=0 // pred_fallthru
    _
  // Predicated region
  $region10: #{boq_forward.32} parent=0 // pred_check
    _
  $region11: #{boq_forward.32} parent=0 // pred_check_branch
    %14 = sbr.rel (0) target = $region13
  $region12: #{boq_forward.32} parent=0 // pred_region
    _
  $region13: #{boq_forward.32} parent=0 // pred_fallthru
    _
  // Predicated region
  $region14: #{boq_forward.32} parent=0 // pred_check
    _
  $region15: #{boq_forward.32} parent=0 // pred_check_branch
    %16 = sbr.rel (0) target = $region17
  $region16: #{boq_forward.32} parent=0 // pred_region
    _
  $region17: #{boq_forward.32} parent=0 // pred_fallthru
    _
  %v17 = vld [vmem:[%s0] sm:$0xff]
  %v18 = vld [vmem:[%s1] sm:$0xff]
  %v19 = vadd.f32 %v17, %v18
  %v20 = vld [vmem:[%s2] sm:$0x1]
  %v21 = vld [vmem:[%s3] sm:$0x1]
  %22 = vadd.xlane.f32.xlu0 %v19
  %v23 = vpop.xlane.xlu0 %22
  %v24 = vrcp.pop 128.0
  %v25 = vmul.f32 %v23, %v24
  %v26 = vsub.f32 %v19, %v25
  %v27 = vmul.f32 %v26, %v26
  %28 = vadd.xlane.f32.xlu0 %v27
  %v29 = vpop.xlane.xlu0 %28
  %v30 = vmul.f32 %v29, %v24
  %v31 = vadd.f32 %v30, 1e-05
  %v32 = vrsqrt.pop %v31
  %v33 = vmul.f32 %v26, %v32
  %v35 = vlaneseq
  %v36 = vshrl.u32 %v35, 7
  %v37 = vsub.s32 0, %v36
  %v38 = vrot.slane %v20, %v37
  %v40 = vmul.f32 %v33, %v38
  %v42 = vlaneseq
  %v43 = vshrl.u32 %v42, 7
  %v44 = vsub.s32 0, %v43
  %v45 = vrot.slane %v21, %v44
  %v47 = vadd.f32 %v40, %v45
  %48 = vst [vmem:[%s4] sm:$0xff] %v47
  // Predicated region
  $region18: #{boq_forward.32} parent=0 // pred_check
    _
  $region19: #{boq_forward.32} parent=0 // pred_check_branch
    %50 = sbr.rel (0) target = $region21
  $region20: #{boq_forward.32} parent=0 // pred_region
    _
  $region21: #{boq_forward.32} parent=0 // pred_fallthru
    _
  // Predicated region
  $region22: #{boq_forward.32} parent=0 // pred_check
    _
  $region23: #{boq_forward.32} parent=0 // pred_check_branch
    %52 = sbr.rel (0) target = $region25
  $region24: #{boq_forward.32} parent=0 // pred_region
    _
  $region25: #{boq_forward.32} parent=0 // pred_fallthru
    _

// kernel: boq_forward.19
$region0: #{boq_forward.19}
  #allocation0 [shape = 'u32[]', space=smem, size = 0x4, offset = 0x4, fixed_abs, tag = 'smem constant byte address 0x4 - core index']
  #allocation1 [shape = 'u32[144,128]{1,0:T(1,128)}', space=vmem, size = 0x12000, scoped, tag = 'internal scratch']
  %s0 = inlined_call_operand.vmem [shape: f32[2,64,128], index: 0, kind: input, shape index: {}, may-alias: {0,1,2}]
  %s1 = inlined_call_operand.vmem [shape: f32[2,64,128], index: 1, kind: input, shape index: {}, may-alias: {0,1,2}]
  %s2 = inlined_call_operand.vmem [shape: f32[2,64,128], index: 2, kind: input, shape index: {}, may-alias: {0,1,2}]
  %s3 = inlined_call_operand.vmem [shape: f32[128,128], index: 3, kind: input, shape index: {}]
  %s4 = inlined_call_operand.vmem [shape: f32[128,128], index: 4, kind: input, shape index: {}]
  %s5 = inlined_call_operand.vmem [shape: f32[128,128], index: 5, kind: input, shape index: {}]
  %s6 = inlined_call_operand.vmem [shape: f32[2,64,128], index: 6, kind: input, shape index: {}]
  %s7 = inlined_call_operand.vmem [shape: f32[1,128], index: 7, kind: input, shape index: {}]
  %s8 = inlined_call_operand.vmem [shape: f32[1,128], index: 8, kind: input, shape index: {}]
  %s9 = inlined_call_operand.vmem [shape: f32[1,128], index: 9, kind: input, shape index: {}]
  %s10 = inlined_call_operand.vmem [shape: f32[1,128], index: 10, kind: input, shape index: {}]
  %s11 = inlined_call_operand.vmem [shape: f32[2,64,128], index: 11, kind: output, shape index: {}]
  %s12 = sld [smem:[#allocation0]]
  $region77: #{boq_forward.19} parent=0
    _
  %s14 = ssub.s32 1, %s12
  %s15 = scalar_select 0, %s14, %s12
  loop: start=0, step=1, limit=4
  $region2: #{boq_forward.19} parent=0 // loop_pre_header
    _
  $region3: #{boq_forward.19} parent=0 // loop_header
    %s17 = sphi 0, %s21
    %p18 = scmp.ge.s32.totalorder %s17, 4
    %s27 = sphi 0, %s29
    %s30 = sphi 0, %s27
    %s31 = sphi 0, %s30
    %s47 = sphi 0, %s31
    %s53 = sphi 0, %s55
    %s56 = sphi 0, %s53
    %s57 = sphi 0, %s56
    %s73 = sphi 0, %s57
    %s79 = sphi 0, %s81
    %s82 = sphi 0, %s79
    %s83 = sphi 0, %s82
    %s99 = sphi 0, %s83
    %s103 = sphi 0, %s103
    %s105 = sphi 0, %s103
    %s106 = sphi 0, %s105
    %s120 = sphi 0, %s106
    %s124 = sphi 0, %s124
    %s126 = sphi 0, %s124
    %s127 = sphi 0, %s126
    %s141 = sphi 0, %s127
    %s145 = sphi 0, %s145
    %s147 = sphi 0, %s145
    %s148 = sphi 0, %s147
    %s162 = sphi 0, %s148
    %s166 = sphi 0, %s166
    %s168 = sphi 0, %s166
    %s169 = sphi 0, %s168
    %s183 = sphi 0, %s169
    %s187 = sphi 0, %s187
    %s189 = sphi 0, %s187
    %s190 = sphi 0, %s189
    %s204 = sphi 0, %s190
    %s208 = sphi 0, %s208
    %s210 = sphi 0, %s208
    %s211 = sphi 0, %s210
    %s225 = sphi 0, %s211
    %s229 = sphi 0, %s229
    %s231 = sphi 0, %s229
    %s232 = sphi 0, %s231
    %s246 = sphi 0, %s232
    %s250 = sphi 0, %s250
    %s252 = sphi 0, %s250
    %s253 = sphi 0, %s252
    %s267 = sphi 0, %s253
    %s273 = sphi 0, %s275
    %s276 = sphi 0, %s273
    %s277 = sphi 0, %s276
    %s293 = sphi 0, %s277
  $region4: #{boq_forward.19} parent=0 // loop_header_branch
    %20 = sbr.rel (%p18) target = $region8
  $region5: #{boq_forward.19} parent=0 // loop_body
    %s22 = ssub.s32 %s17, 1
    %s23 = ssub.s32 %s17, 2
    %s24 = sadd.s32 %s17, 1
    %s25 = ssub.s32 %s17, %s24
    %p26 = scmp.eq.s32.totalorder %s25, 0
    %s28 = sadd.s32 %s27, 1
    %s29 = scalar_select %p26, %s27, %s28
    %p32 = pneg %p26
    %p33 = scmp.eq.s32.totalorder %s17, 1
    %p34 = por %p32, %p33
    %p35 = scmp.ne.s32.totalorder %s27, %s30
    %p36 = scmp.eq.s32.totalorder %s17, 0
    %p37 = por %p35, %p36
    %p38 = scmp.ne.s32.totalorder %s27, %s30
    %p39 = scmp.eq.s32.totalorder %s22, 1
    %p40 = por %p38, %p39
    %p41 = scmp.ne.s32.totalorder %s30, %s31
    %p42 = scmp.eq.s32.totalorder %s22, 0
    %p43 = por %p41, %p42
    %p44 = scmp.ne.s32.totalorder %s30, %s31
    %p45 = scmp.eq.s32.totalorder %s23, 1
    %p46 = por %p44, %p45
    %p48 = scmp.ne.s32.totalorder %s31, %s47
    %p49 = scmp.eq.s32.totalorder %s23, 0
    %p50 = por %p48, %p49
    %s51 = ssub.s32 %s17, %s24
    %p52 = scmp.eq.s32.totalorder %s51, 0
    %s54 = sadd.s32 %s53, 1
    %s55 = scalar_select %p52, %s53, %s54
    %p58 = pneg %p52
    %p59 = scmp.eq.s32.totalorder %s17, 1
    %p60 = por %p58, %p59
    %p61 = scmp.ne.s32.totalorder %s53, %s56
    %p62 = scmp.eq.s32.totalorder %s17, 0
    %p63 = por %p61, %p62
    %p64 = scmp.ne.s32.totalorder %s53, %s56
    %p65 = scmp.eq.s32.totalorder %s22, 1
    %p66 = por %p64, %p65
    %p67 = scmp.ne.s32.totalorder %s56, %s57
    %p68 = scmp.eq.s32.totalorder %s22, 0
    %p69 = por %p67, %p68
    %p70 = scmp.ne.s32.totalorder %s56, %s57
    %p71 = scmp.eq.s32.totalorder %s23, 1
    %p72 = por %p70, %p71
    %p74 = scmp.ne.s32.totalorder %s57, %s73
    %p75 = scmp.eq.s32.totalorder %s23, 0
    %p76 = por %p74, %p75
    %s77 = ssub.s32 %s17, %s24
    %p78 = scmp.eq.s32.totalorder %s77, 0
    %s80 = sadd.s32 %s79, 1
    %s81 = scalar_select %p78, %s79, %s80
    %p84 = pneg %p78
    %p85 = scmp.eq.s32.totalorder %s17, 1
    %p86 = por %p84, %p85
    %p87 = scmp.ne.s32.totalorder %s79, %s82
    %p88 = scmp.eq.s32.totalorder %s17, 0
    %p89 = por %p87, %p88
    %p90 = scmp.ne.s32.totalorder %s79, %s82
    %p91 = scmp.eq.s32.totalorder %s22, 1
    %p92 = por %p90, %p91
    %p93 = scmp.ne.s32.totalorder %s82, %s83
    %p94 = scmp.eq.s32.totalorder %s22, 0
    %p95 = por %p93, %p94
    %p96 = scmp.ne.s32.totalorder %s82, %s83
    %p97 = scmp.eq.s32.totalorder %s23, 1
    %p98 = por %p96, %p97
    %p100 = scmp.ne.s32.totalorder %s83, %s99
    %p101 = scmp.eq.s32.totalorder %s23, 0
    %p102 = por %p100, %p101
    %s104 = sadd.s32 %s103, 1
    %p107 = scmp.eq.s32.totalorder %s17, 1
    %p108 = scmp.ne.s32.totalorder %s103, %s105
    %p109 = scmp.eq.s32.totalorder %s17, 0
    %p110 = por %p108, %p109
    %p111 = scmp.ne.s32.totalorder %s103, %s105
    %p112 = scmp.eq.s32.totalorder %s22, 1
    %p113 = por %p111, %p112
    %p114 = scmp.ne.s32.totalorder %s105, %s106
    %p115 = scmp.eq.s32.totalorder %s22, 0
    %p116 = por %p114, %p115
    %p117 = scmp.ne.s32.totalorder %s105, %s106
    %p118 = scmp.eq.s32.totalorder %s23, 1
    %p119 = por %p117, %p118
    %p121 = scmp.ne.s32.totalorder %s106, %s120
    %p122 = scmp.eq.s32.totalorder %s23, 0
    %p123 = por %p121, %p122
    %s125 = sadd.s32 %s124, 1
    %p128 = scmp.eq.s32.totalorder %s17, 1
    %p129 = scmp.ne.s32.totalorder %s124, %s126
    %p130 = scmp.eq.s32.totalorder %s17, 0
    %p131 = por %p129, %p130
    %p132 = scmp.ne.s32.totalorder %s124, %s126
    %p133 = scmp.eq.s32.totalorder %s22, 1
    %p134 = por %p132, %p133
    %p135 = scmp.ne.s32.totalorder %s126, %s127
    %p136 = scmp.eq.s32.totalorder %s22, 0
    %p137 = por %p135, %p136
    %p138 = scmp.ne.s32.totalorder %s126, %s127
    %p139 = scmp.eq.s32.totalorder %s23, 1
    %p140 = por %p138, %p139
    %p142 = scmp.ne.s32.totalorder %s127, %s141
    %p143 = scmp.eq.s32.totalorder %s23, 0
    %p144 = por %p142, %p143
    %s146 = sadd.s32 %s145, 1
    %p149 = scmp.eq.s32.totalorder %s17, 1
    %p150 = scmp.ne.s32.totalorder %s145, %s147
    %p151 = scmp.eq.s32.totalorder %s17, 0
    %p152 = por %p150, %p151
    %p153 = scmp.ne.s32.totalorder %s145, %s147
    %p154 = scmp.eq.s32.totalorder %s22, 1
    %p155 = por %p153, %p154
    %p156 = scmp.ne.s32.totalorder %s147, %s148
    %p157 = scmp.eq.s32.totalorder %s22, 0
    %p158 = por %p156, %p157
    %p159 = scmp.ne.s32.totalorder %s147, %s148
    %p160 = scmp.eq.s32.totalorder %s23, 1
    %p161 = por %p159, %p160
    %p163 = scmp.ne.s32.totalorder %s148, %s162
    %p164 = scmp.eq.s32.totalorder %s23, 0
    %p165 = por %p163, %p164
    %s167 = sadd.s32 %s166, 1
    %p170 = scmp.eq.s32.totalorder %s17, 1
    %p171 = scmp.ne.s32.totalorder %s166, %s168
    %p172 = scmp.eq.s32.totalorder %s17, 0
    %p173 = por %p171, %p172
    %p174 = scmp.ne.s32.totalorder %s166, %s168
    %p175 = scmp.eq.s32.totalorder %s22, 1
    %p176 = por %p174, %p175
    %p177 = scmp.ne.s32.totalorder %s168, %s169
    %p178 = scmp.eq.s32.totalorder %s22, 0
    %p179 = por %p177, %p178
    %p180 = scmp.ne.s32.totalorder %s168, %s169
    %p181 = scmp.eq.s32.totalorder %s23, 1
    %p182 = por %p180, %p181
    %p184 = scmp.ne.s32.totalorder %s169, %s183
    %p185 = scmp.eq.s32.totalorder %s23, 0
    %p186 = por %p184, %p185
    %s188 = sadd.s32 %s187, 1
    %p191 = scmp.eq.s32.totalorder %s17, 1
    %p192 = scmp.ne.s32.totalorder %s187, %s189
    %p193 = scmp.eq.s32.totalorder %s17, 0
    %p194 = por %p192, %p193
    %p195 = scmp.ne.s32.totalorder %s187, %s189
    %p196 = scmp.eq.s32.totalorder %s22, 1
    %p197 = por %p195, %p196
    %p198 = scmp.ne.s32.totalorder %s189, %s190
    %p199 = scmp.eq.s32.totalorder %s22, 0
    %p200 = por %p198, %p199
    %p201 = scmp.ne.s32.totalorder %s189, %s190
    %p202 = scmp.eq.s32.totalorder %s23, 1
    %p203 = por %p201, %p202
    %p205 = scmp.ne.s32.totalorder %s190, %s204
    %p206 = scmp.eq.s32.totalorder %s23, 0
    %p207 = por %p205, %p206
    %s209 = sadd.s32 %s208, 1
    %p212 = scmp.eq.s32.totalorder %s17, 1
    %p213 = scmp.ne.s32.totalorder %s208, %s210
    %p214 = scmp.eq.s32.totalorder %s17, 0
    %p215 = por %p213, %p214
    %p216 = scmp.ne.s32.totalorder %s208, %s210
    %p217 = scmp.eq.s32.totalorder %s22, 1
    %p218 = por %p216, %p217
    %p219 = scmp.ne.s32.totalorder %s210, %s211
    %p220 = scmp.eq.s32.totalorder %s22, 0
    %p221 = por %p219, %p220
    %p222 = scmp.ne.s32.totalorder %s210, %s211
    %p223 = scmp.eq.s32.totalorder %s23, 1
    %p224 = por %p222, %p223
    %p226 = scmp.ne.s32.totalorder %s211, %s225
    %p227 = scmp.eq.s32.totalorder %s23, 0
    %p228 = por %p226, %p227
    %s230 = sadd.s32 %s229, 1
    %p233 = scmp.eq.s32.totalorder %s17, 1
    %p234 = scmp.ne.s32.totalorder %s229, %s231
    %p235 = scmp.eq.s32.totalorder %s17, 0
    %p236 = por %p234, %p235
    %p237 = scmp.ne.s32.totalorder %s229, %s231
    %p238 = scmp.eq.s32.totalorder %s22, 1
    %p239 = por %p237, %p238
    %p240 = scmp.ne.s32.totalorder %s231, %s232
    %p241 = scmp.eq.s32.totalorder %s22, 0
    %p242 = por %p240, %p241
    %p243 = scmp.ne.s32.totalorder %s231, %s232
    %p244 = scmp.eq.s32.totalorder %s23, 1
    %p245 = por %p243, %p244
    %p247 = scmp.ne.s32.totalorder %s232, %s246
    %p248 = scmp.eq.s32.totalorder %s23, 0
    %p249 = por %p247, %p248
    %s251 = sadd.s32 %s250, 1
    %p254 = scmp.eq.s32.totalorder %s17, 1
    %p255 = scmp.ne.s32.totalorder %s250, %s252
    %p256 = scmp.eq.s32.totalorder %s17, 0
    %p257 = por %p255, %p256
    %p258 = scmp.ne.s32.totalorder %s250, %s252
    %p259 = scmp.eq.s32.totalorder %s22, 1
    %p260 = por %p258, %p259
    %p261 = scmp.ne.s32.totalorder %s252, %s253
    %p262 = scmp.eq.s32.totalorder %s22, 0
    %p263 = por %p261, %p262
    %p264 = scmp.ne.s32.totalorder %s252, %s253
    %p265 = scmp.eq.s32.totalorder %s23, 1
    %p266 = por %p264, %p265
    %p268 = scmp.ne.s32.totalorder %s253, %s267
    %p269 = scmp.eq.s32.totalorder %s23, 0
    %p270 = por %p268, %p269
    %s271 = ssub.s32 %s17, %s24
    %p272 = scmp.eq.s32.totalorder %s271, 0
    %s274 = sadd.s32 %s273, 1
    %s275 = scalar_select %p272, %s273, %s274
    %p278 = pneg %p272
    %p279 = scmp.eq.s32.totalorder %s17, 1
    %p280 = por %p278, %p279
    %p281 = scmp.ne.s32.totalorder %s273, %s276
    %p282 = scmp.eq.s32.totalorder %s17, 0
    %p283 = por %p281, %p282
    %p284 = scmp.ne.s32.totalorder %s273, %s276
    %p285 = scmp.eq.s32.totalorder %s22, 1
    %p286 = por %p284, %p285
    %p287 = scmp.ne.s32.totalorder %s276, %s277
    %p288 = scmp.eq.s32.totalorder %s22, 0
    %p289 = por %p287, %p288
    %p290 = scmp.ne.s32.totalorder %s276, %s277
    %p291 = scmp.eq.s32.totalorder %s23, 1
    %p292 = por %p290, %p291
    %p294 = scmp.ne.s32.totalorder %s277, %s293
    %p295 = scmp.eq.s32.totalorder %s23, 0
    %p296 = por %p294, %p295
    %p297 = scmp.le.s32.totalorder 1, %s17
    %p298 = scmp.lt.s32.totalorder %s17, 3
    %p299 = pnand %p297, %p298
    %p300 = pneg %p299
    // Predicated region
    $region9: #{boq_forward.19} parent=5 // pred_check
      _
    $region10: #{boq_forward.19} parent=5 // pred_check_branch
      %302 = sbr.rel (%p299) target = $region12
    $region11: #{boq_forward.19} parent=5 // pred_region
      %s303 = ssub.s32 %s17, 1
      // Predicated region
      $region13: #{boq_forward.19} parent=11 // pred_check
        %p304 = pneg %p116
      $region14: #{boq_forward.19} parent=11 // pred_check_branch
        %306 = sbr.rel (%p304) target = $region16
      $region15: #{boq_forward.19} parent=11 // pred_region
        _
      $region16: #{boq_forward.19} parent=11 // pred_fallthru
        _
      // Predicated region
      $region17: #{boq_forward.19} parent=11 // pred_check
        %p307 = pneg %p137
      $region18: #{boq_forward.19} parent=11 // pred_check_branch
        %309 = sbr.rel (%p307) target = $region20
      $region19: #{boq_forward.19} parent=11 // pred_region
        _
      $region20: #{boq_forward.19} parent=11 // pred_fallthru
        _
      // Predicated region
      $region21: #{boq_forward.19} parent=11 // pred_check
        %p310 = pneg %p158
      $region22: #{boq_forward.19} parent=11 // pred_check_branch
        %312 = sbr.rel (%p310) target = $region24
      $region23: #{boq_forward.19} parent=11 // pred_region
        _
      $region24: #{boq_forward.19} parent=11 // pred_fallthru
        _
      // Predicated region
      $region25: #{boq_forward.19} parent=11 // pred_check
        %p313 = pneg %p179
      $region26: #{boq_forward.19} parent=11 // pred_check_branch
        %315 = sbr.rel (%p313) target = $region28
      $region27: #{boq_forward.19} parent=11 // pred_region
        _
      $region28: #{boq_forward.19} parent=11 // pred_fallthru
        _
      // Predicated region
      $region29: #{boq_forward.19} parent=11 // pred_check
        %p316 = pneg %p200
      $region30: #{boq_forward.19} parent=11 // pred_check_branch
        %318 = sbr.rel (%p316) target = $region32
      $region31: #{boq_forward.19} parent=11 // pred_region
        _
      $region32: #{boq_forward.19} parent=11 // pred_fallthru
        _
      // Predicated region
      $region33: #{boq_forward.19} parent=11 // pred_check
        %p319 = pneg %p221
      $region34: #{boq_forward.19} parent=11 // pred_check_branch
        %321 = sbr.rel (%p319) target = $region36
      $region35: #{boq_forward.19} parent=11 // pred_region
        _
      $region36: #{boq_forward.19} parent=11 // pred_fallthru
        _
      // Predicated region
      $region37: #{boq_forward.19} parent=11 // pred_check
        %p322 = pneg %p242
      $region38: #{boq_forward.19} parent=11 // pred_check_branch
        %324 = sbr.rel (%p322) target = $region40
      $region39: #{boq_forward.19} parent=11 // pred_region
        _
      $region40: #{boq_forward.19} parent=11 // pred_fallthru
        _
      // Predicated region
      $region41: #{boq_forward.19} parent=11 // pred_check
        %p325 = pneg %p263
      $region42: #{boq_forward.19} parent=11 // pred_check_branch
        %327 = sbr.rel (%p325) target = $region44
      $region43: #{boq_forward.19} parent=11 // pred_region
        _
      $region44: #{boq_forward.19} parent=11 // pred_fallthru
        _
    $region12: #{boq_forward.19} parent=5 // pred_fallthru
      _
    %p328 = scmp.lt.s32.totalorder %s17, 2
    // Predicated region
    $region45: #{boq_forward.19} parent=5 // pred_check
      %p329 = pneg %p328
    $region46: #{boq_forward.19} parent=5 // pred_check_branch
      %331 = sbr.rel (%p329) target = $region48
    $region47: #{boq_forward.19} parent=5 // pred_region
      // Predicated region
      $region49: #{boq_forward.19} parent=47 // pred_check
        %p332 = pneg %p37
      $region50: #{boq_forward.19} parent=47 // pred_check_branch
        %334 = sbr.rel (%p332) target = $region52
      $region51: #{boq_forward.19} parent=47 // pred_region
        %p335 = scmp.lt.s32.totalorder %s17, 1
        %s336 = scalar_select %p335, %s17, 1
        %s337 = smul.addr %s336, 8
        %s338 = smul.addr %s337, 8
        %s339 = scalar_lea.vmem %s0, %s338
      $region52: #{boq_forward.19} parent=47 // pred_fallthru
        _
      // Predicated region
      $region53: #{boq_forward.19} parent=47 // pred_check
        %p340 = pneg %p63
      $region54: #{boq_forward.19} parent=47 // pred_check_branch
        %342 = sbr.rel (%p340) target = $region56
      $region55: #{boq_forward.19} parent=47 // pred_region
        %p343 = scmp.lt.s32.totalorder %s17, 1
        %s344 = scalar_select %p343, %s17, 1
        %s345 = smul.addr %s344, 8
        %s346 = smul.addr %s345, 8
        %s347 = scalar_lea.vmem %s1, %s346
      $region56: #{boq_forward.19} parent=47 // pred_fallthru
        _
      // Predicated region
      $region57: #{boq_forward.19} parent=47 // pred_check
        %p348 = pneg %p89
      $region58: #{boq_forward.19} parent=47 // pred_check_branch
        %350 = sbr.rel (%p348) target = $region60
      $region59: #{boq_forward.19} parent=47 // pred_region
        %p351 = scmp.lt.s32.totalorder %s17, 1
        %s352 = scalar_select %p351, %s17, 1
        %s353 = smul.addr %s352, 8
        %s354 = smul.addr %s353, 8
        %s355 = scalar_lea.vmem %s2, %s354
      $region60: #{boq_forward.19} parent=47 // pred_fallthru
        _
    $region48: #{boq_forward.19} parent=5 // pred_fallthru
      _
    %p356 = scmp.le.s32.totalorder 1, %s17
    %p357 = scmp.lt.s32.totalorder %s17, 3
    %p358 = pnand %p356, %p357
    %p359 = pneg %p358
    // Predicated region
    $region61: #{boq_forward.19} parent=5 // pred_check
      _
    $region62: #{boq_forward.19} parent=5 // pred_check_branch
      %361 = sbr.rel (%p358) target = $region64
    $region63: #{boq_forward.19} parent=5 // pred_region
      %s362 = ssub.s32 %s17, 1
      %p363 = scmp.lt.s32.totalorder %s22, 1
      %s364 = scalar_select %p363, %s22, 1
      %s365 = smul.addr %s364, 8
      %s366 = smul.addr %s365, 8
      %s367 = scalar_lea.vmem %s0, %s366
      %p368 = pneg %p43
      %p369 = pneg %p40
      %p370 = scmp.lt.s32.totalorder %s22, 1
      %s371 = scalar_select %p370, %s22, 1
      %s372 = smul.addr %s371, 8
      %s373 = smul.addr %s372, 8
      %s374 = scalar_lea.vmem %s1, %s373
      %p375 = pneg %p69
      %p376 = pneg %p66
      %p377 = scmp.lt.s32.totalorder %s22, 1
      %s378 = scalar_select %p377, %s22, 1
      %s379 = smul.addr %s378, 8
      %s380 = smul.addr %s379, 8
      %s381 = scalar_lea.vmem %s2, %s380
      %p382 = pneg %p95
      %p383 = pneg %p92
      %p384 = pneg %p116
      %p385 = pneg %p113
      %p386 = pneg %p137
      %p387 = pneg %p134
      %p388 = pneg %p158
      %p389 = pneg %p155
      %p390 = pneg %p179
      %p391 = pneg %p176
      %p392 = pneg %p200
      %p393 = pneg %p197
      %p394 = pneg %p221
      %p395 = pneg %p218
      %p396 = pneg %p242
      %p397 = pneg %p239
      %p398 = pneg %p263
      %p399 = pneg %p260
      %p400 = pneg %p289
      %p401 = pneg %p286
      %p402 = scmp.lt.s32.totalorder %s22, 1
      %s403 = scalar_select %p402, %s22, 1
      %s404 = smul.addr %s403, 8
      %s405 = smul.addr %s404, 8
      %s406 = scalar_lea.vmem %s11, %s405
      %p407 = scmp.lt.s32.totalorder %s22, 1
      %s408 = scalar_select %p407, %s22, 1
      %s409 = smul.addr %s408, 8
      %s410 = smul.addr %s409, 8
      %s411 = scalar_lea.vmem %s0, %s410
      %p412 = scmp.lt.s32.totalorder %s22, 1
      %s413 = scalar_select %p412, %s22, 1
      %s414 = smul.addr %s413, 8
      %s415 = smul.addr %s414, 8
      %s416 = scalar_lea.vmem %s1, %s415
      %p417 = scmp.lt.s32.totalorder %s22, 1
      %s418 = scalar_select %p417, %s22, 1
      %s419 = smul.addr %s418, 8
      %s420 = smul.addr %s419, 8
      %s421 = scalar_lea.vmem %s2, %s420
      %p422 = scmp.lt.s32.totalorder %s22, 1
      %s423 = scalar_select %p422, %s22, 1
      %s424 = smul.addr %s423, 8
      %s425 = smul.addr %s424, 8
      %s426 = scalar_lea.vmem %s11, %s425
      %v428 = vld [vmem:[%s411] sm:$0xff]
      %v429 = vld [vmem:[%s411 + $0x8] sm:$0xff]
      %v430 = vld [vmem:[%s411 + $0x10] sm:$0xff]
      %v431 = vld [vmem:[%s411 + $0x18] sm:$0xff]
      %v432 = vld [vmem:[%s411 + $0x20] sm:$0xff]
      %v433 = vld [vmem:[%s411 + $0x28] sm:$0xff]
      %v434 = vld [vmem:[%s411 + $0x30] sm:$0xff]
      %v435 = vld [vmem:[%s411 + $0x38] sm:$0xff]
      %v436 = vpack.c.bf16 %v429, %v428
      %v437 = vpack.c.bf16 %v431, %v430
      %v438 = vpack.c.bf16 %v433, %v432
      %v439 = vpack.c.bf16 %v435, %v434
      %v440 = vld [vmem:[%s416] sm:$0xff]
      %v441 = vld [vmem:[%s416 + $0x8] sm:$0xff]
      %v442 = vld [vmem:[%s416 + $0x10] sm:$0xff]
      %v443 = vld [vmem:[%s416 + $0x18] sm:$0xff]
      %v444 = vld [vmem:[%s416 + $0x20] sm:$0xff]
      %v445 = vld [vmem:[%s416 + $0x28] sm:$0xff]
      %v446 = vld [vmem:[%s416 + $0x30] sm:$0xff]
      %v447 = vld [vmem:[%s416 + $0x38] sm:$0xff]
      %v448 = vpack.c.bf16 %v441, %v440
      %v449 = vpack.c.bf16 %v443, %v442
      %v450 = vpack.c.bf16 %v445, %v444
      %v451 = vpack.c.bf16 %v447, %v446
      %v452 = vld [vmem:[%s421] sm:$0xff]
      %v453 = vld [vmem:[%s421 + $0x8] sm:$0xff]
      %v454 = vld [vmem:[%s421 + $0x10] sm:$0xff]
      %v455 = vld [vmem:[%s421 + $0x18] sm:$0xff]
      %v456 = vld [vmem:[%s421 + $0x20] sm:$0xff]
      %v457 = vld [vmem:[%s421 + $0x28] sm:$0xff]
      %v458 = vld [vmem:[%s421 + $0x30] sm:$0xff]
      %v459 = vld [vmem:[%s421 + $0x38] sm:$0xff]
      %v460 = vpack.c.bf16 %v453, %v452
      %v461 = vpack.c.bf16 %v455, %v454
      %v462 = vpack.c.bf16 %v457, %v456
      %v463 = vpack.c.bf16 %v459, %v458
      %v464 = vld [vmem:[%s3] sm:$0xff]
      %v465 = vld [vmem:[%s3 + $0x8] sm:$0xff]
      %v466 = vld [vmem:[%s3 + $0x10] sm:$0xff]
      %v467 = vld [vmem:[%s3 + $0x18] sm:$0xff]
      %v468 = vld [vmem:[%s3 + $0x20] sm:$0xff]
      %v469 = vld [vmem:[%s3 + $0x28] sm:$0xff]
      %v470 = vld [vmem:[%s3 + $0x30] sm:$0xff]
      %v471 = vld [vmem:[%s3 + $0x38] sm:$0xff]
      %v472 = vld [vmem:[%s3 + $0x40] sm:$0xff]
      %v473 = vld [vmem:[%s3 + $0x48] sm:$0xff]
      %v474 = vld [vmem:[%s3 + $0x50] sm:$0xff]
      %v475 = vld [vmem:[%s3 + $0x58] sm:$0xff]
      %v476 = vld [vmem:[%s3 + $0x60] sm:$0xff]
      %v477 = vld [vmem:[%s3 + $0x68] sm:$0xff]
      %v478 = vld [vmem:[%s3 + $0x70] sm:$0xff]
      %v479 = vld [vmem:[%s3 + $0x78] sm:$0xff]
      %v480 = vpack.c.bf16 %v465, %v464
      %v481 = vpack.c.bf16 %v467, %v466
      %v482 = vpack.c.bf16 %v469, %v468
      %v483 = vpack.c.bf16 %v471, %v470
      %v484 = vpack.c.bf16 %v473, %v472
      %v485 = vpack.c.bf16 %v475, %v474
      %v486 = vpack.c.bf16 %v477, %v476
      %v487 = vpack.c.bf16 %v479, %v478
      %v488 = vld [vmem:[%s7] sm:$0x1]
      %v490 = vlaneseq
      %v491 = vshrl.u32 %v490, 7
      %v492 = vsub.s32 0, %v491
      %v493 = vrot.slane %v488, %v492
      %495 = vmatprep.subr.bf16.mxu0 0
      %496 = vmatpush1.bf16.msra.mxu0 %v480
      %497 = vmatprep.subr.bf16.mxu0 0
      %498 = vmatpush1.bf16.msra.mxu0 %v481
      %499 = vmatprep.subr.bf16.mxu0 0
      %500 = vmatpush1.bf16.msra.mxu0 %v482
      %501 = vmatprep.subr.bf16.mxu0 0
      %502 = vmatpush1.bf16.msra.mxu0 %v483
      %503 = vmatprep.subr.bf16.mxu0 0
      %504 = vmatpush1.bf16.msra.mxu0 %v484
      %505 = vmatprep.subr.bf16.mxu0 0
      %506 = vmatpush1.bf16.msra.mxu0 %v485
      %507 = vmatprep.subr.bf16.mxu0 0
      %508 = vmatpush1.bf16.msra.mxu0 %v486
      %509 = vmatprep.subr.bf16.mxu0 0
      %510 = vmatpush1.bf16.msra.mxu0 %v487
      %511 = vmatprep.subr.bf16.mxu0 0
      %512 = vmatpush1.bf16.msra.mxu0 0
      %513 = vmatprep.subr.bf16.mxu0 0
      %514 = vmatpush1.bf16.msra.mxu0 0
      %515 = vmatprep.subr.bf16.mxu0 0
      %516 = vmatpush1.bf16.msra.mxu0 0
      %517 = vmatprep.subr.bf16.mxu0 0
      %518 = vmatpush1.bf16.msra.mxu0 0
      %519 = vmatprep.subr.bf16.mxu0 0
      %520 = vmatpush1.bf16.msra.mxu0 0
      %521 = vmatprep.subr.bf16.mxu0 0
      %522 = vmatpush1.bf16.msra.mxu0 0
      %523 = vmatprep.subr.bf16.mxu0 0
      %524 = vmatpush1.bf16.msra.mxu0 0
      %525 = vmatprep.subr.bf16.mxu0 0
      %526 = vmatpush1.bf16.msra.mxu0 0
      %527 = vmatprep.mubr.bf16.mxu0 0
      %528 = vmatmul.mubr.bf16.gmra.mrb[0].mxu0 %v436
      %v529 = vpop.f32.mrb[0].mxu0
      %v530 = vadd.f32 %v493, %v529
      %v531 = vpop.f32.mrb[0].mxu0
      %v532 = vpop.f32.mrb[0].mxu0
      %v533 = vadd.f32 %v493, %v532
      %v534 = vpop.f32.mrb[0].mxu0
      %535 = vmatprep.mubr.bf16.mxu0 0
      %536 = vmatmul.mubr.bf16.gmra.mrb[0].mxu0 %v437
      %v537 = vpop.f32.mrb[0].mxu0
      %v538 = vadd.f32 %v493, %v537
      %v539 = vpop.f32.mrb[0].mxu0
      %v540 = vpop.f32.mrb[0].mxu0
      %v541 = vadd.f32 %v493, %v540
      %v542 = vpop.f32.mrb[0].mxu0
      %543 = vmatprep.mubr.bf16.mxu0 0
      %544 = vmatmul.mubr.bf16.gmra.mrb[0].mxu0 %v438
      %v545 = vpop.f32.mrb[0].mxu0
      %v546 = vadd.f32 %v493, %v545
      %v547 = vpop.f32.mrb[0].mxu0
      %v548 = vpop.f32.mrb[0].mxu0
      %v549 = vadd.f32 %v493, %v548
      %v550 = vpop.f32.mrb[0].mxu0
      %551 = vmatprep.mubr.bf16.mxu0 0
      %552 = vmatmul.mubr.bf16.gmra.mrb[0].mxu0 %v439
      %v553 = vpop.f32.mrb[0].mxu0
      %v554 = vadd.f32 %v493, %v553
      %v555 = vpop.f32.mrb[0].mxu0
      %v556 = vpop.f32.mrb[0].mxu0
      %v557 = vadd.f32 %v493, %v556
      %v558 = vpop.f32.mrb[0].mxu0
      %559 = vdwg.mxu0
      %v560 = vld [vmem:[%s4] sm:$0xff]
      %v561 = vld [vmem:[%s4 + $0x8] sm:$0xff]
      %v562 = vld [vmem:[%s4 + $0x10] sm:$0xff]
      %v563 = vld [vmem:[%s4 + $0x18] sm:$0xff]
      %v564 = vld [vmem:[%s4 + $0x20] sm:$0xff]
      %v565 = vld [vmem:[%s4 + $0x28] sm:$0xff]
      %v566 = vld [vmem:[%s4 + $0x30] sm:$0xff]
      %v567 = vld [vmem:[%s4 + $0x38] sm:$0xff]
      %v568 = vld [vmem:[%s4 + $0x40] sm:$0xff]
      %v569 = vld [vmem:[%s4 + $0x48] sm:$0xff]
      %v570 = vld [vmem:[%s4 + $0x50] sm:$0xff]
      %v571 = vld [vmem:[%s4 + $0x58] sm:$0xff]
      %v572 = vld [vmem:[%s4 + $0x60] sm:$0xff]
      %v573 = vld [vmem:[%s4 + $0x68] sm:$0xff]
      %v574 = vld [vmem:[%s4 + $0x70] sm:$0xff]
      %v575 = vld [vmem:[%s4 + $0x78] sm:$0xff]
      %v576 = vpack.c.bf16 %v561, %v560
      %v577 = vpack.c.bf16 %v563, %v562
      %v578 = vpack.c.bf16 %v565, %v564
      %v579 = vpack.c.bf16 %v567, %v566
      %v580 = vpack.c.bf16 %v569, %v568
      %v581 = vpack.c.bf16 %v571, %v570
      %v582 = vpack.c.bf16 %v573, %v572
      %v583 = vpack.c.bf16 %v575, %v574
      %v584 = vld [vmem:[%s8] sm:$0x1]
      %v586 = vlaneseq
      %v587 = vshrl.u32 %v586, 7
      %v588 = vsub.s32 0, %v587
      %v589 = vrot.slane %v584, %v588
      %591 = vmatprep.subr.bf16.mxu0 0
      %592 = vmatpush1.bf16.msra.mxu0 %v576
      %593 = vmatprep.subr.bf16.mxu0 0
      %594 = vmatpush1.bf16.msra.mxu0 %v577
      %595 = vmatprep.subr.bf16.mxu0 0
      %596 = vmatpush1.bf16.msra.mxu0 %v578
      %597 = vmatprep.subr.bf16.mxu0 0
      %598 = vmatpush1.bf16.msra.mxu0 %v579
      %599 = vmatprep.subr.bf16.mxu0 0
      %600 = vmatpush1.bf16.msra.mxu0 %v580
      %601 = vmatprep.subr.bf16.mxu0 0
      %602 = vmatpush1.bf16.msra.mxu0 %v581
      %603 = vmatprep.subr.bf16.mxu0 0
      %604 = vmatpush1.bf16.msra.mxu0 %v582
      %605 = vmatprep.subr.bf16.mxu0 0
      %606 = vmatpush1.bf16.msra.mxu0 %v583
      %607 = vmatprep.subr.bf16.mxu0 0
      %608 = vmatpush1.bf16.msra.mxu0 0
      %609 = vmatprep.subr.bf16.mxu0 0
      %610 = vmatpush1.bf16.msra.mxu0 0
      %611 = vmatprep.subr.bf16.mxu0 0
      %612 = vmatpush1.bf16.msra.mxu0 0
      %613 = vmatprep.subr.bf16.mxu0 0
      %614 = vmatpush1.bf16.msra.mxu0 0
      %615 = vmatprep.subr.bf16.mxu0 0
      %616 = vmatpush1.bf16.msra.mxu0 0
      %617 = vmatprep.subr.bf16.mxu0 0
      %618 = vmatpush1.bf16.msra.mxu0 0
      %619 = vmatprep.subr.bf16.mxu0 0
      %620 = vmatpush1.bf16.msra.mxu0 0
      %621 = vmatprep.subr.bf16.mxu0 0
      %622 = vmatpush1.bf16.msra.mxu0 0
      %623 = vmatprep.mubr.bf16.mxu0 0
      %624 = vmatmul.mubr.bf16.gmra.mrb[0].mxu0 %v448
      %v625 = vpop.f32.mrb[0].mxu0
      %v626 = vadd.f32 %v589, %v625
      %v627 = vpop.f32.mrb[0].mxu0
      %v628 = vpop.f32.mrb[0].mxu0
      %v629 = vadd.f32 %v589, %v628
      %v630 = vpop.f32.mrb[0].mxu0
      %631 = vmatprep.mubr.bf16.mxu0 0
      %632 = vmatmul.mubr.bf16.gmra.mrb[0].mxu0 %v449
      %v633 = vpop.f32.mrb[0].mxu0
      %v634 = vadd.f32 %v589, %v633
      %v635 = vpop.f32.mrb[0].mxu0
      %v636 = vpop.f32.mrb[0].mxu0
      %v637 = vadd.f32 %v589, %v636
      %v638 = vpop.f32.mrb[0].mxu0
      %639 = vmatprep.mubr.bf16.mxu0 0
      %640 = vmatmul.mubr.bf16.gmra.mrb[0].mxu0 %v450
      %v641 = vpop.f32.mrb[0].mxu0
      %v642 = vadd.f32 %v589, %v641
      %v643 = vpop.f32.mrb[0].mxu0
      %v644 = vpop.f32.mrb[0].mxu0
      %v645 = vadd.f32 %v589, %v644
      %v646 = vpop.f32.mrb[0].mxu0
      %647 = vmatprep.mubr.bf16.mxu0 0
      %648 = vmatmul.mubr.bf16.gmra.mrb[0].mxu0 %v451
      %v649 = vpop.f32.mrb[0].mxu0
      %v650 = vadd.f32 %v589, %v649
      %v651 = vpop.f32.mrb[0].mxu0
      %v652 = vpop.f32.mrb[0].mxu0
      %v653 = vadd.f32 %v589, %v652
      %v654 = vpop.f32.mrb[0].mxu0
      %655 = vdwg.mxu0
      %v656 = vld [vmem:[%s5] sm:$0xff]
      %v657 = vld [vmem:[%s5 + $0x8] sm:$0xff]
      %v658 = vld [vmem:[%s5 + $0x10] sm:$0xff]
      %v659 = vld [vmem:[%s5 + $0x18] sm:$0xff]
      %v660 = vld [vmem:[%s5 + $0x20] sm:$0xff]
      %v661 = vld [vmem:[%s5 + $0x28] sm:$0xff]
      %v662 = vld [vmem:[%s5 + $0x30] sm:$0xff]
      %v663 = vld [vmem:[%s5 + $0x38] sm:$0xff]
      %v664 = vld [vmem:[%s5 + $0x40] sm:$0xff]
      %v665 = vld [vmem:[%s5 + $0x48] sm:$0xff]
      %v666 = vld [vmem:[%s5 + $0x50] sm:$0xff]
      %v667 = vld [vmem:[%s5 + $0x58] sm:$0xff]
      %v668 = vld [vmem:[%s5 + $0x60] sm:$0xff]
      %v669 = vld [vmem:[%s5 + $0x68] sm:$0xff]
      %v670 = vld [vmem:[%s5 + $0x70] sm:$0xff]
      %v671 = vld [vmem:[%s5 + $0x78] sm:$0xff]
      %v672 = vpack.c.bf16 %v657, %v656
      %v673 = vpack.c.bf16 %v659, %v658
      %v674 = vpack.c.bf16 %v661, %v660
      %v675 = vpack.c.bf16 %v663, %v662
      %v676 = vpack.c.bf16 %v665, %v664
      %v677 = vpack.c.bf16 %v667, %v666
      %v678 = vpack.c.bf16 %v669, %v668
      %v679 = vpack.c.bf16 %v671, %v670
      %v680 = vld [vmem:[%s9] sm:$0x1]
      %v682 = vlaneseq
      %v683 = vshrl.u32 %v682, 7
      %v684 = vsub.s32 0, %v683
      %v685 = vrot.slane %v680, %v684
      %687 = vmatprep.subr.bf16.mxu0 0
      %688 = vmatpush1.bf16.msra.mxu0 %v672
      %689 = vmatprep.subr.bf16.mxu0 0
      %690 = vmatpush1.bf16.msra.mxu0 %v673
      %691 = vmatprep.subr.bf16.mxu0 0
      %692 = vmatpush1.bf16.msra.mxu0 %v674
      %693 = vmatprep.subr.bf16.mxu0 0
      %694 = vmatpush1.bf16.msra.mxu0 %v675
      %695 = vmatprep.subr.bf16.mxu0 0
      %696 = vmatpush1.bf16.msra.mxu0 %v676
      %697 = vmatprep.subr.bf16.mxu0 0
      %698 = vmatpush1.bf16.msra.mxu0 %v677
      %699 = vmatprep.subr.bf16.mxu0 0
      %700 = vmatpush1.bf16.msra.mxu0 %v678
      %701 = vmatprep.subr.bf16.mxu0 0
      %702 = vmatpush1.bf16.msra.mxu0 %v679
      %703 = vmatprep.subr.bf16.mxu0 0
      %704 = vmatpush1.bf16.msra.mxu0 0
      %705 = vmatprep.subr.bf16.mxu0 0
      %706 = vmatpush1.bf16.msra.mxu0 0
      %707 = vmatprep.subr.bf16.mxu0 0
      %708 = vmatpush1.bf16.msra.mxu0 0
      %709 = vmatprep.subr.bf16.mxu0 0
      %710 = vmatpush1.bf16.msra.mxu0 0
      %711 = vmatprep.subr.bf16.mxu0 0
      %712 = vmatpush1.bf16.msra.mxu0 0
      %713 = vmatprep.subr.bf16.mxu0 0
      %714 = vmatpush1.bf16.msra.mxu0 0
      %715 = vmatprep.subr.bf16.mxu0 0
      %716 = vmatpush1.bf16.msra.mxu0 0
      %717 = vmatprep.subr.bf16.mxu0 0
      %718 = vmatpush1.bf16.msra.mxu0 0
      %719 = vmatprep.mubr.bf16.mxu0 0
      %720 = vmatmul.mubr.bf16.gmra.mrb[0].mxu0 %v460
      %v721 = vpop.f32.mrb[0].mxu0
      %v722 = vadd.f32 %v685, %v721
      %v723 = vpop.f32.mrb[0].mxu0
      %v724 = vpop.f32.mrb[0].mxu0
      %v725 = vadd.f32 %v685, %v724
      %v726 = vpop.f32.mrb[0].mxu0
      %727 = vmatprep.mubr.bf16.mxu0 0
      %728 = vmatmul.mubr.bf16.gmra.mrb[0].mxu0 %v461
      %v729 = vpop.f32.mrb[0].mxu0
      %v730 = vadd.f32 %v685, %v729
      %v731 = vpop.f32.mrb[0].mxu0
      %v732 = vpop.f32.mrb[0].mxu0
      %v733 = vadd.f32 %v685, %v732
      %v734 = vpop.f32.mrb[0].mxu0
      %735 = vmatprep.mubr.bf16.mxu0 0
      %736 = vmatmul.mubr.bf16.gmra.mrb[0].mxu0 %v462
      %v737 = vpop.f32.mrb[0].mxu0
      %v738 = vadd.f32 %v685, %v737
      %v739 = vpop.f32.mrb[0].mxu0
      %v740 = vpop.f32.mrb[0].mxu0
      %v741 = vadd.f32 %v685, %v740
      %v742 = vpop.f32.mrb[0].mxu0
      %743 = vmatprep.mubr.bf16.mxu0 0
      %744 = vmatmul.mubr.bf16.gmra.mrb[0].mxu0 %v463
      %v745 = vpop.f32.mrb[0].mxu0
      %v746 = vadd.f32 %v685, %v745
      %v747 = vpop.f32.mrb[0].mxu0
      %v748 = vpop.f32.mrb[0].mxu0
      %v749 = vadd.f32 %v685, %v748
      %v750 = vpop.f32.mrb[0].mxu0
      %751 = vdwg.mxu0
      %v752 = vmul.f32 %v530, 0.125
      %v753 = vmul.f32 %v533, 0.125
      %v754 = vmul.f32 %v538, 0.125
      %v755 = vmul.f32 %v541, 0.125
      %v756 = vmul.f32 %v546, 0.125
      %v757 = vmul.f32 %v549, 0.125
      %v758 = vmul.f32 %v554, 0.125
      %v759 = vmul.f32 %v557, 0.125
      %v760 = vpack.c.bf16 %v753, %v752
      %v761 = vpack.c.bf16 %v755, %v754
      %v762 = vpack.c.bf16 %v757, %v756
      %v763 = vpack.c.bf16 %v759, %v758
      %v764 = vpack.c.bf16 %v629, %v626
      %v765 = vpack.c.bf16 %v637, %v634
      %v766 = vpack.c.bf16 %v645, %v642
      %v767 = vpack.c.bf16 %v653, %v650
      %v768 = vpack.c.bf16 %v725, %v722
      %v769 = vpack.c.bf16 %v733, %v730
      %v770 = vpack.c.bf16 %v741, %v738
      %v771 = vpack.c.bf16 %v749, %v746
      %vm772 = vcmask 523264
      %v774 = vsel %vm772, %v760, 0
      %v777 = vsel %vm772, %v761, 0
      %v780 = vsel %vm772, %v762, 0
      %v783 = vsel %vm772, %v763, 0
      %v786 = vsel %vm772, %v764, 0
      %v789 = vsel %vm772, %v765, 0
      %v792 = vsel %vm772, %v766, 0
      %v795 = vsel %vm772, %v767, 0
      %797 = vmatprep.subr.bf16.mxu0 0
      %798 = vmatpush1.bf16.xpose.msra.mxu0 %v786
      %799 = vmatprep.subr.bf16.mxu0 0
      %800 = vmatpush1.bf16.xpose.msra.mxu0 %v789
      %801 = vmatprep.subr.bf16.mxu0 0
      %802 = vmatpush1.bf16.xpose.msra.mxu0 %v792
      %803 = vmatprep.subr.bf16.mxu0 0
      %804 = vmatpush1.bf16.xpose.msra.mxu0 %v795
      %805 = vmatprep.subr.bf16.mxu0 0
      %806 = vmatpush1.bf16.xpose.msra.mxu0 0
      %807 = vmatprep.subr.bf16.mxu0 0
      %808 = vmatpush1.bf16.xpose.msra.mxu0 0
      %809 = vmatprep.subr.bf16.mxu0 0
      %810 = vmatpush1.bf16.xpose.msra.mxu0 0
      %811 = vmatprep.subr.bf16.mxu0 0
      %812 = vmatpush1.bf16.xpose.msra.mxu0 0
      %813 = vmatprep.subr.bf16.mxu0 0
      %814 = vmatpush1.bf16.xpose.msra.mxu0 0
      %815 = vmatprep.subr.bf16.mxu0 0
      %816 = vmatpush1.bf16.xpose.msra.mxu0 0
      %817 = vmatprep.subr.bf16.mxu0 0
      %818 = vmatpush1.bf16.xpose.msra.mxu0 0
      %819 = vmatprep.subr.bf16.mxu0 0
      %820 = vmatpush1.bf16.xpose.msra.mxu0 0
      %821 = vmatprep.subr.bf16.mxu0 0
      %822 = vmatpush1.bf16.xpose.msra.mxu0 0
      %823 = vmatprep.subr.bf16.mxu0 0
      %824 = vmatpush1.bf16.xpose.msra.mxu0 0
      %825 = vmatprep.subr.bf16.mxu0 0
      %826 = vmatpush1.bf16.xpose.msra.mxu0 0
      %827 = vmatprep.subr.bf16.mxu0 0
      %828 = vmatpush1.bf16.xpose.msra.mxu0 0
      %829 = vmatprep.mubr.bf16.mxu0 0
      %830 = vmatmul.mubr.bf16.gmra.mrb[0].mxu0 %v774
      %v831 = vpop.f32.mrb[0].mxu0
      %v832 = vadd.f32 0.0, %v831
      %v833 = vpop.f32.mrb[0].mxu0
      %v834 = vpop.f32.mrb[0].mxu0
      %v835 = vadd.f32 0.0, %v834
      %v836 = vpop.f32.mrb[0].mxu0
      %837 = vmatprep.mubr.bf16.mxu0 0
      %838 = vmatmul.mubr.bf16.gmra.mrb[0].mxu0 %v777
      %v839 = vpop.f32.mrb[0].mxu0
      %v840 = vadd.f32 0.0, %v839
      %v841 = vpop.f32.mrb[0].mxu0
      %v842 = vpop.f32.mrb[0].mxu0
      %v843 = vadd.f32 0.0, %v842
      %v844 = vpop.f32.mrb[0].mxu0
      %845 = vmatprep.mubr.bf16.mxu0 0
      %846 = vmatmul.mubr.bf16.gmra.mrb[0].mxu0 %v780
      %v847 = vpop.f32.mrb[0].mxu0
      %v848 = vadd.f32 0.0, %v847
      %v849 = vpop.f32.mrb[0].mxu0
      %v850 = vpop.f32.mrb[0].mxu0
      %v851 = vadd.f32 0.0, %v850
      %v852 = vpop.f32.mrb[0].mxu0
      %853 = vmatprep.mubr.bf16.mxu0 0
      %854 = vmatmul.mubr.bf16.gmra.mrb[0].mxu0 %v783
      %v855 = vpop.f32.mrb[0].mxu0
      %v856 = vadd.f32 0.0, %v855
      %v857 = vpop.f32.mrb[0].mxu0
      %v858 = vpop.f32.mrb[0].mxu0
      %v859 = vadd.f32 0.0, %v858
      %v860 = vpop.f32.mrb[0].mxu0
      %861 = vdwg.mxu0
      %v862 = vsel %vm772, %v832, -inf
      %863 = vmax.xlane.f32.xlu0 %v862
      %v864 = vpop.xlane.xlu0 %863
      %v865 = vsel %vm772, %v835, -inf
      %866 = vmax.xlane.f32.xlu0 %v865
      %v867 = vpop.xlane.xlu0 %866
      %v868 = vsel %vm772, %v840, -inf
      %869 = vmax.xlane.f32.xlu0 %v868
      %v870 = vpop.xlane.xlu0 %869
      %v871 = vsel %vm772, %v843, -inf
      %872 = vmax.xlane.f32.xlu0 %v871
      %v873 = vpop.xlane.xlu0 %872
      %v874 = vsel %vm772, %v848, -inf
      %875 = vmax.xlane.f32.xlu0 %v874
      %v876 = vpop.xlane.xlu0 %875
      %v877 = vsel %vm772, %v851, -inf
      %878 = vmax.xlane.f32.xlu0 %v877
      %v879 = vpop.xlane.xlu0 %878
      %v880 = vsel %vm772, %v856, -inf
      %881 = vmax.xlane.f32.xlu0 %v880
      %v882 = vpop.xlane.xlu0 %881
      %v883 = vsel %vm772, %v859, -inf
      %884 = vmax.xlane.f32.xlu0 %v883
      %v885 = vpop.xlane.xlu0 %884
      %v886 = vsub.f32 %v832, %v864
      %v887 = vsub.f32 %v835, %v867
      %v888 = vsub.f32 %v840, %v870
      %v889 = vsub.f32 %v843, %v873
      %v890 = vsub.f32 %v848, %v876
      %v891 = vsub.f32 %v851, %v879
      %v892 = vsub.f32 %v856, %v882
      %v893 = vsub.f32 %v859, %v885
      %v894 = vmul.f32 %v886, 1.442695
      %v895 = vpow.pop %v894
      %v896 = vmul.f32 %v887, 1.442695
      %v897 = vpow.pop %v896
      %v898 = vmul.f32 %v888, 1.442695
      %v899 = vpow.pop %v898
      %v900 = vmul.f32 %v889, 1.442695
      %v901 = vpow.pop %v900
      %v902 = vmul.f32 %v890, 1.442695
      %v903 = vpow.pop %v902
      %v904 = vmul.f32 %v891, 1.442695
      %v905 = vpow.pop %v904
      %v906 = vmul.f32 %v892, 1.442695
      %v907 = vpow.pop %v906
      %v908 = vmul.f32 %v893, 1.442695
      %v909 = vpow.pop %v908
      %v910 = vsel %vm772, %v895, 0.0
      %911 = vadd.xlane.f32.xlu0 %v910
      %v912 = vpop.xlane.xlu0 %911
      %v913 = vsel %vm772, %v897, 0.0
      %914 = vadd.xlane.f32.xlu0 %v913
      %v915 = vpop.xlane.xlu0 %914
      %v916 = vsel %vm772, %v899, 0.0
      %917 = vadd.xlane.f32.xlu0 %v916
      %v918 = vpop.xlane.xlu0 %917
      %v919 = vsel %vm772, %v901, 0.0
      %920 = vadd.xlane.f32.xlu0 %v919
      %v921 = vpop.xlane.xlu0 %920
      %v922 = vsel %vm772, %v903, 0.0
      %923 = vadd.xlane.f32.xlu0 %v922
      %v924 = vpop.xlane.xlu0 %923
      %v925 = vsel %vm772, %v905, 0.0
      %926 = vadd.xlane.f32.xlu0 %v925
      %v927 = vpop.xlane.xlu0 %926
      %v928 = vsel %vm772, %v907, 0.0
      %929 = vadd.xlane.f32.xlu0 %v928
      %v930 = vpop.xlane.xlu0 %929
      %v931 = vsel %vm772, %v909, 0.0
      %932 = vadd.xlane.f32.xlu0 %v931
      %v933 = vpop.xlane.xlu0 %932
      %v934 = vrcp.pop %v912
      %v935 = vrcp.pop %v915
      %v936 = vrcp.pop %v918
      %v937 = vrcp.pop %v921
      %v938 = vrcp.pop %v924
      %v939 = vrcp.pop %v927
      %v940 = vrcp.pop %v930
      %v941 = vrcp.pop %v933
      %v942 = vmul.f32 %v895, %v934
      %v943 = vmul.f32 %v897, %v935
      %v944 = vmul.f32 %v899, %v936
      %v945 = vmul.f32 %v901, %v937
      %v946 = vmul.f32 %v903, %v938
      %v947 = vmul.f32 %v905, %v939
      %v948 = vmul.f32 %v907, %v940
      %v949 = vmul.f32 %v909, %v941
      %v950 = vpack.c.bf16 %v943, %v942
      %v951 = vpack.c.bf16 %v945, %v944
      %v952 = vpack.c.bf16 %v947, %v946
      %v953 = vpack.c.bf16 %v949, %v948
      %v955 = vsel %vm772, %v950, 0
      %v958 = vsel %vm772, %v951, 0
      %v961 = vsel %vm772, %v952, 0
      %v964 = vsel %vm772, %v953, 0
      %966 = vmatprep.subr.bf16.mxu0 0
      %967 = vmatpush1.bf16.msra.mxu0 %v768
      %968 = vmatprep.subr.bf16.mxu0 0
      %969 = vmatpush1.bf16.msra.mxu0 %v769
      %970 = vmatprep.subr.bf16.mxu0 0
      %971 = vmatpush1.bf16.msra.mxu0 %v770
      %972 = vmatprep.subr.bf16.mxu0 0
      %973 = vmatpush1.bf16.msra.mxu0 %v771
      %974 = vmatprep.subr.bf16.mxu0 0
      %975 = vmatpush1.bf16.msra.mxu0 0
      %976 = vmatprep.subr.bf16.mxu0 0
      %977 = vmatpush1.bf16.msra.mxu0 0
      %978 = vmatprep.subr.bf16.mxu0 0
      %979 = vmatpush1.bf16.msra.mxu0 0
      %980 = vmatprep.subr.bf16.mxu0 0
      %981 = vmatpush1.bf16.msra.mxu0 0
      %982 = vmatprep.subr.bf16.mxu0 0
      %983 = vmatpush1.bf16.msra.mxu0 0
      %984 = vmatprep.subr.bf16.mxu0 0
      %985 = vmatpush1.bf16.msra.mxu0 0
      %986 = vmatprep.subr.bf16.mxu0 0
      %987 = vmatpush1.bf16.msra.mxu0 0
      %988 = vmatprep.subr.bf16.mxu0 0
      %989 = vmatpush1.bf16.msra.mxu0 0
      %990 = vmatprep.subr.bf16.mxu0 0
      %991 = vmatpush1.bf16.msra.mxu0 0
      %992 = vmatprep.subr.bf16.mxu0 0
      %993 = vmatpush1.bf16.msra.mxu0 0
      %994 = vmatprep.subr.bf16.mxu0 0
      %995 = vmatpush1.bf16.msra.mxu0 0
      %996 = vmatprep.subr.bf16.mxu0 0
      %997 = vmatpush1.bf16.msra.mxu0 0
      %998 = vmatprep.mubr.bf16.mxu0 0
      %999 = vmatmul.mubr.bf16.gmra.mrb[0].mxu0 %v955
      %v1000 = vpop.f32.mrb[0].mxu0
      %v1001 = vadd.f32 0.0, %v1000
      %v1002 = vpop.f32.mrb[0].mxu0
      %v1003 = vpop.f32.mrb[0].mxu0
      %v1004 = vadd.f32 0.0, %v1003
      %v1005 = vpop.f32.mrb[0].mxu0
      %1006 = vmatprep.mubr.bf16.mxu0 0
      %1007 = vmatmul.mubr.bf16.gmra.mrb[0].mxu0 %v958
      %v1008 = vpop.f32.mrb[0].mxu0
      %v1009 = vadd.f32 0.0, %v1008
      %v1010 = vpop.f32.mrb[0].mxu0
      %v1011 = vpop.f32.mrb[0].mxu0
      %v1012 = vadd.f32 0.0, %v1011
      %v1013 = vpop.f32.mrb[0].mxu0
      %1014 = vmatprep.mubr.bf16.mxu0 0
      %1015 = vmatmul.mubr.bf16.gmra.mrb[0].mxu0 %v961
      %v1016 = vpop.f32.mrb[0].mxu0
      %v1017 = vadd.f32 0.0, %v1016
      %v1018 = vpop.f32.mrb[0].mxu0
      %v1019 = vpop.f32.mrb[0].mxu0
      %v1020 = vadd.f32 0.0, %v1019
      %v1021 = vpop.f32.mrb[0].mxu0
      %1022 = vmatprep.mubr.bf16.mxu0 0
      %1023 = vmatmul.mubr.bf16.gmra.mrb[0].mxu0 %v964
      %v1024 = vpop.f32.mrb[0].mxu0
      %v1025 = vadd.f32 0.0, %v1024
      %v1026 = vpop.f32.mrb[0].mxu0
      %v1027 = vpop.f32.mrb[0].mxu0
      %v1028 = vadd.f32 0.0, %v1027
      %v1029 = vpop.f32.mrb[0].mxu0
      %1030 = vdwg.mxu0
      %v1031 = vpack.c.bf16 %v1004, %v1001
      %v1032 = vpack.c.bf16 %v1012, %v1009
      %v1033 = vpack.c.bf16 %v1020, %v1017
      %v1034 = vpack.c.bf16 %v1028, %v1025
      %v1035 = vld [vmem:[%s6] sm:$0xff]
      %v1036 = vld [vmem:[%s6 + $0x8] sm:$0xff]
      %v1037 = vld [vmem:[%s6 + $0x10] sm:$0xff]
      %v1038 = vld [vmem:[%s6 + $0x18] sm:$0xff]
      %v1039 = vld [vmem:[%s6 + $0x20] sm:$0xff]
      %v1040 = vld [vmem:[%s6 + $0x28] sm:$0xff]
      %v1041 = vld [vmem:[%s6 + $0x30] sm:$0xff]
      %v1042 = vld [vmem:[%s6 + $0x38] sm:$0xff]
      %v1043 = vpack.c.bf16 %v1036, %v1035
      %v1044 = vpack.c.bf16 %v1038, %v1037
      %v1045 = vpack.c.bf16 %v1040, %v1039
      %v1046 = vpack.c.bf16 %v1042, %v1041
      %1051 = vrot.lane.b32.xlu0 %v760, 64
      %v1052 = vpop.permute.xlu0 %1051
      %1053 = vrot.lane.b32.xlu0 %v761, 64
      %v1054 = vpop.permute.xlu0 %1053
      %1055 = vrot.lane.b32.xlu0 %v762, 64
      %v1056 = vpop.permute.xlu0 %1055
      %1057 = vrot.lane.b32.xlu0 %v763, 64
      %v1058 = vpop.permute.xlu0 %1057
      %1063 = vrot.lane.b32.xlu0 %v764, 64
      %v1064 = vpop.permute.xlu0 %1063
      %1065 = vrot.lane.b32.xlu0 %v765, 64
      %v1066 = vpop.permute.xlu0 %1065
      %1067 = vrot.lane.b32.xlu0 %v766, 64
      %v1068 = vpop.permute.xlu0 %1067
      %1069 = vrot.lane.b32.xlu0 %v767, 64
      %v1070 = vpop.permute.xlu0 %1069
      %v1072 = vsel %vm772, %v1052, 0
      %v1075 = vsel %vm772, %v1054, 0
      %v1078 = vsel %vm772, %v1056, 0
      %v1081 = vsel %vm772, %v1058, 0
      %v1084 = vsel %vm772, %v1064, 0
      %v1087 = vsel %vm772, %v1066, 0
      %v1090 = vsel %vm772, %v1068, 0
      %v1093 = vsel %vm772, %v1070, 0
      %1095 = vmatprep.subr.bf16.mxu0 0
      %1096 = vmatpush1.bf16.xpose.msra.mxu0 %v1084
      %1097 = vmatprep.subr.bf16.mxu0 0
      %1098 = vmatpush1.bf16.xpose.msra.mxu0 %v1087
      %1099 = vmatprep.subr.bf16.mxu0 0
      %1100 = vmatpush1.bf16.xpose.msra.mxu0 %v1090
      %1101 = vmatprep.subr.bf16.mxu0 0
      %1102 = vmatpush1.bf16.xpose.msra.mxu0 %v1093
      %1103 = vmatprep.subr.bf16.mxu0 0
      %1104 = vmatpush1.bf16.xpose.msra.mxu0 0
      %1105 = vmatprep.subr.bf16.mxu0 0
      %1106 = vmatpush1.bf16.xpose.msra.mxu0 0
      %1107 = vmatprep.subr.bf16.mxu0 0
      %1108 = vmatpush1.bf16.xpose.msra.mxu0 0
      %1109 = vmatprep.subr.bf16.mxu0 0
      %1110 = vmatpush1.bf16.xpose.msra.mxu0 0
      %1111 = vmatprep.subr.bf16.mxu0 0
      %1112 = vmatpush1.bf16.xpose.msra.mxu0 0
      %1113 = vmatprep.subr.bf16.mxu0 0
      %1114 = vmatpush1.bf16.xpose.msra.mxu0 0
      %1115 = vmatprep.subr.bf16.mxu0 0
      %1116 = vmatpush1.bf16.xpose.msra.mxu0 0
      %1117 = vmatprep.subr.bf16.mxu0 0
      %1118 = vmatpush1.bf16.xpose.msra.mxu0 0
      %1119 = vmatprep.subr.bf16.mxu0 0
      %1120 = vmatpush1.bf16.xpose.msra.mxu0 0
      %1121 = vmatprep.subr.bf16.mxu0 0
      %1122 = vmatpush1.bf16.xpose.msra.mxu0 0
      %1123 = vmatprep.subr.bf16.mxu0 0
      %1124 = vmatpush1.bf16.xpose.msra.mxu0 0
      %1125 = vmatprep.subr.bf16.mxu0 0
      %1126 = vmatpush1.bf16.xpose.msra.mxu0 0
      %1127 = vmatprep.mubr.bf16.mxu0 0
      %1128 = vmatmul.mubr.bf16.gmra.mrb[0].mxu0 %v1072
      %v1129 = vpop.f32.mrb[0].mxu0
      %v1130 = vadd.f32 0.0, %v1129
      %v1131 = vpop.f32.mrb[0].mxu0
      %v1132 = vpop.f32.mrb[0].mxu0
      %v1133 = vadd.f32 0.0, %v1132
      %v1134 = vpop.f32.mrb[0].mxu0
      %1135 = vmatprep.mubr.bf16.mxu0 0
      %1136 = vmatmul.mubr.bf16.gmra.mrb[0].mxu0 %v1075
      %v1137 = vpop.f32.mrb[0].mxu0
      %v1138 = vadd.f32 0.0, %v1137
      %v1139 = vpop.f32.mrb[0].mxu0
      %v1140 = vpop.f32.mrb[0].mxu0
      %v1141 = vadd.f32 0.0, %v1140
      %v1142 = vpop.f32.mrb[0].mxu0
      %1143 = vmatprep.mubr.bf16.mxu0 0
      %1144 = vmatmul.mubr.bf16.gmra.mrb[0].mxu0 %v1078
      %v1145 = vpop.f32.mrb[0].mxu0
      %v1146 = vadd.f32 0.0, %v1145
      %v1147 = vpop.f32.mrb[0].mxu0
      %v1148 = vpop.f32.mrb[0].mxu0
      %v1149 = vadd.f32 0.0, %v1148
      %v1150 = vpop.f32.mrb[0].mxu0
      %1151 = vmatprep.mubr.bf16.mxu0 0
      %1152 = vmatmul.mubr.bf16.gmra.mrb[0].mxu0 %v1081
      %v1153 = vpop.f32.mrb[0].mxu0
      %v1154 = vadd.f32 0.0, %v1153
      %v1155 = vpop.f32.mrb[0].mxu0
      %v1156 = vpop.f32.mrb[0].mxu0
      %v1157 = vadd.f32 0.0, %v1156
      %v1158 = vpop.f32.mrb[0].mxu0
      %1159 = vdwg.mxu0
      %v1160 = vsel %vm772, %v1130, -inf
      %1161 = vmax.xlane.f32.xlu0 %v1160
      %v1162 = vpop.xlane.xlu0 %1161
      %v1163 = vsel %vm772, %v1133, -inf
      %1164 = vmax.xlane.f32.xlu0 %v1163
      %v1165 = vpop.xlane.xlu0 %1164
      %v1166 = vsel %vm772, %v1138, -inf
      %1167 = vmax.xlane.f32.xlu0 %v1166
      %v1168 = vpop.xlane.xlu0 %1167
      %v1169 = vsel %vm772, %v1141, -inf
      %1170 = vmax.xlane.f32.xlu0 %v1169
      %v1171 = vpop.xlane.xlu0 %1170
      %v1172 = vsel %vm772, %v1146, -inf
      %1173 = vmax.xlane.f32.xlu0 %v1172
      %v1174 = vpop.xlane.xlu0 %1173
      %v1175 = vsel %vm772, %v1149, -inf
      %1176 = vmax.xlane.f32.xlu0 %v1175
      %v1177 = vpop.xlane.xlu0 %1176
      %v1178 = vsel %vm772, %v1154, -inf
      %1179 = vmax.xlane.f32.xlu0 %v1178
      %v1180 = vpop.xlane.xlu0 %1179
      %v1181 = vsel %vm772, %v1157, -inf
      %1182 = vmax.xlane.f32.xlu0 %v1181
      %v1183 = vpop.xlane.xlu0 %1182
      %v1184 = vsub.f32 %v1130, %v1162
      %v1185 = vsub.f32 %v1133, %v1165
      %v1186 = vsub.f32 %v1138, %v1168
      %v1187 = vsub.f32 %v1141, %v1171
      %v1188 = vsub.f32 %v1146, %v1174
      %v1189 = vsub.f32 %v1149, %v1177
      %v1190 = vsub.f32 %v1154, %v1180
      %v1191 = vsub.f32 %v1157, %v1183
      %v1192 = vmul.f32 %v1184, 1.442695
      %v1193 = vpow.pop %v1192
      %v1194 = vmul.f32 %v1185, 1.442695
      %v1195 = vpow.pop %v1194
      %v1196 = vmul.f32 %v1186, 1.442695
      %v1197 = vpow.pop %v1196
      %v1198 = vmul.f32 %v1187, 1.442695
      %v1199 = vpow.pop %v1198
      %v1200 = vmul.f32 %v1188, 1.442695
      %v1201 = vpow.pop %v1200
      %v1202 = vmul.f32 %v1189, 1.442695
      %v1203 = vpow.pop %v1202
      %v1204 = vmul.f32 %v1190, 1.442695
      %v1205 = vpow.pop %v1204
      %v1206 = vmul.f32 %v1191, 1.442695
      %v1207 = vpow.pop %v1206
      %v1208 = vsel %vm772, %v1193, 0.0
      %1209 = vadd.xlane.f32.xlu0 %v1208
      %v1210 = vpop.xlane.xlu0 %1209
      %v1211 = vsel %vm772, %v1195, 0.0
      %1212 = vadd.xlane.f32.xlu0 %v1211
      %v1213 = vpop.xlane.xlu0 %1212
      %v1214 = vsel %vm772, %v1197, 0.0
      %1215 = vadd.xlane.f32.xlu0 %v1214
      %v1216 = vpop.xlane.xlu0 %1215
      %v1217 = vsel %vm772, %v1199, 0.0
      %1218 = vadd.xlane.f32.xlu0 %v1217
      %v1219 = vpop.xlane.xlu0 %1218
      %v1220 = vsel %vm772, %v1201, 0.0
      %1221 = vadd.xlane.f32.xlu0 %v1220
      %v1222 = vpop.xlane.xlu0 %1221
      %v1223 = vsel %vm772, %v1203, 0.0
      %1224 = vadd.xlane.f32.xlu0 %v1223
      %v1225 = vpop.xlane.xlu0 %1224
      %v1226 = vsel %vm772, %v1205, 0.0
      %1227 = vadd.xlane.f32.xlu0 %v1226
      %v1228 = vpop.xlane.xlu0 %1227
      %v1229 = vsel %vm772, %v1207, 0.0
      %1230 = vadd.xlane.f32.xlu0 %v1229
      %v1231 = vpop.xlane.xlu0 %1230
      %v1232 = vrcp.pop %v1210
      %v1233 = vrcp.pop %v1213
      %v1234 = vrcp.pop %v1216
      %v1235 = vrcp.pop %v1219
      %v1236 = vrcp.pop %v1222
      %v1237 = vrcp.pop %v1225
      %v1238 = vrcp.pop %v1228
      %v1239 = vrcp.pop %v1231
      %v1240 = vmul.f32 %v1193, %v1232
      %v1241 = vmul.f32 %v1195, %v1233
      %v1242 = vmul.f32 %v1197, %v1234
      %v1243 = vmul.f32 %v1199, %v1235
      %v1244 = vmul.f32 %v1201, %v1236
      %v1245 = vmul.f32 %v1203, %v1237
      %v1246 = vmul.f32 %v1205, %v1238
      %v1247 = vmul.f32 %v1207, %v1239
      %v1248 = vpack.c.bf16 %v1241, %v1240
      %v1249 = vpack.c.bf16 %v1243, %v1242
      %v1250 = vpack.c.bf16 %v1245, %v1244
      %v1251 = vpack.c.bf16 %v1247, %v1246
      %1256 = vrot.lane.b32.xlu0 %v768, 64
      %v1257 = vpop.permute.xlu0 %1256
      %1258 = vrot.lane.b32.xlu0 %v769, 64
      %v1259 = vpop.permute.xlu0 %1258
      %1260 = vrot.lane.b32.xlu0 %v770, 64
      %v1261 = vpop.permute.xlu0 %1260
      %1262 = vrot.lane.b32.xlu0 %v771, 64
      %v1263 = vpop.permute.xlu0 %1262
      %v1269 = vsel %vm772, %v1248, 0
      %v1272 = vsel %vm772, %v1249, 0
      %v1275 = vsel %vm772, %v1250, 0
      %v1278 = vsel %vm772, %v1251, 0
      %1280 = vmatprep.subr.bf16.mxu0 0
      %1281 = vmatpush1.bf16.msra.mxu0 %v1257
      %1282 = vmatprep.subr.bf16.mxu0 0
      %1283 = vmatpush1.bf16.msra.mxu0 %v1259
      %1284 = vmatprep.subr.bf16.mxu0 0
      %1285 = vmatpush1.bf16.msra.mxu0 %v1261
      %1286 = vmatprep.subr.bf16.mxu0 0
      %1287 = vmatpush1.bf16.msra.mxu0 %v1263
      %1288 = vmatprep.subr.bf16.mxu0 0
      %1289 = vmatpush1.bf16.msra.mxu0 0
      %1290 = vmatprep.subr.bf16.mxu0 0
      %1291 = vmatpush1.bf16.msra.mxu0 0
      %1292 = vmatprep.subr.bf16.mxu0 0
      %1293 = vmatpush1.bf16.msra.mxu0 0
      %1294 = vmatprep.subr.bf16.mxu0 0
      %1295 = vmatpush1.bf16.msra.mxu0 0
      %1296 = vmatprep.subr.bf16.mxu0 0
      %1297 = vmatpush1.bf16.msra.mxu0 0
      %1298 = vmatprep.subr.bf16.mxu0 0
      %1299 = vmatpush1.bf16.msra.mxu0 0
      %1300 = vmatprep.subr.bf16.mxu0 0
      %1301 = vmatpush1.bf16.msra.mxu0 0
      %1302 = vmatprep.subr.bf16.mxu0 0
      %1303 = vmatpush1.bf16.msra.mxu0 0
      %1304 = vmatprep.subr.bf16.mxu0 0
      %1305 = vmatpush1.bf16.msra.mxu0 0
      %1306 = vmatprep.subr.bf16.mxu0 0
      %1307 = vmatpush1.bf16.msra.mxu0 0
      %1308 = vmatprep.subr.bf16.mxu0 0
      %1309 = vmatpush1.bf16.msra.mxu0 0
      %1310 = vmatprep.subr.bf16.mxu0 0
      %1311 = vmatpush1.bf16.msra.mxu0 0
      %1312 = vmatprep.mubr.bf16.mxu0 0
      %1313 = vmatmul.mubr.bf16.gmra.mrb[0].mxu0 %v1269
      %v1314 = vpop.f32.mrb[0].mxu0
      %v1315 = vadd.f32 0.0, %v1314
      %v1316 = vpop.f32.mrb[0].mxu0
      %v1317 = vpop.f32.mrb[0].mxu0
      %v1318 = vadd.f32 0.0, %v1317
      %v1319 = vpop.f32.mrb[0].mxu0
      %1320 = vmatprep.mubr.bf16.mxu0 0
      %1321 = vmatmul.mubr.bf16.gmra.mrb[0].mxu0 %v1272
      %v1322 = vpop.f32.mrb[0].mxu0
      %v1323 = vadd.f32 0.0, %v1322
      %v1324 = vpop.f32.mrb[0].mxu0
      %v1325 = vpop.f32.mrb[0].mxu0
      %v1326 = vadd.f32 0.0, %v1325
      %v1327 = vpop.f32.mrb[0].mxu0
      %1328 = vmatprep.mubr.bf16.mxu0 0
      %1329 = vmatmul.mubr.bf16.gmra.mrb[0].mxu0 %v1275
      %v1330 = vpop.f32.mrb[0].mxu0
      %v1331 = vadd.f32 0.0, %v1330
      %v1332 = vpop.f32.mrb[0].mxu0
      %v1333 = vpop.f32.mrb[0].mxu0
      %v1334 = vadd.f32 0.0, %v1333
      %v1335 = vpop.f32.mrb[0].mxu0
      %1336 = vmatprep.mubr.bf16.mxu0 0
      %1337 = vmatmul.mubr.bf16.gmra.mrb[0].mxu0 %v1278
      %v1338 = vpop.f32.mrb[0].mxu0
      %v1339 = vadd.f32 0.0, %v1338
      %v1340 = vpop.f32.mrb[0].mxu0
      %v1341 = vpop.f32.mrb[0].mxu0
      %v1342 = vadd.f32 0.0, %v1341
      %v1343 = vpop.f32.mrb[0].mxu0
      %1344 = vdwg.mxu0
      %v1345 = vpack.c.bf16 %v1318, %v1315
      %v1346 = vpack.c.bf16 %v1326, %v1323
      %v1347 = vpack.c.bf16 %v1334, %v1331
      %v1348 = vpack.c.bf16 %v1342, %v1339
      %s1349 = scalar_lea.vmem %s6, 64
      %v1350 = vld [vmem:[%s1349] sm:$0xff]
      %v1351 = vld [vmem:[%s1349 + $0x8] sm:$0xff]
      %v1352 = vld [vmem:[%s1349 + $0x10] sm:$0xff]
      %v1353 = vld [vmem:[%s1349 + $0x18] sm:$0xff]
      %v1354 = vld [vmem:[%s1349 + $0x20] sm:$0xff]
      %v1355 = vld [vmem:[%s1349 + $0x28] sm:$0xff]
      %v1356 = vld [vmem:[%s1349 + $0x30] sm:$0xff]
      %v1357 = vld [vmem:[%s1349 + $0x38] sm:$0xff]
      %v1358 = vpack.c.bf16 %v1351, %v1350
      %v1359 = vpack.c.bf16 %v1353, %v1352
      %v1360 = vpack.c.bf16 %v1355, %v1354
      %v1361 = vpack.c.bf16 %v1357, %v1356
      %v1363 = vsel %vm772, %v1345, 0
      %v1366 = vsel %vm772, %v1346, 0
      %v1369 = vsel %vm772, %v1347, 0
      %v1372 = vsel %vm772, %v1348, 0
      %1374 = vmatprep.subr.bf16.mxu0 0
      %1375 = vmatpush1.bf16.msra.mxu0 %v1358
      %1376 = vmatprep.subr.bf16.mxu0 0
      %1377 = vmatpush1.bf16.msra.mxu0 %v1359
      %1378 = vmatprep.subr.bf16.mxu0 0
      %1379 = vmatpush1.bf16.msra.mxu0 %v1360
      %1380 = vmatprep.subr.bf16.mxu0 0
      %1381 = vmatpush1.bf16.msra.mxu0 %v1361
      %1382 = vmatprep.subr.bf16.mxu0 0
      %1383 = vmatpush1.bf16.msra.mxu0 0
      %1384 = vmatprep.subr.bf16.mxu0 0
      %1385 = vmatpush1.bf16.msra.mxu0 0
      %1386 = vmatprep.subr.bf16.mxu0 0
      %1387 = vmatpush1.bf16.msra.mxu0 0
      %1388 = vmatprep.subr.bf16.mxu0 0
      %1389 = vmatpush1.bf16.msra.mxu0 0
      %1390 = vmatprep.subr.bf16.mxu0 0
      %1391 = vmatpush1.bf16.msra.mxu0 0
      %1392 = vmatprep.subr.bf16.mxu0 0
      %1393 = vmatpush1.bf16.msra.mxu0 0
      %1394 = vmatprep.subr.bf16.mxu0 0
      %1395 = vmatpush1.bf16.msra.mxu0 0
      %1396 = vmatprep.subr.bf16.mxu0 0
      %1397 = vmatpush1.bf16.msra.mxu0 0
      %1398 = vmatprep.subr.bf16.mxu0 0
      %1399 = vmatpush1.bf16.msra.mxu0 0
      %1400 = vmatprep.subr.bf16.mxu0 0
      %1401 = vmatpush1.bf16.msra.mxu0 0
      %1402 = vmatprep.subr.bf16.mxu0 0
      %1403 = vmatpush1.bf16.msra.mxu0 0
      %1404 = vmatprep.subr.bf16.mxu0 0
      %1405 = vmatpush1.bf16.msra.mxu0 0
      %1406 = vmatprep.mubr.bf16.mxu0 0
      %1407 = vmatmul.mubr.bf16.gmra.mrb[0].mxu0 %v1363
      %v1408 = vpop.f32.mrb[0].mxu0
      %v1409 = vadd.f32 0.0, %v1408
      %v1410 = vpop.f32.mrb[0].mxu0
      %v1411 = vpop.f32.mrb[0].mxu0
      %v1412 = vadd.f32 0.0, %v1411
      %v1413 = vpop.f32.mrb[0].mxu0
      %1414 = vmatprep.mubr.bf16.mxu0 0
      %1415 = vmatmul.mubr.bf16.gmra.mrb[0].mxu0 %v1366
      %v1416 = vpop.f32.mrb[0].mxu0
      %v1417 = vadd.f32 0.0, %v1416
      %v1418 = vpop.f32.mrb[0].mxu0
      %v1419 = vpop.f32.mrb[0].mxu0
      %v1420 = vadd.f32 0.0, %v1419
      %v1421 = vpop.f32.mrb[0].mxu0
      %1422 = vmatprep.mubr.bf16.mxu0 0
      %1423 = vmatmul.mubr.bf16.gmra.mrb[0].mxu0 %v1369
      %v1424 = vpop.f32.mrb[0].mxu0
      %v1425 = vadd.f32 0.0, %v1424
      %v1426 = vpop.f32.mrb[0].mxu0
      %v1427 = vpop.f32.mrb[0].mxu0
      %v1428 = vadd.f32 0.0, %v1427
      %v1429 = vpop.f32.mrb[0].mxu0
      %1430 = vmatprep.mubr.bf16.mxu0 0
      %1431 = vmatmul.mubr.bf16.gmra.mrb[0].mxu0 %v1372
      %v1432 = vpop.f32.mrb[0].mxu0
      %v1433 = vadd.f32 0.0, %v1432
      %v1434 = vpop.f32.mrb[0].mxu0
      %v1435 = vpop.f32.mrb[0].mxu0
      %v1436 = vadd.f32 0.0, %v1435
      %v1437 = vpop.f32.mrb[0].mxu0
      %1438 = vdwg.mxu0
      %v1440 = vsel %vm772, %v1031, 0
      %v1443 = vsel %vm772, %v1032, 0
      %v1446 = vsel %vm772, %v1033, 0
      %v1449 = vsel %vm772, %v1034, 0
      %1451 = vmatprep.subr.bf16.mxu0 0
      %1452 = vmatpush1.bf16.msra.mxu0 %v1043
      %1453 = vmatprep.subr.bf16.mxu0 0
      %1454 = vmatpush1.bf16.msra.mxu0 %v1044
      %1455 = vmatprep.subr.bf16.mxu0 0
      %1456 = vmatpush1.bf16.msra.mxu0 %v1045
      %1457 = vmatprep.subr.bf16.mxu0 0
      %1458 = vmatpush1.bf16.msra.mxu0 %v1046
      %1459 = vmatprep.subr.bf16.mxu0 0
      %1460 = vmatpush1.bf16.msra.mxu0 0
      %1461 = vmatprep.subr.bf16.mxu0 0
      %1462 = vmatpush1.bf16.msra.mxu0 0
      %1463 = vmatprep.subr.bf16.mxu0 0
      %1464 = vmatpush1.bf16.msra.mxu0 0
      %1465 = vmatprep.subr.bf16.mxu0 0
      %1466 = vmatpush1.bf16.msra.mxu0 0
      %1467 = vmatprep.subr.bf16.mxu0 0
      %1468 = vmatpush1.bf16.msra.mxu0 0
      %1469 = vmatprep.subr.bf16.mxu0 0
      %1470 = vmatpush1.bf16.msra.mxu0 0
      %1471 = vmatprep.subr.bf16.mxu0 0
      %1472 = vmatpush1.bf16.msra.mxu0 0
      %1473 = vmatprep.subr.bf16.mxu0 0
      %1474 = vmatpush1.bf16.msra.mxu0 0
      %1475 = vmatprep.subr.bf16.mxu0 0
      %1476 = vmatpush1.bf16.msra.mxu0 0
      %1477 = vmatprep.subr.bf16.mxu0 0
      %1478 = vmatpush1.bf16.msra.mxu0 0
      %1479 = vmatprep.subr.bf16.mxu0 0
      %1480 = vmatpush1.bf16.msra.mxu0 0
      %1481 = vmatprep.subr.bf16.mxu0 0
      %1482 = vmatpush1.bf16.msra.mxu0 0
      %1483 = vmatprep.mubr.bf16.mxu0 0
      %1484 = vmatmul.mubr.bf16.gmra.mrb[0].mxu0 %v1440
      %v1485 = vpop.f32.mrb[0].mxu0
      %v1486 = vadd.f32 %v1409, %v1485
      %v1487 = vpop.f32.mrb[0].mxu0
      %v1488 = vpop.f32.mrb[0].mxu0
      %v1489 = vadd.f32 %v1412, %v1488
      %v1490 = vpop.f32.mrb[0].mxu0
      %1491 = vmatprep.mubr.bf16.mxu0 0
      %1492 = vmatmul.mubr.bf16.gmra.mrb[0].mxu0 %v1443
      %v1493 = vpop.f32.mrb[0].mxu0
      %v1494 = vadd.f32 %v1417, %v1493
      %v1495 = vpop.f32.mrb[0].mxu0
      %v1496 = vpop.f32.mrb[0].mxu0
      %v1497 = vadd.f32 %v1420, %v1496
      %v1498 = vpop.f32.mrb[0].mxu0
      %1499 = vmatprep.mubr.bf16.mxu0 0
      %1500 = vmatmul.mubr.bf16.gmra.mrb[0].mxu0 %v1446
      %v1501 = vpop.f32.mrb[0].mxu0
      %v1502 = vadd.f32 %v1425, %v1501
      %v1503 = vpop.f32.mrb[0].mxu0
      %v1504 = vpop.f32.mrb[0].mxu0
      %v1505 = vadd.f32 %v1428, %v1504
      %v1506 = vpop.f32.mrb[0].mxu0
      %1507 = vmatprep.mubr.bf16.mxu0 0
      %1508 = vmatmul.mubr.bf16.gmra.mrb[0].mxu0 %v1449
      %v1509 = vpop.f32.mrb[0].mxu0
      %v1510 = vadd.f32 %v1433, %v1509
      %v1511 = vpop.f32.mrb[0].mxu0
      %v1512 = vpop.f32.mrb[0].mxu0
      %v1513 = vadd.f32 %v1436, %v1512
      %v1514 = vpop.f32.mrb[0].mxu0
      %1515 = vdwg.mxu0
      %v1516 = vld [vmem:[%s10] sm:$0x1]
      %v1518 = vlaneseq
      %v1519 = vshrl.u32 %v1518, 7
      %v1520 = vsub.s32 0, %v1519
      %v1521 = vrot.slane %v1516, %v1520
      %v1523 = vadd.f32 %v1486, %v1521
      %v1524 = vadd.f32 %v1489, %v1521
      %v1525 = vadd.f32 %v1494, %v1521
      %v1526 = vadd.f32 %v1497, %v1521
      %v1527 = vadd.f32 %v1502, %v1521
      %v1528 = vadd.f32 %v1505, %v1521
      %v1529 = vadd.f32 %v1510, %v1521
      %v1530 = vadd.f32 %v1513, %v1521
      %1531 = vst [vmem:[%s426] sm:$0xff] %v1523
      %1532 = vst [vmem:[%s426 + $0x8] sm:$0xff] %v1524
      %1533 = vst [vmem:[%s426 + $0x10] sm:$0xff] %v1525
      %1534 = vst [vmem:[%s426 + $0x18] sm:$0xff] %v1526
      %1535 = vst [vmem:[%s426 + $0x20] sm:$0xff] %v1527
      %1536 = vst [vmem:[%s426 + $0x28] sm:$0xff] %v1528
      %1537 = vst [vmem:[%s426 + $0x30] sm:$0xff] %v1529
      %1538 = vst [vmem:[%s426 + $0x38] sm:$0xff] %v1530
      %p1539 = scmp.lt.s32.totalorder %s22, 1
      %s1540 = scalar_select %p1539, %s22, 1
      %s1541 = smul.addr %s1540, 8
      %s1542 = smul.addr %s1541, 8
      %s1543 = scalar_lea.vmem %s11, %s1542
      // Predicated region
      $region65: #{boq_forward.19} parent=63 // pred_check
        %p1544 = pneg %p286
      $region66: #{boq_forward.19} parent=63 // pred_check_branch
        %1546 = sbr.rel (%p1544) target = $region68
      $region67: #{boq_forward.19} parent=63 // pred_region
        _
      $region68: #{boq_forward.19} parent=63 // pred_fallthru
        _
    $region64: #{boq_forward.19} parent=5 // pred_fallthru
      _
    %p1547 = scmp.le.s32.totalorder 2, %s17
    // Predicated region
    $region69: #{boq_forward.19} parent=5 // pred_check
      %p1548 = pneg %p1547
    $region70: #{boq_forward.19} parent=5 // pred_check_branch
      %1550 = sbr.rel (%p1548) target = $region72
    $region71: #{boq_forward.19} parent=5 // pred_region
      %s1551 = ssub.s32 %s17, 2
      // Predicated region
      $region73: #{boq_forward.19} parent=71 // pred_check
        %p1552 = pneg %p292
      $region74: #{boq_forward.19} parent=71 // pred_check_branch
        %1554 = sbr.rel (%p1552) target = $region76
      $region75: #{boq_forward.19} parent=71 // pred_region
        %p1555 = scmp.lt.s32.totalorder %s23, 1
        %s1556 = scalar_select %p1555, %s23, 1
        %s1557 = smul.addr %s1556, 8
        %s1558 = smul.addr %s1557, 8
        %s1559 = scalar_lea.vmem %s11, %s1558
      $region76: #{boq_forward.19} parent=71 // pred_fallthru
        _
    $region72: #{boq_forward.19} parent=5 // pred_fallthru
      _
  $region6: #{boq_forward.19} parent=0 // loop_footer
    %s21 = sadd.s32 1, %s17
  $region7: #{boq_forward.19} parent=0 // loop_footer_branch
    %16 = sbr.rel target = $region3
  $region8: #{boq_forward.19} parent=0 // loop_exit
    _

// kernel: boq_forward.31
$region0: #{boq_forward.31}
  #allocation0 [shape = 'u32[]', space=smem, size = 0x4, offset = 0x4, fixed_abs, tag = 'smem constant byte address 0x4 - core index']
  #allocation1 [shape = 'u32[144,128]{1,0:T(1,128)}', space=vmem, size = 0x12000, scoped, tag = 'internal scratch']
  %s0 = inlined_call_operand.vmem [shape: f32[1,8,128], index: 0, kind: input, shape index: {}, may-alias: {0,1,2}]
  %s1 = inlined_call_operand.vmem [shape: f32[1,8,128], index: 1, kind: input, shape index: {}, may-alias: {0,1,2}]
  %s2 = inlined_call_operand.vmem [shape: f32[1,8,128], index: 2, kind: input, shape index: {}, may-alias: {0,1,2}]
  %s3 = inlined_call_operand.vmem [shape: f32[128,128], index: 3, kind: input, shape index: {}]
  %s4 = inlined_call_operand.vmem [shape: f32[128,128], index: 4, kind: input, shape index: {}]
  %s5 = inlined_call_operand.vmem [shape: f32[128,128], index: 5, kind: input, shape index: {}]
  %s6 = inlined_call_operand.vmem [shape: f32[2,64,128], index: 6, kind: input, shape index: {}]
  %s7 = inlined_call_operand.vmem [shape: f32[1,128], index: 7, kind: input, shape index: {}]
  %s8 = inlined_call_operand.vmem [shape: f32[1,128], index: 8, kind: input, shape index: {}]
  %s9 = inlined_call_operand.vmem [shape: f32[1,128], index: 9, kind: input, shape index: {}]
  %s10 = inlined_call_operand.vmem [shape: f32[1,128], index: 10, kind: input, shape index: {}]
  %s11 = inlined_call_operand.vmem [shape: f32[1,8,128], index: 11, kind: output, shape index: {}]
  %s12 = sld [smem:[#allocation0]]
  $region54: #{boq_forward.31} parent=0
    _
  %s14 = ssub.s32 1, %s12
  %s15 = scalar_select 0, %s14, %s12
  // Predicated region
  $region2: #{boq_forward.31} parent=0 // pred_check
    _
  $region3: #{boq_forward.31} parent=0 // pred_check_branch
    %17 = sbr.rel (0) target = $region5
  $region4: #{boq_forward.31} parent=0 // pred_region
    _
  $region5: #{boq_forward.31} parent=0 // pred_fallthru
    _
  // Predicated region
  $region6: #{boq_forward.31} parent=0 // pred_check
    _
  $region7: #{boq_forward.31} parent=0 // pred_check_branch
    %19 = sbr.rel (0) target = $region9
  $region8: #{boq_forward.31} parent=0 // pred_region
    _
  $region9: #{boq_forward.31} parent=0 // pred_fallthru
    _
  // Predicated region
  $region10: #{boq_forward.31} parent=0 // pred_check
    _
  $region11: #{boq_forward.31} parent=0 // pred_check_branch
    %21 = sbr.rel (0) target = $region13
  $region12: #{boq_forward.31} parent=0 // pred_region
    _
  $region13: #{boq_forward.31} parent=0 // pred_fallthru
    _
  // Predicated region
  $region14: #{boq_forward.31} parent=0 // pred_check
    _
  $region15: #{boq_forward.31} parent=0 // pred_check_branch
    %23 = sbr.rel (0) target = $region17
  $region16: #{boq_forward.31} parent=0 // pred_region
    _
  $region17: #{boq_forward.31} parent=0 // pred_fallthru
    _
  // Predicated region
  $region18: #{boq_forward.31} parent=0 // pred_check
    _
  $region19: #{boq_forward.31} parent=0 // pred_check_branch
    %25 = sbr.rel (0) target = $region21
  $region20: #{boq_forward.31} parent=0 // pred_region
    _
  $region21: #{boq_forward.31} parent=0 // pred_fallthru
    _
  // Predicated region
  $region22: #{boq_forward.31} parent=0 // pred_check
    _
  $region23: #{boq_forward.31} parent=0 // pred_check_branch
    %27 = sbr.rel (0) target = $region25
  $region24: #{boq_forward.31} parent=0 // pred_region
    _
  $region25: #{boq_forward.31} parent=0 // pred_fallthru
    _
  // Predicated region
  $region26: #{boq_forward.31} parent=0 // pred_check
    _
  $region27: #{boq_forward.31} parent=0 // pred_check_branch
    %29 = sbr.rel (0) target = $region29
  $region28: #{boq_forward.31} parent=0 // pred_region
    _
  $region29: #{boq_forward.31} parent=0 // pred_fallthru
    _
  // Predicated region
  $region30: #{boq_forward.31} parent=0 // pred_check
    _
  $region31: #{boq_forward.31} parent=0 // pred_check_branch
    %31 = sbr.rel (0) target = $region33
  $region32: #{boq_forward.31} parent=0 // pred_region
    _
  $region33: #{boq_forward.31} parent=0 // pred_fallthru
    _
  // Predicated region
  $region34: #{boq_forward.31} parent=0 // pred_check
    _
  $region35: #{boq_forward.31} parent=0 // pred_check_branch
    %33 = sbr.rel (0) target = $region37
  $region36: #{boq_forward.31} parent=0 // pred_region
    _
  $region37: #{boq_forward.31} parent=0 // pred_fallthru
    _
  // Predicated region
  $region38: #{boq_forward.31} parent=0 // pred_check
    _
  $region39: #{boq_forward.31} parent=0 // pred_check_branch
    %35 = sbr.rel (0) target = $region41
  $region40: #{boq_forward.31} parent=0 // pred_region
    _
  $region41: #{boq_forward.31} parent=0 // pred_fallthru
    _
  // Predicated region
  $region42: #{boq_forward.31} parent=0 // pred_check
    _
  $region43: #{boq_forward.31} parent=0 // pred_check_branch
    %37 = sbr.rel (0) target = $region45
  $region44: #{boq_forward.31} parent=0 // pred_region
    _
  $region45: #{boq_forward.31} parent=0 // pred_fallthru
    _
  %v39 = vld [vmem:[%s0] sm:$0xff]
  %v40 = vpack.c.bf16 %v39, %v39
  %v41 = vld [vmem:[%s1] sm:$0xff]
  %v42 = vpack.c.bf16 %v41, %v41
  %v43 = vld [vmem:[%s2] sm:$0xff]
  %v44 = vpack.c.bf16 %v43, %v43
  %v45 = vld [vmem:[%s3] sm:$0xff]
  %v46 = vld [vmem:[%s3 + $0x8] sm:$0xff]
  %v47 = vld [vmem:[%s3 + $0x10] sm:$0xff]
  %v48 = vld [vmem:[%s3 + $0x18] sm:$0xff]
  %v49 = vld [vmem:[%s3 + $0x20] sm:$0xff]
  %v50 = vld [vmem:[%s3 + $0x28] sm:$0xff]
  %v51 = vld [vmem:[%s3 + $0x30] sm:$0xff]
  %v52 = vld [vmem:[%s3 + $0x38] sm:$0xff]
  %v53 = vld [vmem:[%s3 + $0x40] sm:$0xff]
  %v54 = vld [vmem:[%s3 + $0x48] sm:$0xff]
  %v55 = vld [vmem:[%s3 + $0x50] sm:$0xff]
  %v56 = vld [vmem:[%s3 + $0x58] sm:$0xff]
  %v57 = vld [vmem:[%s3 + $0x60] sm:$0xff]
  %v58 = vld [vmem:[%s3 + $0x68] sm:$0xff]
  %v59 = vld [vmem:[%s3 + $0x70] sm:$0xff]
  %v60 = vld [vmem:[%s3 + $0x78] sm:$0xff]
  %v61 = vpack.c.bf16 %v46, %v45
  %v62 = vpack.c.bf16 %v48, %v47
  %v63 = vpack.c.bf16 %v50, %v49
  %v64 = vpack.c.bf16 %v52, %v51
  %v65 = vpack.c.bf16 %v54, %v53
  %v66 = vpack.c.bf16 %v56, %v55
  %v67 = vpack.c.bf16 %v58, %v57
  %v68 = vpack.c.bf16 %v60, %v59
  %v69 = vld [vmem:[%s7] sm:$0x1]
  %v71 = vlaneseq
  %v72 = vshrl.u32 %v71, 7
  %v73 = vsub.s32 0, %v72
  %v74 = vrot.slane %v69, %v73
  %76 = vmatprep.subr.bf16.mxu0 0
  %77 = vmatpush1.bf16.msra.mxu0 %v61
  %78 = vmatprep.subr.bf16.mxu0 0
  %79 = vmatpush1.bf16.msra.mxu0 %v62
  %80 = vmatprep.subr.bf16.mxu0 0
  %81 = vmatpush1.bf16.msra.mxu0 %v63
  %82 = vmatprep.subr.bf16.mxu0 0
  %83 = vmatpush1.bf16.msra.mxu0 %v64
  %84 = vmatprep.subr.bf16.mxu0 0
  %85 = vmatpush1.bf16.msra.mxu0 %v65
  %86 = vmatprep.subr.bf16.mxu0 0
  %87 = vmatpush1.bf16.msra.mxu0 %v66
  %88 = vmatprep.subr.bf16.mxu0 0
  %89 = vmatpush1.bf16.msra.mxu0 %v67
  %90 = vmatprep.subr.bf16.mxu0 0
  %91 = vmatpush1.bf16.msra.mxu0 %v68
  %92 = vmatprep.subr.bf16.mxu0 0
  %93 = vmatpush1.bf16.msra.mxu0 0
  %94 = vmatprep.subr.bf16.mxu0 0
  %95 = vmatpush1.bf16.msra.mxu0 0
  %96 = vmatprep.subr.bf16.mxu0 0
  %97 = vmatpush1.bf16.msra.mxu0 0
  %98 = vmatprep.subr.bf16.mxu0 0
  %99 = vmatpush1.bf16.msra.mxu0 0
  %100 = vmatprep.subr.bf16.mxu0 0
  %101 = vmatpush1.bf16.msra.mxu0 0
  %102 = vmatprep.subr.bf16.mxu0 0
  %103 = vmatpush1.bf16.msra.mxu0 0
  %104 = vmatprep.subr.bf16.mxu0 0
  %105 = vmatpush1.bf16.msra.mxu0 0
  %106 = vmatprep.subr.bf16.mxu0 0
  %107 = vmatpush1.bf16.msra.mxu0 0
  %108 = vmatprep.mubr.bf16.mxu0 0
  %109 = vmatmul.mubr.bf16.gmra.mrb[0].mxu0 %v40
  %v110 = vpop.f32.mrb[0].mxu0
  %v111 = vadd.f32 %v74, %v110
  %v112 = vpop.f32.mrb[0].mxu0
  %v113 = vpop.f32.mrb[0].mxu0
  %v114 = vpop.f32.mrb[0].mxu0
  %115 = vdwg.mxu0
  %v116 = vld [vmem:[%s4] sm:$0xff]
  %v117 = vld [vmem:[%s4 + $0x8] sm:$0xff]
  %v118 = vld [vmem:[%s4 + $0x10] sm:$0xff]
  %v119 = vld [vmem:[%s4 + $0x18] sm:$0xff]
  %v120 = vld [vmem:[%s4 + $0x20] sm:$0xff]
  %v121 = vld [vmem:[%s4 + $0x28] sm:$0xff]
  %v122 = vld [vmem:[%s4 + $0x30] sm:$0xff]
  %v123 = vld [vmem:[%s4 + $0x38] sm:$0xff]
  %v124 = vld [vmem:[%s4 + $0x40] sm:$0xff]
  %v125 = vld [vmem:[%s4 + $0x48] sm:$0xff]
  %v126 = vld [vmem:[%s4 + $0x50] sm:$0xff]
  %v127 = vld [vmem:[%s4 + $0x58] sm:$0xff]
  %v128 = vld [vmem:[%s4 + $0x60] sm:$0xff]
  %v129 = vld [vmem:[%s4 + $0x68] sm:$0xff]
  %v130 = vld [vmem:[%s4 + $0x70] sm:$0xff]
  %v131 = vld [vmem:[%s4 + $0x78] sm:$0xff]
  %v132 = vpack.c.bf16 %v117, %v116
  %v133 = vpack.c.bf16 %v119, %v118
  %v134 = vpack.c.bf16 %v121, %v120
  %v135 = vpack.c.bf16 %v123, %v122
  %v136 = vpack.c.bf16 %v125, %v124
  %v137 = vpack.c.bf16 %v127, %v126
  %v138 = vpack.c.bf16 %v129, %v128
  %v139 = vpack.c.bf16 %v131, %v130
  %v140 = vld [vmem:[%s8] sm:$0x1]
  %v142 = vlaneseq
  %v143 = vshrl.u32 %v142, 7
  %v144 = vsub.s32 0, %v143
  %v145 = vrot.slane %v140, %v144
  %147 = vmatprep.subr.bf16.mxu0 0
  %148 = vmatpush1.bf16.msra.mxu0 %v132
  %149 = vmatprep.subr.bf16.mxu0 0
  %150 = vmatpush1.bf16.msra.mxu0 %v133
  %151 = vmatprep.subr.bf16.mxu0 0
  %152 = vmatpush1.bf16.msra.mxu0 %v134
  %153 = vmatprep.subr.bf16.mxu0 0
  %154 = vmatpush1.bf16.msra.mxu0 %v135
  %155 = vmatprep.subr.bf16.mxu0 0
  %156 = vmatpush1.bf16.msra.mxu0 %v136
  %157 = vmatprep.subr.bf16.mxu0 0
  %158 = vmatpush1.bf16.msra.mxu0 %v137
  %159 = vmatprep.subr.bf16.mxu0 0
  %160 = vmatpush1.bf16.msra.mxu0 %v138
  %161 = vmatprep.subr.bf16.mxu0 0
  %162 = vmatpush1.bf16.msra.mxu0 %v139
  %163 = vmatprep.subr.bf16.mxu0 0
  %164 = vmatpush1.bf16.msra.mxu0 0
  %165 = vmatprep.subr.bf16.mxu0 0
  %166 = vmatpush1.bf16.msra.mxu0 0
  %167 = vmatprep.subr.bf16.mxu0 0
  %168 = vmatpush1.bf16.msra.mxu0 0
  %169 = vmatprep.subr.bf16.mxu0 0
  %170 = vmatpush1.bf16.msra.mxu0 0
  %171 = vmatprep.subr.bf16.mxu0 0
  %172 = vmatpush1.bf16.msra.mxu0 0
  %173 = vmatprep.subr.bf16.mxu0 0
  %174 = vmatpush1.bf16.msra.mxu0 0
  %175 = vmatprep.subr.bf16.mxu0 0
  %176 = vmatpush1.bf16.msra.mxu0 0
  %177 = vmatprep.subr.bf16.mxu0 0
  %178 = vmatpush1.bf16.msra.mxu0 0
  %179 = vmatprep.mubr.bf16.mxu0 0
  %180 = vmatmul.mubr.bf16.gmra.mrb[0].mxu0 %v42
  %v181 = vpop.f32.mrb[0].mxu0
  %v182 = vadd.f32 %v145, %v181
  %v183 = vpop.f32.mrb[0].mxu0
  %v184 = vpop.f32.mrb[0].mxu0
  %v185 = vpop.f32.mrb[0].mxu0
  %186 = vdwg.mxu0
  %v187 = vld [vmem:[%s5] sm:$0xff]
  %v188 = vld [vmem:[%s5 + $0x8] sm:$0xff]
  %v189 = vld [vmem:[%s5 + $0x10] sm:$0xff]
  %v190 = vld [vmem:[%s5 + $0x18] sm:$0xff]
  %v191 = vld [vmem:[%s5 + $0x20] sm:$0xff]
  %v192 = vld [vmem:[%s5 + $0x28] sm:$0xff]
  %v193 = vld [vmem:[%s5 + $0x30] sm:$0xff]
  %v194 = vld [vmem:[%s5 + $0x38] sm:$0xff]
  %v195 = vld [vmem:[%s5 + $0x40] sm:$0xff]
  %v196 = vld [vmem:[%s5 + $0x48] sm:$0xff]
  %v197 = vld [vmem:[%s5 + $0x50] sm:$0xff]
  %v198 = vld [vmem:[%s5 + $0x58] sm:$0xff]
  %v199 = vld [vmem:[%s5 + $0x60] sm:$0xff]
  %v200 = vld [vmem:[%s5 + $0x68] sm:$0xff]
  %v201 = vld [vmem:[%s5 + $0x70] sm:$0xff]
  %v202 = vld [vmem:[%s5 + $0x78] sm:$0xff]
  %v203 = vpack.c.bf16 %v188, %v187
  %v204 = vpack.c.bf16 %v190, %v189
  %v205 = vpack.c.bf16 %v192, %v191
  %v206 = vpack.c.bf16 %v194, %v193
  %v207 = vpack.c.bf16 %v196, %v195
  %v208 = vpack.c.bf16 %v198, %v197
  %v209 = vpack.c.bf16 %v200, %v199
  %v210 = vpack.c.bf16 %v202, %v201
  %v211 = vld [vmem:[%s9] sm:$0x1]
  %v213 = vlaneseq
  %v214 = vshrl.u32 %v213, 7
  %v215 = vsub.s32 0, %v214
  %v216 = vrot.slane %v211, %v215
  %218 = vmatprep.subr.bf16.mxu0 0
  %219 = vmatpush1.bf16.msra.mxu0 %v203
  %220 = vmatprep.subr.bf16.mxu0 0
  %221 = vmatpush1.bf16.msra.mxu0 %v204
  %222 = vmatprep.subr.bf16.mxu0 0
  %223 = vmatpush1.bf16.msra.mxu0 %v205
  %224 = vmatprep.subr.bf16.mxu0 0
  %225 = vmatpush1.bf16.msra.mxu0 %v206
  %226 = vmatprep.subr.bf16.mxu0 0
  %227 = vmatpush1.bf16.msra.mxu0 %v207
  %228 = vmatprep.subr.bf16.mxu0 0
  %229 = vmatpush1.bf16.msra.mxu0 %v208
  %230 = vmatprep.subr.bf16.mxu0 0
  %231 = vmatpush1.bf16.msra.mxu0 %v209
  %232 = vmatprep.subr.bf16.mxu0 0
  %233 = vmatpush1.bf16.msra.mxu0 %v210
  %234 = vmatprep.subr.bf16.mxu0 0
  %235 = vmatpush1.bf16.msra.mxu0 0
  %236 = vmatprep.subr.bf16.mxu0 0
  %237 = vmatpush1.bf16.msra.mxu0 0
  %238 = vmatprep.subr.bf16.mxu0 0
  %239 = vmatpush1.bf16.msra.mxu0 0
  %240 = vmatprep.subr.bf16.mxu0 0
  %241 = vmatpush1.bf16.msra.mxu0 0
  %242 = vmatprep.subr.bf16.mxu0 0
  %243 = vmatpush1.bf16.msra.mxu0 0
  %244 = vmatprep.subr.bf16.mxu0 0
  %245 = vmatpush1.bf16.msra.mxu0 0
  %246 = vmatprep.subr.bf16.mxu0 0
  %247 = vmatpush1.bf16.msra.mxu0 0
  %248 = vmatprep.subr.bf16.mxu0 0
  %249 = vmatpush1.bf16.msra.mxu0 0
  %250 = vmatprep.mubr.bf16.mxu0 0
  %251 = vmatmul.mubr.bf16.gmra.mrb[0].mxu0 %v44
  %v252 = vpop.f32.mrb[0].mxu0
  %v253 = vadd.f32 %v216, %v252
  %v254 = vpop.f32.mrb[0].mxu0
  %v255 = vpop.f32.mrb[0].mxu0
  %v256 = vpop.f32.mrb[0].mxu0
  %257 = vdwg.mxu0
  %v258 = vmul.f32 %v111, 0.125
  %v259 = vpack.c.bf16 %v258, %v258
  %v260 = vpack.c.bf16 %v182, %v182
  %v261 = vpack.c.bf16 %v253, %v253
  %vm262 = vcmask 523264
  %v264 = vsel %vm262, %v259, 0
  %v267 = vsel %vm262, %v260, 0
  %269 = vmatprep.subr.bf16.mxu0 0
  %270 = vmatpush1.bf16.xpose.msra.mxu0 %v267
  %271 = vmatprep.subr.bf16.mxu0 0
  %272 = vmatpush1.bf16.xpose.msra.mxu0 0
  %273 = vmatprep.subr.bf16.mxu0 0
  %274 = vmatpush1.bf16.xpose.msra.mxu0 0
  %275 = vmatprep.subr.bf16.mxu0 0
  %276 = vmatpush1.bf16.xpose.msra.mxu0 0
  %277 = vmatprep.subr.bf16.mxu0 0
  %278 = vmatpush1.bf16.xpose.msra.mxu0 0
  %279 = vmatprep.subr.bf16.mxu0 0
  %280 = vmatpush1.bf16.xpose.msra.mxu0 0
  %281 = vmatprep.subr.bf16.mxu0 0
  %282 = vmatpush1.bf16.xpose.msra.mxu0 0
  %283 = vmatprep.subr.bf16.mxu0 0
  %284 = vmatpush1.bf16.xpose.msra.mxu0 0
  %285 = vmatprep.subr.bf16.mxu0 0
  %286 = vmatpush1.bf16.xpose.msra.mxu0 0
  %287 = vmatprep.subr.bf16.mxu0 0
  %288 = vmatpush1.bf16.xpose.msra.mxu0 0
  %289 = vmatprep.subr.bf16.mxu0 0
  %290 = vmatpush1.bf16.xpose.msra.mxu0 0
  %291 = vmatprep.subr.bf16.mxu0 0
  %292 = vmatpush1.bf16.xpose.msra.mxu0 0
  %293 = vmatprep.subr.bf16.mxu0 0
  %294 = vmatpush1.bf16.xpose.msra.mxu0 0
  %295 = vmatprep.subr.bf16.mxu0 0
  %296 = vmatpush1.bf16.xpose.msra.mxu0 0
  %297 = vmatprep.subr.bf16.mxu0 0
  %298 = vmatpush1.bf16.xpose.msra.mxu0 0
  %299 = vmatprep.subr.bf16.mxu0 0
  %300 = vmatpush1.bf16.xpose.msra.mxu0 0
  %301 = vmatprep.mubr.bf16.mxu0 0
  %302 = vmatmul.mubr.bf16.gmra.mrb[0].mxu0 %v264
  %v303 = vpop.f32.mrb[0].mxu0
  %v304 = vadd.f32 0.0, %v303
  %v305 = vpop.f32.mrb[0].mxu0
  %v306 = vpop.f32.mrb[0].mxu0
  %v307 = vpop.f32.mrb[0].mxu0
  %308 = vdwg.mxu0
  %vm309 = vcmask 64512
  %v310 = vsel %vm309, %v304, -inf
  %311 = vmax.xlane.f32.xlu0 %v310
  %v312 = vpop.xlane.xlu0 %311
  %v313 = vsub.f32 %v304, %v312
  %v314 = vmul.f32 %v313, 1.442695
  %v315 = vpow.pop %v314
  %v316 = vsel %vm309, %v315, 0.0
  %317 = vadd.xlane.f32.xlu0 %v316
  %v318 = vpop.xlane.xlu0 %317
  %v319 = vrcp.pop %v318
  %v320 = vmul.f32 %v315, %v319
  %v321 = vpack.c.bf16 %v320, %v320
  %v323 = vsel %vm309, %v321, 0
  %vm325 = vcmask 1043456
  %v327 = vsel %vm325, %v261, 0
  %329 = vmatprep.subr.bf16.mxu0 0
  %330 = vmatpush1.bf16.msra.mxu0 %v327
  %331 = vmatprep.subr.bf16.mxu0 0
  %332 = vmatpush1.bf16.msra.mxu0 0
  %333 = vmatprep.subr.bf16.mxu0 0
  %334 = vmatpush1.bf16.msra.mxu0 0
  %335 = vmatprep.subr.bf16.mxu0 0
  %336 = vmatpush1.bf16.msra.mxu0 0
  %337 = vmatprep.subr.bf16.mxu0 0
  %338 = vmatpush1.bf16.msra.mxu0 0
  %339 = vmatprep.subr.bf16.mxu0 0
  %340 = vmatpush1.bf16.msra.mxu0 0
  %341 = vmatprep.subr.bf16.mxu0 0
  %342 = vmatpush1.bf16.msra.mxu0 0
  %343 = vmatprep.subr.bf16.mxu0 0
  %344 = vmatpush1.bf16.msra.mxu0 0
  %345 = vmatprep.subr.bf16.mxu0 0
  %346 = vmatpush1.bf16.msra.mxu0 0
  %347 = vmatprep.subr.bf16.mxu0 0
  %348 = vmatpush1.bf16.msra.mxu0 0
  %349 = vmatprep.subr.bf16.mxu0 0
  %350 = vmatpush1.bf16.msra.mxu0 0
  %351 = vmatprep.subr.bf16.mxu0 0
  %352 = vmatpush1.bf16.msra.mxu0 0
  %353 = vmatprep.subr.bf16.mxu0 0
  %354 = vmatpush1.bf16.msra.mxu0 0
  %355 = vmatprep.subr.bf16.mxu0 0
  %356 = vmatpush1.bf16.msra.mxu0 0
  %357 = vmatprep.subr.bf16.mxu0 0
  %358 = vmatpush1.bf16.msra.mxu0 0
  %359 = vmatprep.subr.bf16.mxu0 0
  %360 = vmatpush1.bf16.msra.mxu0 0
  %361 = vmatprep.mubr.bf16.mxu0 0
  %362 = vmatmul.mubr.bf16.gmra.mrb[0].mxu0 %v323
  %v363 = vpop.f32.mrb[0].mxu0
  %v364 = vadd.f32 0.0, %v363
  %v365 = vpop.f32.mrb[0].mxu0
  %v366 = vpop.f32.mrb[0].mxu0
  %v367 = vpop.f32.mrb[0].mxu0
  %368 = vdwg.mxu0
  %v369 = vpack.c.bf16 %v364, %v364
  %v370 = vld [vmem:[%s6] sm:$0xff]
  %v371 = vld [vmem:[%s6 + $0x8] sm:$0xff]
  %v372 = vld [vmem:[%s6 + $0x10] sm:$0xff]
  %v373 = vld [vmem:[%s6 + $0x18] sm:$0xff]
  %v374 = vld [vmem:[%s6 + $0x20] sm:$0xff]
  %v375 = vld [vmem:[%s6 + $0x28] sm:$0xff]
  %v376 = vld [vmem:[%s6 + $0x30] sm:$0xff]
  %v377 = vld [vmem:[%s6 + $0x38] sm:$0xff]
  %v378 = vpack.c.bf16 %v371, %v370
  %v379 = vpack.c.bf16 %v373, %v372
  %v380 = vpack.c.bf16 %v375, %v374
  %v381 = vpack.c.bf16 %v377, %v376
  %383 = vrot.lane.b32.xlu0 %v259, 64
  %v384 = vpop.permute.xlu0 %383
  %386 = vrot.lane.b32.xlu0 %v260, 64
  %v387 = vpop.permute.xlu0 %386
  %v389 = vsel %vm262, %v384, 0
  %v392 = vsel %vm262, %v387, 0
  %394 = vmatprep.subr.bf16.mxu0 0
  %395 = vmatpush1.bf16.xpose.msra.mxu0 %v392
  %396 = vmatprep.subr.bf16.mxu0 0
  %397 = vmatpush1.bf16.xpose.msra.mxu0 0
  %398 = vmatprep.subr.bf16.mxu0 0
  %399 = vmatpush1.bf16.xpose.msra.mxu0 0
  %400 = vmatprep.subr.bf16.mxu0 0
  %401 = vmatpush1.bf16.xpose.msra.mxu0 0
  %402 = vmatprep.subr.bf16.mxu0 0
  %403 = vmatpush1.bf16.xpose.msra.mxu0 0
  %404 = vmatprep.subr.bf16.mxu0 0
  %405 = vmatpush1.bf16.xpose.msra.mxu0 0
  %406 = vmatprep.subr.bf16.mxu0 0
  %407 = vmatpush1.bf16.xpose.msra.mxu0 0
  %408 = vmatprep.subr.bf16.mxu0 0
  %409 = vmatpush1.bf16.xpose.msra.mxu0 0
  %410 = vmatprep.subr.bf16.mxu0 0
  %411 = vmatpush1.bf16.xpose.msra.mxu0 0
  %412 = vmatprep.subr.bf16.mxu0 0
  %413 = vmatpush1.bf16.xpose.msra.mxu0 0
  %414 = vmatprep.subr.bf16.mxu0 0
  %415 = vmatpush1.bf16.xpose.msra.mxu0 0
  %416 = vmatprep.subr.bf16.mxu0 0
  %417 = vmatpush1.bf16.xpose.msra.mxu0 0
  %418 = vmatprep.subr.bf16.mxu0 0
  %419 = vmatpush1.bf16.xpose.msra.mxu0 0
  %420 = vmatprep.subr.bf16.mxu0 0
  %421 = vmatpush1.bf16.xpose.msra.mxu0 0
  %422 = vmatprep.subr.bf16.mxu0 0
  %423 = vmatpush1.bf16.xpose.msra.mxu0 0
  %424 = vmatprep.subr.bf16.mxu0 0
  %425 = vmatpush1.bf16.xpose.msra.mxu0 0
  %426 = vmatprep.mubr.bf16.mxu0 0
  %427 = vmatmul.mubr.bf16.gmra.mrb[0].mxu0 %v389
  %v428 = vpop.f32.mrb[0].mxu0
  %v429 = vadd.f32 0.0, %v428
  %v430 = vpop.f32.mrb[0].mxu0
  %v431 = vpop.f32.mrb[0].mxu0
  %v432 = vpop.f32.mrb[0].mxu0
  %433 = vdwg.mxu0
  %v434 = vsel %vm309, %v429, -inf
  %435 = vmax.xlane.f32.xlu0 %v434
  %v436 = vpop.xlane.xlu0 %435
  %v437 = vsub.f32 %v429, %v436
  %v438 = vmul.f32 %v437, 1.442695
  %v439 = vpow.pop %v438
  %v440 = vsel %vm309, %v439, 0.0
  %441 = vadd.xlane.f32.xlu0 %v440
  %v442 = vpop.xlane.xlu0 %441
  %v443 = vrcp.pop %v442
  %v444 = vmul.f32 %v439, %v443
  %v445 = vpack.c.bf16 %v444, %v444
  %447 = vrot.lane.b32.xlu0 %v261, 64
  %v448 = vpop.permute.xlu0 %447
  %v450 = vsel %vm309, %v445, 0
  %v453 = vsel %vm325, %v448, 0
  %455 = vmatprep.subr.bf16.mxu0 0
  %456 = vmatpush1.bf16.msra.mxu0 %v453
  %457 = vmatprep.subr.bf16.mxu0 0
  %458 = vmatpush1.bf16.msra.mxu0 0
  %459 = vmatprep.subr.bf16.mxu0 0
  %460 = vmatpush1.bf16.msra.mxu0 0
  %461 = vmatprep.subr.bf16.mxu0 0
  %462 = vmatpush1.bf16.msra.mxu0 0
  %463 = vmatprep.subr.bf16.mxu0 0
  %464 = vmatpush1.bf16.msra.mxu0 0
  %465 = vmatprep.subr.bf16.mxu0 0
  %466 = vmatpush1.bf16.msra.mxu0 0
  %467 = vmatprep.subr.bf16.mxu0 0
  %468 = vmatpush1.bf16.msra.mxu0 0
  %469 = vmatprep.subr.bf16.mxu0 0
  %470 = vmatpush1.bf16.msra.mxu0 0
  %471 = vmatprep.subr.bf16.mxu0 0
  %472 = vmatpush1.bf16.msra.mxu0 0
  %473 = vmatprep.subr.bf16.mxu0 0
  %474 = vmatpush1.bf16.msra.mxu0 0
  %475 = vmatprep.subr.bf16.mxu0 0
  %476 = vmatpush1.bf16.msra.mxu0 0
  %477 = vmatprep.subr.bf16.mxu0 0
  %478 = vmatpush1.bf16.msra.mxu0 0
  %479 = vmatprep.subr.bf16.mxu0 0
  %480 = vmatpush1.bf16.msra.mxu0 0
  %481 = vmatprep.subr.bf16.mxu0 0
  %482 = vmatpush1.bf16.msra.mxu0 0
  %483 = vmatprep.subr.bf16.mxu0 0
  %484 = vmatpush1.bf16.msra.mxu0 0
  %485 = vmatprep.subr.bf16.mxu0 0
  %486 = vmatpush1.bf16.msra.mxu0 0
  %487 = vmatprep.mubr.bf16.mxu0 0
  %488 = vmatmul.mubr.bf16.gmra.mrb[0].mxu0 %v450
  %v489 = vpop.f32.mrb[0].mxu0
  %v490 = vadd.f32 0.0, %v489
  %v491 = vpop.f32.mrb[0].mxu0
  %v492 = vpop.f32.mrb[0].mxu0
  %v493 = vpop.f32.mrb[0].mxu0
  %494 = vdwg.mxu0
  %v495 = vpack.c.bf16 %v490, %v490
  %s496 = scalar_lea.vmem %s6, 64
  %v497 = vld [vmem:[%s496] sm:$0xff]
  %v498 = vld [vmem:[%s496 + $0x8] sm:$0xff]
  %v499 = vld [vmem:[%s496 + $0x10] sm:$0xff]
  %v500 = vld [vmem:[%s496 + $0x18] sm:$0xff]
  %v501 = vld [vmem:[%s496 + $0x20] sm:$0xff]
  %v502 = vld [vmem:[%s496 + $0x28] sm:$0xff]
  %v503 = vld [vmem:[%s496 + $0x30] sm:$0xff]
  %v504 = vld [vmem:[%s496 + $0x38] sm:$0xff]
  %v505 = vpack.c.bf16 %v498, %v497
  %v506 = vpack.c.bf16 %v500, %v499
  %v507 = vpack.c.bf16 %v502, %v501
  %v508 = vpack.c.bf16 %v504, %v503
  %v510 = vsel %vm262, %v495, 0
  %512 = vmatprep.subr.bf16.mxu0 0
  %513 = vmatpush1.bf16.msra.mxu0 %v505
  %514 = vmatprep.subr.bf16.mxu0 0
  %515 = vmatpush1.bf16.msra.mxu0 %v506
  %516 = vmatprep.subr.bf16.mxu0 0
  %517 = vmatpush1.bf16.msra.mxu0 %v507
  %518 = vmatprep.subr.bf16.mxu0 0
  %519 = vmatpush1.bf16.msra.mxu0 %v508
  %520 = vmatprep.subr.bf16.mxu0 0
  %521 = vmatpush1.bf16.msra.mxu0 0
  %522 = vmatprep.subr.bf16.mxu0 0
  %523 = vmatpush1.bf16.msra.mxu0 0
  %524 = vmatprep.subr.bf16.mxu0 0
  %525 = vmatpush1.bf16.msra.mxu0 0
  %526 = vmatprep.subr.bf16.mxu0 0
  %527 = vmatpush1.bf16.msra.mxu0 0
  %528 = vmatprep.subr.bf16.mxu0 0
  %529 = vmatpush1.bf16.msra.mxu0 0
  %530 = vmatprep.subr.bf16.mxu0 0
  %531 = vmatpush1.bf16.msra.mxu0 0
  %532 = vmatprep.subr.bf16.mxu0 0
  %533 = vmatpush1.bf16.msra.mxu0 0
  %534 = vmatprep.subr.bf16.mxu0 0
  %535 = vmatpush1.bf16.msra.mxu0 0
  %536 = vmatprep.subr.bf16.mxu0 0
  %537 = vmatpush1.bf16.msra.mxu0 0
  %538 = vmatprep.subr.bf16.mxu0 0
  %539 = vmatpush1.bf16.msra.mxu0 0
  %540 = vmatprep.subr.bf16.mxu0 0
  %541 = vmatpush1.bf16.msra.mxu0 0
  %542 = vmatprep.subr.bf16.mxu0 0
  %543 = vmatpush1.bf16.msra.mxu0 0
  %544 = vmatprep.mubr.bf16.mxu0 0
  %545 = vmatmul.mubr.bf16.gmra.mrb[0].mxu0 %v510
  %v546 = vpop.f32.mrb[0].mxu0
  %v547 = vadd.f32 0.0, %v546
  %v548 = vpop.f32.mrb[0].mxu0
  %v549 = vpop.f32.mrb[0].mxu0
  %v550 = vpop.f32.mrb[0].mxu0
  %551 = vdwg.mxu0
  %v553 = vsel %vm262, %v369, 0
  %555 = vmatprep.subr.bf16.mxu0 0
  %556 = vmatpush1.bf16.msra.mxu0 %v378
  %557 = vmatprep.subr.bf16.mxu0 0
  %558 = vmatpush1.bf16.msra.mxu0 %v379
  %559 = vmatprep.subr.bf16.mxu0 0
  %560 = vmatpush1.bf16.msra.mxu0 %v380
  %561 = vmatprep.subr.bf16.mxu0 0
  %562 = vmatpush1.bf16.msra.mxu0 %v381
  %563 = vmatprep.subr.bf16.mxu0 0
  %564 = vmatpush1.bf16.msra.mxu0 0
  %565 = vmatprep.subr.bf16.mxu0 0
  %566 = vmatpush1.bf16.msra.mxu0 0
  %567 = vmatprep.subr.bf16.mxu0 0
  %568 = vmatpush1.bf16.msra.mxu0 0
  %569 = vmatprep.subr.bf16.mxu0 0
  %570 = vmatpush1.bf16.msra.mxu0 0
  %571 = vmatprep.subr.bf16.mxu0 0
  %572 = vmatpush1.bf16.msra.mxu0 0
  %573 = vmatprep.subr.bf16.mxu0 0
  %574 = vmatpush1.bf16.msra.mxu0 0
  %575 = vmatprep.subr.bf16.mxu0 0
  %576 = vmatpush1.bf16.msra.mxu0 0
  %577 = vmatprep.subr.bf16.mxu0 0
  %578 = vmatpush1.bf16.msra.mxu0 0
  %579 = vmatprep.subr.bf16.mxu0 0
  %580 = vmatpush1.bf16.msra.mxu0 0
  %581 = vmatprep.subr.bf16.mxu0 0
  %582 = vmatpush1.bf16.msra.mxu0 0
  %583 = vmatprep.subr.bf16.mxu0 0
  %584 = vmatpush1.bf16.msra.mxu0 0
  %585 = vmatprep.subr.bf16.mxu0 0
  %586 = vmatpush1.bf16.msra.mxu0 0
  %587 = vmatprep.mubr.bf16.mxu0 0
  %588 = vmatmul.mubr.bf16.gmra.mrb[0].mxu0 %v553
  %v589 = vpop.f32.mrb[0].mxu0
  %v590 = vadd.f32 %v547, %v589
  %v591 = vpop.f32.mrb[0].mxu0
  %v592 = vpop.f32.mrb[0].mxu0
  %v593 = vpop.f32.mrb[0].mxu0
  %594 = vdwg.mxu0
  %v595 = vld [vmem:[%s10] sm:$0x1]
  %v597 = vlaneseq
  %v598 = vshrl.u32 %v597, 7
  %v599 = vsub.s32 0, %v598
  %v600 = vrot.slane %v595, %v599
  %v602 = vadd.f32 %v590, %v600
  %603 = vst [vmem:[%s11] sm:$0xff] %v602
  // Predicated region
  $region46: #{boq_forward.31} parent=0 // pred_check
    _
  $region47: #{boq_forward.31} parent=0 // pred_check_branch
    %605 = sbr.rel (0) target = $region49
  $region48: #{boq_forward.31} parent=0 // pred_region
    _
  $region49: #{boq_forward.31} parent=0 // pred_fallthru
    _
  // Predicated region
  $region50: #{boq_forward.31} parent=0 // pred_check
    _
  $region51: #{boq_forward.31} parent=0 // pred_check_branch
    %607 = sbr.rel (0) target = $region53
  $region52: #{boq_forward.31} parent=0 // pred_region
    _
  $region53: #{boq_forward.31} parent=0 // pred_fallthru
    _

// kernel: boq_forward.34
$region0: #{boq_forward.34}
  #allocation0 [shape = 'u32[]', space=smem, size = 0x4, offset = 0x4, fixed_abs, tag = 'smem constant byte address 0x4 - core index']
  #allocation1 [shape = 'u32[144,128]{1,0:T(1,128)}', space=vmem, size = 0x12000, scoped, tag = 'internal scratch']
  %s0 = inlined_call_operand.vmem [shape: f32[16,128], index: 0, kind: input, shape index: {}]
  %s1 = inlined_call_operand.vmem [shape: f32[1,128], index: 1, kind: input, shape index: {}]
  %s2 = inlined_call_operand.vmem [shape: f32[1,128], index: 2, kind: input, shape index: {}]
  %s3 = inlined_call_operand.vmem [shape: f32[16,128], index: 3, kind: output, shape index: {}]
  %s4 = sld [smem:[#allocation0]]
  $region22: #{boq_forward.34} parent=0
    _
  %s6 = ssub.s32 1, %s4
  %s7 = scalar_select 0, %s6, %s4
  // Predicated region
  $region2: #{boq_forward.34} parent=0 // pred_check
    _
  $region3: #{boq_forward.34} parent=0 // pred_check_branch
    %9 = sbr.rel (0) target = $region5
  $region4: #{boq_forward.34} parent=0 // pred_region
    _
  $region5: #{boq_forward.34} parent=0 // pred_fallthru
    _
  // Predicated region
  $region6: #{boq_forward.34} parent=0 // pred_check
    _
  $region7: #{boq_forward.34} parent=0 // pred_check_branch
    %11 = sbr.rel (0) target = $region9
  $region8: #{boq_forward.34} parent=0 // pred_region
    _
  $region9: #{boq_forward.34} parent=0 // pred_fallthru
    _
  // Predicated region
  $region10: #{boq_forward.34} parent=0 // pred_check
    _
  $region11: #{boq_forward.34} parent=0 // pred_check_branch
    %13 = sbr.rel (0) target = $region13
  $region12: #{boq_forward.34} parent=0 // pred_region
    _
  $region13: #{boq_forward.34} parent=0 // pred_fallthru
    _
  %v14 = vld [vmem:[%s0] sm:$0xff]
  %v15 = vld [vmem:[%s0 + $0x8] sm:$0xff]
  %v16 = vld [vmem:[%s1] sm:$0x1]
  %v17 = vld [vmem:[%s2] sm:$0x1]
  %18 = vadd.xlane.f32.xlu0 %v14
  %v19 = vpop.xlane.xlu0 %18
  %20 = vadd.xlane.f32.xlu0 %v15
  %v21 = vpop.xlane.xlu0 %20
  %v22 = vrcp.pop 128.0
  %v23 = vmul.f32 %v19, %v22
  %v24 = vmul.f32 %v21, %v22
  %v25 = vsub.f32 %v14, %v23
  %v26 = vsub.f32 %v15, %v24
  %v27 = vmul.f32 %v25, %v25
  %v28 = vmul.f32 %v26, %v26
  %29 = vadd.xlane.f32.xlu0 %v27
  %v30 = vpop.xlane.xlu0 %29
  %31 = vadd.xlane.f32.xlu0 %v28
  %v32 = vpop.xlane.xlu0 %31
  %v33 = vmul.f32 %v30, %v22
  %v34 = vmul.f32 %v32, %v22
  %v35 = vadd.f32 %v33, 1e-05
  %v36 = vadd.f32 %v34, 1e-05
  %v37 = vrsqrt.pop %v35
  %v38 = vrsqrt.pop %v36
  %v39 = vmul.f32 %v25, %v37
  %v40 = vmul.f32 %v26, %v38
  %v42 = vlaneseq
  %v43 = vshrl.u32 %v42, 7
  %v44 = vsub.s32 0, %v43
  %v45 = vrot.slane %v16, %v44
  %v47 = vmul.f32 %v39, %v45
  %v48 = vmul.f32 %v40, %v45
  %v50 = vlaneseq
  %v51 = vshrl.u32 %v50, 7
  %v52 = vsub.s32 0, %v51
  %v53 = vrot.slane %v17, %v52
  %v55 = vadd.f32 %v47, %v53
  %v56 = vadd.f32 %v48, %v53
  %57 = vst [vmem:[%s3] sm:$0xff] %v55
  %58 = vst [vmem:[%s3 + $0x8] sm:$0xff] %v56
  // Predicated region
  $region14: #{boq_forward.34} parent=0 // pred_check
    _
  $region15: #{boq_forward.34} parent=0 // pred_check_branch
    %60 = sbr.rel (0) target = $region17
  $region16: #{boq_forward.34} parent=0 // pred_region
    _
  $region17: #{boq_forward.34} parent=0 // pred_fallthru
    _
  // Predicated region
  $region18: #{boq_forward.34} parent=0 // pred_check
    _
  $region19: #{boq_forward.34} parent=0 // pred_check_branch
    %62 = sbr.rel (0) target = $region21
  $region20: #{boq_forward.34} parent=0 // pred_region
    _
  $region21: #{boq_forward.34} parent=0 // pred_fallthru
    _

// kernel: boq_forward.33
$region0: #{boq_forward.33}
  #allocation0 [shape = 'u32[]', space=smem, size = 0x4, offset = 0x4, fixed_abs, tag = 'smem constant byte address 0x4 - core index']
  #allocation1 [shape = 'u32[144,128]{1,0:T(1,128)}', space=vmem, size = 0x12000, scoped, tag = 'internal scratch']
  %s0 = inlined_call_operand.vmem [shape: f32[1,8,128], index: 0, kind: input, shape index: {}]
  %s1 = inlined_call_operand.vmem [shape: f32[2,64,128], index: 1, kind: input, shape index: {}, may-alias: {1,2}]
  %s2 = inlined_call_operand.vmem [shape: f32[2,64,128], index: 2, kind: input, shape index: {}, may-alias: {1,2}]
  %s3 = inlined_call_operand.vmem [shape: f32[128,128], index: 3, kind: input, shape index: {}]
  %s4 = inlined_call_operand.vmem [shape: f32[128,128], index: 4, kind: input, shape index: {}]
  %s5 = inlined_call_operand.vmem [shape: f32[128,128], index: 5, kind: input, shape index: {}]
  %s6 = inlined_call_operand.vmem [shape: f32[2,64,128], index: 6, kind: input, shape index: {}]
  %s7 = inlined_call_operand.vmem [shape: f32[1,128], index: 7, kind: input, shape index: {}]
  %s8 = inlined_call_operand.vmem [shape: f32[1,128], index: 8, kind: input, shape index: {}]
  %s9 = inlined_call_operand.vmem [shape: f32[1,128], index: 9, kind: input, shape index: {}]
  %s10 = inlined_call_operand.vmem [shape: f32[1,128], index: 10, kind: input, shape index: {}]
  %s11 = inlined_call_operand.vmem [shape: f32[2,8,128], index: 11, kind: output, shape index: {0}]
  %s12 = inlined_call_operand.hbm [shape: f32[2,8,64], index: 12, kind: output, shape index: {1}]
  %13 = xla_tuple %s11, %s12
  %s14 = sld [smem:[#allocation0]]
  $region85: #{boq_forward.33} parent=0
    _
  %s16 = ssub.s32 1, %s14
  %s17 = scalar_select 0, %s16, %s14
  $region1: #{boq_forward.33} parent=0
    #allocation2 [shape = 'u8[8192]{0}', space=vmem, size = 0x2000, scoped, tag = 'output window, operand 1']
    #allocation3 [shape = 's32[2]{0}', space=sflag, size = 0x8, scoped, tag = 'scoped memory for boq_forward.33']
    %18 = vsyncpa [#allocation3], 0
    %s19 = scalar_lea.sflag [#allocation3], 1
    %20 = vsyncpa %s19, 0
    loop: start=0, step=1, limit=4
    $region2: #{boq_forward.33} parent=1 // loop_pre_header
      _
    $region3: #{boq_forward.33} parent=1 // loop_header
      %s22 = sphi 0, %s26
      %p23 = scmp.ge.s32.totalorder %s22, 4
      %s30 = sphi 0, %s30
      %s32 = sphi 0, %s30
      %s33 = sphi 0, %s32
      %s47 = sphi 0, %s33
      %s53 = sphi 0, %s55
      %s56 = sphi 0, %s53
      %s57 = sphi 0, %s56
      %s73 = sphi 0, %s57
      %s79 = sphi 0, %s81
      %s82 = sphi 0, %s79
      %s83 = sphi 0, %s82
      %s99 = sphi 0, %s83
      %s103 = sphi 0, %s103
      %s105 = sphi 0, %s103
      %s106 = sphi 0, %s105
      %s120 = sphi 0, %s106
      %s124 = sphi 0, %s124
      %s126 = sphi 0, %s124
      %s127 = sphi 0, %s126
      %s141 = sphi 0, %s127
      %s145 = sphi 0, %s145
      %s147 = sphi 0, %s145
      %s148 = sphi 0, %s147
      %s162 = sphi 0, %s148
      %s166 = sphi 0, %s166
      %s168 = sphi 0, %s166
      %s169 = sphi 0, %s168
      %s183 = sphi 0, %s169
      %s187 = sphi 0, %s187
      %s189 = sphi 0, %s187
      %s190 = sphi 0, %s189
      %s204 = sphi 0, %s190
      %s208 = sphi 0, %s208
      %s210 = sphi 0, %s208
      %s211 = sphi 0, %s210
      %s225 = sphi 0, %s211
      %s229 = sphi 0, %s229
      %s231 = sphi 0, %s229
      %s232 = sphi 0, %s231
      %s246 = sphi 0, %s232
      %s250 = sphi 0, %s250
      %s252 = sphi 0, %s250
      %s253 = sphi 0, %s252
      %s267 = sphi 0, %s253
      %s273 = sphi 0, %s275
      %s276 = sphi 0, %s273
      %s277 = sphi 0, %s276
      %s293 = sphi 0, %s277
      %s299 = sphi 0, %s301
      %s302 = sphi 0, %s299
      %s303 = sphi 0, %s302
      %s319 = sphi 0, %s303
    $region4: #{boq_forward.33} parent=1 // loop_header_branch
      %25 = sbr.rel (%p23) target = $region8
    $region5: #{boq_forward.33} parent=1 // loop_body
      %s27 = ssub.s32 %s22, 1
      %s28 = ssub.s32 %s22, 2
      %s29 = sadd.s32 %s22, 1
      %s31 = sadd.s32 %s30, 1
      %p34 = scmp.eq.s32.totalorder %s22, 1
      %p35 = scmp.ne.s32.totalorder %s30, %s32
      %p36 = scmp.eq.s32.totalorder %s22, 0
      %p37 = por %p35, %p36
      %p38 = scmp.ne.s32.totalorder %s30, %s32
      %p39 = scmp.eq.s32.totalorder %s27, 1
      %p40 = por %p38, %p39
      %p41 = scmp.ne.s32.totalorder %s32, %s33
      %p42 = scmp.eq.s32.totalorder %s27, 0
      %p43 = por %p41, %p42
      %p44 = scmp.ne.s32.totalorder %s32, %s33
      %p45 = scmp.eq.s32.totalorder %s28, 1
      %p46 = por %p44, %p45
      %p48 = scmp.ne.s32.totalorder %s33, %s47
      %p49 = scmp.eq.s32.totalorder %s28, 0
      %p50 = por %p48, %p49
      %s51 = ssub.s32 %s22, %s29
      %p52 = scmp.eq.s32.totalorder %s51, 0
      %s54 = sadd.s32 %s53, 1
      %s55 = scalar_select %p52, %s53, %s54
      %p58 = pneg %p52
      %p59 = scmp.eq.s32.totalorder %s22, 1
      %p60 = por %p58, %p59
      %p61 = scmp.ne.s32.totalorder %s53, %s56
      %p62 = scmp.eq.s32.totalorder %s22, 0
      %p63 = por %p61, %p62
      %p64 = scmp.ne.s32.totalorder %s53, %s56
      %p65 = scmp.eq.s32.totalorder %s27, 1
      %p66 = por %p64, %p65
      %p67 = scmp.ne.s32.totalorder %s56, %s57
      %p68 = scmp.eq.s32.totalorder %s27, 0
      %p69 = por %p67, %p68
      %p70 = scmp.ne.s32.totalorder %s56, %s57
      %p71 = scmp.eq.s32.totalorder %s28, 1
      %p72 = por %p70, %p71
      %p74 = scmp.ne.s32.totalorder %s57, %s73
      %p75 = scmp.eq.s32.totalorder %s28, 0
      %p76 = por %p74, %p75
      %s77 = ssub.s32 %s22, %s29
      %p78 = scmp.eq.s32.totalorder %s77, 0
      %s80 = sadd.s32 %s79, 1
      %s81 = scalar_select %p78, %s79, %s80
      %p84 = pneg %p78
      %p85 = scmp.eq.s32.totalorder %s22, 1
      %p86 = por %p84, %p85
      %p87 = scmp.ne.s32.totalorder %s79, %s82
      %p88 = scmp.eq.s32.totalorder %s22, 0
      %p89 = por %p87, %p88
      %p90 = scmp.ne.s32.totalorder %s79, %s82
      %p91 = scmp.eq.s32.totalorder %s27, 1
      %p92 = por %p90, %p91
      %p93 = scmp.ne.s32.totalorder %s82, %s83
      %p94 = scmp.eq.s32.totalorder %s27, 0
      %p95 = por %p93, %p94
      %p96 = scmp.ne.s32.totalorder %s82, %s83
      %p97 = scmp.eq.s32.totalorder %s28, 1
      %p98 = por %p96, %p97
      %p100 = scmp.ne.s32.totalorder %s83, %s99
      %p101 = scmp.eq.s32.totalorder %s28, 0
      %p102 = por %p100, %p101
      %s104 = sadd.s32 %s103, 1
      %p107 = scmp.eq.s32.totalorder %s22, 1
      %p108 = scmp.ne.s32.totalorder %s103, %s105
      %p109 = scmp.eq.s32.totalorder %s22, 0
      %p110 = por %p108, %p109
      %p111 = scmp.ne.s32.totalorder %s103, %s105
      %p112 = scmp.eq.s32.totalorder %s27, 1
      %p113 = por %p111, %p112
      %p114 = scmp.ne.s32.totalorder %s105, %s106
      %p115 = scmp.eq.s32.totalorder %s27, 0
      %p116 = por %p114, %p115
      %p117 = scmp.ne.s32.totalorder %s105, %s106
      %p118 = scmp.eq.s32.totalorder %s28, 1
      %p119 = por %p117, %p118
      %p121 = scmp.ne.s32.totalorder %s106, %s120
      %p122 = scmp.eq.s32.totalorder %s28, 0
      %p123 = por %p121, %p122
      %s125 = sadd.s32 %s124, 1
      %p128 = scmp.eq.s32.totalorder %s22, 1
      %p129 = scmp.ne.s32.totalorder %s124, %s126
      %p130 = scmp.eq.s32.totalorder %s22, 0
      %p131 = por %p129, %p130
      %p132 = scmp.ne.s32.totalorder %s124, %s126
      %p133 = scmp.eq.s32.totalorder %s27, 1
      %p134 = por %p132, %p133
      %p135 = scmp.ne.s32.totalorder %s126, %s127
      %p136 = scmp.eq.s32.totalorder %s27, 0
      %p137 = por %p135, %p136
      %p138 = scmp.ne.s32.totalorder %s126, %s127
      %p139 = scmp.eq.s32.totalorder %s28, 1
      %p140 = por %p138, %p139
      %p142 = scmp.ne.s32.totalorder %s127, %s141
      %p143 = scmp.eq.s32.totalorder %s28, 0
      %p144 = por %p142, %p143
      %s146 = sadd.s32 %s145, 1
      %p149 = scmp.eq.s32.totalorder %s22, 1
      %p150 = scmp.ne.s32.totalorder %s145, %s147
      %p151 = scmp.eq.s32.totalorder %s22, 0
      %p152 = por %p150, %p151
      %p153 = scmp.ne.s32.totalorder %s145, %s147
      %p154 = scmp.eq.s32.totalorder %s27, 1
      %p155 = por %p153, %p154
      %p156 = scmp.ne.s32.totalorder %s147, %s148
      %p157 = scmp.eq.s32.totalorder %s27, 0
      %p158 = por %p156, %p157
      %p159 = scmp.ne.s32.totalorder %s147, %s148
      %p160 = scmp.eq.s32.totalorder %s28, 1
      %p161 = por %p159, %p160
      %p163 = scmp.ne.s32.totalorder %s148, %s162
      %p164 = scmp.eq.s32.totalorder %s28, 0
      %p165 = por %p163, %p164
      %s167 = sadd.s32 %s166, 1
      %p170 = scmp.eq.s32.totalorder %s22, 1
      %p171 = scmp.ne.s32.totalorder %s166, %s168
      %p172 = scmp.eq.s32.totalorder %s22, 0
      %p173 = por %p171, %p172
      %p174 = scmp.ne.s32.totalorder %s166, %s168
      %p175 = scmp.eq.s32.totalorder %s27, 1
      %p176 = por %p174, %p175
      %p177 = scmp.ne.s32.totalorder %s168, %s169
      %p178 = scmp.eq.s32.totalorder %s27, 0
      %p179 = por %p177, %p178
      %p180 = scmp.ne.s32.totalorder %s168, %s169
      %p181 = scmp.eq.s32.totalorder %s28, 1
      %p182 = por %p180, %p181
      %p184 = scmp.ne.s32.totalorder %s169, %s183
      %p185 = scmp.eq.s32.totalorder %s28, 0
      %p186 = por %p184, %p185
      %s188 = sadd.s32 %s187, 1
      %p191 = scmp.eq.s32.totalorder %s22, 1
      %p192 = scmp.ne.s32.totalorder %s187, %s189
      %p193 = scmp.eq.s32.totalorder %s22, 0
      %p194 = por %p192, %p193
      %p195 = scmp.ne.s32.totalorder %s187, %s189
      %p196 = scmp.eq.s32.totalorder %s27, 1
      %p197 = por %p195, %p196
      %p198 = scmp.ne.s32.totalorder %s189, %s190
      %p199 = scmp.eq.s32.totalorder %s27, 0
      %p200 = por %p198, %p199
      %p201 = scmp.ne.s32.totalorder %s189, %s190
      %p202 = scmp.eq.s32.totalorder %s28, 1
      %p203 = por %p201, %p202
      %p205 = scmp.ne.s32.totalorder %s190, %s204
      %p206 = scmp.eq.s32.totalorder %s28, 0
      %p207 = por %p205, %p206
      %s209 = sadd.s32 %s208, 1
      %p212 = scmp.eq.s32.totalorder %s22, 1
      %p213 = scmp.ne.s32.totalorder %s208, %s210
      %p214 = scmp.eq.s32.totalorder %s22, 0
      %p215 = por %p213, %p214
      %p216 = scmp.ne.s32.totalorder %s208, %s210
      %p217 = scmp.eq.s32.totalorder %s27, 1
      %p218 = por %p216, %p217
      %p219 = scmp.ne.s32.totalorder %s210, %s211
      %p220 = scmp.eq.s32.totalorder %s27, 0
      %p221 = por %p219, %p220
      %p222 = scmp.ne.s32.totalorder %s210, %s211
      %p223 = scmp.eq.s32.totalorder %s28, 1
      %p224 = por %p222, %p223
      %p226 = scmp.ne.s32.totalorder %s211, %s225
      %p227 = scmp.eq.s32.totalorder %s28, 0
      %p228 = por %p226, %p227
      %s230 = sadd.s32 %s229, 1
      %p233 = scmp.eq.s32.totalorder %s22, 1
      %p234 = scmp.ne.s32.totalorder %s229, %s231
      %p235 = scmp.eq.s32.totalorder %s22, 0
      %p236 = por %p234, %p235
      %p237 = scmp.ne.s32.totalorder %s229, %s231
      %p238 = scmp.eq.s32.totalorder %s27, 1
      %p239 = por %p237, %p238
      %p240 = scmp.ne.s32.totalorder %s231, %s232
      %p241 = scmp.eq.s32.totalorder %s27, 0
      %p242 = por %p240, %p241
      %p243 = scmp.ne.s32.totalorder %s231, %s232
      %p244 = scmp.eq.s32.totalorder %s28, 1
      %p245 = por %p243, %p244
      %p247 = scmp.ne.s32.totalorder %s232, %s246
      %p248 = scmp.eq.s32.totalorder %s28, 0
      %p249 = por %p247, %p248
      %s251 = sadd.s32 %s250, 1
      %p254 = scmp.eq.s32.totalorder %s22, 1
      %p255 = scmp.ne.s32.totalorder %s250, %s252
      %p256 = scmp.eq.s32.totalorder %s22, 0
      %p257 = por %p255, %p256
      %p258 = scmp.ne.s32.totalorder %s250, %s252
      %p259 = scmp.eq.s32.totalorder %s27, 1
      %p260 = por %p258, %p259
      %p261 = scmp.ne.s32.totalorder %s252, %s253
      %p262 = scmp.eq.s32.totalorder %s27, 0
      %p263 = por %p261, %p262
      %p264 = scmp.ne.s32.totalorder %s252, %s253
      %p265 = scmp.eq.s32.totalorder %s28, 1
      %p266 = por %p264, %p265
      %p268 = scmp.ne.s32.totalorder %s253, %s267
      %p269 = scmp.eq.s32.totalorder %s28, 0
      %p270 = por %p268, %p269
      %s271 = ssub.s32 %s22, %s29
      %p272 = scmp.eq.s32.totalorder %s271, 0
      %s274 = sadd.s32 %s273, 1
      %s275 = scalar_select %p272, %s273, %s274
      %p278 = pneg %p272
      %p279 = scmp.eq.s32.totalorder %s22, 1
      %p280 = por %p278, %p279
      %p281 = scmp.ne.s32.totalorder %s273, %s276
      %p282 = scmp.eq.s32.totalorder %s22, 0
      %p283 = por %p281, %p282
      %p284 = scmp.ne.s32.totalorder %s273, %s276
      %p285 = scmp.eq.s32.totalorder %s27, 1
      %p286 = por %p284, %p285
      %p287 = scmp.ne.s32.totalorder %s276, %s277
      %p288 = scmp.eq.s32.totalorder %s27, 0
      %p289 = por %p287, %p288
      %p290 = scmp.ne.s32.totalorder %s276, %s277
      %p291 = scmp.eq.s32.totalorder %s28, 1
      %p292 = por %p290, %p291
      %p294 = scmp.ne.s32.totalorder %s277, %s293
      %p295 = scmp.eq.s32.totalorder %s28, 0
      %p296 = por %p294, %p295
      %s297 = ssub.s32 %s22, %s29
      %p298 = scmp.eq.s32.totalorder %s297, 0
      %s300 = sadd.s32 %s299, 1
      %s301 = scalar_select %p298, %s299, %s300
      %p304 = pneg %p298
      %p305 = scmp.eq.s32.totalorder %s22, 1
      %p306 = por %p304, %p305
      %p307 = scmp.ne.s32.totalorder %s299, %s302
      %p308 = scmp.eq.s32.totalorder %s22, 0
      %p309 = por %p307, %p308
      %p310 = scmp.ne.s32.totalorder %s299, %s302
      %p311 = scmp.eq.s32.totalorder %s27, 1
      %p312 = por %p310, %p311
      %p313 = scmp.ne.s32.totalorder %s302, %s303
      %p314 = scmp.eq.s32.totalorder %s27, 0
      %p315 = por %p313, %p314
      %p316 = scmp.ne.s32.totalorder %s302, %s303
      %p317 = scmp.eq.s32.totalorder %s28, 1
      %p318 = por %p316, %p317
      %p320 = scmp.ne.s32.totalorder %s303, %s319
      %p321 = scmp.eq.s32.totalorder %s28, 0
      %p322 = por %p320, %p321
      %p323 = scmp.le.s32.totalorder 1, %s22
      %p324 = scmp.lt.s32.totalorder %s22, 3
      %p325 = pnand %p323, %p324
      %p326 = pneg %p325
      // Predicated region
      $region9: #{boq_forward.33} parent=5 // pred_check
        _
      $region10: #{boq_forward.33} parent=5 // pred_check_branch
        %328 = sbr.rel (%p325) target = $region12
      $region11: #{boq_forward.33} parent=5 // pred_region
        %s329 = ssub.s32 %s22, 1
        // Predicated region
        $region13: #{boq_forward.33} parent=11 // pred_check
          %p330 = pneg %p43
        $region14: #{boq_forward.33} parent=11 // pred_check_branch
          %332 = sbr.rel (%p330) target = $region16
        $region15: #{boq_forward.33} parent=11 // pred_region
          _
        $region16: #{boq_forward.33} parent=11 // pred_fallthru
          _
        // Predicated region
        $region17: #{boq_forward.33} parent=11 // pred_check
          %p333 = pneg %p116
        $region18: #{boq_forward.33} parent=11 // pred_check_branch
          %335 = sbr.rel (%p333) target = $region20
        $region19: #{boq_forward.33} parent=11 // pred_region
          _
        $region20: #{boq_forward.33} parent=11 // pred_fallthru
          _
        // Predicated region
        $region21: #{boq_forward.33} parent=11 // pred_check
          %p336 = pneg %p137
        $region22: #{boq_forward.33} parent=11 // pred_check_branch
          %338 = sbr.rel (%p336) target = $region24
        $region23: #{boq_forward.33} parent=11 // pred_region
          _
        $region24: #{boq_forward.33} parent=11 // pred_fallthru
          _
        // Predicated region
        $region25: #{boq_forward.33} parent=11 // pred_check
          %p339 = pneg %p158
        $region26: #{boq_forward.33} parent=11 // pred_check_branch
          %341 = sbr.rel (%p339) target = $region28
        $region27: #{boq_forward.33} parent=11 // pred_region
          _
        $region28: #{boq_forward.33} parent=11 // pred_fallthru
          _
        // Predicated region
        $region29: #{boq_forward.33} parent=11 // pred_check
          %p342 = pneg %p179
        $region30: #{boq_forward.33} parent=11 // pred_check_branch
          %344 = sbr.rel (%p342) target = $region32
        $region31: #{boq_forward.33} parent=11 // pred_region
          _
        $region32: #{boq_forward.33} parent=11 // pred_fallthru
          _
        // Predicated region
        $region33: #{boq_forward.33} parent=11 // pred_check
          %p345 = pneg %p200
        $region34: #{boq_forward.33} parent=11 // pred_check_branch
          %347 = sbr.rel (%p345) target = $region36
        $region35: #{boq_forward.33} parent=11 // pred_region
          _
        $region36: #{boq_forward.33} parent=11 // pred_fallthru
          _
        // Predicated region
        $region37: #{boq_forward.33} parent=11 // pred_check
          %p348 = pneg %p221
        $region38: #{boq_forward.33} parent=11 // pred_check_branch
          %350 = sbr.rel (%p348) target = $region40
        $region39: #{boq_forward.33} parent=11 // pred_region
          _
        $region40: #{boq_forward.33} parent=11 // pred_fallthru
          _
        // Predicated region
        $region41: #{boq_forward.33} parent=11 // pred_check
          %p351 = pneg %p242
        $region42: #{boq_forward.33} parent=11 // pred_check_branch
          %353 = sbr.rel (%p351) target = $region44
        $region43: #{boq_forward.33} parent=11 // pred_region
          _
        $region44: #{boq_forward.33} parent=11 // pred_fallthru
          _
        // Predicated region
        $region45: #{boq_forward.33} parent=11 // pred_check
          %p354 = pneg %p263
        $region46: #{boq_forward.33} parent=11 // pred_check_branch
          %356 = sbr.rel (%p354) target = $region48
        $region47: #{boq_forward.33} parent=11 // pred_region
          _
        $region48: #{boq_forward.33} parent=11 // pred_fallthru
          _
      $region12: #{boq_forward.33} parent=5 // pred_fallthru
        _
      %p357 = scmp.lt.s32.totalorder %s22, 2
      // Predicated region
      $region49: #{boq_forward.33} parent=5 // pred_check
        %p358 = pneg %p357
      $region50: #{boq_forward.33} parent=5 // pred_check_branch
        %360 = sbr.rel (%p358) target = $region52
      $region51: #{boq_forward.33} parent=5 // pred_region
        // Predicated region
        $region53: #{boq_forward.33} parent=51 // pred_check
          %p361 = pneg %p63
        $region54: #{boq_forward.33} parent=51 // pred_check_branch
          %363 = sbr.rel (%p361) target = $region56
        $region55: #{boq_forward.33} parent=51 // pred_region
          %p364 = scmp.lt.s32.totalorder %s22, 1
          %s365 = scalar_select %p364, %s22, 1
          %s366 = smul.addr %s365, 8
          %s367 = smul.addr %s366, 8
          %s368 = scalar_lea.vmem %s1, %s367
        $region56: #{boq_forward.33} parent=51 // pred_fallthru
          _
        // Predicated region
        $region57: #{boq_forward.33} parent=51 // pred_check
          %p369 = pneg %p89
        $region58: #{boq_forward.33} parent=51 // pred_check_branch
          %371 = sbr.rel (%p369) target = $region60
        $region59: #{boq_forward.33} parent=51 // pred_region
          %p372 = scmp.lt.s32.totalorder %s22, 1
          %s373 = scalar_select %p372, %s22, 1
          %s374 = smul.addr %s373, 8
          %s375 = smul.addr %s374, 8
          %s376 = scalar_lea.vmem %s2, %s375
        $region60: #{boq_forward.33} parent=51 // pred_fallthru
          _
      $region52: #{boq_forward.33} parent=5 // pred_fallthru
        _
      %p377 = scmp.le.s32.totalorder 1, %s22
      %p378 = scmp.lt.s32.totalorder %s22, 3
      %p379 = pnand %p377, %p378
      %p380 = pneg %p379
      // Predicated region
      $region61: #{boq_forward.33} parent=5 // pred_check
        _
      $region62: #{boq_forward.33} parent=5 // pred_check_branch
        %382 = sbr.rel (%p379) target = $region64
      $region63: #{boq_forward.33} parent=5 // pred_region
        %s383 = ssub.s32 %s22, 1
        %p384 = pneg %p43
        %p385 = pneg %p40
        %p386 = scmp.lt.s32.totalorder %s27, 1
        %s387 = scalar_select %p386, %s27, 1
        %s388 = smul.addr %s387, 8
        %s389 = smul.addr %s388, 8
        %s390 = scalar_lea.vmem %s1, %s389
        %p391 = pneg %p69
        %p392 = pneg %p66
        %p393 = scmp.lt.s32.totalorder %s27, 1
        %s394 = scalar_select %p393, %s27, 1
        %s395 = smul.addr %s394, 8
        %s396 = smul.addr %s395, 8
        %s397 = scalar_lea.vmem %s2, %s396
        %p398 = pneg %p95
        %p399 = pneg %p92
        %p400 = pneg %p116
        %p401 = pneg %p113
        %p402 = pneg %p137
        %p403 = pneg %p134
        %p404 = pneg %p158
        %p405 = pneg %p155
        %p406 = pneg %p179
        %p407 = pneg %p176
        %p408 = pneg %p200
        %p409 = pneg %p197
        %p410 = pneg %p221
        %p411 = pneg %p218
        %p412 = pneg %p242
        %p413 = pneg %p239
        %p414 = pneg %p263
        %p415 = pneg %p260
        %p416 = pneg %p289
        %p417 = pneg %p286
        %p418 = scmp.lt.s32.totalorder %s27, 1
        %s419 = scalar_select %p418, %s27, 1
        %s420 = smul.addr %s419, 8
        %s421 = scalar_lea.vmem %s11, %s420
        %p422 = pneg %p315
        %p423 = pneg %p312
        %s424 = sand.u32 %s302, 1
        %s425 = scalar_lea.sflag [#allocation3], %s424
        %s426 = sand.u32 %s302, 1
        %s427 = smul.addr %s426, 8
        %s428 = scalar_lea.vmem [#allocation2], %s427
        %p429 = scmp.lt.s32.totalorder %s27, 1
        %s430 = scalar_select %p429, %s27, 1
        %s431 = smul.addr %s430, 8
        %s432 = smul.addr %s431, 8
        %s433 = scalar_lea.vmem %s1, %s432
        %p434 = scmp.lt.s32.totalorder %s27, 1
        %s435 = scalar_select %p434, %s27, 1
        %s436 = smul.addr %s435, 8
        %s437 = smul.addr %s436, 8
        %s438 = scalar_lea.vmem %s2, %s437
        %p439 = scmp.lt.s32.totalorder %s27, 1
        %s440 = scalar_select %p439, %s27, 1
        %s441 = smul.addr %s440, 8
        %s442 = scalar_lea.vmem %s11, %s441
        %v444 = vld [vmem:[%s0] sm:$0xff]
        %v445 = vpack.c.bf16 %v444, %v444
        %v446 = vld [vmem:[%s433] sm:$0xff]
        %v447 = vld [vmem:[%s433 + $0x8] sm:$0xff]
        %v448 = vld [vmem:[%s433 + $0x10] sm:$0xff]
        %v449 = vld [vmem:[%s433 + $0x18] sm:$0xff]
        %v450 = vld [vmem:[%s433 + $0x20] sm:$0xff]
        %v451 = vld [vmem:[%s433 + $0x28] sm:$0xff]
        %v452 = vld [vmem:[%s433 + $0x30] sm:$0xff]
        %v453 = vld [vmem:[%s433 + $0x38] sm:$0xff]
        %v454 = vpack.c.bf16 %v447, %v446
        %v455 = vpack.c.bf16 %v449, %v448
        %v456 = vpack.c.bf16 %v451, %v450
        %v457 = vpack.c.bf16 %v453, %v452
        %v458 = vld [vmem:[%s438] sm:$0xff]
        %v459 = vld [vmem:[%s438 + $0x8] sm:$0xff]
        %v460 = vld [vmem:[%s438 + $0x10] sm:$0xff]
        %v461 = vld [vmem:[%s438 + $0x18] sm:$0xff]
        %v462 = vld [vmem:[%s438 + $0x20] sm:$0xff]
        %v463 = vld [vmem:[%s438 + $0x28] sm:$0xff]
        %v464 = vld [vmem:[%s438 + $0x30] sm:$0xff]
        %v465 = vld [vmem:[%s438 + $0x38] sm:$0xff]
        %v466 = vpack.c.bf16 %v459, %v458
        %v467 = vpack.c.bf16 %v461, %v460
        %v468 = vpack.c.bf16 %v463, %v462
        %v469 = vpack.c.bf16 %v465, %v464
        %v470 = vld [vmem:[%s3] sm:$0xff]
        %v471 = vld [vmem:[%s3 + $0x8] sm:$0xff]
        %v472 = vld [vmem:[%s3 + $0x10] sm:$0xff]
        %v473 = vld [vmem:[%s3 + $0x18] sm:$0xff]
        %v474 = vld [vmem:[%s3 + $0x20] sm:$0xff]
        %v475 = vld [vmem:[%s3 + $0x28] sm:$0xff]
        %v476 = vld [vmem:[%s3 + $0x30] sm:$0xff]
        %v477 = vld [vmem:[%s3 + $0x38] sm:$0xff]
        %v478 = vld [vmem:[%s3 + $0x40] sm:$0xff]
        %v479 = vld [vmem:[%s3 + $0x48] sm:$0xff]
        %v480 = vld [vmem:[%s3 + $0x50] sm:$0xff]
        %v481 = vld [vmem:[%s3 + $0x58] sm:$0xff]
        %v482 = vld [vmem:[%s3 + $0x60] sm:$0xff]
        %v483 = vld [vmem:[%s3 + $0x68] sm:$0xff]
        %v484 = vld [vmem:[%s3 + $0x70] sm:$0xff]
        %v485 = vld [vmem:[%s3 + $0x78] sm:$0xff]
        %v486 = vpack.c.bf16 %v471, %v470
        %v487 = vpack.c.bf16 %v473, %v472
        %v488 = vpack.c.bf16 %v475, %v474
        %v489 = vpack.c.bf16 %v477, %v476
        %v490 = vpack.c.bf16 %v479, %v478
        %v491 = vpack.c.bf16 %v481, %v480
        %v492 = vpack.c.bf16 %v483, %v482
        %v493 = vpack.c.bf16 %v485, %v484
        %v494 = vld [vmem:[%s7] sm:$0x1]
        %v496 = vlaneseq
        %v497 = vshrl.u32 %v496, 7
        %v498 = vsub.s32 0, %v497
        %v499 = vrot.slane %v494, %v498
        %501 = vmatprep.subr.bf16.mxu0 0
        %502 = vmatpush1.bf16.msra.mxu0 %v486
        %503 = vmatprep.subr.bf16.mxu0 0
        %504 = vmatpush1.bf16.msra.mxu0 %v487
        %505 = vmatprep.subr.bf16.mxu0 0
        %506 = vmatpush1.bf16.msra.mxu0 %v488
        %507 = vmatprep.subr.bf16.mxu0 0
        %508 = vmatpush1.bf16.msra.mxu0 %v489
        %509 = vmatprep.subr.bf16.mxu0 0
        %510 = vmatpush1.bf16.msra.mxu0 %v490
        %511 = vmatprep.subr.bf16.mxu0 0
        %512 = vmatpush1.bf16.msra.mxu0 %v491
        %513 = vmatprep.subr.bf16.mxu0 0
        %514 = vmatpush1.bf16.msra.mxu0 %v492
        %515 = vmatprep.subr.bf16.mxu0 0
        %516 = vmatpush1.bf16.msra.mxu0 %v493
        %517 = vmatprep.subr.bf16.mxu0 0
        %518 = vmatpush1.bf16.msra.mxu0 0
        %519 = vmatprep.subr.bf16.mxu0 0
        %520 = vmatpush1.bf16.msra.mxu0 0
        %521 = vmatprep.subr.bf16.mxu0 0
        %522 = vmatpush1.bf16.msra.mxu0 0
        %523 = vmatprep.subr.bf16.mxu0 0
        %524 = vmatpush1.bf16.msra.mxu0 0
        %525 = vmatprep.subr.bf16.mxu0 0
        %526 = vmatpush1.bf16.msra.mxu0 0
        %527 = vmatprep.subr.bf16.mxu0 0
        %528 = vmatpush1.bf16.msra.mxu0 0
        %529 = vmatprep.subr.bf16.mxu0 0
        %530 = vmatpush1.bf16.msra.mxu0 0
        %531 = vmatprep.subr.bf16.mxu0 0
        %532 = vmatpush1.bf16.msra.mxu0 0
        %533 = vmatprep.mubr.bf16.mxu0 0
        %534 = vmatmul.mubr.bf16.gmra.mrb[0].mxu0 %v445
        %v535 = vpop.f32.mrb[0].mxu0
        %v536 = vadd.f32 %v499, %v535
        %v537 = vpop.f32.mrb[0].mxu0
        %v538 = vpop.f32.mrb[0].mxu0
        %v539 = vpop.f32.mrb[0].mxu0
        %540 = vdwg.mxu0
        %v541 = vld [vmem:[%s4] sm:$0xff]
        %v542 = vld [vmem:[%s4 + $0x8] sm:$0xff]
        %v543 = vld [vmem:[%s4 + $0x10] sm:$0xff]
        %v544 = vld [vmem:[%s4 + $0x18] sm:$0xff]
        %v545 = vld [vmem:[%s4 + $0x20] sm:$0xff]
        %v546 = vld [vmem:[%s4 + $0x28] sm:$0xff]
        %v547 = vld [vmem:[%s4 + $0x30] sm:$0xff]
        %v548 = vld [vmem:[%s4 + $0x38] sm:$0xff]
        %v549 = vld [vmem:[%s4 + $0x40] sm:$0xff]
        %v550 = vld [vmem:[%s4 + $0x48] sm:$0xff]
        %v551 = vld [vmem:[%s4 + $0x50] sm:$0xff]
        %v552 = vld [vmem:[%s4 + $0x58] sm:$0xff]
        %v553 = vld [vmem:[%s4 + $0x60] sm:$0xff]
        %v554 = vld [vmem:[%s4 + $0x68] sm:$0xff]
        %v555 = vld [vmem:[%s4 + $0x70] sm:$0xff]
        %v556 = vld [vmem:[%s4 + $0x78] sm:$0xff]
        %v557 = vpack.c.bf16 %v542, %v541
        %v558 = vpack.c.bf16 %v544, %v543
        %v559 = vpack.c.bf16 %v546, %v545
        %v560 = vpack.c.bf16 %v548, %v547
        %v561 = vpack.c.bf16 %v550, %v549
        %v562 = vpack.c.bf16 %v552, %v551
        %v563 = vpack.c.bf16 %v554, %v553
        %v564 = vpack.c.bf16 %v556, %v555
        %v565 = vld [vmem:[%s8] sm:$0x1]
        %v567 = vlaneseq
        %v568 = vshrl.u32 %v567, 7
        %v569 = vsub.s32 0, %v568
        %v570 = vrot.slane %v565, %v569
        %572 = vmatprep.subr.bf16.mxu0 0
        %573 = vmatpush1.bf16.msra.mxu0 %v557
        %574 = vmatprep.subr.bf16.mxu0 0
        %575 = vmatpush1.bf16.msra.mxu0 %v558
        %576 = vmatprep.subr.bf16.mxu0 0
        %577 = vmatpush1.bf16.msra.mxu0 %v559
        %578 = vmatprep.subr.bf16.mxu0 0
        %579 = vmatpush1.bf16.msra.mxu0 %v560
        %580 = vmatprep.subr.bf16.mxu0 0
        %581 = vmatpush1.bf16.msra.mxu0 %v561
        %582 = vmatprep.subr.bf16.mxu0 0
        %583 = vmatpush1.bf16.msra.mxu0 %v562
        %584 = vmatprep.subr.bf16.mxu0 0
        %585 = vmatpush1.bf16.msra.mxu0 %v563
        %586 = vmatprep.subr.bf16.mxu0 0
        %587 = vmatpush1.bf16.msra.mxu0 %v564
        %588 = vmatprep.subr.bf16.mxu0 0
        %589 = vmatpush1.bf16.msra.mxu0 0
        %590 = vmatprep.subr.bf16.mxu0 0
        %591 = vmatpush1.bf16.msra.mxu0 0
        %592 = vmatprep.subr.bf16.mxu0 0
        %593 = vmatpush1.bf16.msra.mxu0 0
        %594 = vmatprep.subr.bf16.mxu0 0
        %595 = vmatpush1.bf16.msra.mxu0 0
        %596 = vmatprep.subr.bf16.mxu0 0
        %597 = vmatpush1.bf16.msra.mxu0 0
        %598 = vmatprep.subr.bf16.mxu0 0
        %599 = vmatpush1.bf16.msra.mxu0 0
        %600 = vmatprep.subr.bf16.mxu0 0
        %601 = vmatpush1.bf16.msra.mxu0 0
        %602 = vmatprep.subr.bf16.mxu0 0
        %603 = vmatpush1.bf16.msra.mxu0 0
        %604 = vmatprep.mubr.bf16.mxu0 0
        %605 = vmatmul.mubr.bf16.gmra.mrb[0].mxu0 %v454
        %v606 = vpop.f32.mrb[0].mxu0
        %v607 = vadd.f32 %v570, %v606
        %v608 = vpop.f32.mrb[0].mxu0
        %v609 = vpop.f32.mrb[0].mxu0
        %v610 = vadd.f32 %v570, %v609
        %v611 = vpop.f32.mrb[0].mxu0
        %612 = vmatprep.mubr.bf16.mxu0 0
        %613 = vmatmul.mubr.bf16.gmra.mrb[0].mxu0 %v455
        %v614 = vpop.f32.mrb[0].mxu0
        %v615 = vadd.f32 %v570, %v614
        %v616 = vpop.f32.mrb[0].mxu0
        %v617 = vpop.f32.mrb[0].mxu0
        %v618 = vadd.f32 %v570, %v617
        %v619 = vpop.f32.mrb[0].mxu0
        %620 = vmatprep.mubr.bf16.mxu0 0
        %621 = vmatmul.mubr.bf16.gmra.mrb[0].mxu0 %v456
        %v622 = vpop.f32.mrb[0].mxu0
        %v623 = vadd.f32 %v570, %v622
        %v624 = vpop.f32.mrb[0].mxu0
        %v625 = vpop.f32.mrb[0].mxu0
        %v626 = vadd.f32 %v570, %v625
        %v627 = vpop.f32.mrb[0].mxu0
        %628 = vmatprep.mubr.bf16.mxu0 0
        %629 = vmatmul.mubr.bf16.gmra.mrb[0].mxu0 %v457
        %v630 = vpop.f32.mrb[0].mxu0
        %v631 = vadd.f32 %v570, %v630
        %v632 = vpop.f32.mrb[0].mxu0
        %v633 = vpop.f32.mrb[0].mxu0
        %v634 = vadd.f32 %v570, %v633
        %v635 = vpop.f32.mrb[0].mxu0
        %636 = vdwg.mxu0
        %v637 = vld [vmem:[%s5] sm:$0xff]
        %v638 = vld [vmem:[%s5 + $0x8] sm:$0xff]
        %v639 = vld [vmem:[%s5 + $0x10] sm:$0xff]
        %v640 = vld [vmem:[%s5 + $0x18] sm:$0xff]
        %v641 = vld [vmem:[%s5 + $0x20] sm:$0xff]
        %v642 = vld [vmem:[%s5 + $0x28] sm:$0xff]
        %v643 = vld [vmem:[%s5 + $0x30] sm:$0xff]
        %v644 = vld [vmem:[%s5 + $0x38] sm:$0xff]
        %v645 = vld [vmem:[%s5 + $0x40] sm:$0xff]
        %v646 = vld [vmem:[%s5 + $0x48] sm:$0xff]
        %v647 = vld [vmem:[%s5 + $0x50] sm:$0xff]
        %v648 = vld [vmem:[%s5 + $0x58] sm:$0xff]
        %v649 = vld [vmem:[%s5 + $0x60] sm:$0xff]
        %v650 = vld [vmem:[%s5 + $0x68] sm:$0xff]
        %v651 = vld [vmem:[%s5 + $0x70] sm:$0xff]
        %v652 = vld [vmem:[%s5 + $0x78] sm:$0xff]
        %v653 = vpack.c.bf16 %v638, %v637
        %v654 = vpack.c.bf16 %v640, %v639
        %v655 = vpack.c.bf16 %v642, %v641
        %v656 = vpack.c.bf16 %v644, %v643
        %v657 = vpack.c.bf16 %v646, %v645
        %v658 = vpack.c.bf16 %v648, %v647
        %v659 = vpack.c.bf16 %v650, %v649
        %v660 = vpack.c.bf16 %v652, %v651
        %v661 = vld [vmem:[%s9] sm:$0x1]
        %v663 = vlaneseq
        %v664 = vshrl.u32 %v663, 7
        %v665 = vsub.s32 0, %v664
        %v666 = vrot.slane %v661, %v665
        %668 = vmatprep.subr.bf16.mxu0 0
        %669 = vmatpush1.bf16.msra.mxu0 %v653
        %670 = vmatprep.subr.bf16.mxu0 0
        %671 = vmatpush1.bf16.msra.mxu0 %v654
        %672 = vmatprep.subr.bf16.mxu0 0
        %673 = vmatpush1.bf16.msra.mxu0 %v655
        %674 = vmatprep.subr.bf16.mxu0 0
        %675 = vmatpush1.bf16.msra.mxu0 %v656
        %676 = vmatprep.subr.bf16.mxu0 0
        %677 = vmatpush1.bf16.msra.mxu0 %v657
        %678 = vmatprep.subr.bf16.mxu0 0
        %679 = vmatpush1.bf16.msra.mxu0 %v658
        %680 = vmatprep.subr.bf16.mxu0 0
        %681 = vmatpush1.bf16.msra.mxu0 %v659
        %682 = vmatprep.subr.bf16.mxu0 0
        %683 = vmatpush1.bf16.msra.mxu0 %v660
        %684 = vmatprep.subr.bf16.mxu0 0
        %685 = vmatpush1.bf16.msra.mxu0 0
        %686 = vmatprep.subr.bf16.mxu0 0
        %687 = vmatpush1.bf16.msra.mxu0 0
        %688 = vmatprep.subr.bf16.mxu0 0
        %689 = vmatpush1.bf16.msra.mxu0 0
        %690 = vmatprep.subr.bf16.mxu0 0
        %691 = vmatpush1.bf16.msra.mxu0 0
        %692 = vmatprep.subr.bf16.mxu0 0
        %693 = vmatpush1.bf16.msra.mxu0 0
        %694 = vmatprep.subr.bf16.mxu0 0
        %695 = vmatpush1.bf16.msra.mxu0 0
        %696 = vmatprep.subr.bf16.mxu0 0
        %697 = vmatpush1.bf16.msra.mxu0 0
        %698 = vmatprep.subr.bf16.mxu0 0
        %699 = vmatpush1.bf16.msra.mxu0 0
        %700 = vmatprep.mubr.bf16.mxu0 0
        %701 = vmatmul.mubr.bf16.gmra.mrb[0].mxu0 %v466
        %v702 = vpop.f32.mrb[0].mxu0
        %v703 = vadd.f32 %v666, %v702
        %v704 = vpop.f32.mrb[0].mxu0
        %v705 = vpop.f32.mrb[0].mxu0
        %v706 = vadd.f32 %v666, %v705
        %v707 = vpop.f32.mrb[0].mxu0
        %708 = vmatprep.mubr.bf16.mxu0 0
        %709 = vmatmul.mubr.bf16.gmra.mrb[0].mxu0 %v467
        %v710 = vpop.f32.mrb[0].mxu0
        %v711 = vadd.f32 %v666, %v710
        %v712 = vpop.f32.mrb[0].mxu0
        %v713 = vpop.f32.mrb[0].mxu0
        %v714 = vadd.f32 %v666, %v713
        %v715 = vpop.f32.mrb[0].mxu0
        %716 = vmatprep.mubr.bf16.mxu0 0
        %717 = vmatmul.mubr.bf16.gmra.mrb[0].mxu0 %v468
        %v718 = vpop.f32.mrb[0].mxu0
        %v719 = vadd.f32 %v666, %v718
        %v720 = vpop.f32.mrb[0].mxu0
        %v721 = vpop.f32.mrb[0].mxu0
        %v722 = vadd.f32 %v666, %v721
        %v723 = vpop.f32.mrb[0].mxu0
        %724 = vmatprep.mubr.bf16.mxu0 0
        %725 = vmatmul.mubr.bf16.gmra.mrb[0].mxu0 %v469
        %v726 = vpop.f32.mrb[0].mxu0
        %v727 = vadd.f32 %v666, %v726
        %v728 = vpop.f32.mrb[0].mxu0
        %v729 = vpop.f32.mrb[0].mxu0
        %v730 = vadd.f32 %v666, %v729
        %v731 = vpop.f32.mrb[0].mxu0
        %732 = vdwg.mxu0
        %v733 = vmul.f32 %v536, 0.125
        %v734 = vpack.c.bf16 %v733, %v733
        %v735 = vpack.c.bf16 %v610, %v607
        %v736 = vpack.c.bf16 %v618, %v615
        %v737 = vpack.c.bf16 %v626, %v623
        %v738 = vpack.c.bf16 %v634, %v631
        %v739 = vpack.c.bf16 %v706, %v703
        %v740 = vpack.c.bf16 %v714, %v711
        %v741 = vpack.c.bf16 %v722, %v719
        %v742 = vpack.c.bf16 %v730, %v727
        %vm743 = vcmask 523264
        %v745 = vsel %vm743, %v734, 0
        %v748 = vsel %vm743, %v735, 0
        %v751 = vsel %vm743, %v736, 0
        %v754 = vsel %vm743, %v737, 0
        %v757 = vsel %vm743, %v738, 0
        %759 = vmatprep.subr.bf16.mxu0 0
        %760 = vmatpush1.bf16.xpose.msra.mxu0 %v748
        %761 = vmatprep.subr.bf16.mxu0 0
        %762 = vmatpush1.bf16.xpose.msra.mxu0 %v751
        %763 = vmatprep.subr.bf16.mxu0 0
        %764 = vmatpush1.bf16.xpose.msra.mxu0 %v754
        %765 = vmatprep.subr.bf16.mxu0 0
        %766 = vmatpush1.bf16.xpose.msra.mxu0 %v757
        %767 = vmatprep.subr.bf16.mxu0 0
        %768 = vmatpush1.bf16.xpose.msra.mxu0 0
        %769 = vmatprep.subr.bf16.mxu0 0
        %770 = vmatpush1.bf16.xpose.msra.mxu0 0
        %771 = vmatprep.subr.bf16.mxu0 0
        %772 = vmatpush1.bf16.xpose.msra.mxu0 0
        %773 = vmatprep.subr.bf16.mxu0 0
        %774 = vmatpush1.bf16.xpose.msra.mxu0 0
        %775 = vmatprep.subr.bf16.mxu0 0
        %776 = vmatpush1.bf16.xpose.msra.mxu0 0
        %777 = vmatprep.subr.bf16.mxu0 0
        %778 = vmatpush1.bf16.xpose.msra.mxu0 0
        %779 = vmatprep.subr.bf16.mxu0 0
        %780 = vmatpush1.bf16.xpose.msra.mxu0 0
        %781 = vmatprep.subr.bf16.mxu0 0
        %782 = vmatpush1.bf16.xpose.msra.mxu0 0
        %783 = vmatprep.subr.bf16.mxu0 0
        %784 = vmatpush1.bf16.xpose.msra.mxu0 0
        %785 = vmatprep.subr.bf16.mxu0 0
        %786 = vmatpush1.bf16.xpose.msra.mxu0 0
        %787 = vmatprep.subr.bf16.mxu0 0
        %788 = vmatpush1.bf16.xpose.msra.mxu0 0
        %789 = vmatprep.subr.bf16.mxu0 0
        %790 = vmatpush1.bf16.xpose.msra.mxu0 0
        %791 = vmatprep.mubr.bf16.mxu0 0
        %792 = vmatmul.mubr.bf16.gmra.mrb[0].mxu0 %v745
        %v793 = vpop.f32.mrb[0].mxu0
        %v794 = vadd.f32 0.0, %v793
        %v795 = vpop.f32.mrb[0].mxu0
        %v796 = vpop.f32.mrb[0].mxu0
        %v797 = vpop.f32.mrb[0].mxu0
        %798 = vdwg.mxu0
        %v799 = vsel %vm743, %v794, -inf
        %800 = vmax.xlane.f32.xlu0 %v799
        %v801 = vpop.xlane.xlu0 %800
        %v802 = vsub.f32 %v794, %v801
        %v803 = vmul.f32 %v802, 1.442695
        %v804 = vpow.pop %v803
        %v805 = vsel %vm743, %v804, 0.0
        %806 = vadd.xlane.f32.xlu0 %v805
        %v807 = vpop.xlane.xlu0 %806
        %v808 = vrcp.pop %v807
        %v809 = vmul.f32 %v804, %v808
        %v810 = vpack.c.bf16 %v809, %v809
        %v812 = vsel %vm743, %v810, 0
        %814 = vmatprep.subr.bf16.mxu0 0
        %815 = vmatpush1.bf16.msra.mxu0 %v739
        %816 = vmatprep.subr.bf16.mxu0 0
        %817 = vmatpush1.bf16.msra.mxu0 %v740
        %818 = vmatprep.subr.bf16.mxu0 0
        %819 = vmatpush1.bf16.msra.mxu0 %v741
        %820 = vmatprep.subr.bf16.mxu0 0
        %821 = vmatpush1.bf16.msra.mxu0 %v742
        %822 = vmatprep.subr.bf16.mxu0 0
        %823 = vmatpush1.bf16.msra.mxu0 0
        %824 = vmatprep.subr.bf16.mxu0 0
        %825 = vmatpush1.bf16.msra.mxu0 0
        %826 = vmatprep.subr.bf16.mxu0 0
        %827 = vmatpush1.bf16.msra.mxu0 0
        %828 = vmatprep.subr.bf16.mxu0 0
        %829 = vmatpush1.bf16.msra.mxu0 0
        %830 = vmatprep.subr.bf16.mxu0 0
        %831 = vmatpush1.bf16.msra.mxu0 0
        %832 = vmatprep.subr.bf16.mxu0 0
        %833 = vmatpush1.bf16.msra.mxu0 0
        %834 = vmatprep.subr.bf16.mxu0 0
        %835 = vmatpush1.bf16.msra.mxu0 0
        %836 = vmatprep.subr.bf16.mxu0 0
        %837 = vmatpush1.bf16.msra.mxu0 0
        %838 = vmatprep.subr.bf16.mxu0 0
        %839 = vmatpush1.bf16.msra.mxu0 0
        %840 = vmatprep.subr.bf16.mxu0 0
        %841 = vmatpush1.bf16.msra.mxu0 0
        %842 = vmatprep.subr.bf16.mxu0 0
        %843 = vmatpush1.bf16.msra.mxu0 0
        %844 = vmatprep.subr.bf16.mxu0 0
        %845 = vmatpush1.bf16.msra.mxu0 0
        %846 = vmatprep.mubr.bf16.mxu0 0
        %847 = vmatmul.mubr.bf16.gmra.mrb[0].mxu0 %v812
        %v848 = vpop.f32.mrb[0].mxu0
        %v849 = vadd.f32 0.0, %v848
        %v850 = vpop.f32.mrb[0].mxu0
        %v851 = vpop.f32.mrb[0].mxu0
        %v852 = vpop.f32.mrb[0].mxu0
        %853 = vdwg.mxu0
        %v854 = vpack.c.bf16 %v849, %v849
        %v855 = vld [vmem:[%s6] sm:$0xff]
        %v856 = vld [vmem:[%s6 + $0x8] sm:$0xff]
        %v857 = vld [vmem:[%s6 + $0x10] sm:$0xff]
        %v858 = vld [vmem:[%s6 + $0x18] sm:$0xff]
        %v859 = vld [vmem:[%s6 + $0x20] sm:$0xff]
        %v860 = vld [vmem:[%s6 + $0x28] sm:$0xff]
        %v861 = vld [vmem:[%s6 + $0x30] sm:$0xff]
        %v862 = vld [vmem:[%s6 + $0x38] sm:$0xff]
        %v863 = vpack.c.bf16 %v856, %v855
        %v864 = vpack.c.bf16 %v858, %v857
        %v865 = vpack.c.bf16 %v860, %v859
        %v866 = vpack.c.bf16 %v862, %v861
        %v867 = vadd.f32 %v809, 0.0
        %869 = vrot.lane.b32.xlu0 %v734, 64
        %v870 = vpop.permute.xlu0 %869
        %875 = vrot.lane.b32.xlu0 %v735, 64
        %v876 = vpop.permute.xlu0 %875
        %877 = vrot.lane.b32.xlu0 %v736, 64
        %v878 = vpop.permute.xlu0 %877
        %879 = vrot.lane.b32.xlu0 %v737, 64
        %v880 = vpop.permute.xlu0 %879
        %881 = vrot.lane.b32.xlu0 %v738, 64
        %v882 = vpop.permute.xlu0 %881
        %v884 = vsel %vm743, %v870, 0
        %v887 = vsel %vm743, %v876, 0
        %v890 = vsel %vm743, %v878, 0
        %v893 = vsel %vm743, %v880, 0
        %v896 = vsel %vm743, %v882, 0
        %898 = vmatprep.subr.bf16.mxu0 0
        %899 = vmatpush1.bf16.xpose.msra.mxu0 %v887
        %900 = vmatprep.subr.bf16.mxu0 0
        %901 = vmatpush1.bf16.xpose.msra.mxu0 %v890
        %902 = vmatprep.subr.bf16.mxu0 0
        %903 = vmatpush1.bf16.xpose.msra.mxu0 %v893
        %904 = vmatprep.subr.bf16.mxu0 0
        %905 = vmatpush1.bf16.xpose.msra.mxu0 %v896
        %906 = vmatprep.subr.bf16.mxu0 0
        %907 = vmatpush1.bf16.xpose.msra.mxu0 0
        %908 = vmatprep.subr.bf16.mxu0 0
        %909 = vmatpush1.bf16.xpose.msra.mxu0 0
        %910 = vmatprep.subr.bf16.mxu0 0
        %911 = vmatpush1.bf16.xpose.msra.mxu0 0
        %912 = vmatprep.subr.bf16.mxu0 0
        %913 = vmatpush1.bf16.xpose.msra.mxu0 0
        %914 = vmatprep.subr.bf16.mxu0 0
        %915 = vmatpush1.bf16.xpose.msra.mxu0 0
        %916 = vmatprep.subr.bf16.mxu0 0
        %917 = vmatpush1.bf16.xpose.msra.mxu0 0
        %918 = vmatprep.subr.bf16.mxu0 0
        %919 = vmatpush1.bf16.xpose.msra.mxu0 0
        %920 = vmatprep.subr.bf16.mxu0 0
        %921 = vmatpush1.bf16.xpose.msra.mxu0 0
        %922 = vmatprep.subr.bf16.mxu0 0
        %923 = vmatpush1.bf16.xpose.msra.mxu0 0
        %924 = vmatprep.subr.bf16.mxu0 0
        %925 = vmatpush1.bf16.xpose.msra.mxu0 0
        %926 = vmatprep.subr.bf16.mxu0 0
        %927 = vmatpush1.bf16.xpose.msra.mxu0 0
        %928 = vmatprep.subr.bf16.mxu0 0
        %929 = vmatpush1.bf16.xpose.msra.mxu0 0
        %930 = vmatprep.mubr.bf16.mxu0 0
        %931 = vmatmul.mubr.bf16.gmra.mrb[0].mxu0 %v884
        %v932 = vpop.f32.mrb[0].mxu0
        %v933 = vadd.f32 0.0, %v932
        %v934 = vpop.f32.mrb[0].mxu0
        %v935 = vpop.f32.mrb[0].mxu0
        %v936 = vpop.f32.mrb[0].mxu0
        %937 = vdwg.mxu0
        %v938 = vsel %vm743, %v933, -inf
        %939 = vmax.xlane.f32.xlu0 %v938
        %v940 = vpop.xlane.xlu0 %939
        %v941 = vsub.f32 %v933, %v940
        %v942 = vmul.f32 %v941, 1.442695
        %v943 = vpow.pop %v942
        %v944 = vsel %vm743, %v943, 0.0
        %945 = vadd.xlane.f32.xlu0 %v944
        %v946 = vpop.xlane.xlu0 %945
        %v947 = vrcp.pop %v946
        %v948 = vmul.f32 %v943, %v947
        %v949 = vpack.c.bf16 %v948, %v948
        %954 = vrot.lane.b32.xlu0 %v739, 64
        %v955 = vpop.permute.xlu0 %954
        %956 = vrot.lane.b32.xlu0 %v740, 64
        %v957 = vpop.permute.xlu0 %956
        %958 = vrot.lane.b32.xlu0 %v741, 64
        %v959 = vpop.permute.xlu0 %958
        %960 = vrot.lane.b32.xlu0 %v742, 64
        %v961 = vpop.permute.xlu0 %960
        %v967 = vsel %vm743, %v949, 0
        %969 = vmatprep.subr.bf16.mxu0 0
        %970 = vmatpush1.bf16.msra.mxu0 %v955
        %971 = vmatprep.subr.bf16.mxu0 0
        %972 = vmatpush1.bf16.msra.mxu0 %v957
        %973 = vmatprep.subr.bf16.mxu0 0
        %974 = vmatpush1.bf16.msra.mxu0 %v959
        %975 = vmatprep.subr.bf16.mxu0 0
        %976 = vmatpush1.bf16.msra.mxu0 %v961
        %977 = vmatprep.subr.bf16.mxu0 0
        %978 = vmatpush1.bf16.msra.mxu0 0
        %979 = vmatprep.subr.bf16.mxu0 0
        %980 = vmatpush1.bf16.msra.mxu0 0
        %981 = vmatprep.subr.bf16.mxu0 0
        %982 = vmatpush1.bf16.msra.mxu0 0
        %983 = vmatprep.subr.bf16.mxu0 0
        %984 = vmatpush1.bf16.msra.mxu0 0
        %985 = vmatprep.subr.bf16.mxu0 0
        %986 = vmatpush1.bf16.msra.mxu0 0
        %987 = vmatprep.subr.bf16.mxu0 0
        %988 = vmatpush1.bf16.msra.mxu0 0
        %989 = vmatprep.subr.bf16.mxu0 0
        %990 = vmatpush1.bf16.msra.mxu0 0
        %991 = vmatprep.subr.bf16.mxu0 0
        %992 = vmatpush1.bf16.msra.mxu0 0
        %993 = vmatprep.subr.bf16.mxu0 0
        %994 = vmatpush1.bf16.msra.mxu0 0
        %995 = vmatprep.subr.bf16.mxu0 0
        %996 = vmatpush1.bf16.msra.mxu0 0
        %997 = vmatprep.subr.bf16.mxu0 0
        %998 = vmatpush1.bf16.msra.mxu0 0
        %999 = vmatprep.subr.bf16.mxu0 0
        %1000 = vmatpush1.bf16.msra.mxu0 0
        %1001 = vmatprep.mubr.bf16.mxu0 0
        %1002 = vmatmul.mubr.bf16.gmra.mrb[0].mxu0 %v967
        %v1003 = vpop.f32.mrb[0].mxu0
        %v1004 = vadd.f32 0.0, %v1003
        %v1005 = vpop.f32.mrb[0].mxu0
        %v1006 = vpop.f32.mrb[0].mxu0
        %v1007 = vpop.f32.mrb[0].mxu0
        %1008 = vdwg.mxu0
        %v1009 = vpack.c.bf16 %v1004, %v1004
        %s1010 = scalar_lea.vmem %s6, 64
        %v1011 = vld [vmem:[%s1010] sm:$0xff]
        %v1012 = vld [vmem:[%s1010 + $0x8] sm:$0xff]
        %v1013 = vld [vmem:[%s1010 + $0x10] sm:$0xff]
        %v1014 = vld [vmem:[%s1010 + $0x18] sm:$0xff]
        %v1015 = vld [vmem:[%s1010 + $0x20] sm:$0xff]
        %v1016 = vld [vmem:[%s1010 + $0x28] sm:$0xff]
        %v1017 = vld [vmem:[%s1010 + $0x30] sm:$0xff]
        %v1018 = vld [vmem:[%s1010 + $0x38] sm:$0xff]
        %v1019 = vpack.c.bf16 %v1012, %v1011
        %v1020 = vpack.c.bf16 %v1014, %v1013
        %v1021 = vpack.c.bf16 %v1016, %v1015
        %v1022 = vpack.c.bf16 %v1018, %v1017
        %v1024 = vsel %vm743, %v1009, 0
        %1026 = vmatprep.subr.bf16.mxu0 0
        %1027 = vmatpush1.bf16.msra.mxu0 %v1019
        %1028 = vmatprep.subr.bf16.mxu0 0
        %1029 = vmatpush1.bf16.msra.mxu0 %v1020
        %1030 = vmatprep.subr.bf16.mxu0 0
        %1031 = vmatpush1.bf16.msra.mxu0 %v1021
        %1032 = vmatprep.subr.bf16.mxu0 0
        %1033 = vmatpush1.bf16.msra.mxu0 %v1022
        %1034 = vmatprep.subr.bf16.mxu0 0
        %1035 = vmatpush1.bf16.msra.mxu0 0
        %1036 = vmatprep.subr.bf16.mxu0 0
        %1037 = vmatpush1.bf16.msra.mxu0 0
        %1038 = vmatprep.subr.bf16.mxu0 0
        %1039 = vmatpush1.bf16.msra.mxu0 0
        %1040 = vmatprep.subr.bf16.mxu0 0
        %1041 = vmatpush1.bf16.msra.mxu0 0
        %1042 = vmatprep.subr.bf16.mxu0 0
        %1043 = vmatpush1.bf16.msra.mxu0 0
        %1044 = vmatprep.subr.bf16.mxu0 0
        %1045 = vmatpush1.bf16.msra.mxu0 0
        %1046 = vmatprep.subr.bf16.mxu0 0
        %1047 = vmatpush1.bf16.msra.mxu0 0
        %1048 = vmatprep.subr.bf16.mxu0 0
        %1049 = vmatpush1.bf16.msra.mxu0 0
        %1050 = vmatprep.subr.bf16.mxu0 0
        %1051 = vmatpush1.bf16.msra.mxu0 0
        %1052 = vmatprep.subr.bf16.mxu0 0
        %1053 = vmatpush1.bf16.msra.mxu0 0
        %1054 = vmatprep.subr.bf16.mxu0 0
        %1055 = vmatpush1.bf16.msra.mxu0 0
        %1056 = vmatprep.subr.bf16.mxu0 0
        %1057 = vmatpush1.bf16.msra.mxu0 0
        %1058 = vmatprep.mubr.bf16.mxu0 0
        %1059 = vmatmul.mubr.bf16.gmra.mrb[0].mxu0 %v1024
        %v1060 = vpop.f32.mrb[0].mxu0
        %v1061 = vadd.f32 0.0, %v1060
        %v1062 = vpop.f32.mrb[0].mxu0
        %v1063 = vpop.f32.mrb[0].mxu0
        %v1064 = vpop.f32.mrb[0].mxu0
        %1065 = vdwg.mxu0
        %v1067 = vsel %vm743, %v854, 0
        %1069 = vmatprep.subr.bf16.mxu0 0
        %1070 = vmatpush1.bf16.msra.mxu0 %v863
        %1071 = vmatprep.subr.bf16.mxu0 0
        %1072 = vmatpush1.bf16.msra.mxu0 %v864
        %1073 = vmatprep.subr.bf16.mxu0 0
        %1074 = vmatpush1.bf16.msra.mxu0 %v865
        %1075 = vmatprep.subr.bf16.mxu0 0
        %1076 = vmatpush1.bf16.msra.mxu0 %v866
        %1077 = vmatprep.subr.bf16.mxu0 0
        %1078 = vmatpush1.bf16.msra.mxu0 0
        %1079 = vmatprep.subr.bf16.mxu0 0
        %1080 = vmatpush1.bf16.msra.mxu0 0
        %1081 = vmatprep.subr.bf16.mxu0 0
        %1082 = vmatpush1.bf16.msra.mxu0 0
        %1083 = vmatprep.subr.bf16.mxu0 0
        %1084 = vmatpush1.bf16.msra.mxu0 0
        %1085 = vmatprep.subr.bf16.mxu0 0
        %1086 = vmatpush1.bf16.msra.mxu0 0
        %1087 = vmatprep.subr.bf16.mxu0 0
        %1088 = vmatpush1.bf16.msra.mxu0 0
        %1089 = vmatprep.subr.bf16.mxu0 0
        %1090 = vmatpush1.bf16.msra.mxu0 0
        %1091 = vmatprep.subr.bf16.mxu0 0
        %1092 = vmatpush1.bf16.msra.mxu0 0
        %1093 = vmatprep.subr.bf16.mxu0 0
        %1094 = vmatpush1.bf16.msra.mxu0 0
        %1095 = vmatprep.subr.bf16.mxu0 0
        %1096 = vmatpush1.bf16.msra.mxu0 0
        %1097 = vmatprep.subr.bf16.mxu0 0
        %1098 = vmatpush1.bf16.msra.mxu0 0
        %1099 = vmatprep.subr.bf16.mxu0 0
        %1100 = vmatpush1.bf16.msra.mxu0 0
        %1101 = vmatprep.mubr.bf16.mxu0 0
        %1102 = vmatmul.mubr.bf16.gmra.mrb[0].mxu0 %v1067
        %v1103 = vpop.f32.mrb[0].mxu0
        %v1104 = vadd.f32 %v1061, %v1103
        %v1105 = vpop.f32.mrb[0].mxu0
        %v1106 = vpop.f32.mrb[0].mxu0
        %v1107 = vpop.f32.mrb[0].mxu0
        %1108 = vdwg.mxu0
        %v1109 = vadd.f32 %v867, %v948
        %v1110 = vld [vmem:[%s10] sm:$0x1]
        %v1112 = vlaneseq
        %v1113 = vshrl.u32 %v1112, 7
        %v1114 = vsub.s32 0, %v1113
        %v1115 = vrot.slane %v1110, %v1114
        %v1117 = vadd.f32 %v1104, %v1115
        %1118 = vst [vmem:[%s442] sm:$0xff] %v1117
        %v1119 = vmul.f32 %v1109, 0.5
        %1120 = vst.msk [vmem:[%s428] sm:$0xff] %vm743, %v1119
        %p1121 = scmp.lt.s32.totalorder %s27, 1
        %s1122 = scalar_select %p1121, %s27, 1
        %s1123 = smul.addr %s1122, 8
        %s1124 = scalar_lea.vmem %s11, %s1123
        %s1125 = sand.u32 %s302, 1
        %s1126 = scalar_lea.sflag [#allocation3], %s1125
        %s1127 = sand.u32 %s302, 1
        %s1128 = smul.addr %s1127, 8
        %s1129 = scalar_lea.vmem [#allocation2], %s1128
        // Predicated region
        $region65: #{boq_forward.33} parent=63 // pred_check
          %p1130 = pneg %p286
        $region66: #{boq_forward.33} parent=63 // pred_check_branch
          %1132 = sbr.rel (%p1130) target = $region68
        $region67: #{boq_forward.33} parent=63 // pred_region
          _
        $region68: #{boq_forward.33} parent=63 // pred_fallthru
          _
        // Predicated region
        $region69: #{boq_forward.33} parent=63 // pred_check
          %p1133 = pneg %p312
        $region70: #{boq_forward.33} parent=63 // pred_check_branch
          %1135 = sbr.rel (%p1133) target = $region72
        $region71: #{boq_forward.33} parent=63 // pred_region
          %s1137 = ssub.s32 128, 128
          %1138 = vsyncadd %s1126, %s1137
          %s1139 = smul.addr %s27, 128
          %s1140 = scalar_lea.hbm %s12, %s1139
          %s1142 = sshll.u32 %s1129, 4
          %s1143 = int_to_ptr.vmem [resolvable:$true] %s1142
          %1145 = dma.vmem_to_hbm [thread:$0]  %s1143, 128, %s1140, %s1126
        $region72: #{boq_forward.33} parent=63 // pred_fallthru
          _
      $region64: #{boq_forward.33} parent=5 // pred_fallthru
        _
      %p1146 = scmp.le.s32.totalorder 2, %s22
      // Predicated region
      $region73: #{boq_forward.33} parent=5 // pred_check
        %p1147 = pneg %p1146
      $region74: #{boq_forward.33} parent=5 // pred_check_branch
        %1149 = sbr.rel (%p1147) target = $region76
      $region75: #{boq_forward.33} parent=5 // pred_region
        %s1150 = ssub.s32 %s22, 2
        // Predicated region
        $region77: #{boq_forward.33} parent=75 // pred_check
          %p1151 = pneg %p292
        $region78: #{boq_forward.33} parent=75 // pred_check_branch
          %1153 = sbr.rel (%p1151) target = $region80
        $region79: #{boq_forward.33} parent=75 // pred_region
          %p1154 = scmp.lt.s32.totalorder %s28, 1
          %s1155 = scalar_select %p1154, %s28, 1
          %s1156 = smul.addr %s1155, 8
          %s1157 = scalar_lea.vmem %s11, %s1156
        $region80: #{boq_forward.33} parent=75 // pred_fallthru
          _
        // Predicated region
        $region81: #{boq_forward.33} parent=75 // pred_check
          %p1158 = pneg %p318
        $region82: #{boq_forward.33} parent=75 // pred_check_branch
          %1160 = sbr.rel (%p1158) target = $region84
        $region83: #{boq_forward.33} parent=75 // pred_region
          %s1161 = sand.u32 %s303, 1
          %s1162 = scalar_lea.sflag [#allocation3], %s1161
          %s1163 = sand.u32 %s303, 1
          %s1164 = smul.addr %s1163, 8
          %s1165 = scalar_lea.vmem [#allocation2], %s1164
          %1166 = dma.done %s1162, 128
        $region84: #{boq_forward.33} parent=75 // pred_fallthru
          _
      $region76: #{boq_forward.33} parent=5 // pred_fallthru
        _
    $region6: #{boq_forward.33} parent=1 // loop_footer
      %s26 = sadd.s32 1, %s22
    $region7: #{boq_forward.33} parent=1 // loop_footer_branch
      %21 = sbr.rel target = $region3
    $region8: #{boq_forward.33} parent=1 // loop_exit
      _
    %1167 = vsyncpa [#allocation3], 1
    %s1168 = scalar_lea.sflag [#allocation3], 1
    %1169 = vsyncpa %s1168, 1

// kernel: boq_forward.35
$region0: #{boq_forward.35}
  #allocation0 [shape = 'u32[]', space=smem, size = 0x4, offset = 0x4, fixed_abs, tag = 'smem constant byte address 0x4 - core index']
  #allocation1 [shape = 'u32[144,128]{1,0:T(1,128)}', space=vmem, size = 0x12000, scoped, tag = 'internal scratch']
  %s0 = inlined_call_operand.vmem [shape: f32[2,128,16], index: 0, kind: input, shape index: {}]
  %s1 = inlined_call_operand.vmem [shape: f32[16,8], index: 1, kind: input, shape index: {}]
  %s2 = inlined_call_operand.vmem [shape: f32[1,8], index: 2, kind: input, shape index: {}]
  %s3 = inlined_call_operand.vmem [shape: f32[2,128,8], index: 3, kind: output, shape index: {}]
  %s4 = sld [smem:[#allocation0]]
  $region45: #{boq_forward.35} parent=0
    _
  %s6 = ssub.s32 1, %s4
  %s7 = scalar_select 0, %s6, %s4
  loop: start=0, step=1, limit=4
  $region2: #{boq_forward.35} parent=0 // loop_pre_header
    _
  $region3: #{boq_forward.35} parent=0 // loop_header
    %s9 = sphi 0, %s13
    %p10 = scmp.ge.s32.totalorder %s9, 4
    %s19 = sphi 0, %s21
    %s22 = sphi 0, %s19
    %s23 = sphi 0, %s22
    %s39 = sphi 0, %s23
    %s43 = sphi 0, %s43
    %s45 = sphi 0, %s43
    %s46 = sphi 0, %s45
    %s60 = sphi 0, %s46
    %s64 = sphi 0, %s64
    %s66 = sphi 0, %s64
    %s67 = sphi 0, %s66
    %s81 = sphi 0, %s67
    %s87 = sphi 0, %s89
    %s90 = sphi 0, %s87
    %s91 = sphi 0, %s90
    %s107 = sphi 0, %s91
  $region4: #{boq_forward.35} parent=0 // loop_header_branch
    %12 = sbr.rel (%p10) target = $region8
  $region5: #{boq_forward.35} parent=0 // loop_body
    %s14 = ssub.s32 %s9, 1
    %s15 = ssub.s32 %s9, 2
    %s16 = sadd.s32 %s9, 1
    %s17 = ssub.s32 %s9, %s16
    %p18 = scmp.eq.s32.totalorder %s17, 0
    %s20 = sadd.s32 %s19, 1
    %s21 = scalar_select %p18, %s19, %s20
    %p24 = pneg %p18
    %p25 = scmp.eq.s32.totalorder %s9, 1
    %p26 = por %p24, %p25
    %p27 = scmp.ne.s32.totalorder %s19, %s22
    %p28 = scmp.eq.s32.totalorder %s9, 0
    %p29 = por %p27, %p28
    %p30 = scmp.ne.s32.totalorder %s19, %s22
    %p31 = scmp.eq.s32.totalorder %s14, 1
    %p32 = por %p30, %p31
    %p33 = scmp.ne.s32.totalorder %s22, %s23
    %p34 = scmp.eq.s32.totalorder %s14, 0
    %p35 = por %p33, %p34
    %p36 = scmp.ne.s32.totalorder %s22, %s23
    %p37 = scmp.eq.s32.totalorder %s15, 1
    %p38 = por %p36, %p37
    %p40 = scmp.ne.s32.totalorder %s23, %s39
    %p41 = scmp.eq.s32.totalorder %s15, 0
    %p42 = por %p40, %p41
    %s44 = sadd.s32 %s43, 1
    %p47 = scmp.eq.s32.totalorder %s9, 1
    %p48 = scmp.ne.s32.totalorder %s43, %s45
    %p49 = scmp.eq.s32.totalorder %s9, 0
    %p50 = por %p48, %p49
    %p51 = scmp.ne.s32.totalorder %s43, %s45
    %p52 = scmp.eq.s32.totalorder %s14, 1
    %p53 = por %p51, %p52
    %p54 = scmp.ne.s32.totalorder %s45, %s46
    %p55 = scmp.eq.s32.totalorder %s14, 0
    %p56 = por %p54, %p55
    %p57 = scmp.ne.s32.totalorder %s45, %s46
    %p58 = scmp.eq.s32.totalorder %s15, 1
    %p59 = por %p57, %p58
    %p61 = scmp.ne.s32.totalorder %s46, %s60
    %p62 = scmp.eq.s32.totalorder %s15, 0
    %p63 = por %p61, %p62
    %s65 = sadd.s32 %s64, 1
    %p68 = scmp.eq.s32.totalorder %s9, 1
    %p69 = scmp.ne.s32.totalorder %s64, %s66
    %p70 = scmp.eq.s32.totalorder %s9, 0
    %p71 = por %p69, %p70
    %p72 = scmp.ne.s32.totalorder %s64, %s66
    %p73 = scmp.eq.s32.totalorder %s14, 1
    %p74 = por %p72, %p73
    %p75 = scmp.ne.s32.totalorder %s66, %s67
    %p76 = scmp.eq.s32.totalorder %s14, 0
    %p77 = por %p75, %p76
    %p78 = scmp.ne.s32.totalorder %s66, %s67
    %p79 = scmp.eq.s32.totalorder %s15, 1
    %p80 = por %p78, %p79
    %p82 = scmp.ne.s32.totalorder %s67, %s81
    %p83 = scmp.eq.s32.totalorder %s15, 0
    %p84 = por %p82, %p83
    %s85 = ssub.s32 %s9, %s16
    %p86 = scmp.eq.s32.totalorder %s85, 0
    %s88 = sadd.s32 %s87, 1
    %s89 = scalar_select %p86, %s87, %s88
    %p92 = pneg %p86
    %p93 = scmp.eq.s32.totalorder %s9, 1
    %p94 = por %p92, %p93
    %p95 = scmp.ne.s32.totalorder %s87, %s90
    %p96 = scmp.eq.s32.totalorder %s9, 0
    %p97 = por %p95, %p96
    %p98 = scmp.ne.s32.totalorder %s87, %s90
    %p99 = scmp.eq.s32.totalorder %s14, 1
    %p100 = por %p98, %p99
    %p101 = scmp.ne.s32.totalorder %s90, %s91
    %p102 = scmp.eq.s32.totalorder %s14, 0
    %p103 = por %p101, %p102
    %p104 = scmp.ne.s32.totalorder %s90, %s91
    %p105 = scmp.eq.s32.totalorder %s15, 1
    %p106 = por %p104, %p105
    %p108 = scmp.ne.s32.totalorder %s91, %s107
    %p109 = scmp.eq.s32.totalorder %s15, 0
    %p110 = por %p108, %p109
    %p111 = scmp.le.s32.totalorder 1, %s9
    %p112 = scmp.lt.s32.totalorder %s9, 3
    %p113 = pnand %p111, %p112
    %p114 = pneg %p113
    // Predicated region
    $region9: #{boq_forward.35} parent=5 // pred_check
      _
    $region10: #{boq_forward.35} parent=5 // pred_check_branch
      %116 = sbr.rel (%p113) target = $region12
    $region11: #{boq_forward.35} parent=5 // pred_region
      %s117 = ssub.s32 %s9, 1
      // Predicated region
      $region13: #{boq_forward.35} parent=11 // pred_check
        %p118 = pneg %p56
      $region14: #{boq_forward.35} parent=11 // pred_check_branch
        %120 = sbr.rel (%p118) target = $region16
      $region15: #{boq_forward.35} parent=11 // pred_region
        _
      $region16: #{boq_forward.35} parent=11 // pred_fallthru
        _
      // Predicated region
      $region17: #{boq_forward.35} parent=11 // pred_check
        %p121 = pneg %p77
      $region18: #{boq_forward.35} parent=11 // pred_check_branch
        %123 = sbr.rel (%p121) target = $region20
      $region19: #{boq_forward.35} parent=11 // pred_region
        _
      $region20: #{boq_forward.35} parent=11 // pred_fallthru
        _
    $region12: #{boq_forward.35} parent=5 // pred_fallthru
      _
    %p124 = scmp.lt.s32.totalorder %s9, 2
    // Predicated region
    $region21: #{boq_forward.35} parent=5 // pred_check
      %p125 = pneg %p124
    $region22: #{boq_forward.35} parent=5 // pred_check_branch
      %127 = sbr.rel (%p125) target = $region24
    $region23: #{boq_forward.35} parent=5 // pred_region
      // Predicated region
      $region25: #{boq_forward.35} parent=23 // pred_check
        %p128 = pneg %p29
      $region26: #{boq_forward.35} parent=23 // pred_check_branch
        %130 = sbr.rel (%p128) target = $region28
      $region27: #{boq_forward.35} parent=23 // pred_region
        %p131 = scmp.lt.s32.totalorder %s9, 1
        %s132 = scalar_select %p131, %s9, 1
        %s133 = smul.addr %s132, 16
        %s134 = smul.addr %s133, 8
        %s135 = scalar_lea.vmem %s0, %s134
      $region28: #{boq_forward.35} parent=23 // pred_fallthru
        _
    $region24: #{boq_forward.35} parent=5 // pred_fallthru
      _
    %p136 = scmp.le.s32.totalorder 1, %s9
    %p137 = scmp.lt.s32.totalorder %s9, 3
    %p138 = pnand %p136, %p137
    %p139 = pneg %p138
    // Predicated region
    $region29: #{boq_forward.35} parent=5 // pred_check
      _
    $region30: #{boq_forward.35} parent=5 // pred_check_branch
      %141 = sbr.rel (%p138) target = $region32
    $region31: #{boq_forward.35} parent=5 // pred_region
      %s142 = ssub.s32 %s9, 1
      %p143 = scmp.lt.s32.totalorder %s14, 1
      %s144 = scalar_select %p143, %s14, 1
      %s145 = smul.addr %s144, 16
      %s146 = smul.addr %s145, 8
      %s147 = scalar_lea.vmem %s0, %s146
      %p148 = pneg %p35
      %p149 = pneg %p32
      %p150 = pneg %p56
      %p151 = pneg %p53
      %p152 = pneg %p77
      %p153 = pneg %p74
      %p154 = pneg %p103
      %p155 = pneg %p100
      %p156 = scmp.lt.s32.totalorder %s14, 1
      %s157 = scalar_select %p156, %s14, 1
      %s158 = smul.addr %s157, 16
      %s159 = smul.addr %s158, 8
      %s160 = scalar_lea.vmem %s3, %s159
      %p161 = scmp.lt.s32.totalorder %s14, 1
      %s162 = scalar_select %p161, %s14, 1
      %s163 = smul.addr %s162, 16
      %s164 = smul.addr %s163, 8
      %s165 = scalar_lea.vmem %s0, %s164
      %p166 = scmp.lt.s32.totalorder %s14, 1
      %s167 = scalar_select %p166, %s14, 1
      %s168 = smul.addr %s167, 16
      %s169 = smul.addr %s168, 8
      %s170 = scalar_lea.vmem %s3, %s169
      %v171 = vld [vmem:[%s165] sm:$0xff]
      %v172 = vld [vmem:[%s165 + $0x8] sm:$0xff]
      %v173 = vld [vmem:[%s165 + $0x10] sm:$0xff]
      %v174 = vld [vmem:[%s165 + $0x18] sm:$0xff]
      %v175 = vld [vmem:[%s165 + $0x20] sm:$0xff]
      %v176 = vld [vmem:[%s165 + $0x28] sm:$0xff]
      %v177 = vld [vmem:[%s165 + $0x30] sm:$0xff]
      %v178 = vld [vmem:[%s165 + $0x38] sm:$0xff]
      %v179 = vld [vmem:[%s165 + $0x40] sm:$0xff]
      %v180 = vld [vmem:[%s165 + $0x48] sm:$0xff]
      %v181 = vld [vmem:[%s165 + $0x50] sm:$0xff]
      %v182 = vld [vmem:[%s165 + $0x58] sm:$0xff]
      %v183 = vld [vmem:[%s165 + $0x60] sm:$0xff]
      %v184 = vld [vmem:[%s165 + $0x68] sm:$0xff]
      %v185 = vld [vmem:[%s165 + $0x70] sm:$0xff]
      %v186 = vld [vmem:[%s165 + $0x78] sm:$0xff]
      %v187 = vld [vmem:[%s1] sm:$0xff]
      %v188 = vld [vmem:[%s1 + $0x8] sm:$0xff]
      %v189 = vld [vmem:[%s2] sm:$0x1]
      %v191 = vlaneseq
      %v192 = vshrl.u32 %v191, 7
      %v193 = vsub.s32 0, %v192
      %v194 = vrot.slane %v189, %v193
      %vm196 = vcmask 130048
      %v198 = vsel %vm196, %v171, 0
      %v201 = vsel %vm196, %v172, 0
      %v204 = vsel %vm196, %v173, 0
      %v207 = vsel %vm196, %v174, 0
      %v210 = vsel %vm196, %v175, 0
      %v213 = vsel %vm196, %v176, 0
      %v216 = vsel %vm196, %v177, 0
      %v219 = vsel %vm196, %v178, 0
      %v222 = vsel %vm196, %v179, 0
      %v225 = vsel %vm196, %v180, 0
      %v228 = vsel %vm196, %v181, 0
      %v231 = vsel %vm196, %v182, 0
      %v234 = vsel %vm196, %v183, 0
      %v237 = vsel %vm196, %v184, 0
      %v240 = vsel %vm196, %v185, 0
      %v243 = vsel %vm196, %v186, 0
      %245 = vmatprep.subr.mxu0 0.0
      %246 = vmatpush1.msra.mxu0 %v187
      %247 = vmatprep.subr.mxu0 0.0
      %248 = vmatpush1.msra.mxu0 %v188
      %249 = vmatprep.subr.mxu0 0.0
      %250 = vmatpush1.msra.mxu0 0.0
      %251 = vmatprep.subr.mxu0 0.0
      %252 = vmatpush1.msra.mxu0 0.0
      %253 = vmatprep.subr.mxu0 0.0
      %254 = vmatpush1.msra.mxu0 0.0
      %255 = vmatprep.subr.mxu0 0.0
      %256 = vmatpush1.msra.mxu0 0.0
      %257 = vmatprep.subr.mxu0 0.0
      %258 = vmatpush1.msra.mxu0 0.0
      %259 = vmatprep.subr.mxu0 0.0
      %260 = vmatpush1.msra.mxu0 0.0
      %261 = vmatprep.subr.mxu0 0.0
      %262 = vmatpush1.msra.mxu0 0.0
      %263 = vmatprep.subr.mxu0 0.0
      %264 = vmatpush1.msra.mxu0 0.0
      %265 = vmatprep.subr.mxu0 0.0
      %266 = vmatpush1.msra.mxu0 0.0
      %267 = vmatprep.subr.mxu0 0.0
      %268 = vmatpush1.msra.mxu0 0.0
      %269 = vmatprep.subr.mxu0 0.0
      %270 = vmatpush1.msra.mxu0 0.0
      %271 = vmatprep.subr.mxu0 0.0
      %272 = vmatpush1.msra.mxu0 0.0
      %273 = vmatprep.subr.mxu0 0.0
      %274 = vmatpush1.msra.mxu0 0.0
      %275 = vmatprep.subr.mxu0 0.0
      %276 = vmatpush1.msra.mxu0 0.0
      %277 = vmatprep.subr.mxu0 0.0
      %278 = vmatpush1.msra.mxu0 0.0
      %279 = vmatprep.subr.mxu0 0.0
      %280 = vmatpush1.msra.mxu0 0.0
      %281 = vmatprep.subr.mxu0 0.0
      %282 = vmatpush1.msra.mxu0 0.0
      %283 = vmatprep.subr.mxu0 0.0
      %284 = vmatpush1.msra.mxu0 0.0
      %285 = vmatprep.subr.mxu0 0.0
      %286 = vmatpush1.msra.mxu0 0.0
      %287 = vmatprep.subr.mxu0 0.0
      %288 = vmatpush1.msra.mxu0 0.0
      %289 = vmatprep.subr.mxu0 0.0
      %290 = vmatpush1.msra.mxu0 0.0
      %291 = vmatprep.subr.mxu0 0.0
      %292 = vmatpush1.msra.mxu0 0.0
      %293 = vmatprep.subr.mxu0 0.0
      %294 = vmatpush1.msra.mxu0 0.0
      %295 = vmatprep.subr.mxu0 0.0
      %296 = vmatpush1.msra.mxu0 0.0
      %297 = vmatprep.subr.mxu0 0.0
      %298 = vmatpush1.msra.mxu0 0.0
      %299 = vmatprep.subr.mxu0 0.0
      %300 = vmatpush1.msra.mxu0 0.0
      %301 = vmatprep.subr.mxu0 0.0
      %302 = vmatpush1.msra.mxu0 0.0
      %303 = vmatprep.subr.mxu0 0.0
      %304 = vmatpush1.msra.mxu0 0.0
      %305 = vmatprep.subr.mxu0 0.0
      %306 = vmatpush1.msra.mxu0 0.0
      %307 = vmatprep.subr.mxu0 0.0
      %308 = vmatpush1.msra.mxu0 0.0
      %309 = vmatprep.mubr.f32.mxu0 0.0
      %310 = vmatmul.mubr.f32.gmra.mrb[0].mxu0 %v198
      %v311 = vpop.f32.mrb[0].mxu0
      %v312 = vadd.f32 %v194, %v311
      %v313 = vpop.f32.mrb[0].mxu0
      %314 = vmatprep.mubr.f32.mxu0 0.0
      %315 = vmatmul.mubr.f32.gmra.mrb[0].mxu0 %v201
      %v316 = vpop.f32.mrb[0].mxu0
      %v317 = vadd.f32 %v194, %v316
      %v318 = vpop.f32.mrb[0].mxu0
      %319 = vmatprep.mubr.f32.mxu0 0.0
      %320 = vmatmul.mubr.f32.gmra.mrb[0].mxu0 %v204
      %v321 = vpop.f32.mrb[0].mxu0
      %v322 = vadd.f32 %v194, %v321
      %v323 = vpop.f32.mrb[0].mxu0
      %324 = vmatprep.mubr.f32.mxu0 0.0
      %325 = vmatmul.mubr.f32.gmra.mrb[0].mxu0 %v207
      %v326 = vpop.f32.mrb[0].mxu0
      %v327 = vadd.f32 %v194, %v326
      %v328 = vpop.f32.mrb[0].mxu0
      %329 = vmatprep.mubr.f32.mxu0 0.0
      %330 = vmatmul.mubr.f32.gmra.mrb[0].mxu0 %v210
      %v331 = vpop.f32.mrb[0].mxu0
      %v332 = vadd.f32 %v194, %v331
      %v333 = vpop.f32.mrb[0].mxu0
      %334 = vmatprep.mubr.f32.mxu0 0.0
      %335 = vmatmul.mubr.f32.gmra.mrb[0].mxu0 %v213
      %v336 = vpop.f32.mrb[0].mxu0
      %v337 = vadd.f32 %v194, %v336
      %v338 = vpop.f32.mrb[0].mxu0
      %339 = vmatprep.mubr.f32.mxu0 0.0
      %340 = vmatmul.mubr.f32.gmra.mrb[0].mxu0 %v216
      %v341 = vpop.f32.mrb[0].mxu0
      %v342 = vadd.f32 %v194, %v341
      %v343 = vpop.f32.mrb[0].mxu0
      %344 = vmatprep.mubr.f32.mxu0 0.0
      %345 = vmatmul.mubr.f32.gmra.mrb[0].mxu0 %v219
      %v346 = vpop.f32.mrb[0].mxu0
      %v347 = vadd.f32 %v194, %v346
      %v348 = vpop.f32.mrb[0].mxu0
      %349 = vmatprep.mubr.f32.mxu0 0.0
      %350 = vmatmul.mubr.f32.gmra.mrb[0].mxu0 %v222
      %v351 = vpop.f32.mrb[0].mxu0
      %v352 = vadd.f32 %v194, %v351
      %v353 = vpop.f32.mrb[0].mxu0
      %354 = vmatprep.mubr.f32.mxu0 0.0
      %355 = vmatmul.mubr.f32.gmra.mrb[0].mxu0 %v225
      %v356 = vpop.f32.mrb[0].mxu0
      %v357 = vadd.f32 %v194, %v356
      %v358 = vpop.f32.mrb[0].mxu0
      %359 = vmatprep.mubr.f32.mxu0 0.0
      %360 = vmatmul.mubr.f32.gmra.mrb[0].mxu0 %v228
      %v361 = vpop.f32.mrb[0].mxu0
      %v362 = vadd.f32 %v194, %v361
      %v363 = vpop.f32.mrb[0].mxu0
      %364 = vmatprep.mubr.f32.mxu0 0.0
      %365 = vmatmul.mubr.f32.gmra.mrb[0].mxu0 %v231
      %v366 = vpop.f32.mrb[0].mxu0
      %v367 = vadd.f32 %v194, %v366
      %v368 = vpop.f32.mrb[0].mxu0
      %369 = vmatprep.mubr.f32.mxu0 0.0
      %370 = vmatmul.mubr.f32.gmra.mrb[0].mxu0 %v234
      %v371 = vpop.f32.mrb[0].mxu0
      %v372 = vadd.f32 %v194, %v371
      %v373 = vpop.f32.mrb[0].mxu0
      %374 = vmatprep.mubr.f32.mxu0 0.0
      %375 = vmatmul.mubr.f32.gmra.mrb[0].mxu0 %v237
      %v376 = vpop.f32.mrb[0].mxu0
      %v377 = vadd.f32 %v194, %v376
      %v378 = vpop.f32.mrb[0].mxu0
      %379 = vmatprep.mubr.f32.mxu0 0.0
      %380 = vmatmul.mubr.f32.gmra.mrb[0].mxu0 %v240
      %v381 = vpop.f32.mrb[0].mxu0
      %v382 = vadd.f32 %v194, %v381
      %v383 = vpop.f32.mrb[0].mxu0
      %384 = vmatprep.mubr.f32.mxu0 0.0
      %385 = vmatmul.mubr.f32.gmra.mrb[0].mxu0 %v243
      %v386 = vpop.f32.mrb[0].mxu0
      %v387 = vadd.f32 %v194, %v386
      %v388 = vpop.f32.mrb[0].mxu0
      %389 = vdwg.mxu0
      %v390 = vmul.f32 %v312, %v312
      %v391 = vmul.f32 %v317, %v317
      %v392 = vmul.f32 %v322, %v322
      %v393 = vmul.f32 %v327, %v327
      %v394 = vmul.f32 %v332, %v332
      %v395 = vmul.f32 %v337, %v337
      %v396 = vmul.f32 %v342, %v342
      %v397 = vmul.f32 %v347, %v347
      %v398 = vmul.f32 %v352, %v352
      %v399 = vmul.f32 %v357, %v357
      %v400 = vmul.f32 %v362, %v362
      %v401 = vmul.f32 %v367, %v367
      %v402 = vmul.f32 %v372, %v372
      %v403 = vmul.f32 %v377, %v377
      %v404 = vmul.f32 %v382, %v382
      %v405 = vmul.f32 %v387, %v387
      %vm406 = vcmask 64512
      %v407 = vsel %vm406, %v390, 0.0
      %408 = vadd.xlane.f32.xlu0 %v407
      %v409 = vpop.xlane.xlu0 %408
      %v410 = vsel %vm406, %v391, 0.0
      %411 = vadd.xlane.f32.xlu0 %v410
      %v412 = vpop.xlane.xlu0 %411
      %v413 = vsel %vm406, %v392, 0.0
      %414 = vadd.xlane.f32.xlu0 %v413
      %v415 = vpop.xlane.xlu0 %414
      %v416 = vsel %vm406, %v393, 0.0
      %417 = vadd.xlane.f32.xlu0 %v416
      %v418 = vpop.xlane.xlu0 %417
      %v419 = vsel %vm406, %v394, 0.0
      %420 = vadd.xlane.f32.xlu0 %v419
      %v421 = vpop.xlane.xlu0 %420
      %v422 = vsel %vm406, %v395, 0.0
      %423 = vadd.xlane.f32.xlu0 %v422
      %v424 = vpop.xlane.xlu0 %423
      %v425 = vsel %vm406, %v396, 0.0
      %426 = vadd.xlane.f32.xlu0 %v425
      %v427 = vpop.xlane.xlu0 %426
      %v428 = vsel %vm406, %v397, 0.0
      %429 = vadd.xlane.f32.xlu0 %v428
      %v430 = vpop.xlane.xlu0 %429
      %v431 = vsel %vm406, %v398, 0.0
      %432 = vadd.xlane.f32.xlu0 %v431
      %v433 = vpop.xlane.xlu0 %432
      %v434 = vsel %vm406, %v399, 0.0
      %435 = vadd.xlane.f32.xlu0 %v434
      %v436 = vpop.xlane.xlu0 %435
      %v437 = vsel %vm406, %v400, 0.0
      %438 = vadd.xlane.f32.xlu0 %v437
      %v439 = vpop.xlane.xlu0 %438
      %v440 = vsel %vm406, %v401, 0.0
      %441 = vadd.xlane.f32.xlu0 %v440
      %v442 = vpop.xlane.xlu0 %441
      %v443 = vsel %vm406, %v402, 0.0
      %444 = vadd.xlane.f32.xlu0 %v443
      %v445 = vpop.xlane.xlu0 %444
      %v446 = vsel %vm406, %v403, 0.0
      %447 = vadd.xlane.f32.xlu0 %v446
      %v448 = vpop.xlane.xlu0 %447
      %v449 = vsel %vm406, %v404, 0.0
      %450 = vadd.xlane.f32.xlu0 %v449
      %v451 = vpop.xlane.xlu0 %450
      %v452 = vsel %vm406, %v405, 0.0
      %453 = vadd.xlane.f32.xlu0 %v452
      %v454 = vpop.xlane.xlu0 %453
      %v455 = vadd.f32 %v409, %v412
      %v456 = vadd.f32 %v455, %v415
      %v457 = vadd.f32 %v456, %v418
      %v458 = vadd.f32 %v457, %v421
      %v459 = vadd.f32 %v458, %v424
      %v460 = vadd.f32 %v459, %v427
      %v461 = vadd.f32 %v460, %v430
      %v462 = vadd.f32 %v461, %v433
      %v463 = vadd.f32 %v462, %v436
      %v464 = vadd.f32 %v463, %v439
      %v465 = vadd.f32 %v464, %v442
      %v466 = vadd.f32 %v465, %v445
      %v467 = vadd.f32 %v466, %v448
      %v468 = vadd.f32 %v467, %v451
      %v469 = vadd.f32 %v468, %v454
      %v470 = vrot.slane %v469, 4
      %v471 = vadd.f32 %v469, %v470
      %v472 = vrot.slane %v471, 2
      %v473 = vadd.f32 %v471, %v472
      %v474 = vrot.slane %v473, 1
      %v475 = vadd.f32 %v473, %v474
      %v476 = vrsqrt.pop %v475
      %v477 = vmul.f32 %v475, %v476
      %vm478 = vcmp.eq.f32.partialorder %v475, inf
      %v479 = vsel %vm478, %v475, %v477
      %vm480 = vcmp.eq.f32.partialorder %v475, 0.0
      %v481 = vand.u32 %v475, 2147483648
      %v482 = vsel %vm480, %v481, %v479
      %v483 = vmax.f32 %v482, 1e-12
      %v484 = vrcp.pop %v483
      %v485 = vmul.f32 %v312, %v484
      %v486 = vmul.f32 %v317, %v484
      %v487 = vmul.f32 %v322, %v484
      %v488 = vmul.f32 %v327, %v484
      %v489 = vmul.f32 %v332, %v484
      %v490 = vmul.f32 %v337, %v484
      %v491 = vmul.f32 %v342, %v484
      %v492 = vmul.f32 %v347, %v484
      %v493 = vmul.f32 %v352, %v484
      %v494 = vmul.f32 %v357, %v484
      %v495 = vmul.f32 %v362, %v484
      %v496 = vmul.f32 %v367, %v484
      %v497 = vmul.f32 %v372, %v484
      %v498 = vmul.f32 %v377, %v484
      %v499 = vmul.f32 %v382, %v484
      %v500 = vmul.f32 %v387, %v484
      %501 = vst.msk [vmem:[%s170] sm:$0xff] %vm406, %v485
      %502 = vst.msk [vmem:[%s170 + $0x8] sm:$0xff] %vm406, %v486
      %503 = vst.msk [vmem:[%s170 + $0x10] sm:$0xff] %vm406, %v487
      %504 = vst.msk [vmem:[%s170 + $0x18] sm:$0xff] %vm406, %v488
      %505 = vst.msk [vmem:[%s170 + $0x20] sm:$0xff] %vm406, %v489
      %506 = vst.msk [vmem:[%s170 + $0x28] sm:$0xff] %vm406, %v490
      %507 = vst.msk [vmem:[%s170 + $0x30] sm:$0xff] %vm406, %v491
      %508 = vst.msk [vmem:[%s170 + $0x38] sm:$0xff] %vm406, %v492
      %509 = vst.msk [vmem:[%s170 + $0x40] sm:$0xff] %vm406, %v493
      %510 = vst.msk [vmem:[%s170 + $0x48] sm:$0xff] %vm406, %v494
      %511 = vst.msk [vmem:[%s170 + $0x50] sm:$0xff] %vm406, %v495
      %512 = vst.msk [vmem:[%s170 + $0x58] sm:$0xff] %vm406, %v496
      %513 = vst.msk [vmem:[%s170 + $0x60] sm:$0xff] %vm406, %v497
      %514 = vst.msk [vmem:[%s170 + $0x68] sm:$0xff] %vm406, %v498
      %515 = vst.msk [vmem:[%s170 + $0x70] sm:$0xff] %vm406, %v499
      %516 = vst.msk [vmem:[%s170 + $0x78] sm:$0xff] %vm406, %v500
      %p517 = scmp.lt.s32.totalorder %s14, 1
      %s518 = scalar_select %p517, %s14, 1
      %s519 = smul.addr %s518, 16
      %s520 = smul.addr %s519, 8
      %s521 = scalar_lea.vmem %s3, %s520
      // Predicated region
      $region33: #{boq_forward.35} parent=31 // pred_check
        %p522 = pneg %p100
      $region34: #{boq_forward.35} parent=31 // pred_check_branch
        %524 = sbr.rel (%p522) target = $region36
      $region35: #{boq_forward.35} parent=31 // pred_region
        _
      $region36: #{boq_forward.35} parent=31 // pred_fallthru
        _
    $region32: #{boq_forward.35} parent=5 // pred_fallthru
      _
    %p525 = scmp.le.s32.totalorder 2, %s9
    // Predicated region
    $region37: #{boq_forward.35} parent=5 // pred_check
      %p526 = pneg %p525
    $region38: #{boq_forward.35} parent=5 // pred_check_branch
      %528 = sbr.rel (%p526) target = $region40
    $region39: #{boq_forward.35} parent=5 // pred_region
      %s529 = ssub.s32 %s9, 2
      // Predicated region
      $region41: #{boq_forward.35} parent=39 // pred_check
        %p530 = pneg %p106
      $region42: #{boq_forward.35} parent=39 // pred_check_branch
        %532 = sbr.rel (%p530) target = $region44
      $region43: #{boq_forward.35} parent=39 // pred_region
        %p533 = scmp.lt.s32.totalorder %s15, 1
        %s534 = scalar_select %p533, %s15, 1
        %s535 = smul.addr %s534, 16
        %s536 = smul.addr %s535, 8
        %s537 = scalar_lea.vmem %s3, %s536
      $region44: #{boq_forward.35} parent=39 // pred_fallthru
        _
    $region40: #{boq_forward.35} parent=5 // pred_fallthru
      _
  $region6: #{boq_forward.35} parent=0 // loop_footer
    %s13 = sadd.s32 1, %s9
  $region7: #{boq_forward.35} parent=0 // loop_footer_branch
    %8 = sbr.rel target = $region3
  $region8: #{boq_forward.35} parent=0 // loop_exit
    _

</llo_original>
